<compile_context>
chip_gen: v7x
topology: tpu7x:2x2x1
jax: 0.10.0
libtpu: 0.0.40
codegen_flags: <defaults>
</compile_context>

<pallas_src>
import functools

import jax
import jax.numpy as jnp
from jax.experimental import pallas as pl
from jax.experimental.pallas import tpu as pltpu

# ----------------------- synthetic config (small shapes) -----------------------
HIDDEN = 256          # implied by hidden_states[-1][:, 0].view(1, bs, 256)
N_HEADS = 4
HEAD_DIM = HIDDEN // N_HEADS
FFN_DIM = 512
N_LAYERS = 2
VOCAB = 100
SEQ = 8
BATCH = 2
LSTM_IN = 512         # conf['bert']['lstm_in_dim']
LSTM_HID = 64         # conf['bert']['lstm_hid_dim']  (bidirectional -> 128)
LN_EPS = 1e-12

VMEM = pl.BlockSpec(memory_space=pltpu.MemorySpace.VMEM)   # whole-array-in-VMEM spec


# --------------------------- single fused Pallas kernel -------------------------
def _fused_forward_kernel(
    emb_ref, bias_ref, emb_ln_g, emb_ln_b,
    w_qkv, b_qkv, wo, bo, ln1_g, ln1_b,
    w_ffn1, b_ffn1, w_ffn2, b_ffn2, ln2_g, ln2_b,
    lstm_w, lstm_b, w_l2, b_l2, w_l4, b_l4,
    out_ref, *, n_layers, batch, seq,
):
    def layernorm(h, g, b):                       # f32 on VPU/EUP (v5e-safe)
        mu = jnp.mean(h, axis=-1, keepdims=True)
        var = jnp.mean(jnp.square(h - mu), axis=-1, keepdims=True)
        return (h - mu) * jax.lax.rsqrt(var + LN_EPS) * g + b

    def dot_bf16(x, w):                           # bf16 MXU inputs, f32 accumulation
        return jnp.dot(x.astype(jnp.bfloat16), w, preferred_element_type=jnp.float32)

    bias = bias_ref[...]                          # (B*S, B*S) additive attention bias, f32
    x = layernorm(emb_ref[...], emb_ln_g[...], emb_ln_b[...])      # (B*S, H) f32
    scale = 1.0 / (HEAD_DIM ** 0.5)

    cls_tokens = []                               # CLS row of every hidden state after each layer
    for l in range(n_layers):                     # unrolled at trace time
        # ---- fused QKV projection: one (H, 3H) matmul ----
        qkv = dot_bf16(x, w_qkv[l]) + b_qkv[l]    # (B*S, 3H) f32

        # ---- per-head attention on 2D tiles; cross-batch pairs masked via bias ----
        ctx_heads = []
        for h in range(N_HEADS):
            qs = (qkv[:, h * HEAD_DIM:(h + 1) * HEAD_DIM] * scale).astype(jnp.bfloat16)
            ks = qkv[:, HIDDEN + h * HEAD_DIM:HIDDEN + (h + 1) * HEAD_DIM].astype(jnp.bfloat16)
            vs = qkv[:, 2 * HIDDEN + h * HEAD_DIM:2 * HIDDEN + (h + 1) * HEAD_DIM].astype(jnp.bfloat16)
            s = jax.lax.dot_general(qs, ks, (((1,), (1,)), ((), ())),
                                    preferred_element_type=jnp.float32) + bias
            s = s - jnp.max(s, axis=-1, keepdims=True)             # f32 softmax
            p = jnp.exp(s)
            p = p / jnp.sum(p, axis=-1, keepdims=True)
            ctx_heads.append(jnp.dot(p.astype(jnp.bfloat16), vs,
                                     preferred_element_type=jnp.float32))
        ctx = jnp.concatenate(ctx_heads, axis=-1)                  # lane-dense (B*S, H)

        attn_out = dot_bf16(ctx, wo[l]) + bo[l]
        x1 = layernorm(attn_out + x, ln1_g[l], ln1_b[l])

        # TODO(synk): HF BERT uses exact erf GELU; tanh-approximate GELU used here
        # (erf lowering is not guaranteed in Mosaic; encoder weights are synthetic anyway).
        ffn = jax.nn.gelu(dot_bf16(x1, w_ffn1[l]) + b_ffn1[l])
        x = layernorm(dot_bf16(ffn, w_ffn2[l]) + b_ffn2[l] + x1, ln2_g[l], ln2_b[l])

        cls_tokens.append(
            jnp.concatenate([x[b * seq:b * seq + 1, :] for b in range(batch)], axis=0))  # (B, H)

    # ---- CLS of last two hidden states -> (B, 2H) = seq-len-1 BiLSTM input ----
    concat_hidden = jnp.concatenate([cls_tokens[-1], cls_tokens[-2]], axis=-1)   # (B, 512)

    # ---- bidirectional LSTM, single timestep, zero (h0, c0):
    #      gates = x @ W_ih + (b_ih + b_hh); f*c0 == 0 and W_hh @ h0 == 0 drop out exactly ----
    def lstm_cell(xc, w, b):
        gates = dot_bf16(xc, w) + b
        i = jax.nn.sigmoid(gates[:, 0 * LSTM_HID:1 * LSTM_HID])
        g = jnp.tanh(gates[:, 2 * LSTM_HID:3 * LSTM_HID])
        o = jax.nn.sigmoid(gates[:, 3 * LSTM_HID:4 * LSTM_HID])
        return o * jnp.tanh(i * g)

    hf = lstm_cell(concat_hidden, lstm_w[0], lstm_b[0])
    hb = lstm_cell(concat_hidden, lstm_w[1], lstm_b[1])
    lstm_out = jnp.concatenate([hf, hb], axis=-1)                  # (B, 128)

    # ---- MLP head: l2 + ReLU (+ eval-mode Dropout == identity) + l4 ----
    hh = jnp.maximum(dot_bf16(lstm_out, w_l2[...]) + b_l2[...], 0.0)
    # TODO(synk): self.l3 = Dropout(p) is identity in eval mode; train-mode dropout not modeled.
    out_ref[...] = (dot_bf16(hh, w_l4[...]) + b_l4[...]).astype(out_ref.dtype)


# ------------------------------ forward wrapper ----------------------------------
def bert_class_forward(params, ids, mask, token_type_ids):
    B, S = ids.shape
    # --- embedding gather (plain-JAX glue; data-dependent table gather kept outside kernel) ---
    emb = (params["word_emb"][ids]
           + params["pos_emb"][jnp.arange(S)][None]
           + params["tok_emb"][token_type_ids]).reshape(B * S, HIDDEN)

    # combined additive attention bias: padding mask + cross-batch block-diagonal, (B*S, B*S)
    same_batch = jnp.eye(B, dtype=bool)
    keep = jnp.broadcast_to(
        same_batch[:, None, :, None] & mask.astype(bool)[None, None, :, :],
        (B, S, B, S))
    attn_bias = jnp.where(keep, 0.0, -10000.0).astype(jnp.float32).reshape(B * S, B * S)

    kernel = functools.partial(_fused_forward_kernel, n_layers=N_LAYERS, batch=B, seq=S)
    return pl.pallas_call(
        kernel,
        out_shape=jax.ShapeDtypeStruct((B, 14), jnp.float32),
        in_specs=[VMEM] * 22,
        out_specs=VMEM,
    )(emb, attn_bias,
      params["emb_ln_g"], params["emb_ln_b"],
      params["w_qkv"], params["b_qkv"], params["wo"], params["bo"],
      params["ln1_g"], params["ln1_b"],
      params["w_ffn1"], params["b_ffn1"], params["w_ffn2"], params["b_ffn2"],
      params["ln2_g"], params["ln2_b"],
      params["lstm_w"], params["lstm_b"],
      params["w_l2"], params["b_l2"], params["w_l4"], params["b_l4"])


# ------------------------------ param init --------------------------------------
def init_params(key):
    keys = iter(jax.random.split(key, 64))

    def dense(shape, scale=0.02):
        return (scale * jax.random.normal(next(keys), shape)).astype(jnp.float32)

    def zeros(shape):
        return jnp.zeros(shape, jnp.float32)

    def ones(shape):
        return jnp.ones(shape, jnp.float32)

    bf = lambda a: a.astype(jnp.bfloat16)

    layers = []
    for _ in range(N_LAYERS):
        layers.append(dict(
            w_qkv=dense((HIDDEN, 3 * HIDDEN)), b_qkv=zeros((1, 3 * HIDDEN)),   # fused Q|K|V
            wo=dense((HIDDEN, HIDDEN)), bo=zeros((1, HIDDEN)),
            ln1_g=ones((1, HIDDEN)), ln1_b=zeros((1, HIDDEN)),
            w_ffn1=dense((HIDDEN, FFN_DIM)), b_ffn1=zeros((1, FFN_DIM)),
            w_ffn2=dense((FFN_DIM, HIDDEN)), b_ffn2=zeros((1, HIDDEN)),
            ln2_g=ones((1, HIDDEN)), ln2_b=zeros((1, HIDDEN)),
        ))
    stack = lambda name: jnp.stack([l[name] for l in layers], axis=0)   # layer-stacked

    params = {
        "word_emb": dense((VOCAB, HIDDEN)),
        "pos_emb": dense((SEQ, HIDDEN)),
        "tok_emb": dense((2, HIDDEN)),
        "emb_ln_g": ones((1, HIDDEN)), "emb_ln_b": zeros((1, HIDDEN)),
        # matmul weights in bf16 (halves weight DMA; MXU-native), biases / LN params in f32
        "w_qkv": bf(stack("w_qkv")), "b_qkv": stack("b_qkv"),
        "wo": bf(stack("wo")), "bo": stack("bo"),
        "ln1_g": stack("ln1_g"), "ln1_b": stack("ln1_b"),
        "w_ffn1": bf(stack("w_ffn1")), "b_ffn1": stack("b_ffn1"),
        "w_ffn2": bf(stack("w_ffn2")), "b_ffn2": stack("b_ffn2"),
        "ln2_g": stack("ln2_g"), "ln2_b": stack("ln2_b"),
        # forward / backward LSTM cells stacked on a leading axis; bias = b_ih + b_hh fused
        "lstm_w": bf(jnp.stack([dense((LSTM_IN, 4 * LSTM_HID)),
                                dense((LSTM_IN, 4 * LSTM_HID))], axis=0)),
        "lstm_b": jnp.stack([dense((1, 4 * LSTM_HID)),
                             dense((1, 4 * LSTM_HID))], axis=0),
        "w_l2": bf(dense((2 * LSTM_HID, 64))), "b_l2": zeros((1, 64)),
        "w_l4": bf(dense((64, 14))), "b_l4": zeros((1, 14)),
    }
    return params


# ---------------------------------- main -----------------------------------------
if __name__ == "__main__":
    key = jax.random.PRNGKey(0)
    pkey, dkey = jax.random.split(key)
    params = init_params(pkey)

    ids = jax.random.randint(dkey, (BATCH, SEQ), 0, VOCAB, dtype=jnp.int32)
    mask = jnp.ones((BATCH, SEQ), jnp.int32).at[1, SEQ - 2:].set(0)   # pad tail of sample 1
    token_type_ids = jnp.zeros((BATCH, SEQ), jnp.int32)

    out = jax.jit(bert_class_forward)(params, ids, mask, token_type_ids)
    out = jax.block_until_ready(out)
    assert out.shape == (BATCH, 14) and out.dtype == jnp.float32
    print("KERNEL_OK")
</pallas_src>

<mosaic_0001>
module attributes {stable_mosaic.version = 11 : i64} {
  func.func @_fused_forward_kernel(%arg0: memref<16x256xf32, #tpu.memory_space<vmem>>, %arg1: memref<16x16xf32, #tpu.memory_space<vmem>>, %arg2: memref<1x256xf32, #tpu.memory_space<vmem>>, %arg3: memref<1x256xf32, #tpu.memory_space<vmem>>, %arg4: memref<2x256x768xbf16, #tpu.memory_space<vmem>>, %arg5: memref<2x1x768xf32, #tpu.memory_space<vmem>>, %arg6: memref<2x256x256xbf16, #tpu.memory_space<vmem>>, %arg7: memref<2x1x256xf32, #tpu.memory_space<vmem>>, %arg8: memref<2x1x256xf32, #tpu.memory_space<vmem>>, %arg9: memref<2x1x256xf32, #tpu.memory_space<vmem>>, %arg10: memref<2x256x512xbf16, #tpu.memory_space<vmem>>, %arg11: memref<2x1x512xf32, #tpu.memory_space<vmem>>, %arg12: memref<2x512x256xbf16, #tpu.memory_space<vmem>>, %arg13: memref<2x1x256xf32, #tpu.memory_space<vmem>>, %arg14: memref<2x1x256xf32, #tpu.memory_space<vmem>>, %arg15: memref<2x1x256xf32, #tpu.memory_space<vmem>>, %arg16: memref<2x512x256xbf16, #tpu.memory_space<vmem>>, %arg17: memref<2x1x256xf32, #tpu.memory_space<vmem>>, %arg18: memref<128x64xbf16, #tpu.memory_space<vmem>>, %arg19: memref<1x64xf32, #tpu.memory_space<vmem>>, %arg20: memref<64x14xbf16, #tpu.memory_space<vmem>>, %arg21: memref<1x14xf32, #tpu.memory_space<vmem>>, %arg22: memref<2x14xf32, #tpu.memory_space<vmem>>) attributes {dimension_semantics = [], scalar_prefetch = 0 : i64, scratch_operands = 0 : i64, tpu.core_type = #tpu.core_type<tc>} {
    %c0 = arith.constant 0 : index
    %c0_0 = arith.constant 0 : index
    %0 = vector.load %arg1[%c0, %c0_0] : memref<16x16xf32, #tpu.memory_space<vmem>>, vector<16x16xf32>
    %c0_1 = arith.constant 0 : index
    %c0_2 = arith.constant 0 : index
    %1 = vector.load %arg0[%c0_1, %c0_2] : memref<16x256xf32, #tpu.memory_space<vmem>>, vector<16x256xf32>
    %c0_3 = arith.constant 0 : index
    %c0_4 = arith.constant 0 : index
    %2 = vector.load %arg2[%c0_3, %c0_4] : memref<1x256xf32, #tpu.memory_space<vmem>>, vector<1x256xf32>
    %c0_5 = arith.constant 0 : index
    %c0_6 = arith.constant 0 : index
    %3 = vector.load %arg3[%c0_5, %c0_6] : memref<1x256xf32, #tpu.memory_space<vmem>>, vector<1x256xf32>
    %cst = arith.constant dense<0.000000e+00> : vector<16xf32>
    %4 = vector.multi_reduction <add>, %1, %cst [1] : vector<16x256xf32> to vector<16xf32>
    %5 = vector.shape_cast %4 : vector<16xf32> to vector<16x1xf32>
    %cst_7 = arith.constant 2.560000e+02 : f32
    %6 = vector.broadcast %cst_7 : f32 to vector<16x1xf32>
    %7 = arith.divf %5, %6 : vector<16x1xf32>
    %8 = vector.broadcast %7 : vector<16x1xf32> to vector<16x256xf32>
    %9 = arith.subf %1, %8 : vector<16x256xf32>
    %10 = arith.mulf %9, %9 : vector<16x256xf32>
    %cst_8 = arith.constant dense<0.000000e+00> : vector<16xf32>
    %11 = vector.multi_reduction <add>, %10, %cst_8 [1] : vector<16x256xf32> to vector<16xf32>
    %12 = vector.shape_cast %11 : vector<16xf32> to vector<16x1xf32>
    %cst_9 = arith.constant 2.560000e+02 : f32
    %13 = vector.broadcast %cst_9 : f32 to vector<16x1xf32>
    %14 = arith.divf %12, %13 : vector<16x1xf32>
    %15 = vector.broadcast %7 : vector<16x1xf32> to vector<16x256xf32>
    %16 = arith.subf %1, %15 : vector<16x256xf32>
    %cst_10 = arith.constant 9.99999996E-13 : f32
    %17 = vector.broadcast %cst_10 : f32 to vector<16x1xf32>
    %18 = arith.addf %14, %17 : vector<16x1xf32>
    %19 = math.rsqrt %18 : vector<16x1xf32>
    %20 = vector.broadcast %19 : vector<16x1xf32> to vector<16x256xf32>
    %21 = arith.mulf %16, %20 : vector<16x256xf32>
    %22 = vector.broadcast %2 : vector<1x256xf32> to vector<16x256xf32>
    %23 = arith.mulf %21, %22 : vector<16x256xf32>
    %24 = vector.broadcast %3 : vector<1x256xf32> to vector<16x256xf32>
    %25 = arith.addf %23, %24 : vector<16x256xf32>
    %c0_11 = arith.constant 0 : index
    %c0_12 = arith.constant 0 : index
    %c0_13 = arith.constant 0 : index
    %26 = vector.load %arg4[%c0_11, %c0_12, %c0_13] : memref<2x256x768xbf16, #tpu.memory_space<vmem>>, vector<1x256x768xbf16>
    %27 = vector.shape_cast %26 : vector<1x256x768xbf16> to vector<256x768xbf16>
    %28 = arith.truncf %25 : vector<16x256xf32> to vector<16x256xbf16>
    %cst_14 = arith.constant dense<0.000000e+00> : vector<16x768xf32>
    %29 = tpu.matmul %28, %27, %cst_14 {dimension_numbers = #tpu.dot_dimension_numbers<[1], [0], [0], [1], [0, 0, 1, 1], [], []>} : vector<16x256xbf16>, vector<256x768xbf16>, vector<16x768xf32> -> vector<16x768xf32>
    %c0_15 = arith.constant 0 : index
    %c0_16 = arith.constant 0 : index
    %c0_17 = arith.constant 0 : index
    %30 = vector.load %arg5[%c0_15, %c0_16, %c0_17] : memref<2x1x768xf32, #tpu.memory_space<vmem>>, vector<1x1x768xf32>
    %31 = vector.shape_cast %30 : vector<1x1x768xf32> to vector<1x768xf32>
    %32 = vector.broadcast %31 : vector<1x768xf32> to vector<16x768xf32>
    %33 = arith.addf %29, %32 : vector<16x768xf32>
    %34 = vector.extract_strided_slice %33 {offsets = [0, 0], sizes = [16, 64], strides = [1, 1]} : vector<16x768xf32> to vector<16x64xf32>
    %cst_18 = arith.constant 1.250000e-01 : f32
    %35 = vector.broadcast %cst_18 : f32 to vector<16x64xf32>
    %36 = arith.mulf %34, %35 : vector<16x64xf32>
    %37 = arith.truncf %36 : vector<16x64xf32> to vector<16x64xbf16>
    %38 = vector.extract_strided_slice %33 {offsets = [0, 256], sizes = [16, 64], strides = [1, 1]} : vector<16x768xf32> to vector<16x64xf32>
    %39 = arith.truncf %38 : vector<16x64xf32> to vector<16x64xbf16>
    %40 = vector.extract_strided_slice %33 {offsets = [0, 512], sizes = [16, 64], strides = [1, 1]} : vector<16x768xf32> to vector<16x64xf32>
    %41 = arith.truncf %40 : vector<16x64xf32> to vector<16x64xbf16>
    %cst_19 = arith.constant dense<0.000000e+00> : vector<16x16xf32>
    %42 = tpu.matmul %37, %39, %cst_19 {dimension_numbers = #tpu.dot_dimension_numbers<[1], [1], [0], [0], [0, 0, 1, 0], [], []>} : vector<16x64xbf16>, vector<16x64xbf16>, vector<16x16xf32> -> vector<16x16xf32>
    %43 = arith.addf %42, %0 : vector<16x16xf32>
    %cst_20 = arith.constant dense<0xFF800000> : vector<16xf32>
    %44 = vector.multi_reduction <maximumf>, %43, %cst_20 [1] : vector<16x16xf32> to vector<16xf32>
    %45 = vector.shape_cast %44 : vector<16xf32> to vector<16x1xf32>
    %46 = vector.broadcast %45 : vector<16x1xf32> to vector<16x16xf32>
    %47 = arith.subf %43, %46 : vector<16x16xf32>
    %48 = math.exp %47 : vector<16x16xf32>
    %cst_21 = arith.constant dense<0.000000e+00> : vector<16xf32>
    %49 = vector.multi_reduction <add>, %48, %cst_21 [1] : vector<16x16xf32> to vector<16xf32>
    %50 = vector.shape_cast %49 : vector<16xf32> to vector<16x1xf32>
    %51 = vector.broadcast %50 : vector<16x1xf32> to vector<16x16xf32>
    %52 = arith.divf %48, %51 : vector<16x16xf32>
    %53 = arith.truncf %52 : vector<16x16xf32> to vector<16x16xbf16>
    %cst_22 = arith.constant dense<0.000000e+00> : vector<16x64xf32>
    %54 = tpu.matmul %53, %41, %cst_22 {dimension_numbers = #tpu.dot_dimension_numbers<[1], [0], [0], [1], [0, 0, 1, 1], [], []>} : vector<16x16xbf16>, vector<16x64xbf16>, vector<16x64xf32> -> vector<16x64xf32>
    %55 = vector.extract_strided_slice %33 {offsets = [0, 64], sizes = [16, 64], strides = [1, 1]} : vector<16x768xf32> to vector<16x64xf32>
    %cst_23 = arith.constant 1.250000e-01 : f32
    %56 = vector.broadcast %cst_23 : f32 to vector<16x64xf32>
    %57 = arith.mulf %55, %56 : vector<16x64xf32>
    %58 = arith.truncf %57 : vector<16x64xf32> to vector<16x64xbf16>
    %59 = vector.extract_strided_slice %33 {offsets = [0, 320], sizes = [16, 64], strides = [1, 1]} : vector<16x768xf32> to vector<16x64xf32>
    %60 = arith.truncf %59 : vector<16x64xf32> to vector<16x64xbf16>
    %61 = vector.extract_strided_slice %33 {offsets = [0, 576], sizes = [16, 64], strides = [1, 1]} : vector<16x768xf32> to vector<16x64xf32>
    %62 = arith.truncf %61 : vector<16x64xf32> to vector<16x64xbf16>
    %cst_24 = arith.constant dense<0.000000e+00> : vector<16x16xf32>
    %63 = tpu.matmul %58, %60, %cst_24 {dimension_numbers = #tpu.dot_dimension_numbers<[1], [1], [0], [0], [0, 0, 1, 0], [], []>} : vector<16x64xbf16>, vector<16x64xbf16>, vector<16x16xf32> -> vector<16x16xf32>
    %64 = arith.addf %63, %0 : vector<16x16xf32>
    %cst_25 = arith.constant dense<0xFF800000> : vector<16xf32>
    %65 = vector.multi_reduction <maximumf>, %64, %cst_25 [1] : vector<16x16xf32> to vector<16xf32>
    %66 = vector.shape_cast %65 : vector<16xf32> to vector<16x1xf32>
    %67 = vector.broadcast %66 : vector<16x1xf32> to vector<16x16xf32>
    %68 = arith.subf %64, %67 : vector<16x16xf32>
    %69 = math.exp %68 : vector<16x16xf32>
    %cst_26 = arith.constant dense<0.000000e+00> : vector<16xf32>
    %70 = vector.multi_reduction <add>, %69, %cst_26 [1] : vector<16x16xf32> to vector<16xf32>
    %71 = vector.shape_cast %70 : vector<16xf32> to vector<16x1xf32>
    %72 = vector.broadcast %71 : vector<16x1xf32> to vector<16x16xf32>
    %73 = arith.divf %69, %72 : vector<16x16xf32>
    %74 = arith.truncf %73 : vector<16x16xf32> to vector<16x16xbf16>
    %cst_27 = arith.constant dense<0.000000e+00> : vector<16x64xf32>
    %75 = tpu.matmul %74, %62, %cst_27 {dimension_numbers = #tpu.dot_dimension_numbers<[1], [0], [0], [1], [0, 0, 1, 1], [], []>} : vector<16x16xbf16>, vector<16x64xbf16>, vector<16x64xf32> -> vector<16x64xf32>
    %76 = vector.extract_strided_slice %33 {offsets = [0, 128], sizes = [16, 64], strides = [1, 1]} : vector<16x768xf32> to vector<16x64xf32>
    %cst_28 = arith.constant 1.250000e-01 : f32
    %77 = vector.broadcast %cst_28 : f32 to vector<16x64xf32>
    %78 = arith.mulf %76, %77 : vector<16x64xf32>
    %79 = arith.truncf %78 : vector<16x64xf32> to vector<16x64xbf16>
    %80 = vector.extract_strided_slice %33 {offsets = [0, 384], sizes = [16, 64], strides = [1, 1]} : vector<16x768xf32> to vector<16x64xf32>
    %81 = arith.truncf %80 : vector<16x64xf32> to vector<16x64xbf16>
    %82 = vector.extract_strided_slice %33 {offsets = [0, 640], sizes = [16, 64], strides = [1, 1]} : vector<16x768xf32> to vector<16x64xf32>
    %83 = arith.truncf %82 : vector<16x64xf32> to vector<16x64xbf16>
    %cst_29 = arith.constant dense<0.000000e+00> : vector<16x16xf32>
    %84 = tpu.matmul %79, %81, %cst_29 {dimension_numbers = #tpu.dot_dimension_numbers<[1], [1], [0], [0], [0, 0, 1, 0], [], []>} : vector<16x64xbf16>, vector<16x64xbf16>, vector<16x16xf32> -> vector<16x16xf32>
    %85 = arith.addf %84, %0 : vector<16x16xf32>
    %cst_30 = arith.constant dense<0xFF800000> : vector<16xf32>
    %86 = vector.multi_reduction <maximumf>, %85, %cst_30 [1] : vector<16x16xf32> to vector<16xf32>
    %87 = vector.shape_cast %86 : vector<16xf32> to vector<16x1xf32>
    %88 = vector.broadcast %87 : vector<16x1xf32> to vector<16x16xf32>
    %89 = arith.subf %85, %88 : vector<16x16xf32>
    %90 = math.exp %89 : vector<16x16xf32>
    %cst_31 = arith.constant dense<0.000000e+00> : vector<16xf32>
    %91 = vector.multi_reduction <add>, %90, %cst_31 [1] : vector<16x16xf32> to vector<16xf32>
    %92 = vector.shape_cast %91 : vector<16xf32> to vector<16x1xf32>
    %93 = vector.broadcast %92 : vector<16x1xf32> to vector<16x16xf32>
    %94 = arith.divf %90, %93 : vector<16x16xf32>
    %95 = arith.truncf %94 : vector<16x16xf32> to vector<16x16xbf16>
    %cst_32 = arith.constant dense<0.000000e+00> : vector<16x64xf32>
    %96 = tpu.matmul %95, %83, %cst_32 {dimension_numbers = #tpu.dot_dimension_numbers<[1], [0], [0], [1], [0, 0, 1, 1], [], []>} : vector<16x16xbf16>, vector<16x64xbf16>, vector<16x64xf32> -> vector<16x64xf32>
    %97 = vector.extract_strided_slice %33 {offsets = [0, 192], sizes = [16, 64], strides = [1, 1]} : vector<16x768xf32> to vector<16x64xf32>
    %cst_33 = arith.constant 1.250000e-01 : f32
    %98 = vector.broadcast %cst_33 : f32 to vector<16x64xf32>
    %99 = arith.mulf %97, %98 : vector<16x64xf32>
    %100 = arith.truncf %99 : vector<16x64xf32> to vector<16x64xbf16>
    %101 = vector.extract_strided_slice %33 {offsets = [0, 448], sizes = [16, 64], strides = [1, 1]} : vector<16x768xf32> to vector<16x64xf32>
    %102 = arith.truncf %101 : vector<16x64xf32> to vector<16x64xbf16>
    %103 = vector.extract_strided_slice %33 {offsets = [0, 704], sizes = [16, 64], strides = [1, 1]} : vector<16x768xf32> to vector<16x64xf32>
    %104 = arith.truncf %103 : vector<16x64xf32> to vector<16x64xbf16>
    %cst_34 = arith.constant dense<0.000000e+00> : vector<16x16xf32>
    %105 = tpu.matmul %100, %102, %cst_34 {dimension_numbers = #tpu.dot_dimension_numbers<[1], [1], [0], [0], [0, 0, 1, 0], [], []>} : vector<16x64xbf16>, vector<16x64xbf16>, vector<16x16xf32> -> vector<16x16xf32>
    %106 = arith.addf %105, %0 : vector<16x16xf32>
    %cst_35 = arith.constant dense<0xFF800000> : vector<16xf32>
    %107 = vector.multi_reduction <maximumf>, %106, %cst_35 [1] : vector<16x16xf32> to vector<16xf32>
    %108 = vector.shape_cast %107 : vector<16xf32> to vector<16x1xf32>
    %109 = vector.broadcast %108 : vector<16x1xf32> to vector<16x16xf32>
    %110 = arith.subf %106, %109 : vector<16x16xf32>
    %111 = math.exp %110 : vector<16x16xf32>
    %cst_36 = arith.constant dense<0.000000e+00> : vector<16xf32>
    %112 = vector.multi_reduction <add>, %111, %cst_36 [1] : vector<16x16xf32> to vector<16xf32>
    %113 = vector.shape_cast %112 : vector<16xf32> to vector<16x1xf32>
    %114 = vector.broadcast %113 : vector<16x1xf32> to vector<16x16xf32>
    %115 = arith.divf %111, %114 : vector<16x16xf32>
    %116 = arith.truncf %115 : vector<16x16xf32> to vector<16x16xbf16>
    %cst_37 = arith.constant dense<0.000000e+00> : vector<16x64xf32>
    %117 = tpu.matmul %116, %104, %cst_37 {dimension_numbers = #tpu.dot_dimension_numbers<[1], [0], [0], [1], [0, 0, 1, 1], [], []>} : vector<16x16xbf16>, vector<16x64xbf16>, vector<16x64xf32> -> vector<16x64xf32>
    %118 = tpu.concatenate %54, %75, %96, %117 in 1 : vector<16x64xf32>, vector<16x64xf32>, vector<16x64xf32>, vector<16x64xf32> -> vector<16x256xf32>
    %c0_38 = arith.constant 0 : index
    %c0_39 = arith.constant 0 : index
    %c0_40 = arith.constant 0 : index
    %119 = vector.load %arg6[%c0_38, %c0_39, %c0_40] : memref<2x256x256xbf16, #tpu.memory_space<vmem>>, vector<1x256x256xbf16>
    %120 = vector.shape_cast %119 : vector<1x256x256xbf16> to vector<256x256xbf16>
    %121 = arith.truncf %118 : vector<16x256xf32> to vector<16x256xbf16>
    %cst_41 = arith.constant dense<0.000000e+00> : vector<16x256xf32>
    %122 = tpu.matmul %121, %120, %cst_41 {dimension_numbers = #tpu.dot_dimension_numbers<[1], [0], [0], [1], [0, 0, 1, 1], [], []>} : vector<16x256xbf16>, vector<256x256xbf16>, vector<16x256xf32> -> vector<16x256xf32>
    %c0_42 = arith.constant 0 : index
    %c0_43 = arith.constant 0 : index
    %c0_44 = arith.constant 0 : index
    %123 = vector.load %arg7[%c0_42, %c0_43, %c0_44] : memref<2x1x256xf32, #tpu.memory_space<vmem>>, vector<1x1x256xf32>
    %124 = vector.shape_cast %123 : vector<1x1x256xf32> to vector<1x256xf32>
    %125 = vector.broadcast %124 : vector<1x256xf32> to vector<16x256xf32>
    %126 = arith.addf %122, %125 : vector<16x256xf32>
    %127 = arith.addf %126, %25 : vector<16x256xf32>
    %c0_45 = arith.constant 0 : index
    %c0_46 = arith.constant 0 : index
    %c0_47 = arith.constant 0 : index
    %128 = vector.load %arg8[%c0_45, %c0_46, %c0_47] : memref<2x1x256xf32, #tpu.memory_space<vmem>>, vector<1x1x256xf32>
    %129 = vector.shape_cast %128 : vector<1x1x256xf32> to vector<1x256xf32>
    %c0_48 = arith.constant 0 : index
    %c0_49 = arith.constant 0 : index
    %c0_50 = arith.constant 0 : index
    %130 = vector.load %arg9[%c0_48, %c0_49, %c0_50] : memref<2x1x256xf32, #tpu.memory_space<vmem>>, vector<1x1x256xf32>
    %131 = vector.shape_cast %130 : vector<1x1x256xf32> to vector<1x256xf32>
    %cst_51 = arith.constant dense<0.000000e+00> : vector<16xf32>
    %132 = vector.multi_reduction <add>, %127, %cst_51 [1] : vector<16x256xf32> to vector<16xf32>
    %133 = vector.shape_cast %132 : vector<16xf32> to vector<16x1xf32>
    %cst_52 = arith.constant 2.560000e+02 : f32
    %134 = vector.broadcast %cst_52 : f32 to vector<16x1xf32>
    %135 = arith.divf %133, %134 : vector<16x1xf32>
    %136 = vector.broadcast %135 : vector<16x1xf32> to vector<16x256xf32>
    %137 = arith.subf %127, %136 : vector<16x256xf32>
    %138 = arith.mulf %137, %137 : vector<16x256xf32>
    %cst_53 = arith.constant dense<0.000000e+00> : vector<16xf32>
    %139 = vector.multi_reduction <add>, %138, %cst_53 [1] : vector<16x256xf32> to vector<16xf32>
    %140 = vector.shape_cast %139 : vector<16xf32> to vector<16x1xf32>
    %cst_54 = arith.constant 2.560000e+02 : f32
    %141 = vector.broadcast %cst_54 : f32 to vector<16x1xf32>
    %142 = arith.divf %140, %141 : vector<16x1xf32>
    %143 = vector.broadcast %135 : vector<16x1xf32> to vector<16x256xf32>
    %144 = arith.subf %127, %143 : vector<16x256xf32>
    %cst_55 = arith.constant 9.99999996E-13 : f32
    %145 = vector.broadcast %cst_55 : f32 to vector<16x1xf32>
    %146 = arith.addf %142, %145 : vector<16x1xf32>
    %147 = math.rsqrt %146 : vector<16x1xf32>
    %148 = vector.broadcast %147 : vector<16x1xf32> to vector<16x256xf32>
    %149 = arith.mulf %144, %148 : vector<16x256xf32>
    %150 = vector.broadcast %129 : vector<1x256xf32> to vector<16x256xf32>
    %151 = arith.mulf %149, %150 : vector<16x256xf32>
    %152 = vector.broadcast %131 : vector<1x256xf32> to vector<16x256xf32>
    %153 = arith.addf %151, %152 : vector<16x256xf32>
    %c0_56 = arith.constant 0 : index
    %c0_57 = arith.constant 0 : index
    %c0_58 = arith.constant 0 : index
    %154 = vector.load %arg10[%c0_56, %c0_57, %c0_58] : memref<2x256x512xbf16, #tpu.memory_space<vmem>>, vector<1x256x512xbf16>
    %155 = vector.shape_cast %154 : vector<1x256x512xbf16> to vector<256x512xbf16>
    %156 = arith.truncf %153 : vector<16x256xf32> to vector<16x256xbf16>
    %cst_59 = arith.constant dense<0.000000e+00> : vector<16x512xf32>
    %157 = tpu.matmul %156, %155, %cst_59 {dimension_numbers = #tpu.dot_dimension_numbers<[1], [0], [0], [1], [0, 0, 1, 1], [], []>} : vector<16x256xbf16>, vector<256x512xbf16>, vector<16x512xf32> -> vector<16x512xf32>
    %c0_60 = arith.constant 0 : index
    %c0_61 = arith.constant 0 : index
    %c0_62 = arith.constant 0 : index
    %158 = vector.load %arg11[%c0_60, %c0_61, %c0_62] : memref<2x1x512xf32, #tpu.memory_space<vmem>>, vector<1x1x512xf32>
    %159 = vector.shape_cast %158 : vector<1x1x512xf32> to vector<1x512xf32>
    %160 = vector.broadcast %159 : vector<1x512xf32> to vector<16x512xf32>
    %161 = arith.addf %157, %160 : vector<16x512xf32>
    %162 = arith.mulf %161, %161 : vector<16x512xf32>
    %163 = arith.mulf %161, %162 : vector<16x512xf32>
    %cst_63 = arith.constant 4.471500e-02 : f32
    %164 = vector.broadcast %cst_63 : f32 to vector<16x512xf32>
    %165 = arith.mulf %164, %163 : vector<16x512xf32>
    %166 = arith.addf %161, %165 : vector<16x512xf32>
    %cst_64 = arith.constant 0.797884583 : f32
    %167 = vector.broadcast %cst_64 : f32 to vector<16x512xf32>
    %168 = arith.mulf %167, %166 : vector<16x512xf32>
    %169 = math.tanh %168 : vector<16x512xf32>
    %cst_65 = arith.constant 1.000000e+00 : f32
    %170 = vector.broadcast %cst_65 : f32 to vector<16x512xf32>
    %171 = arith.addf %170, %169 : vector<16x512xf32>
    %cst_66 = arith.constant 5.000000e-01 : f32
    %172 = vector.broadcast %cst_66 : f32 to vector<16x512xf32>
    %173 = arith.mulf %172, %171 : vector<16x512xf32>
    %174 = arith.mulf %161, %173 : vector<16x512xf32>
    %c0_67 = arith.constant 0 : index
    %c0_68 = arith.constant 0 : index
    %c0_69 = arith.constant 0 : index
    %175 = vector.load %arg12[%c0_67, %c0_68, %c0_69] : memref<2x512x256xbf16, #tpu.memory_space<vmem>>, vector<1x512x256xbf16>
    %176 = vector.shape_cast %175 : vector<1x512x256xbf16> to vector<512x256xbf16>
    %177 = arith.truncf %174 : vector<16x512xf32> to vector<16x512xbf16>
    %cst_70 = arith.constant dense<0.000000e+00> : vector<16x256xf32>
    %178 = tpu.matmul %177, %176, %cst_70 {dimension_numbers = #tpu.dot_dimension_numbers<[1], [0], [0], [1], [0, 0, 1, 1], [], []>} : vector<16x512xbf16>, vector<512x256xbf16>, vector<16x256xf32> -> vector<16x256xf32>
    %c0_71 = arith.constant 0 : index
    %c0_72 = arith.constant 0 : index
    %c0_73 = arith.constant 0 : index
    %179 = vector.load %arg13[%c0_71, %c0_72, %c0_73] : memref<2x1x256xf32, #tpu.memory_space<vmem>>, vector<1x1x256xf32>
    %180 = vector.shape_cast %179 : vector<1x1x256xf32> to vector<1x256xf32>
    %181 = vector.broadcast %180 : vector<1x256xf32> to vector<16x256xf32>
    %182 = arith.addf %178, %181 : vector<16x256xf32>
    %183 = arith.addf %182, %153 : vector<16x256xf32>
    %c0_74 = arith.constant 0 : index
    %c0_75 = arith.constant 0 : index
    %c0_76 = arith.constant 0 : index
    %184 = vector.load %arg14[%c0_74, %c0_75, %c0_76] : memref<2x1x256xf32, #tpu.memory_space<vmem>>, vector<1x1x256xf32>
    %185 = vector.shape_cast %184 : vector<1x1x256xf32> to vector<1x256xf32>
    %c0_77 = arith.constant 0 : index
    %c0_78 = arith.constant 0 : index
    %c0_79 = arith.constant 0 : index
    %186 = vector.load %arg15[%c0_77, %c0_78, %c0_79] : memref<2x1x256xf32, #tpu.memory_space<vmem>>, vector<1x1x256xf32>
    %187 = vector.shape_cast %186 : vector<1x1x256xf32> to vector<1x256xf32>
    %cst_80 = arith.constant dense<0.000000e+00> : vector<16xf32>
    %188 = vector.multi_reduction <add>, %183, %cst_80 [1] : vector<16x256xf32> to vector<16xf32>
    %189 = vector.shape_cast %188 : vector<16xf32> to vector<16x1xf32>
    %cst_81 = arith.constant 2.560000e+02 : f32
    %190 = vector.broadcast %cst_81 : f32 to vector<16x1xf32>
    %191 = arith.divf %189, %190 : vector<16x1xf32>
    %192 = vector.broadcast %191 : vector<16x1xf32> to vector<16x256xf32>
    %193 = arith.subf %183, %192 : vector<16x256xf32>
    %194 = arith.mulf %193, %193 : vector<16x256xf32>
    %cst_82 = arith.constant dense<0.000000e+00> : vector<16xf32>
    %195 = vector.multi_reduction <add>, %194, %cst_82 [1] : vector<16x256xf32> to vector<16xf32>
    %196 = vector.shape_cast %195 : vector<16xf32> to vector<16x1xf32>
    %cst_83 = arith.constant 2.560000e+02 : f32
    %197 = vector.broadcast %cst_83 : f32 to vector<16x1xf32>
    %198 = arith.divf %196, %197 : vector<16x1xf32>
    %199 = vector.broadcast %191 : vector<16x1xf32> to vector<16x256xf32>
    %200 = arith.subf %183, %199 : vector<16x256xf32>
    %cst_84 = arith.constant 9.99999996E-13 : f32
    %201 = vector.broadcast %cst_84 : f32 to vector<16x1xf32>
    %202 = arith.addf %198, %201 : vector<16x1xf32>
    %203 = math.rsqrt %202 : vector<16x1xf32>
    %204 = vector.broadcast %203 : vector<16x1xf32> to vector<16x256xf32>
    %205 = arith.mulf %200, %204 : vector<16x256xf32>
    %206 = vector.broadcast %185 : vector<1x256xf32> to vector<16x256xf32>
    %207 = arith.mulf %205, %206 : vector<16x256xf32>
    %208 = vector.broadcast %187 : vector<1x256xf32> to vector<16x256xf32>
    %209 = arith.addf %207, %208 : vector<16x256xf32>
    %210 = vector.extract_strided_slice %209 {offsets = [0, 0], sizes = [1, 256], strides = [1, 1]} : vector<16x256xf32> to vector<1x256xf32>
    %211 = vector.extract_strided_slice %209 {offsets = [8, 0], sizes = [1, 256], strides = [1, 1]} : vector<16x256xf32> to vector<1x256xf32>
    %212 = tpu.concatenate %210, %211 in 0 : vector<1x256xf32>, vector<1x256xf32> -> vector<2x256xf32>
    %c1 = arith.constant 1 : index
    %c0_85 = arith.constant 0 : index
    %c0_86 = arith.constant 0 : index
    %213 = vector.load %arg4[%c1, %c0_85, %c0_86] : memref<2x256x768xbf16, #tpu.memory_space<vmem>>, vector<1x256x768xbf16>
    %214 = vector.shape_cast %213 : vector<1x256x768xbf16> to vector<256x768xbf16>
    %215 = arith.truncf %209 : vector<16x256xf32> to vector<16x256xbf16>
    %cst_87 = arith.constant dense<0.000000e+00> : vector<16x768xf32>
    %216 = tpu.matmul %215, %214, %cst_87 {dimension_numbers = #tpu.dot_dimension_numbers<[1], [0], [0], [1], [0, 0, 1, 1], [], []>} : vector<16x256xbf16>, vector<256x768xbf16>, vector<16x768xf32> -> vector<16x768xf32>
    %c1_88 = arith.constant 1 : index
    %c0_89 = arith.constant 0 : index
    %c0_90 = arith.constant 0 : index
    %217 = vector.load %arg5[%c1_88, %c0_89, %c0_90] : memref<2x1x768xf32, #tpu.memory_space<vmem>>, vector<1x1x768xf32>
    %218 = vector.shape_cast %217 : vector<1x1x768xf32> to vector<1x768xf32>
    %219 = vector.broadcast %218 : vector<1x768xf32> to vector<16x768xf32>
    %220 = arith.addf %216, %219 : vector<16x768xf32>
    %221 = vector.extract_strided_slice %220 {offsets = [0, 0], sizes = [16, 64], strides = [1, 1]} : vector<16x768xf32> to vector<16x64xf32>
    %cst_91 = arith.constant 1.250000e-01 : f32
    %222 = vector.broadcast %cst_91 : f32 to vector<16x64xf32>
    %223 = arith.mulf %221, %222 : vector<16x64xf32>
    %224 = arith.truncf %223 : vector<16x64xf32> to vector<16x64xbf16>
    %225 = vector.extract_strided_slice %220 {offsets = [0, 256], sizes = [16, 64], strides = [1, 1]} : vector<16x768xf32> to vector<16x64xf32>
    %226 = arith.truncf %225 : vector<16x64xf32> to vector<16x64xbf16>
    %227 = vector.extract_strided_slice %220 {offsets = [0, 512], sizes = [16, 64], strides = [1, 1]} : vector<16x768xf32> to vector<16x64xf32>
    %228 = arith.truncf %227 : vector<16x64xf32> to vector<16x64xbf16>
    %cst_92 = arith.constant dense<0.000000e+00> : vector<16x16xf32>
    %229 = tpu.matmul %224, %226, %cst_92 {dimension_numbers = #tpu.dot_dimension_numbers<[1], [1], [0], [0], [0, 0, 1, 0], [], []>} : vector<16x64xbf16>, vector<16x64xbf16>, vector<16x16xf32> -> vector<16x16xf32>
    %230 = arith.addf %229, %0 : vector<16x16xf32>
    %cst_93 = arith.constant dense<0xFF800000> : vector<16xf32>
    %231 = vector.multi_reduction <maximumf>, %230, %cst_93 [1] : vector<16x16xf32> to vector<16xf32>
    %232 = vector.shape_cast %231 : vector<16xf32> to vector<16x1xf32>
    %233 = vector.broadcast %232 : vector<16x1xf32> to vector<16x16xf32>
    %234 = arith.subf %230, %233 : vector<16x16xf32>
    %235 = math.exp %234 : vector<16x16xf32>
    %cst_94 = arith.constant dense<0.000000e+00> : vector<16xf32>
    %236 = vector.multi_reduction <add>, %235, %cst_94 [1] : vector<16x16xf32> to vector<16xf32>
    %237 = vector.shape_cast %236 : vector<16xf32> to vector<16x1xf32>
    %238 = vector.broadcast %237 : vector<16x1xf32> to vector<16x16xf32>
    %239 = arith.divf %235, %238 : vector<16x16xf32>
    %240 = arith.truncf %239 : vector<16x16xf32> to vector<16x16xbf16>
    %cst_95 = arith.constant dense<0.000000e+00> : vector<16x64xf32>
    %241 = tpu.matmul %240, %228, %cst_95 {dimension_numbers = #tpu.dot_dimension_numbers<[1], [0], [0], [1], [0, 0, 1, 1], [], []>} : vector<16x16xbf16>, vector<16x64xbf16>, vector<16x64xf32> -> vector<16x64xf32>
    %242 = vector.extract_strided_slice %220 {offsets = [0, 64], sizes = [16, 64], strides = [1, 1]} : vector<16x768xf32> to vector<16x64xf32>
    %cst_96 = arith.constant 1.250000e-01 : f32
    %243 = vector.broadcast %cst_96 : f32 to vector<16x64xf32>
    %244 = arith.mulf %242, %243 : vector<16x64xf32>
    %245 = arith.truncf %244 : vector<16x64xf32> to vector<16x64xbf16>
    %246 = vector.extract_strided_slice %220 {offsets = [0, 320], sizes = [16, 64], strides = [1, 1]} : vector<16x768xf32> to vector<16x64xf32>
    %247 = arith.truncf %246 : vector<16x64xf32> to vector<16x64xbf16>
    %248 = vector.extract_strided_slice %220 {offsets = [0, 576], sizes = [16, 64], strides = [1, 1]} : vector<16x768xf32> to vector<16x64xf32>
    %249 = arith.truncf %248 : vector<16x64xf32> to vector<16x64xbf16>
    %cst_97 = arith.constant dense<0.000000e+00> : vector<16x16xf32>
    %250 = tpu.matmul %245, %247, %cst_97 {dimension_numbers = #tpu.dot_dimension_numbers<[1], [1], [0], [0], [0, 0, 1, 0], [], []>} : vector<16x64xbf16>, vector<16x64xbf16>, vector<16x16xf32> -> vector<16x16xf32>
    %251 = arith.addf %250, %0 : vector<16x16xf32>
    %cst_98 = arith.constant dense<0xFF800000> : vector<16xf32>
    %252 = vector.multi_reduction <maximumf>, %251, %cst_98 [1] : vector<16x16xf32> to vector<16xf32>
    %253 = vector.shape_cast %252 : vector<16xf32> to vector<16x1xf32>
    %254 = vector.broadcast %253 : vector<16x1xf32> to vector<16x16xf32>
    %255 = arith.subf %251, %254 : vector<16x16xf32>
    %256 = math.exp %255 : vector<16x16xf32>
    %cst_99 = arith.constant dense<0.000000e+00> : vector<16xf32>
    %257 = vector.multi_reduction <add>, %256, %cst_99 [1] : vector<16x16xf32> to vector<16xf32>
    %258 = vector.shape_cast %257 : vector<16xf32> to vector<16x1xf32>
    %259 = vector.broadcast %258 : vector<16x1xf32> to vector<16x16xf32>
    %260 = arith.divf %256, %259 : vector<16x16xf32>
    %261 = arith.truncf %260 : vector<16x16xf32> to vector<16x16xbf16>
    %cst_100 = arith.constant dense<0.000000e+00> : vector<16x64xf32>
    %262 = tpu.matmul %261, %249, %cst_100 {dimension_numbers = #tpu.dot_dimension_numbers<[1], [0], [0], [1], [0, 0, 1, 1], [], []>} : vector<16x16xbf16>, vector<16x64xbf16>, vector<16x64xf32> -> vector<16x64xf32>
    %263 = vector.extract_strided_slice %220 {offsets = [0, 128], sizes = [16, 64], strides = [1, 1]} : vector<16x768xf32> to vector<16x64xf32>
    %cst_101 = arith.constant 1.250000e-01 : f32
    %264 = vector.broadcast %cst_101 : f32 to vector<16x64xf32>
    %265 = arith.mulf %263, %264 : vector<16x64xf32>
    %266 = arith.truncf %265 : vector<16x64xf32> to vector<16x64xbf16>
    %267 = vector.extract_strided_slice %220 {offsets = [0, 384], sizes = [16, 64], strides = [1, 1]} : vector<16x768xf32> to vector<16x64xf32>
    %268 = arith.truncf %267 : vector<16x64xf32> to vector<16x64xbf16>
    %269 = vector.extract_strided_slice %220 {offsets = [0, 640], sizes = [16, 64], strides = [1, 1]} : vector<16x768xf32> to vector<16x64xf32>
    %270 = arith.truncf %269 : vector<16x64xf32> to vector<16x64xbf16>
    %cst_102 = arith.constant dense<0.000000e+00> : vector<16x16xf32>
    %271 = tpu.matmul %266, %268, %cst_102 {dimension_numbers = #tpu.dot_dimension_numbers<[1], [1], [0], [0], [0, 0, 1, 0], [], []>} : vector<16x64xbf16>, vector<16x64xbf16>, vector<16x16xf32> -> vector<16x16xf32>
    %272 = arith.addf %271, %0 : vector<16x16xf32>
    %cst_103 = arith.constant dense<0xFF800000> : vector<16xf32>
    %273 = vector.multi_reduction <maximumf>, %272, %cst_103 [1] : vector<16x16xf32> to vector<16xf32>
    %274 = vector.shape_cast %273 : vector<16xf32> to vector<16x1xf32>
    %275 = vector.broadcast %274 : vector<16x1xf32> to vector<16x16xf32>
    %276 = arith.subf %272, %275 : vector<16x16xf32>
    %277 = math.exp %276 : vector<16x16xf32>
    %cst_104 = arith.constant dense<0.000000e+00> : vector<16xf32>
    %278 = vector.multi_reduction <add>, %277, %cst_104 [1] : vector<16x16xf32> to vector<16xf32>
    %279 = vector.shape_cast %278 : vector<16xf32> to vector<16x1xf32>
    %280 = vector.broadcast %279 : vector<16x1xf32> to vector<16x16xf32>
    %281 = arith.divf %277, %280 : vector<16x16xf32>
    %282 = arith.truncf %281 : vector<16x16xf32> to vector<16x16xbf16>
    %cst_105 = arith.constant dense<0.000000e+00> : vector<16x64xf32>
    %283 = tpu.matmul %282, %270, %cst_105 {dimension_numbers = #tpu.dot_dimension_numbers<[1], [0], [0], [1], [0, 0, 1, 1], [], []>} : vector<16x16xbf16>, vector<16x64xbf16>, vector<16x64xf32> -> vector<16x64xf32>
    %284 = vector.extract_strided_slice %220 {offsets = [0, 192], sizes = [16, 64], strides = [1, 1]} : vector<16x768xf32> to vector<16x64xf32>
    %cst_106 = arith.constant 1.250000e-01 : f32
    %285 = vector.broadcast %cst_106 : f32 to vector<16x64xf32>
    %286 = arith.mulf %284, %285 : vector<16x64xf32>
    %287 = arith.truncf %286 : vector<16x64xf32> to vector<16x64xbf16>
    %288 = vector.extract_strided_slice %220 {offsets = [0, 448], sizes = [16, 64], strides = [1, 1]} : vector<16x768xf32> to vector<16x64xf32>
    %289 = arith.truncf %288 : vector<16x64xf32> to vector<16x64xbf16>
    %290 = vector.extract_strided_slice %220 {offsets = [0, 704], sizes = [16, 64], strides = [1, 1]} : vector<16x768xf32> to vector<16x64xf32>
    %291 = arith.truncf %290 : vector<16x64xf32> to vector<16x64xbf16>
    %cst_107 = arith.constant dense<0.000000e+00> : vector<16x16xf32>
    %292 = tpu.matmul %287, %289, %cst_107 {dimension_numbers = #tpu.dot_dimension_numbers<[1], [1], [0], [0], [0, 0, 1, 0], [], []>} : vector<16x64xbf16>, vector<16x64xbf16>, vector<16x16xf32> -> vector<16x16xf32>
    %293 = arith.addf %292, %0 : vector<16x16xf32>
    %cst_108 = arith.constant dense<0xFF800000> : vector<16xf32>
    %294 = vector.multi_reduction <maximumf>, %293, %cst_108 [1] : vector<16x16xf32> to vector<16xf32>
    %295 = vector.shape_cast %294 : vector<16xf32> to vector<16x1xf32>
    %296 = vector.broadcast %295 : vector<16x1xf32> to vector<16x16xf32>
    %297 = arith.subf %293, %296 : vector<16x16xf32>
    %298 = math.exp %297 : vector<16x16xf32>
    %cst_109 = arith.constant dense<0.000000e+00> : vector<16xf32>
    %299 = vector.multi_reduction <add>, %298, %cst_109 [1] : vector<16x16xf32> to vector<16xf32>
    %300 = vector.shape_cast %299 : vector<16xf32> to vector<16x1xf32>
    %301 = vector.broadcast %300 : vector<16x1xf32> to vector<16x16xf32>
    %302 = arith.divf %298, %301 : vector<16x16xf32>
    %303 = arith.truncf %302 : vector<16x16xf32> to vector<16x16xbf16>
    %cst_110 = arith.constant dense<0.000000e+00> : vector<16x64xf32>
    %304 = tpu.matmul %303, %291, %cst_110 {dimension_numbers = #tpu.dot_dimension_numbers<[1], [0], [0], [1], [0, 0, 1, 1], [], []>} : vector<16x16xbf16>, vector<16x64xbf16>, vector<16x64xf32> -> vector<16x64xf32>
    %305 = tpu.concatenate %241, %262, %283, %304 in 1 : vector<16x64xf32>, vector<16x64xf32>, vector<16x64xf32>, vector<16x64xf32> -> vector<16x256xf32>
    %c1_111 = arith.constant 1 : index
    %c0_112 = arith.constant 0 : index
    %c0_113 = arith.constant 0 : index
    %306 = vector.load %arg6[%c1_111, %c0_112, %c0_113] : memref<2x256x256xbf16, #tpu.memory_space<vmem>>, vector<1x256x256xbf16>
    %307 = vector.shape_cast %306 : vector<1x256x256xbf16> to vector<256x256xbf16>
    %308 = arith.truncf %305 : vector<16x256xf32> to vector<16x256xbf16>
    %cst_114 = arith.constant dense<0.000000e+00> : vector<16x256xf32>
    %309 = tpu.matmul %308, %307, %cst_114 {dimension_numbers = #tpu.dot_dimension_numbers<[1], [0], [0], [1], [0, 0, 1, 1], [], []>} : vector<16x256xbf16>, vector<256x256xbf16>, vector<16x256xf32> -> vector<16x256xf32>
    %c1_115 = arith.constant 1 : index
    %c0_116 = arith.constant 0 : index
    %c0_117 = arith.constant 0 : index
    %310 = vector.load %arg7[%c1_115, %c0_116, %c0_117] : memref<2x1x256xf32, #tpu.memory_space<vmem>>, vector<1x1x256xf32>
    %311 = vector.shape_cast %310 : vector<1x1x256xf32> to vector<1x256xf32>
    %312 = vector.broadcast %311 : vector<1x256xf32> to vector<16x256xf32>
    %313 = arith.addf %309, %312 : vector<16x256xf32>
    %314 = arith.addf %313, %209 : vector<16x256xf32>
    %c1_118 = arith.constant 1 : index
    %c0_119 = arith.constant 0 : index
    %c0_120 = arith.constant 0 : index
    %315 = vector.load %arg8[%c1_118, %c0_119, %c0_120] : memref<2x1x256xf32, #tpu.memory_space<vmem>>, vector<1x1x256xf32>
    %316 = vector.shape_cast %315 : vector<1x1x256xf32> to vector<1x256xf32>
    %c1_121 = arith.constant 1 : index
    %c0_122 = arith.constant 0 : index
    %c0_123 = arith.constant 0 : index
    %317 = vector.load %arg9[%c1_121, %c0_122, %c0_123] : memref<2x1x256xf32, #tpu.memory_space<vmem>>, vector<1x1x256xf32>
    %318 = vector.shape_cast %317 : vector<1x1x256xf32> to vector<1x256xf32>
    %cst_124 = arith.constant dense<0.000000e+00> : vector<16xf32>
    %319 = vector.multi_reduction <add>, %314, %cst_124 [1] : vector<16x256xf32> to vector<16xf32>
    %320 = vector.shape_cast %319 : vector<16xf32> to vector<16x1xf32>
    %cst_125 = arith.constant 2.560000e+02 : f32
    %321 = vector.broadcast %cst_125 : f32 to vector<16x1xf32>
    %322 = arith.divf %320, %321 : vector<16x1xf32>
    %323 = vector.broadcast %322 : vector<16x1xf32> to vector<16x256xf32>
    %324 = arith.subf %314, %323 : vector<16x256xf32>
    %325 = arith.mulf %324, %324 : vector<16x256xf32>
    %cst_126 = arith.constant dense<0.000000e+00> : vector<16xf32>
    %326 = vector.multi_reduction <add>, %325, %cst_126 [1] : vector<16x256xf32> to vector<16xf32>
    %327 = vector.shape_cast %326 : vector<16xf32> to vector<16x1xf32>
    %cst_127 = arith.constant 2.560000e+02 : f32
    %328 = vector.broadcast %cst_127 : f32 to vector<16x1xf32>
    %329 = arith.divf %327, %328 : vector<16x1xf32>
    %330 = vector.broadcast %322 : vector<16x1xf32> to vector<16x256xf32>
    %331 = arith.subf %314, %330 : vector<16x256xf32>
    %cst_128 = arith.constant 9.99999996E-13 : f32
    %332 = vector.broadcast %cst_128 : f32 to vector<16x1xf32>
    %333 = arith.addf %329, %332 : vector<16x1xf32>
    %334 = math.rsqrt %333 : vector<16x1xf32>
    %335 = vector.broadcast %334 : vector<16x1xf32> to vector<16x256xf32>
    %336 = arith.mulf %331, %335 : vector<16x256xf32>
    %337 = vector.broadcast %316 : vector<1x256xf32> to vector<16x256xf32>
    %338 = arith.mulf %336, %337 : vector<16x256xf32>
    %339 = vector.broadcast %318 : vector<1x256xf32> to vector<16x256xf32>
    %340 = arith.addf %338, %339 : vector<16x256xf32>
    %c1_129 = arith.constant 1 : index
    %c0_130 = arith.constant 0 : index
    %c0_131 = arith.constant 0 : index
    %341 = vector.load %arg10[%c1_129, %c0_130, %c0_131] : memref<2x256x512xbf16, #tpu.memory_space<vmem>>, vector<1x256x512xbf16>
    %342 = vector.shape_cast %341 : vector<1x256x512xbf16> to vector<256x512xbf16>
    %343 = arith.truncf %340 : vector<16x256xf32> to vector<16x256xbf16>
    %cst_132 = arith.constant dense<0.000000e+00> : vector<16x512xf32>
    %344 = tpu.matmul %343, %342, %cst_132 {dimension_numbers = #tpu.dot_dimension_numbers<[1], [0], [0], [1], [0, 0, 1, 1], [], []>} : vector<16x256xbf16>, vector<256x512xbf16>, vector<16x512xf32> -> vector<16x512xf32>
    %c1_133 = arith.constant 1 : index
    %c0_134 = arith.constant 0 : index
    %c0_135 = arith.constant 0 : index
    %345 = vector.load %arg11[%c1_133, %c0_134, %c0_135] : memref<2x1x512xf32, #tpu.memory_space<vmem>>, vector<1x1x512xf32>
    %346 = vector.shape_cast %345 : vector<1x1x512xf32> to vector<1x512xf32>
    %347 = vector.broadcast %346 : vector<1x512xf32> to vector<16x512xf32>
    %348 = arith.addf %344, %347 : vector<16x512xf32>
    %349 = arith.mulf %348, %348 : vector<16x512xf32>
    %350 = arith.mulf %348, %349 : vector<16x512xf32>
    %cst_136 = arith.constant 4.471500e-02 : f32
    %351 = vector.broadcast %cst_136 : f32 to vector<16x512xf32>
    %352 = arith.mulf %351, %350 : vector<16x512xf32>
    %353 = arith.addf %348, %352 : vector<16x512xf32>
    %cst_137 = arith.constant 0.797884583 : f32
    %354 = vector.broadcast %cst_137 : f32 to vector<16x512xf32>
    %355 = arith.mulf %354, %353 : vector<16x512xf32>
    %356 = math.tanh %355 : vector<16x512xf32>
    %cst_138 = arith.constant 1.000000e+00 : f32
    %357 = vector.broadcast %cst_138 : f32 to vector<16x512xf32>
    %358 = arith.addf %357, %356 : vector<16x512xf32>
    %cst_139 = arith.constant 5.000000e-01 : f32
    %359 = vector.broadcast %cst_139 : f32 to vector<16x512xf32>
    %360 = arith.mulf %359, %358 : vector<16x512xf32>
    %361 = arith.mulf %348, %360 : vector<16x512xf32>
    %c1_140 = arith.constant 1 : index
    %c0_141 = arith.constant 0 : index
    %c0_142 = arith.constant 0 : index
    %362 = vector.load %arg12[%c1_140, %c0_141, %c0_142] : memref<2x512x256xbf16, #tpu.memory_space<vmem>>, vector<1x512x256xbf16>
    %363 = vector.shape_cast %362 : vector<1x512x256xbf16> to vector<512x256xbf16>
    %364 = arith.truncf %361 : vector<16x512xf32> to vector<16x512xbf16>
    %cst_143 = arith.constant dense<0.000000e+00> : vector<16x256xf32>
    %365 = tpu.matmul %364, %363, %cst_143 {dimension_numbers = #tpu.dot_dimension_numbers<[1], [0], [0], [1], [0, 0, 1, 1], [], []>} : vector<16x512xbf16>, vector<512x256xbf16>, vector<16x256xf32> -> vector<16x256xf32>
    %c1_144 = arith.constant 1 : index
    %c0_145 = arith.constant 0 : index
    %c0_146 = arith.constant 0 : index
    %366 = vector.load %arg13[%c1_144, %c0_145, %c0_146] : memref<2x1x256xf32, #tpu.memory_space<vmem>>, vector<1x1x256xf32>
    %367 = vector.shape_cast %366 : vector<1x1x256xf32> to vector<1x256xf32>
    %368 = vector.broadcast %367 : vector<1x256xf32> to vector<16x256xf32>
    %369 = arith.addf %365, %368 : vector<16x256xf32>
    %370 = arith.addf %369, %340 : vector<16x256xf32>
    %c1_147 = arith.constant 1 : index
    %c0_148 = arith.constant 0 : index
    %c0_149 = arith.constant 0 : index
    %371 = vector.load %arg14[%c1_147, %c0_148, %c0_149] : memref<2x1x256xf32, #tpu.memory_space<vmem>>, vector<1x1x256xf32>
    %372 = vector.shape_cast %371 : vector<1x1x256xf32> to vector<1x256xf32>
    %c1_150 = arith.constant 1 : index
    %c0_151 = arith.constant 0 : index
    %c0_152 = arith.constant 0 : index
    %373 = vector.load %arg15[%c1_150, %c0_151, %c0_152] : memref<2x1x256xf32, #tpu.memory_space<vmem>>, vector<1x1x256xf32>
    %374 = vector.shape_cast %373 : vector<1x1x256xf32> to vector<1x256xf32>
    %cst_153 = arith.constant dense<0.000000e+00> : vector<16xf32>
    %375 = vector.multi_reduction <add>, %370, %cst_153 [1] : vector<16x256xf32> to vector<16xf32>
    %376 = vector.shape_cast %375 : vector<16xf32> to vector<16x1xf32>
    %cst_154 = arith.constant 2.560000e+02 : f32
    %377 = vector.broadcast %cst_154 : f32 to vector<16x1xf32>
    %378 = arith.divf %376, %377 : vector<16x1xf32>
    %379 = vector.broadcast %378 : vector<16x1xf32> to vector<16x256xf32>
    %380 = arith.subf %370, %379 : vector<16x256xf32>
    %381 = arith.mulf %380, %380 : vector<16x256xf32>
    %cst_155 = arith.constant dense<0.000000e+00> : vector<16xf32>
    %382 = vector.multi_reduction <add>, %381, %cst_155 [1] : vector<16x256xf32> to vector<16xf32>
    %383 = vector.shape_cast %382 : vector<16xf32> to vector<16x1xf32>
    %cst_156 = arith.constant 2.560000e+02 : f32
    %384 = vector.broadcast %cst_156 : f32 to vector<16x1xf32>
    %385 = arith.divf %383, %384 : vector<16x1xf32>
    %386 = vector.broadcast %378 : vector<16x1xf32> to vector<16x256xf32>
    %387 = arith.subf %370, %386 : vector<16x256xf32>
    %cst_157 = arith.constant 9.99999996E-13 : f32
    %388 = vector.broadcast %cst_157 : f32 to vector<16x1xf32>
    %389 = arith.addf %385, %388 : vector<16x1xf32>
    %390 = math.rsqrt %389 : vector<16x1xf32>
    %391 = vector.broadcast %390 : vector<16x1xf32> to vector<16x256xf32>
    %392 = arith.mulf %387, %391 : vector<16x256xf32>
    %393 = vector.broadcast %372 : vector<1x256xf32> to vector<16x256xf32>
    %394 = arith.mulf %392, %393 : vector<16x256xf32>
    %395 = vector.broadcast %374 : vector<1x256xf32> to vector<16x256xf32>
    %396 = arith.addf %394, %395 : vector<16x256xf32>
    %397 = vector.extract_strided_slice %396 {offsets = [0, 0], sizes = [1, 256], strides = [1, 1]} : vector<16x256xf32> to vector<1x256xf32>
    %398 = vector.extract_strided_slice %396 {offsets = [8, 0], sizes = [1, 256], strides = [1, 1]} : vector<16x256xf32> to vector<1x256xf32>
    %399 = tpu.concatenate %397, %398 in 0 : vector<1x256xf32>, vector<1x256xf32> -> vector<2x256xf32>
    %400 = tpu.concatenate %399, %212 in 1 : vector<2x256xf32>, vector<2x256xf32> -> vector<2x512xf32>
    %c0_158 = arith.constant 0 : index
    %c0_159 = arith.constant 0 : index
    %c0_160 = arith.constant 0 : index
    %401 = vector.load %arg16[%c0_158, %c0_159, %c0_160] : memref<2x512x256xbf16, #tpu.memory_space<vmem>>, vector<1x512x256xbf16>
    %402 = vector.shape_cast %401 : vector<1x512x256xbf16> to vector<512x256xbf16>
    %c0_161 = arith.constant 0 : index
    %c0_162 = arith.constant 0 : index
    %c0_163 = arith.constant 0 : index
    %403 = vector.load %arg17[%c0_161, %c0_162, %c0_163] : memref<2x1x256xf32, #tpu.memory_space<vmem>>, vector<1x1x256xf32>
    %404 = vector.shape_cast %403 : vector<1x1x256xf32> to vector<1x256xf32>
    %405 = arith.truncf %400 : vector<2x512xf32> to vector<2x512xbf16>
    %cst_164 = arith.constant dense<0.000000e+00> : vector<2x256xf32>
    %406 = tpu.matmul %405, %402, %cst_164 {dimension_numbers = #tpu.dot_dimension_numbers<[1], [0], [0], [1], [0, 0, 1, 1], [], []>} : vector<2x512xbf16>, vector<512x256xbf16>, vector<2x256xf32> -> vector<2x256xf32>
    %407 = vector.broadcast %404 : vector<1x256xf32> to vector<2x256xf32>
    %408 = arith.addf %406, %407 : vector<2x256xf32>
    %409 = vector.extract_strided_slice %408 {offsets = [0, 0], sizes = [2, 64], strides = [1, 1]} : vector<2x256xf32> to vector<2x64xf32>
    %410 = arith.negf %409 : vector<2x64xf32>
    %411 = math.exp %410 : vector<2x64xf32>
    %cst_165 = arith.constant 1.000000e+00 : f32
    %412 = vector.broadcast %cst_165 : f32 to vector<2x64xf32>
    %413 = arith.addf %412, %411 : vector<2x64xf32>
    %414 = arith.divf %412, %413 : vector<2x64xf32>
    %415 = vector.extract_strided_slice %408 {offsets = [0, 128], sizes = [2, 64], strides = [1, 1]} : vector<2x256xf32> to vector<2x64xf32>
    %416 = math.tanh %415 : vector<2x64xf32>
    %417 = vector.extract_strided_slice %408 {offsets = [0, 192], sizes = [2, 64], strides = [1, 1]} : vector<2x256xf32> to vector<2x64xf32>
    %418 = arith.negf %417 : vector<2x64xf32>
    %419 = math.exp %418 : vector<2x64xf32>
    %cst_166 = arith.constant 1.000000e+00 : f32
    %420 = vector.broadcast %cst_166 : f32 to vector<2x64xf32>
    %421 = arith.addf %420, %419 : vector<2x64xf32>
    %422 = arith.divf %420, %421 : vector<2x64xf32>
    %423 = arith.mulf %414, %416 : vector<2x64xf32>
    %424 = math.tanh %423 : vector<2x64xf32>
    %425 = arith.mulf %422, %424 : vector<2x64xf32>
    %c1_167 = arith.constant 1 : index
    %c0_168 = arith.constant 0 : index
    %c0_169 = arith.constant 0 : index
    %426 = vector.load %arg16[%c1_167, %c0_168, %c0_169] : memref<2x512x256xbf16, #tpu.memory_space<vmem>>, vector<1x512x256xbf16>
    %427 = vector.shape_cast %426 : vector<1x512x256xbf16> to vector<512x256xbf16>
    %c1_170 = arith.constant 1 : index
    %c0_171 = arith.constant 0 : index
    %c0_172 = arith.constant 0 : index
    %428 = vector.load %arg17[%c1_170, %c0_171, %c0_172] : memref<2x1x256xf32, #tpu.memory_space<vmem>>, vector<1x1x256xf32>
    %429 = vector.shape_cast %428 : vector<1x1x256xf32> to vector<1x256xf32>
    %430 = arith.truncf %400 : vector<2x512xf32> to vector<2x512xbf16>
    %cst_173 = arith.constant dense<0.000000e+00> : vector<2x256xf32>
    %431 = tpu.matmul %430, %427, %cst_173 {dimension_numbers = #tpu.dot_dimension_numbers<[1], [0], [0], [1], [0, 0, 1, 1], [], []>} : vector<2x512xbf16>, vector<512x256xbf16>, vector<2x256xf32> -> vector<2x256xf32>
    %432 = vector.broadcast %429 : vector<1x256xf32> to vector<2x256xf32>
    %433 = arith.addf %431, %432 : vector<2x256xf32>
    %434 = vector.extract_strided_slice %433 {offsets = [0, 0], sizes = [2, 64], strides = [1, 1]} : vector<2x256xf32> to vector<2x64xf32>
    %435 = arith.negf %434 : vector<2x64xf32>
    %436 = math.exp %435 : vector<2x64xf32>
    %cst_174 = arith.constant 1.000000e+00 : f32
    %437 = vector.broadcast %cst_174 : f32 to vector<2x64xf32>
    %438 = arith.addf %437, %436 : vector<2x64xf32>
    %439 = arith.divf %437, %438 : vector<2x64xf32>
    %440 = vector.extract_strided_slice %433 {offsets = [0, 128], sizes = [2, 64], strides = [1, 1]} : vector<2x256xf32> to vector<2x64xf32>
    %441 = math.tanh %440 : vector<2x64xf32>
    %442 = vector.extract_strided_slice %433 {offsets = [0, 192], sizes = [2, 64], strides = [1, 1]} : vector<2x256xf32> to vector<2x64xf32>
    %443 = arith.negf %442 : vector<2x64xf32>
    %444 = math.exp %443 : vector<2x64xf32>
    %cst_175 = arith.constant 1.000000e+00 : f32
    %445 = vector.broadcast %cst_175 : f32 to vector<2x64xf32>
    %446 = arith.addf %445, %444 : vector<2x64xf32>
    %447 = arith.divf %445, %446 : vector<2x64xf32>
    %448 = arith.mulf %439, %441 : vector<2x64xf32>
    %449 = math.tanh %448 : vector<2x64xf32>
    %450 = arith.mulf %447, %449 : vector<2x64xf32>
    %451 = tpu.concatenate %425, %450 in 1 : vector<2x64xf32>, vector<2x64xf32> -> vector<2x128xf32>
    %c0_176 = arith.constant 0 : index
    %c0_177 = arith.constant 0 : index
    %452 = vector.load %arg18[%c0_176, %c0_177] : memref<128x64xbf16, #tpu.memory_space<vmem>>, vector<128x64xbf16>
    %453 = arith.truncf %451 : vector<2x128xf32> to vector<2x128xbf16>
    %cst_178 = arith.constant dense<0.000000e+00> : vector<2x64xf32>
    %454 = tpu.matmul %453, %452, %cst_178 {dimension_numbers = #tpu.dot_dimension_numbers<[1], [0], [0], [1], [0, 0, 1, 1], [], []>} : vector<2x128xbf16>, vector<128x64xbf16>, vector<2x64xf32> -> vector<2x64xf32>
    %c0_179 = arith.constant 0 : index
    %c0_180 = arith.constant 0 : index
    %455 = vector.load %arg19[%c0_179, %c0_180] : memref<1x64xf32, #tpu.memory_space<vmem>>, vector<1x64xf32>
    %456 = vector.broadcast %455 : vector<1x64xf32> to vector<2x64xf32>
    %457 = arith.addf %454, %456 : vector<2x64xf32>
    %cst_181 = arith.constant 0.000000e+00 : f32
    %458 = vector.broadcast %cst_181 : f32 to vector<2x64xf32>
    %459 = arith.maximumf %457, %458 : vector<2x64xf32>
    %c0_182 = arith.constant 0 : index
    %c0_183 = arith.constant 0 : index
    %460 = vector.load %arg20[%c0_182, %c0_183] : memref<64x14xbf16, #tpu.memory_space<vmem>>, vector<64x14xbf16>
    %461 = arith.truncf %459 : vector<2x64xf32> to vector<2x64xbf16>
    %cst_184 = arith.constant dense<0.000000e+00> : vector<2x14xf32>
    %462 = tpu.matmul %461, %460, %cst_184 {dimension_numbers = #tpu.dot_dimension_numbers<[1], [0], [0], [1], [0, 0, 1, 1], [], []>} : vector<2x64xbf16>, vector<64x14xbf16>, vector<2x14xf32> -> vector<2x14xf32>
    %c0_185 = arith.constant 0 : index
    %c0_186 = arith.constant 0 : index
    %463 = vector.load %arg21[%c0_185, %c0_186] : memref<1x14xf32, #tpu.memory_space<vmem>>, vector<1x14xf32>
    %464 = vector.broadcast %463 : vector<1x14xf32> to vector<2x14xf32>
    %465 = arith.addf %462, %464 : vector<2x14xf32>
    %c0_187 = arith.constant 0 : index
    %c0_188 = arith.constant 0 : index
    %466 = vector.load %arg22[%c0_187, %c0_188] : memref<2x14xf32, #tpu.memory_space<vmem>>, vector<2x14xf32>
    tpu.vector_store %arg22[%c0_187, %c0_188], %465 {strides = array<i32>} : memref<2x14xf32, #tpu.memory_space<vmem>>, vector<2x14xf32>,
    return
  }
}

</mosaic_0001>

<llo_original>
// kernel: bert_class_forward.1
$region0: #{bert_class_forward.1}
  #allocation0 [shape = 'u32[]', space=smem, size = 0x4, offset = 0x4, fixed_abs, tag = 'smem constant byte address 0x4 - core index']
  #allocation1 [shape = 'u32[144,128]{1,0:T(1,128)}', space=vmem, size = 0x12000, scoped, tag = 'internal scratch']
  %s0 = inlined_call_operand.vmem [shape: f32[16,256], index: 0, kind: input, shape index: {}]
  %s1 = inlined_call_operand.vmem [shape: f32[16,16], index: 1, kind: input, shape index: {}]
  %s2 = inlined_call_operand.vmem [shape: f32[1,256], index: 2, kind: input, shape index: {}]
  %s3 = inlined_call_operand.vmem [shape: f32[1,256], index: 3, kind: input, shape index: {}]
  %s4 = inlined_call_operand.hbm [shape: bf16[2,256,768], index: 4, kind: input, shape index: {}]
  %s5 = inlined_call_operand.vmem [shape: f32[2,1,768], index: 5, kind: input, shape index: {}]
  %s6 = inlined_call_operand.vmem [shape: bf16[2,256,256], index: 6, kind: input, shape index: {}]
  %s7 = inlined_call_operand.vmem [shape: f32[2,1,256], index: 7, kind: input, shape index: {}]
  %s8 = inlined_call_operand.vmem [shape: f32[2,1,256], index: 8, kind: input, shape index: {}]
  %s9 = inlined_call_operand.vmem [shape: f32[2,1,256], index: 9, kind: input, shape index: {}]
  %s10 = inlined_call_operand.hbm [shape: bf16[2,256,512], index: 10, kind: input, shape index: {}]
  %s11 = inlined_call_operand.vmem [shape: f32[2,1,512], index: 11, kind: input, shape index: {}]
  %s12 = inlined_call_operand.hbm [shape: bf16[2,512,256], index: 12, kind: input, shape index: {}]
  %s13 = inlined_call_operand.vmem [shape: f32[2,1,256], index: 13, kind: input, shape index: {}]
  %s14 = inlined_call_operand.vmem [shape: f32[2,1,256], index: 14, kind: input, shape index: {}]
  %s15 = inlined_call_operand.vmem [shape: f32[2,1,256], index: 15, kind: input, shape index: {}]
  %s16 = inlined_call_operand.hbm [shape: bf16[2,512,256], index: 16, kind: input, shape index: {}]
  %s17 = inlined_call_operand.vmem [shape: f32[2,1,256], index: 17, kind: input, shape index: {}]
  %s18 = inlined_call_operand.vmem [shape: bf16[128,64], index: 18, kind: input, shape index: {}]
  %s19 = inlined_call_operand.vmem [shape: f32[1,64], index: 19, kind: input, shape index: {}]
  %s20 = inlined_call_operand.vmem [shape: bf16[64,14], index: 20, kind: input, shape index: {}]
  %s21 = inlined_call_operand.vmem [shape: f32[1,14], index: 21, kind: input, shape index: {}]
  %s22 = inlined_call_operand.hbm [shape: f32[2,14], index: 22, kind: output, shape index: {}]
  %s23 = sld [smem:[#allocation0]]
  $region114: #{bert_class_forward.1} parent=0
    _
  %s25 = ssub.s32 1, %s23
  %s26 = scalar_select 0, %s25, %s23
  $region1: #{bert_class_forward.1} parent=0
    #allocation2 [shape = 'u8[786432]{0}', space=vmem, size = 0xc0000, scoped, tag = 'input window, operand 4, single buffered']
    #allocation3 [shape = 's32[1]{0}', space=sflag, size = 0x4, scoped, tag = 'scoped memory for bert_class_forward.1']
    #allocation4 [shape = 's32[1]{0}', space=sflag, size = 0x4, scoped, tag = 'scoped memory for bert_class_forward.1']
    #allocation5 [shape = 'u8[524288]{0}', space=vmem, size = 0x80000, scoped, tag = 'input window, operand 10, single buffered']
    #allocation6 [shape = 's32[1]{0}', space=sflag, size = 0x4, scoped, tag = 'scoped memory for bert_class_forward.1']
    #allocation7 [shape = 'u8[524288]{0}', space=vmem, size = 0x80000, scoped, tag = 'input window, operand 12, single buffered']
    #allocation8 [shape = 'u8[524288]{0}', space=vmem, size = 0x80000, scoped, tag = 'input window, operand 16, single buffered']
    #allocation9 [shape = 's32[1]{0}', space=sflag, size = 0x4, scoped, tag = 'scoped memory for bert_class_forward.1']
    #allocation10 [shape = 'u8[1024]{0}', space=vmem, size = 0x400, scoped, tag = 'output window, operand 0, single buffered']
    %27 = vsyncpa [#allocation3], 0
    %28 = vsyncpa [#allocation6], 0
    %29 = vsyncpa [#allocation9], 0
    %30 = vsyncpa [#allocation4], 0
    // Predicated region
    $region2: #{bert_class_forward.1} parent=1 // pred_check
      _
    $region3: #{bert_class_forward.1} parent=1 // pred_check_branch
      %32 = sbr.rel (0) target = $region5
    $region4: #{bert_class_forward.1} parent=1 // pred_region
      _
    $region5: #{bert_class_forward.1} parent=1 // pred_fallthru
      _
    // Predicated region
    $region6: #{bert_class_forward.1} parent=1 // pred_check
      _
    $region7: #{bert_class_forward.1} parent=1 // pred_check_branch
      %34 = sbr.rel (0) target = $region9
    $region8: #{bert_class_forward.1} parent=1 // pred_region
      _
    $region9: #{bert_class_forward.1} parent=1 // pred_fallthru
      _
    // Predicated region
    $region10: #{bert_class_forward.1} parent=1 // pred_check
      _
    $region11: #{bert_class_forward.1} parent=1 // pred_check_branch
      %36 = sbr.rel (0) target = $region13
    $region12: #{bert_class_forward.1} parent=1 // pred_region
      _
    $region13: #{bert_class_forward.1} parent=1 // pred_fallthru
      _
    // Predicated region
    $region14: #{bert_class_forward.1} parent=1 // pred_check
      _
    $region15: #{bert_class_forward.1} parent=1 // pred_check_branch
      %38 = sbr.rel (0) target = $region17
    $region16: #{bert_class_forward.1} parent=1 // pred_region
      _
    $region17: #{bert_class_forward.1} parent=1 // pred_fallthru
      _
    // Predicated region
    $region18: #{bert_class_forward.1} parent=1 // pred_check
      _
    $region19: #{bert_class_forward.1} parent=1 // pred_check_branch
      %40 = sbr.rel (0) target = $region21
    $region20: #{bert_class_forward.1} parent=1 // pred_region
      %s42 = ssub.s32 24576, 24576
      %43 = vsyncadd [#allocation3], %s42
      %s44 = sshll.u32 [#allocation2], 4
      %s45 = int_to_ptr.vmem [resolvable:$true] %s44
      %50 = dma.hbm_to_vmem [thread:$0]  %s4, 24576, %s45, [#allocation3], 384, 384, 24
    $region21: #{bert_class_forward.1} parent=1 // pred_fallthru
      _
    // Predicated region
    $region22: #{bert_class_forward.1} parent=1 // pred_check
      _
    $region23: #{bert_class_forward.1} parent=1 // pred_check_branch
      %52 = sbr.rel (0) target = $region25
    $region24: #{bert_class_forward.1} parent=1 // pred_region
      _
    $region25: #{bert_class_forward.1} parent=1 // pred_fallthru
      _
    // Predicated region
    $region26: #{bert_class_forward.1} parent=1 // pred_check
      _
    $region27: #{bert_class_forward.1} parent=1 // pred_check_branch
      %54 = sbr.rel (0) target = $region29
    $region28: #{bert_class_forward.1} parent=1 // pred_region
      _
    $region29: #{bert_class_forward.1} parent=1 // pred_fallthru
      _
    // Predicated region
    $region30: #{bert_class_forward.1} parent=1 // pred_check
      _
    $region31: #{bert_class_forward.1} parent=1 // pred_check_branch
      %56 = sbr.rel (0) target = $region33
    $region32: #{bert_class_forward.1} parent=1 // pred_region
      _
    $region33: #{bert_class_forward.1} parent=1 // pred_fallthru
      _
    // Predicated region
    $region34: #{bert_class_forward.1} parent=1 // pred_check
      _
    $region35: #{bert_class_forward.1} parent=1 // pred_check_branch
      %58 = sbr.rel (0) target = $region37
    $region36: #{bert_class_forward.1} parent=1 // pred_region
      _
    $region37: #{bert_class_forward.1} parent=1 // pred_fallthru
      _
    // Predicated region
    $region38: #{bert_class_forward.1} parent=1 // pred_check
      _
    $region39: #{bert_class_forward.1} parent=1 // pred_check_branch
      %60 = sbr.rel (0) target = $region41
    $region40: #{bert_class_forward.1} parent=1 // pred_region
      _
    $region41: #{bert_class_forward.1} parent=1 // pred_fallthru
      _
    // Predicated region
    $region42: #{bert_class_forward.1} parent=1 // pred_check
      _
    $region43: #{bert_class_forward.1} parent=1 // pred_check_branch
      %62 = sbr.rel (0) target = $region45
    $region44: #{bert_class_forward.1} parent=1 // pred_region
      %s64 = ssub.s32 16384, 16384
      %65 = vsyncadd [#allocation6], %s64
      %s66 = sshll.u32 [#allocation5], 4
      %s67 = int_to_ptr.vmem [resolvable:$true] %s66
      %72 = dma.hbm_to_vmem [thread:$0]  %s10, 16384, %s67, [#allocation6], 256, 256, 16
    $region45: #{bert_class_forward.1} parent=1 // pred_fallthru
      _
    // Predicated region
    $region46: #{bert_class_forward.1} parent=1 // pred_check
      _
    $region47: #{bert_class_forward.1} parent=1 // pred_check_branch
      %74 = sbr.rel (0) target = $region49
    $region48: #{bert_class_forward.1} parent=1 // pred_region
      _
    $region49: #{bert_class_forward.1} parent=1 // pred_fallthru
      _
    // Predicated region
    $region50: #{bert_class_forward.1} parent=1 // pred_check
      _
    $region51: #{bert_class_forward.1} parent=1 // pred_check_branch
      %76 = sbr.rel (0) target = $region53
    $region52: #{bert_class_forward.1} parent=1 // pred_region
      %s78 = ssub.s32 16384, 16384
      %79 = vsyncadd [#allocation6], %s78
      %s80 = sshll.u32 [#allocation7], 4
      %s81 = int_to_ptr.vmem [resolvable:$true] %s80
      %86 = dma.hbm_to_vmem [thread:$0]  %s12, 16384, %s81, [#allocation6], 128, 128, 8
    $region53: #{bert_class_forward.1} parent=1 // pred_fallthru
      _
    // Predicated region
    $region54: #{bert_class_forward.1} parent=1 // pred_check
      _
    $region55: #{bert_class_forward.1} parent=1 // pred_check_branch
      %88 = sbr.rel (0) target = $region57
    $region56: #{bert_class_forward.1} parent=1 // pred_region
      _
    $region57: #{bert_class_forward.1} parent=1 // pred_fallthru
      _
    // Predicated region
    $region58: #{bert_class_forward.1} parent=1 // pred_check
      _
    $region59: #{bert_class_forward.1} parent=1 // pred_check_branch
      %90 = sbr.rel (0) target = $region61
    $region60: #{bert_class_forward.1} parent=1 // pred_region
      _
    $region61: #{bert_class_forward.1} parent=1 // pred_fallthru
      _
    // Predicated region
    $region62: #{bert_class_forward.1} parent=1 // pred_check
      _
    $region63: #{bert_class_forward.1} parent=1 // pred_check_branch
      %92 = sbr.rel (0) target = $region65
    $region64: #{bert_class_forward.1} parent=1 // pred_region
      _
    $region65: #{bert_class_forward.1} parent=1 // pred_fallthru
      _
    // Predicated region
    $region66: #{bert_class_forward.1} parent=1 // pred_check
      _
    $region67: #{bert_class_forward.1} parent=1 // pred_check_branch
      %94 = sbr.rel (0) target = $region69
    $region68: #{bert_class_forward.1} parent=1 // pred_region
      %s96 = ssub.s32 16384, 16384
      %97 = vsyncadd [#allocation9], %s96
      %s98 = sshll.u32 [#allocation8], 4
      %s99 = int_to_ptr.vmem [resolvable:$true] %s98
      %104 = dma.hbm_to_vmem [thread:$0]  %s16, 16384, %s99, [#allocation9], 128, 128, 8
    $region69: #{bert_class_forward.1} parent=1 // pred_fallthru
      _
    // Predicated region
    $region70: #{bert_class_forward.1} parent=1 // pred_check
      _
    $region71: #{bert_class_forward.1} parent=1 // pred_check_branch
      %106 = sbr.rel (0) target = $region73
    $region72: #{bert_class_forward.1} parent=1 // pred_region
      _
    $region73: #{bert_class_forward.1} parent=1 // pred_fallthru
      _
    // Predicated region
    $region74: #{bert_class_forward.1} parent=1 // pred_check
      _
    $region75: #{bert_class_forward.1} parent=1 // pred_check_branch
      %108 = sbr.rel (0) target = $region77
    $region76: #{bert_class_forward.1} parent=1 // pred_region
      _
    $region77: #{bert_class_forward.1} parent=1 // pred_fallthru
      _
    // Predicated region
    $region78: #{bert_class_forward.1} parent=1 // pred_check
      _
    $region79: #{bert_class_forward.1} parent=1 // pred_check_branch
      %110 = sbr.rel (0) target = $region81
    $region80: #{bert_class_forward.1} parent=1 // pred_region
      _
    $region81: #{bert_class_forward.1} parent=1 // pred_fallthru
      _
    // Predicated region
    $region82: #{bert_class_forward.1} parent=1 // pred_check
      _
    $region83: #{bert_class_forward.1} parent=1 // pred_check_branch
      %112 = sbr.rel (0) target = $region85
    $region84: #{bert_class_forward.1} parent=1 // pred_region
      _
    $region85: #{bert_class_forward.1} parent=1 // pred_fallthru
      _
    // Predicated region
    $region86: #{bert_class_forward.1} parent=1 // pred_check
      _
    $region87: #{bert_class_forward.1} parent=1 // pred_check_branch
      %114 = sbr.rel (0) target = $region89
    $region88: #{bert_class_forward.1} parent=1 // pred_region
      _
    $region89: #{bert_class_forward.1} parent=1 // pred_fallthru
      _
    // Predicated region
    $region90: #{bert_class_forward.1} parent=1 // pred_check
      _
    $region91: #{bert_class_forward.1} parent=1 // pred_check_branch
      %116 = sbr.rel (0) target = $region93
    $region92: #{bert_class_forward.1} parent=1 // pred_region
      %117 = dma.done [#allocation3], 24576
    $region93: #{bert_class_forward.1} parent=1 // pred_fallthru
      _
    // Predicated region
    $region94: #{bert_class_forward.1} parent=1 // pred_check
      _
    $region95: #{bert_class_forward.1} parent=1 // pred_check_branch
      %119 = sbr.rel (0) target = $region97
    $region96: #{bert_class_forward.1} parent=1 // pred_region
      %120 = dma.done [#allocation6], 16384
    $region97: #{bert_class_forward.1} parent=1 // pred_fallthru
      _
    // Predicated region
    $region98: #{bert_class_forward.1} parent=1 // pred_check
      _
    $region99: #{bert_class_forward.1} parent=1 // pred_check_branch
      %122 = sbr.rel (0) target = $region101
    $region100: #{bert_class_forward.1} parent=1 // pred_region
      %123 = dma.done [#allocation6], 16384
    $region101: #{bert_class_forward.1} parent=1 // pred_fallthru
      _
    // Predicated region
    $region102: #{bert_class_forward.1} parent=1 // pred_check
      _
    $region103: #{bert_class_forward.1} parent=1 // pred_check_branch
      %125 = sbr.rel (0) target = $region105
    $region104: #{bert_class_forward.1} parent=1 // pred_region
      %126 = dma.done [#allocation9], 16384
    $region105: #{bert_class_forward.1} parent=1 // pred_fallthru
      _
    %v128 = vld [vmem:[%s1] sm:$0xff]
    %v129 = vld [vmem:[%s1 + $0x8] sm:$0xff]
    %v130 = vld [vmem:[%s0] sm:$0xff]
    %v131 = vld [vmem:[%s0 + $0x8] sm:$0xff]
    %v132 = vld [vmem:[%s0 + $0x10] sm:$0xff]
    %v133 = vld [vmem:[%s0 + $0x18] sm:$0xff]
    %v134 = vld [vmem:[%s2] sm:$0x3]
    %v135 = vld [vmem:[%s3] sm:$0x3]
    %v136 = vadd.f32 %v130, %v131
    %137 = vadd.xlane.f32.xlu0 %v136
    %v138 = vpop.xlane.xlu0 %137
    %v139 = vadd.f32 %v132, %v133
    %140 = vadd.xlane.f32.xlu0 %v139
    %v141 = vpop.xlane.xlu0 %140
    %v142 = vrcp.pop 256.0
    %v143 = vmul.f32 %v138, %v142
    %v144 = vmul.f32 %v141, %v142
    %v145 = vsub.f32 %v130, %v143
    %v146 = vsub.f32 %v131, %v143
    %v147 = vsub.f32 %v132, %v144
    %v148 = vsub.f32 %v133, %v144
    %v149 = vmul.f32 %v145, %v145
    %v150 = vmul.f32 %v146, %v146
    %v151 = vmul.f32 %v147, %v147
    %v152 = vmul.f32 %v148, %v148
    %v153 = vadd.f32 %v149, %v150
    %154 = vadd.xlane.f32.xlu0 %v153
    %v155 = vpop.xlane.xlu0 %154
    %v156 = vadd.f32 %v151, %v152
    %157 = vadd.xlane.f32.xlu0 %v156
    %v158 = vpop.xlane.xlu0 %157
    %v159 = vmul.f32 %v155, %v142
    %v160 = vmul.f32 %v158, %v142
    %v161 = vadd.f32 %v159, 1e-12
    %v162 = vadd.f32 %v160, 1e-12
    %v163 = vrsqrt.pop %v161
    %v164 = vrsqrt.pop %v162
    %v165 = vmul.f32 %v145, %v163
    %v166 = vmul.f32 %v146, %v163
    %v167 = vmul.f32 %v147, %v164
    %v168 = vmul.f32 %v148, %v164
    %v170 = vlaneseq
    %v171 = vshrl.u32 %v170, 7
    %v172 = vsub.s32 0, %v171
    %v173 = vrot.slane %v134, %v172
    %v174 = vlaneseq
    %v175 = vshrl.u32 %v174, 7
    %v176 = vsub.s32 1, %v175
    %v177 = vrot.slane %v134, %v176
    %v180 = vmul.f32 %v165, %v173
    %v181 = vmul.f32 %v166, %v177
    %v182 = vmul.f32 %v167, %v173
    %v183 = vmul.f32 %v168, %v177
    %v185 = vlaneseq
    %v186 = vshrl.u32 %v185, 7
    %v187 = vsub.s32 0, %v186
    %v188 = vrot.slane %v135, %v187
    %v189 = vlaneseq
    %v190 = vshrl.u32 %v189, 7
    %v191 = vsub.s32 1, %v190
    %v192 = vrot.slane %v135, %v191
    %v195 = vadd.f32 %v180, %v188
    %v196 = vadd.f32 %v181, %v192
    %v197 = vadd.f32 %v182, %v188
    %v198 = vadd.f32 %v183, %v192
    %v199 = vld [vmem:[#allocation2] sm:$0xff]
    %v200 = vld [vmem:[#allocation2 + $0x8] sm:$0xff]
    %v201 = vld [vmem:[#allocation2 + $0x10] sm:$0xff]
    %v202 = vld [vmem:[#allocation2 + $0x18] sm:$0xff]
    %v203 = vld [vmem:[#allocation2 + $0x20] sm:$0xff]
    %v204 = vld [vmem:[#allocation2 + $0x28] sm:$0xff]
    %v205 = vld [vmem:[#allocation2 + $0x30] sm:$0xff]
    %v206 = vld [vmem:[#allocation2 + $0x38] sm:$0xff]
    %v207 = vld [vmem:[#allocation2 + $0x40] sm:$0xff]
    %v208 = vld [vmem:[#allocation2 + $0x48] sm:$0xff]
    %v209 = vld [vmem:[#allocation2 + $0x50] sm:$0xff]
    %v210 = vld [vmem:[#allocation2 + $0x58] sm:$0xff]
    %v211 = vld [vmem:[#allocation2 + $0x60] sm:$0xff]
    %v212 = vld [vmem:[#allocation2 + $0x68] sm:$0xff]
    %v213 = vld [vmem:[#allocation2 + $0x70] sm:$0xff]
    %v214 = vld [vmem:[#allocation2 + $0x78] sm:$0xff]
    %v215 = vld [vmem:[#allocation2 + $0x80] sm:$0xff]
    %v216 = vld [vmem:[#allocation2 + $0x88] sm:$0xff]
    %v217 = vld [vmem:[#allocation2 + $0x90] sm:$0xff]
    %v218 = vld [vmem:[#allocation2 + $0x98] sm:$0xff]
    %v219 = vld [vmem:[#allocation2 + $0xa0] sm:$0xff]
    %v220 = vld [vmem:[#allocation2 + $0xa8] sm:$0xff]
    %v221 = vld [vmem:[#allocation2 + $0xb0] sm:$0xff]
    %v222 = vld [vmem:[#allocation2 + $0xb8] sm:$0xff]
    %v223 = vld [vmem:[#allocation2 + $0xc0] sm:$0xff]
    %v224 = vld [vmem:[#allocation2 + $0xc8] sm:$0xff]
    %v225 = vld [vmem:[#allocation2 + $0xd0] sm:$0xff]
    %v226 = vld [vmem:[#allocation2 + $0xd8] sm:$0xff]
    %v227 = vld [vmem:[#allocation2 + $0xe0] sm:$0xff]
    %v228 = vld [vmem:[#allocation2 + $0xe8] sm:$0xff]
    %v229 = vld [vmem:[#allocation2 + $0xf0] sm:$0xff]
    %v230 = vld [vmem:[#allocation2 + $0xf8] sm:$0xff]
    %v231 = vld [vmem:[#allocation2 + $0x100] sm:$0xff]
    %v232 = vld [vmem:[#allocation2 + $0x108] sm:$0xff]
    %v233 = vld [vmem:[#allocation2 + $0x110] sm:$0xff]
    %v234 = vld [vmem:[#allocation2 + $0x118] sm:$0xff]
    %v235 = vld [vmem:[#allocation2 + $0x120] sm:$0xff]
    %v236 = vld [vmem:[#allocation2 + $0x128] sm:$0xff]
    %v237 = vld [vmem:[#allocation2 + $0x130] sm:$0xff]
    %v238 = vld [vmem:[#allocation2 + $0x138] sm:$0xff]
    %v239 = vld [vmem:[#allocation2 + $0x140] sm:$0xff]
    %v240 = vld [vmem:[#allocation2 + $0x148] sm:$0xff]
    %v241 = vld [vmem:[#allocation2 + $0x150] sm:$0xff]
    %v242 = vld [vmem:[#allocation2 + $0x158] sm:$0xff]
    %v243 = vld [vmem:[#allocation2 + $0x160] sm:$0xff]
    %v244 = vld [vmem:[#allocation2 + $0x168] sm:$0xff]
    %v245 = vld [vmem:[#allocation2 + $0x170] sm:$0xff]
    %v246 = vld [vmem:[#allocation2 + $0x178] sm:$0xff]
    %v247 = vld [vmem:[#allocation2 + $0x180] sm:$0xff]
    %v248 = vld [vmem:[#allocation2 + $0x188] sm:$0xff]
    %v249 = vld [vmem:[#allocation2 + $0x190] sm:$0xff]
    %v250 = vld [vmem:[#allocation2 + $0x198] sm:$0xff]
    %v251 = vld [vmem:[#allocation2 + $0x1a0] sm:$0xff]
    %v252 = vld [vmem:[#allocation2 + $0x1a8] sm:$0xff]
    %v253 = vld [vmem:[#allocation2 + $0x1b0] sm:$0xff]
    %v254 = vld [vmem:[#allocation2 + $0x1b8] sm:$0xff]
    %v255 = vld [vmem:[#allocation2 + $0x1c0] sm:$0xff]
    %v256 = vld [vmem:[#allocation2 + $0x1c8] sm:$0xff]
    %v257 = vld [vmem:[#allocation2 + $0x1d0] sm:$0xff]
    %v258 = vld [vmem:[#allocation2 + $0x1d8] sm:$0xff]
    %v259 = vld [vmem:[#allocation2 + $0x1e0] sm:$0xff]
    %v260 = vld [vmem:[#allocation2 + $0x1e8] sm:$0xff]
    %v261 = vld [vmem:[#allocation2 + $0x1f0] sm:$0xff]
    %v262 = vld [vmem:[#allocation2 + $0x1f8] sm:$0xff]
    %v263 = vld [vmem:[#allocation2 + $0x200] sm:$0xff]
    %v264 = vld [vmem:[#allocation2 + $0x208] sm:$0xff]
    %v265 = vld [vmem:[#allocation2 + $0x210] sm:$0xff]
    %v266 = vld [vmem:[#allocation2 + $0x218] sm:$0xff]
    %v267 = vld [vmem:[#allocation2 + $0x220] sm:$0xff]
    %v268 = vld [vmem:[#allocation2 + $0x228] sm:$0xff]
    %v269 = vld [vmem:[#allocation2 + $0x230] sm:$0xff]
    %v270 = vld [vmem:[#allocation2 + $0x238] sm:$0xff]
    %v271 = vld [vmem:[#allocation2 + $0x240] sm:$0xff]
    %v272 = vld [vmem:[#allocation2 + $0x248] sm:$0xff]
    %v273 = vld [vmem:[#allocation2 + $0x250] sm:$0xff]
    %v274 = vld [vmem:[#allocation2 + $0x258] sm:$0xff]
    %v275 = vld [vmem:[#allocation2 + $0x260] sm:$0xff]
    %v276 = vld [vmem:[#allocation2 + $0x268] sm:$0xff]
    %v277 = vld [vmem:[#allocation2 + $0x270] sm:$0xff]
    %v278 = vld [vmem:[#allocation2 + $0x278] sm:$0xff]
    %v279 = vld [vmem:[#allocation2 + $0x280] sm:$0xff]
    %v280 = vld [vmem:[#allocation2 + $0x288] sm:$0xff]
    %v281 = vld [vmem:[#allocation2 + $0x290] sm:$0xff]
    %v282 = vld [vmem:[#allocation2 + $0x298] sm:$0xff]
    %v283 = vld [vmem:[#allocation2 + $0x2a0] sm:$0xff]
    %v284 = vld [vmem:[#allocation2 + $0x2a8] sm:$0xff]
    %v285 = vld [vmem:[#allocation2 + $0x2b0] sm:$0xff]
    %v286 = vld [vmem:[#allocation2 + $0x2b8] sm:$0xff]
    %v287 = vld [vmem:[#allocation2 + $0x2c0] sm:$0xff]
    %v288 = vld [vmem:[#allocation2 + $0x2c8] sm:$0xff]
    %v289 = vld [vmem:[#allocation2 + $0x2d0] sm:$0xff]
    %v290 = vld [vmem:[#allocation2 + $0x2d8] sm:$0xff]
    %v291 = vld [vmem:[#allocation2 + $0x2e0] sm:$0xff]
    %v292 = vld [vmem:[#allocation2 + $0x2e8] sm:$0xff]
    %v293 = vld [vmem:[#allocation2 + $0x2f0] sm:$0xff]
    %v294 = vld [vmem:[#allocation2 + $0x2f8] sm:$0xff]
    %v295 = vpack.c.bf16 %v197, %v195
    %v296 = vpack.c.bf16 %v198, %v196
    %v297 = vld [vmem:[%s5] sm:$0x3f]
    %v299 = vlaneseq
    %v300 = vshrl.u32 %v299, 7
    %v301 = vsub.s32 0, %v300
    %v302 = vrot.slane %v297, %v301
    %v303 = vlaneseq
    %v304 = vshrl.u32 %v303, 7
    %v305 = vsub.s32 1, %v304
    %v306 = vrot.slane %v297, %v305
    %v307 = vlaneseq
    %v308 = vshrl.u32 %v307, 7
    %v309 = vsub.s32 2, %v308
    %v310 = vrot.slane %v297, %v309
    %v311 = vlaneseq
    %v312 = vshrl.u32 %v311, 7
    %v313 = vsub.s32 3, %v312
    %v314 = vrot.slane %v297, %v313
    %v315 = vlaneseq
    %v316 = vshrl.u32 %v315, 7
    %v317 = vsub.s32 4, %v316
    %v318 = vrot.slane %v297, %v317
    %v319 = vlaneseq
    %v320 = vshrl.u32 %v319, 7
    %v321 = vsub.s32 5, %v320
    %v322 = vrot.slane %v297, %v321
    %v425 = vunpack.c.l.b16 %v199
    %v426 = vunpack.c.h.b16 %v199
    %v427 = vunpack.c.l.b16 %v200
    %v428 = vunpack.c.h.b16 %v200
    %v429 = vunpack.c.l.b16 %v201
    %v430 = vunpack.c.h.b16 %v201
    %v431 = vunpack.c.l.b16 %v202
    %v432 = vunpack.c.h.b16 %v202
    %v433 = vunpack.c.l.b16 %v203
    %v434 = vunpack.c.h.b16 %v203
    %v435 = vunpack.c.l.b16 %v204
    %v436 = vunpack.c.h.b16 %v204
    %v437 = vunpack.c.l.b16 %v205
    %v438 = vunpack.c.h.b16 %v205
    %v439 = vunpack.c.l.b16 %v206
    %v440 = vunpack.c.h.b16 %v206
    %v441 = vunpack.c.l.b16 %v207
    %v442 = vunpack.c.h.b16 %v207
    %v443 = vunpack.c.l.b16 %v208
    %v444 = vunpack.c.h.b16 %v208
    %v445 = vunpack.c.l.b16 %v209
    %v446 = vunpack.c.h.b16 %v209
    %v447 = vunpack.c.l.b16 %v210
    %v448 = vunpack.c.h.b16 %v210
    %v449 = vunpack.c.l.b16 %v211
    %v450 = vunpack.c.h.b16 %v211
    %v451 = vunpack.c.l.b16 %v212
    %v452 = vunpack.c.h.b16 %v212
    %v453 = vunpack.c.l.b16 %v213
    %v454 = vunpack.c.h.b16 %v213
    %v455 = vunpack.c.l.b16 %v214
    %v456 = vunpack.c.h.b16 %v214
    %v457 = vunpack.c.l.b16 %v215
    %v458 = vunpack.c.h.b16 %v215
    %v459 = vunpack.c.l.b16 %v216
    %v460 = vunpack.c.h.b16 %v216
    %v461 = vunpack.c.l.b16 %v217
    %v462 = vunpack.c.h.b16 %v217
    %v463 = vunpack.c.l.b16 %v218
    %v464 = vunpack.c.h.b16 %v218
    %v465 = vunpack.c.l.b16 %v219
    %v466 = vunpack.c.h.b16 %v219
    %v467 = vunpack.c.l.b16 %v220
    %v468 = vunpack.c.h.b16 %v220
    %v469 = vunpack.c.l.b16 %v221
    %v470 = vunpack.c.h.b16 %v221
    %v471 = vunpack.c.l.b16 %v222
    %v472 = vunpack.c.h.b16 %v222
    %v473 = vunpack.c.l.b16 %v223
    %v474 = vunpack.c.h.b16 %v223
    %v475 = vunpack.c.l.b16 %v224
    %v476 = vunpack.c.h.b16 %v224
    %v477 = vunpack.c.l.b16 %v225
    %v478 = vunpack.c.h.b16 %v225
    %v479 = vunpack.c.l.b16 %v226
    %v480 = vunpack.c.h.b16 %v226
    %v481 = vunpack.c.l.b16 %v227
    %v482 = vunpack.c.h.b16 %v227
    %v483 = vunpack.c.l.b16 %v228
    %v484 = vunpack.c.h.b16 %v228
    %v485 = vunpack.c.l.b16 %v229
    %v486 = vunpack.c.h.b16 %v229
    %v487 = vunpack.c.l.b16 %v230
    %v488 = vunpack.c.h.b16 %v230
    %v489 = vunpack.c.l.b16 %v231
    %v490 = vunpack.c.h.b16 %v231
    %v491 = vunpack.c.l.b16 %v232
    %v492 = vunpack.c.h.b16 %v232
    %v493 = vunpack.c.l.b16 %v233
    %v494 = vunpack.c.h.b16 %v233
    %v495 = vunpack.c.l.b16 %v234
    %v496 = vunpack.c.h.b16 %v234
    %v497 = vunpack.c.l.b16 %v235
    %v498 = vunpack.c.h.b16 %v235
    %v499 = vunpack.c.l.b16 %v236
    %v500 = vunpack.c.h.b16 %v236
    %v501 = vunpack.c.l.b16 %v237
    %v502 = vunpack.c.h.b16 %v237
    %v503 = vunpack.c.l.b16 %v238
    %v504 = vunpack.c.h.b16 %v238
    %v505 = vunpack.c.l.b16 %v239
    %v506 = vunpack.c.h.b16 %v239
    %v507 = vunpack.c.l.b16 %v240
    %v508 = vunpack.c.h.b16 %v240
    %v509 = vunpack.c.l.b16 %v241
    %v510 = vunpack.c.h.b16 %v241
    %v511 = vunpack.c.l.b16 %v242
    %v512 = vunpack.c.h.b16 %v242
    %v513 = vunpack.c.l.b16 %v243
    %v514 = vunpack.c.h.b16 %v243
    %v515 = vunpack.c.l.b16 %v244
    %v516 = vunpack.c.h.b16 %v244
    %v517 = vunpack.c.l.b16 %v245
    %v518 = vunpack.c.h.b16 %v245
    %v519 = vunpack.c.l.b16 %v246
    %v520 = vunpack.c.h.b16 %v246
    %v521 = vunpack.c.l.b16 %v247
    %v522 = vunpack.c.h.b16 %v247
    %v523 = vunpack.c.l.b16 %v248
    %v524 = vunpack.c.h.b16 %v248
    %v525 = vunpack.c.l.b16 %v249
    %v526 = vunpack.c.h.b16 %v249
    %v527 = vunpack.c.l.b16 %v250
    %v528 = vunpack.c.h.b16 %v250
    %v529 = vunpack.c.l.b16 %v251
    %v530 = vunpack.c.h.b16 %v251
    %v531 = vunpack.c.l.b16 %v252
    %v532 = vunpack.c.h.b16 %v252
    %v533 = vunpack.c.l.b16 %v253
    %v534 = vunpack.c.h.b16 %v253
    %v535 = vunpack.c.l.b16 %v254
    %v536 = vunpack.c.h.b16 %v254
    %v537 = vunpack.c.l.b16 %v255
    %v538 = vunpack.c.h.b16 %v255
    %v539 = vunpack.c.l.b16 %v256
    %v540 = vunpack.c.h.b16 %v256
    %v541 = vunpack.c.l.b16 %v257
    %v542 = vunpack.c.h.b16 %v257
    %v543 = vunpack.c.l.b16 %v258
    %v544 = vunpack.c.h.b16 %v258
    %v545 = vunpack.c.l.b16 %v259
    %v546 = vunpack.c.h.b16 %v259
    %v547 = vunpack.c.l.b16 %v260
    %v548 = vunpack.c.h.b16 %v260
    %v549 = vunpack.c.l.b16 %v261
    %v550 = vunpack.c.h.b16 %v261
    %v551 = vunpack.c.l.b16 %v262
    %v552 = vunpack.c.h.b16 %v262
    %v553 = vunpack.c.l.b16 %v263
    %v554 = vunpack.c.h.b16 %v263
    %v555 = vunpack.c.l.b16 %v264
    %v556 = vunpack.c.h.b16 %v264
    %v557 = vunpack.c.l.b16 %v265
    %v558 = vunpack.c.h.b16 %v265
    %v559 = vunpack.c.l.b16 %v266
    %v560 = vunpack.c.h.b16 %v266
    %v561 = vunpack.c.l.b16 %v267
    %v562 = vunpack.c.h.b16 %v267
    %v563 = vunpack.c.l.b16 %v268
    %v564 = vunpack.c.h.b16 %v268
    %v565 = vunpack.c.l.b16 %v269
    %v566 = vunpack.c.h.b16 %v269
    %v567 = vunpack.c.l.b16 %v270
    %v568 = vunpack.c.h.b16 %v270
    %v569 = vunpack.c.l.b16 %v271
    %v570 = vunpack.c.h.b16 %v271
    %v571 = vunpack.c.l.b16 %v272
    %v572 = vunpack.c.h.b16 %v272
    %v573 = vunpack.c.l.b16 %v273
    %v574 = vunpack.c.h.b16 %v273
    %v575 = vunpack.c.l.b16 %v274
    %v576 = vunpack.c.h.b16 %v274
    %v577 = vunpack.c.l.b16 %v275
    %v578 = vunpack.c.h.b16 %v275
    %v579 = vunpack.c.l.b16 %v276
    %v580 = vunpack.c.h.b16 %v276
    %v581 = vunpack.c.l.b16 %v277
    %v582 = vunpack.c.h.b16 %v277
    %v583 = vunpack.c.l.b16 %v278
    %v584 = vunpack.c.h.b16 %v278
    %v585 = vunpack.c.l.b16 %v279
    %v586 = vunpack.c.h.b16 %v279
    %v587 = vunpack.c.l.b16 %v280
    %v588 = vunpack.c.h.b16 %v280
    %v589 = vunpack.c.l.b16 %v281
    %v590 = vunpack.c.h.b16 %v281
    %v591 = vunpack.c.l.b16 %v282
    %v592 = vunpack.c.h.b16 %v282
    %v593 = vunpack.c.l.b16 %v283
    %v594 = vunpack.c.h.b16 %v283
    %v595 = vunpack.c.l.b16 %v284
    %v596 = vunpack.c.h.b16 %v284
    %v597 = vunpack.c.l.b16 %v285
    %v598 = vunpack.c.h.b16 %v285
    %v599 = vunpack.c.l.b16 %v286
    %v600 = vunpack.c.h.b16 %v286
    %v601 = vunpack.c.l.b16 %v287
    %v602 = vunpack.c.h.b16 %v287
    %v603 = vunpack.c.l.b16 %v288
    %v604 = vunpack.c.h.b16 %v288
    %v605 = vunpack.c.l.b16 %v289
    %v606 = vunpack.c.h.b16 %v289
    %v607 = vunpack.c.l.b16 %v290
    %v608 = vunpack.c.h.b16 %v290
    %v609 = vunpack.c.l.b16 %v291
    %v610 = vunpack.c.h.b16 %v291
    %v611 = vunpack.c.l.b16 %v292
    %v612 = vunpack.c.h.b16 %v292
    %v613 = vunpack.c.l.b16 %v293
    %v614 = vunpack.c.h.b16 %v293
    %v615 = vunpack.c.l.b16 %v294
    %v616 = vunpack.c.h.b16 %v294
    %v617 = vpack.c.b16 %v431, %v425
    %v618 = vpack.c.b16 %v432, %v426
    %v619 = vpack.c.b16 %v433, %v427
    %v620 = vpack.c.b16 %v434, %v428
    %v621 = vpack.c.b16 %v435, %v429
    %v622 = vpack.c.b16 %v436, %v430
    %v623 = vpack.c.b16 %v443, %v437
    %v624 = vpack.c.b16 %v444, %v438
    %v625 = vpack.c.b16 %v445, %v439
    %v626 = vpack.c.b16 %v446, %v440
    %v627 = vpack.c.b16 %v447, %v441
    %v628 = vpack.c.b16 %v448, %v442
    %v629 = vpack.c.b16 %v455, %v449
    %v630 = vpack.c.b16 %v456, %v450
    %v631 = vpack.c.b16 %v457, %v451
    %v632 = vpack.c.b16 %v458, %v452
    %v633 = vpack.c.b16 %v459, %v453
    %v634 = vpack.c.b16 %v460, %v454
    %v635 = vpack.c.b16 %v467, %v461
    %v636 = vpack.c.b16 %v468, %v462
    %v637 = vpack.c.b16 %v469, %v463
    %v638 = vpack.c.b16 %v470, %v464
    %v639 = vpack.c.b16 %v471, %v465
    %v640 = vpack.c.b16 %v472, %v466
    %v641 = vpack.c.b16 %v479, %v473
    %v642 = vpack.c.b16 %v480, %v474
    %v643 = vpack.c.b16 %v481, %v475
    %v644 = vpack.c.b16 %v482, %v476
    %v645 = vpack.c.b16 %v483, %v477
    %v646 = vpack.c.b16 %v484, %v478
    %v647 = vpack.c.b16 %v491, %v485
    %v648 = vpack.c.b16 %v492, %v486
    %v649 = vpack.c.b16 %v493, %v487
    %v650 = vpack.c.b16 %v494, %v488
    %v651 = vpack.c.b16 %v495, %v489
    %v652 = vpack.c.b16 %v496, %v490
    %v653 = vpack.c.b16 %v503, %v497
    %v654 = vpack.c.b16 %v504, %v498
    %v655 = vpack.c.b16 %v505, %v499
    %v656 = vpack.c.b16 %v506, %v500
    %v657 = vpack.c.b16 %v507, %v501
    %v658 = vpack.c.b16 %v508, %v502
    %v659 = vpack.c.b16 %v515, %v509
    %v660 = vpack.c.b16 %v516, %v510
    %v661 = vpack.c.b16 %v517, %v511
    %v662 = vpack.c.b16 %v518, %v512
    %v663 = vpack.c.b16 %v519, %v513
    %v664 = vpack.c.b16 %v520, %v514
    %v665 = vpack.c.b16 %v527, %v521
    %v666 = vpack.c.b16 %v528, %v522
    %v667 = vpack.c.b16 %v529, %v523
    %v668 = vpack.c.b16 %v530, %v524
    %v669 = vpack.c.b16 %v531, %v525
    %v670 = vpack.c.b16 %v532, %v526
    %v671 = vpack.c.b16 %v539, %v533
    %v672 = vpack.c.b16 %v540, %v534
    %v673 = vpack.c.b16 %v541, %v535
    %v674 = vpack.c.b16 %v542, %v536
    %v675 = vpack.c.b16 %v543, %v537
    %v676 = vpack.c.b16 %v544, %v538
    %v677 = vpack.c.b16 %v551, %v545
    %v678 = vpack.c.b16 %v552, %v546
    %v679 = vpack.c.b16 %v553, %v547
    %v680 = vpack.c.b16 %v554, %v548
    %v681 = vpack.c.b16 %v555, %v549
    %v682 = vpack.c.b16 %v556, %v550
    %v683 = vpack.c.b16 %v563, %v557
    %v684 = vpack.c.b16 %v564, %v558
    %v685 = vpack.c.b16 %v565, %v559
    %v686 = vpack.c.b16 %v566, %v560
    %v687 = vpack.c.b16 %v567, %v561
    %v688 = vpack.c.b16 %v568, %v562
    %v689 = vpack.c.b16 %v575, %v569
    %v690 = vpack.c.b16 %v576, %v570
    %v691 = vpack.c.b16 %v577, %v571
    %v692 = vpack.c.b16 %v578, %v572
    %v693 = vpack.c.b16 %v579, %v573
    %v694 = vpack.c.b16 %v580, %v574
    %v695 = vpack.c.b16 %v587, %v581
    %v696 = vpack.c.b16 %v588, %v582
    %v697 = vpack.c.b16 %v589, %v583
    %v698 = vpack.c.b16 %v590, %v584
    %v699 = vpack.c.b16 %v591, %v585
    %v700 = vpack.c.b16 %v592, %v586
    %v701 = vpack.c.b16 %v599, %v593
    %v702 = vpack.c.b16 %v600, %v594
    %v703 = vpack.c.b16 %v601, %v595
    %v704 = vpack.c.b16 %v602, %v596
    %v705 = vpack.c.b16 %v603, %v597
    %v706 = vpack.c.b16 %v604, %v598
    %v707 = vpack.c.b16 %v611, %v605
    %v708 = vpack.c.b16 %v612, %v606
    %v709 = vpack.c.b16 %v613, %v607
    %v710 = vpack.c.b16 %v614, %v608
    %v711 = vpack.c.b16 %v615, %v609
    %v712 = vpack.c.b16 %v616, %v610
    %809 = vmatprep.subr.bf16.mxu0 %v618
    %810 = vmatpush1.bf16.msra.mxu0 %v617
    %811 = vmatprep.subr.bf16.mxu0 %v624
    %812 = vmatpush1.bf16.msra.mxu0 %v623
    %813 = vmatprep.subr.bf16.mxu0 %v630
    %814 = vmatpush1.bf16.msra.mxu0 %v629
    %815 = vmatprep.subr.bf16.mxu0 %v636
    %816 = vmatpush1.bf16.msra.mxu0 %v635
    %817 = vmatprep.subr.bf16.mxu0 %v642
    %818 = vmatpush1.bf16.msra.mxu0 %v641
    %819 = vmatprep.subr.bf16.mxu0 %v648
    %820 = vmatpush1.bf16.msra.mxu0 %v647
    %821 = vmatprep.subr.bf16.mxu0 %v654
    %822 = vmatpush1.bf16.msra.mxu0 %v653
    %823 = vmatprep.subr.bf16.mxu0 %v660
    %824 = vmatpush1.bf16.msra.mxu0 %v659
    %825 = vmatprep.subr.bf16.mxu0 %v666
    %826 = vmatpush1.bf16.msra.mxu0 %v665
    %827 = vmatprep.subr.bf16.mxu0 %v672
    %828 = vmatpush1.bf16.msra.mxu0 %v671
    %829 = vmatprep.subr.bf16.mxu0 %v678
    %830 = vmatpush1.bf16.msra.mxu0 %v677
    %831 = vmatprep.subr.bf16.mxu0 %v684
    %832 = vmatpush1.bf16.msra.mxu0 %v683
    %833 = vmatprep.subr.bf16.mxu0 %v690
    %834 = vmatpush1.bf16.msra.mxu0 %v689
    %835 = vmatprep.subr.bf16.mxu0 %v696
    %836 = vmatpush1.bf16.msra.mxu0 %v695
    %837 = vmatprep.subr.bf16.mxu0 %v702
    %838 = vmatpush1.bf16.msra.mxu0 %v701
    %839 = vmatprep.subr.bf16.mxu0 %v708
    %840 = vmatpush1.bf16.msra.mxu0 %v707
    %841 = vmatprep.mubr.bf16.mxu0 %v296
    %842 = vmatmul.mubr.bf16.gmra.mrb[0].mxu0 %v295
    %v843 = vpop.f32.mrb[0].mxu0
    %v844 = vadd.f32 %v302, %v843
    %v845 = vpop.f32.mrb[0].mxu0
    %v846 = vadd.f32 %v306, %v845
    %v847 = vpop.f32.mrb[0].mxu0
    %v848 = vadd.f32 %v302, %v847
    %v849 = vpop.f32.mrb[0].mxu0
    %v850 = vadd.f32 %v306, %v849
    %851 = vdwg.mxu0
    %852 = vmatprep.subr.bf16.mxu0 %v620
    %853 = vmatpush1.bf16.msra.mxu0 %v619
    %854 = vmatprep.subr.bf16.mxu0 %v626
    %855 = vmatpush1.bf16.msra.mxu0 %v625
    %856 = vmatprep.subr.bf16.mxu0 %v632
    %857 = vmatpush1.bf16.msra.mxu0 %v631
    %858 = vmatprep.subr.bf16.mxu0 %v638
    %859 = vmatpush1.bf16.msra.mxu0 %v637
    %860 = vmatprep.subr.bf16.mxu0 %v644
    %861 = vmatpush1.bf16.msra.mxu0 %v643
    %862 = vmatprep.subr.bf16.mxu0 %v650
    %863 = vmatpush1.bf16.msra.mxu0 %v649
    %864 = vmatprep.subr.bf16.mxu0 %v656
    %865 = vmatpush1.bf16.msra.mxu0 %v655
    %866 = vmatprep.subr.bf16.mxu0 %v662
    %867 = vmatpush1.bf16.msra.mxu0 %v661
    %868 = vmatprep.subr.bf16.mxu0 %v668
    %869 = vmatpush1.bf16.msra.mxu0 %v667
    %870 = vmatprep.subr.bf16.mxu0 %v674
    %871 = vmatpush1.bf16.msra.mxu0 %v673
    %872 = vmatprep.subr.bf16.mxu0 %v680
    %873 = vmatpush1.bf16.msra.mxu0 %v679
    %874 = vmatprep.subr.bf16.mxu0 %v686
    %875 = vmatpush1.bf16.msra.mxu0 %v685
    %876 = vmatprep.subr.bf16.mxu0 %v692
    %877 = vmatpush1.bf16.msra.mxu0 %v691
    %878 = vmatprep.subr.bf16.mxu0 %v698
    %879 = vmatpush1.bf16.msra.mxu0 %v697
    %880 = vmatprep.subr.bf16.mxu0 %v704
    %881 = vmatpush1.bf16.msra.mxu0 %v703
    %882 = vmatprep.subr.bf16.mxu0 %v710
    %883 = vmatpush1.bf16.msra.mxu0 %v709
    %884 = vmatprep.mubr.bf16.mxu0 %v296
    %885 = vmatmul.mubr.bf16.gmra.mrb[0].mxu0 %v295
    %v886 = vpop.f32.mrb[0].mxu0
    %v887 = vadd.f32 %v310, %v886
    %v888 = vpop.f32.mrb[0].mxu0
    %v889 = vadd.f32 %v314, %v888
    %v890 = vpop.f32.mrb[0].mxu0
    %v891 = vadd.f32 %v310, %v890
    %v892 = vpop.f32.mrb[0].mxu0
    %v893 = vadd.f32 %v314, %v892
    %894 = vdwg.mxu0
    %895 = vmatprep.subr.bf16.mxu0 %v622
    %896 = vmatpush1.bf16.msra.mxu0 %v621
    %897 = vmatprep.subr.bf16.mxu0 %v628
    %898 = vmatpush1.bf16.msra.mxu0 %v627
    %899 = vmatprep.subr.bf16.mxu0 %v634
    %900 = vmatpush1.bf16.msra.mxu0 %v633
    %901 = vmatprep.subr.bf16.mxu0 %v640
    %902 = vmatpush1.bf16.msra.mxu0 %v639
    %903 = vmatprep.subr.bf16.mxu0 %v646
    %904 = vmatpush1.bf16.msra.mxu0 %v645
    %905 = vmatprep.subr.bf16.mxu0 %v652
    %906 = vmatpush1.bf16.msra.mxu0 %v651
    %907 = vmatprep.subr.bf16.mxu0 %v658
    %908 = vmatpush1.bf16.msra.mxu0 %v657
    %909 = vmatprep.subr.bf16.mxu0 %v664
    %910 = vmatpush1.bf16.msra.mxu0 %v663
    %911 = vmatprep.subr.bf16.mxu0 %v670
    %912 = vmatpush1.bf16.msra.mxu0 %v669
    %913 = vmatprep.subr.bf16.mxu0 %v676
    %914 = vmatpush1.bf16.msra.mxu0 %v675
    %915 = vmatprep.subr.bf16.mxu0 %v682
    %916 = vmatpush1.bf16.msra.mxu0 %v681
    %917 = vmatprep.subr.bf16.mxu0 %v688
    %918 = vmatpush1.bf16.msra.mxu0 %v687
    %919 = vmatprep.subr.bf16.mxu0 %v694
    %920 = vmatpush1.bf16.msra.mxu0 %v693
    %921 = vmatprep.subr.bf16.mxu0 %v700
    %922 = vmatpush1.bf16.msra.mxu0 %v699
    %923 = vmatprep.subr.bf16.mxu0 %v706
    %924 = vmatpush1.bf16.msra.mxu0 %v705
    %925 = vmatprep.subr.bf16.mxu0 %v712
    %926 = vmatpush1.bf16.msra.mxu0 %v711
    %927 = vmatprep.mubr.bf16.mxu0 %v296
    %928 = vmatmul.mubr.bf16.gmra.mrb[0].mxu0 %v295
    %v929 = vpop.f32.mrb[0].mxu0
    %v930 = vadd.f32 %v318, %v929
    %v931 = vpop.f32.mrb[0].mxu0
    %v932 = vadd.f32 %v322, %v931
    %v933 = vpop.f32.mrb[0].mxu0
    %v934 = vadd.f32 %v318, %v933
    %v935 = vpop.f32.mrb[0].mxu0
    %v936 = vadd.f32 %v322, %v935
    %937 = vdwg.mxu0
    %v938 = vmul.f32 %v844, 0.125
    %v939 = vmul.f32 %v848, 0.125
    %v940 = vpack.c.bf16 %v939, %v938
    %v941 = vpack.c.bf16 %v891, %v887
    %v942 = vpack.c.bf16 %v934, %v930
    %vm943 = vcmask 523264
    %v945 = vsel %vm943, %v940, 0
    %v948 = vsel %vm943, %v941, 0
    %950 = vmatprep.subr.bf16.mxu0 0
    %951 = vmatpush1.bf16.xpose.msra.mxu0 %v948
    %952 = vmatprep.subr.bf16.mxu0 0
    %953 = vmatpush1.bf16.xpose.msra.mxu0 0
    %954 = vmatprep.subr.bf16.mxu0 0
    %955 = vmatpush1.bf16.xpose.msra.mxu0 0
    %956 = vmatprep.subr.bf16.mxu0 0
    %957 = vmatpush1.bf16.xpose.msra.mxu0 0
    %958 = vmatprep.subr.bf16.mxu0 0
    %959 = vmatpush1.bf16.xpose.msra.mxu0 0
    %960 = vmatprep.subr.bf16.mxu0 0
    %961 = vmatpush1.bf16.xpose.msra.mxu0 0
    %962 = vmatprep.subr.bf16.mxu0 0
    %963 = vmatpush1.bf16.xpose.msra.mxu0 0
    %964 = vmatprep.subr.bf16.mxu0 0
    %965 = vmatpush1.bf16.xpose.msra.mxu0 0
    %966 = vmatprep.subr.bf16.mxu0 0
    %967 = vmatpush1.bf16.xpose.msra.mxu0 0
    %968 = vmatprep.subr.bf16.mxu0 0
    %969 = vmatpush1.bf16.xpose.msra.mxu0 0
    %970 = vmatprep.subr.bf16.mxu0 0
    %971 = vmatpush1.bf16.xpose.msra.mxu0 0
    %972 = vmatprep.subr.bf16.mxu0 0
    %973 = vmatpush1.bf16.xpose.msra.mxu0 0
    %974 = vmatprep.subr.bf16.mxu0 0
    %975 = vmatpush1.bf16.xpose.msra.mxu0 0
    %976 = vmatprep.subr.bf16.mxu0 0
    %977 = vmatpush1.bf16.xpose.msra.mxu0 0
    %978 = vmatprep.subr.bf16.mxu0 0
    %979 = vmatpush1.bf16.xpose.msra.mxu0 0
    %980 = vmatprep.subr.bf16.mxu0 0
    %981 = vmatpush1.bf16.xpose.msra.mxu0 0
    %982 = vmatprep.mubr.bf16.mxu0 0
    %983 = vmatmul.mubr.bf16.gmra.mrb[0].mxu0 %v945
    %v984 = vpop.f32.mrb[0].mxu0
    %v985 = vadd.f32 %v128, %v984
    %v986 = vpop.f32.mrb[0].mxu0
    %v987 = vpop.f32.mrb[0].mxu0
    %v988 = vadd.f32 %v129, %v987
    %v989 = vpop.f32.mrb[0].mxu0
    %990 = vdwg.mxu0
    %vm991 = vcmask 130048
    %v992 = vsel %vm991, %v985, -inf
    %993 = vmax.xlane.f32.xlu0 %v992
    %v994 = vpop.xlane.xlu0 %993
    %v995 = vsel %vm991, %v988, -inf
    %996 = vmax.xlane.f32.xlu0 %v995
    %v997 = vpop.xlane.xlu0 %996
    %v998 = vsub.f32 %v985, %v994
    %v999 = vsub.f32 %v988, %v997
    %v1000 = vmul.f32 %v998, 1.442695
    %v1001 = vpow.pop %v1000
    %v1002 = vmul.f32 %v999, 1.442695
    %v1003 = vpow.pop %v1002
    %v1004 = vsel %vm991, %v1001, 0.0
    %1005 = vadd.xlane.f32.xlu0 %v1004
    %v1006 = vpop.xlane.xlu0 %1005
    %v1007 = vsel %vm991, %v1003, 0.0
    %1008 = vadd.xlane.f32.xlu0 %v1007
    %v1009 = vpop.xlane.xlu0 %1008
    %v1010 = vrcp.pop %v1006
    %v1011 = vmul.f32 %v1001, %v1010
    %v1012 = vrcp.pop %v1009
    %v1013 = vmul.f32 %v1003, %v1012
    %v1014 = vpack.c.bf16 %v1013, %v1011
    %v1016 = vsel %vm991, %v1014, 0
    %1018 = vmatprep.subr.bf16.mxu0 0
    %1019 = vmatpush1.bf16.msra.mxu0 %v942
    %1020 = vmatprep.subr.bf16.mxu0 0
    %1021 = vmatpush1.bf16.msra.mxu0 0
    %1022 = vmatprep.subr.bf16.mxu0 0
    %1023 = vmatpush1.bf16.msra.mxu0 0
    %1024 = vmatprep.subr.bf16.mxu0 0
    %1025 = vmatpush1.bf16.msra.mxu0 0
    %1026 = vmatprep.subr.bf16.mxu0 0
    %1027 = vmatpush1.bf16.msra.mxu0 0
    %1028 = vmatprep.subr.bf16.mxu0 0
    %1029 = vmatpush1.bf16.msra.mxu0 0
    %1030 = vmatprep.subr.bf16.mxu0 0
    %1031 = vmatpush1.bf16.msra.mxu0 0
    %1032 = vmatprep.subr.bf16.mxu0 0
    %1033 = vmatpush1.bf16.msra.mxu0 0
    %1034 = vmatprep.subr.bf16.mxu0 0
    %1035 = vmatpush1.bf16.msra.mxu0 0
    %1036 = vmatprep.subr.bf16.mxu0 0
    %1037 = vmatpush1.bf16.msra.mxu0 0
    %1038 = vmatprep.subr.bf16.mxu0 0
    %1039 = vmatpush1.bf16.msra.mxu0 0
    %1040 = vmatprep.subr.bf16.mxu0 0
    %1041 = vmatpush1.bf16.msra.mxu0 0
    %1042 = vmatprep.subr.bf16.mxu0 0
    %1043 = vmatpush1.bf16.msra.mxu0 0
    %1044 = vmatprep.subr.bf16.mxu0 0
    %1045 = vmatpush1.bf16.msra.mxu0 0
    %1046 = vmatprep.subr.bf16.mxu0 0
    %1047 = vmatpush1.bf16.msra.mxu0 0
    %1048 = vmatprep.subr.bf16.mxu0 0
    %1049 = vmatpush1.bf16.msra.mxu0 0
    %1050 = vmatprep.mubr.bf16.mxu0 0
    %1051 = vmatmul.mubr.bf16.gmra.mrb[0].mxu0 %v1016
    %v1052 = vpop.f32.mrb[0].mxu0
    %v1053 = vadd.f32 0.0, %v1052
    %v1054 = vpop.f32.mrb[0].mxu0
    %v1055 = vpop.f32.mrb[0].mxu0
    %v1056 = vadd.f32 0.0, %v1055
    %v1057 = vpop.f32.mrb[0].mxu0
    %1058 = vdwg.mxu0
    %1060 = vrot.lane.b32.xlu0 %v940, 64
    %v1061 = vpop.permute.xlu0 %1060
    %1063 = vrot.lane.b32.xlu0 %v941, 64
    %v1064 = vpop.permute.xlu0 %1063
    %v1066 = vsel %vm943, %v1061, 0
    %v1069 = vsel %vm943, %v1064, 0
    %1071 = vmatprep.subr.bf16.mxu0 0
    %1072 = vmatpush1.bf16.xpose.msra.mxu0 %v1069
    %1073 = vmatprep.subr.bf16.mxu0 0
    %1074 = vmatpush1.bf16.xpose.msra.mxu0 0
    %1075 = vmatprep.subr.bf16.mxu0 0
    %1076 = vmatpush1.bf16.xpose.msra.mxu0 0
    %1077 = vmatprep.subr.bf16.mxu0 0
    %1078 = vmatpush1.bf16.xpose.msra.mxu0 0
    %1079 = vmatprep.subr.bf16.mxu0 0
    %1080 = vmatpush1.bf16.xpose.msra.mxu0 0
    %1081 = vmatprep.subr.bf16.mxu0 0
    %1082 = vmatpush1.bf16.xpose.msra.mxu0 0
    %1083 = vmatprep.subr.bf16.mxu0 0
    %1084 = vmatpush1.bf16.xpose.msra.mxu0 0
    %1085 = vmatprep.subr.bf16.mxu0 0
    %1086 = vmatpush1.bf16.xpose.msra.mxu0 0
    %1087 = vmatprep.subr.bf16.mxu0 0
    %1088 = vmatpush1.bf16.xpose.msra.mxu0 0
    %1089 = vmatprep.subr.bf16.mxu0 0
    %1090 = vmatpush1.bf16.xpose.msra.mxu0 0
    %1091 = vmatprep.subr.bf16.mxu0 0
    %1092 = vmatpush1.bf16.xpose.msra.mxu0 0
    %1093 = vmatprep.subr.bf16.mxu0 0
    %1094 = vmatpush1.bf16.xpose.msra.mxu0 0
    %1095 = vmatprep.subr.bf16.mxu0 0
    %1096 = vmatpush1.bf16.xpose.msra.mxu0 0
    %1097 = vmatprep.subr.bf16.mxu0 0
    %1098 = vmatpush1.bf16.xpose.msra.mxu0 0
    %1099 = vmatprep.subr.bf16.mxu0 0
    %1100 = vmatpush1.bf16.xpose.msra.mxu0 0
    %1101 = vmatprep.subr.bf16.mxu0 0
    %1102 = vmatpush1.bf16.xpose.msra.mxu0 0
    %1103 = vmatprep.mubr.bf16.mxu0 0
    %1104 = vmatmul.mubr.bf16.gmra.mrb[0].mxu0 %v1066
    %v1105 = vpop.f32.mrb[0].mxu0
    %v1106 = vadd.f32 %v128, %v1105
    %v1107 = vpop.f32.mrb[0].mxu0
    %v1108 = vpop.f32.mrb[0].mxu0
    %v1109 = vadd.f32 %v129, %v1108
    %v1110 = vpop.f32.mrb[0].mxu0
    %1111 = vdwg.mxu0
    %v1112 = vsel %vm991, %v1106, -inf
    %1113 = vmax.xlane.f32.xlu0 %v1112
    %v1114 = vpop.xlane.xlu0 %1113
    %v1115 = vsel %vm991, %v1109, -inf
    %1116 = vmax.xlane.f32.xlu0 %v1115
    %v1117 = vpop.xlane.xlu0 %1116
    %v1118 = vsub.f32 %v1106, %v1114
    %v1119 = vsub.f32 %v1109, %v1117
    %v1120 = vmul.f32 %v1118, 1.442695
    %v1121 = vpow.pop %v1120
    %v1122 = vmul.f32 %v1119, 1.442695
    %v1123 = vpow.pop %v1122
    %v1124 = vsel %vm991, %v1121, 0.0
    %1125 = vadd.xlane.f32.xlu0 %v1124
    %v1126 = vpop.xlane.xlu0 %1125
    %v1127 = vsel %vm991, %v1123, 0.0
    %1128 = vadd.xlane.f32.xlu0 %v1127
    %v1129 = vpop.xlane.xlu0 %1128
    %v1130 = vrcp.pop %v1126
    %v1131 = vmul.f32 %v1121, %v1130
    %v1132 = vrcp.pop %v1129
    %v1133 = vmul.f32 %v1123, %v1132
    %v1134 = vpack.c.bf16 %v1133, %v1131
    %1136 = vrot.lane.b32.xlu0 %v942, 64
    %v1137 = vpop.permute.xlu0 %1136
    %v1140 = vsel %vm991, %v1134, 0
    %1142 = vmatprep.subr.bf16.mxu0 0
    %1143 = vmatpush1.bf16.msra.mxu0 %v1137
    %1144 = vmatprep.subr.bf16.mxu0 0
    %1145 = vmatpush1.bf16.msra.mxu0 0
    %1146 = vmatprep.subr.bf16.mxu0 0
    %1147 = vmatpush1.bf16.msra.mxu0 0
    %1148 = vmatprep.subr.bf16.mxu0 0
    %1149 = vmatpush1.bf16.msra.mxu0 0
    %1150 = vmatprep.subr.bf16.mxu0 0
    %1151 = vmatpush1.bf16.msra.mxu0 0
    %1152 = vmatprep.subr.bf16.mxu0 0
    %1153 = vmatpush1.bf16.msra.mxu0 0
    %1154 = vmatprep.subr.bf16.mxu0 0
    %1155 = vmatpush1.bf16.msra.mxu0 0
    %1156 = vmatprep.subr.bf16.mxu0 0
    %1157 = vmatpush1.bf16.msra.mxu0 0
    %1158 = vmatprep.subr.bf16.mxu0 0
    %1159 = vmatpush1.bf16.msra.mxu0 0
    %1160 = vmatprep.subr.bf16.mxu0 0
    %1161 = vmatpush1.bf16.msra.mxu0 0
    %1162 = vmatprep.subr.bf16.mxu0 0
    %1163 = vmatpush1.bf16.msra.mxu0 0
    %1164 = vmatprep.subr.bf16.mxu0 0
    %1165 = vmatpush1.bf16.msra.mxu0 0
    %1166 = vmatprep.subr.bf16.mxu0 0
    %1167 = vmatpush1.bf16.msra.mxu0 0
    %1168 = vmatprep.subr.bf16.mxu0 0
    %1169 = vmatpush1.bf16.msra.mxu0 0
    %1170 = vmatprep.subr.bf16.mxu0 0
    %1171 = vmatpush1.bf16.msra.mxu0 0
    %1172 = vmatprep.subr.bf16.mxu0 0
    %1173 = vmatpush1.bf16.msra.mxu0 0
    %1174 = vmatprep.mubr.bf16.mxu0 0
    %1175 = vmatmul.mubr.bf16.gmra.mrb[0].mxu0 %v1140
    %v1176 = vpop.f32.mrb[0].mxu0
    %v1177 = vadd.f32 0.0, %v1176
    %v1178 = vpop.f32.mrb[0].mxu0
    %v1179 = vpop.f32.mrb[0].mxu0
    %v1180 = vadd.f32 0.0, %v1179
    %v1181 = vpop.f32.mrb[0].mxu0
    %1182 = vdwg.mxu0
    %v1183 = vmul.f32 %v846, 0.125
    %v1184 = vmul.f32 %v850, 0.125
    %v1185 = vpack.c.bf16 %v1184, %v1183
    %v1186 = vpack.c.bf16 %v893, %v889
    %v1187 = vpack.c.bf16 %v936, %v932
    %v1189 = vsel %vm943, %v1185, 0
    %v1192 = vsel %vm943, %v1186, 0
    %1194 = vmatprep.subr.bf16.mxu0 0
    %1195 = vmatpush1.bf16.xpose.msra.mxu0 %v1192
    %1196 = vmatprep.subr.bf16.mxu0 0
    %1197 = vmatpush1.bf16.xpose.msra.mxu0 0
    %1198 = vmatprep.subr.bf16.mxu0 0
    %1199 = vmatpush1.bf16.xpose.msra.mxu0 0
    %1200 = vmatprep.subr.bf16.mxu0 0
    %1201 = vmatpush1.bf16.xpose.msra.mxu0 0
    %1202 = vmatprep.subr.bf16.mxu0 0
    %1203 = vmatpush1.bf16.xpose.msra.mxu0 0
    %1204 = vmatprep.subr.bf16.mxu0 0
    %1205 = vmatpush1.bf16.xpose.msra.mxu0 0
    %1206 = vmatprep.subr.bf16.mxu0 0
    %1207 = vmatpush1.bf16.xpose.msra.mxu0 0
    %1208 = vmatprep.subr.bf16.mxu0 0
    %1209 = vmatpush1.bf16.xpose.msra.mxu0 0
    %1210 = vmatprep.subr.bf16.mxu0 0
    %1211 = vmatpush1.bf16.xpose.msra.mxu0 0
    %1212 = vmatprep.subr.bf16.mxu0 0
    %1213 = vmatpush1.bf16.xpose.msra.mxu0 0
    %1214 = vmatprep.subr.bf16.mxu0 0
    %1215 = vmatpush1.bf16.xpose.msra.mxu0 0
    %1216 = vmatprep.subr.bf16.mxu0 0
    %1217 = vmatpush1.bf16.xpose.msra.mxu0 0
    %1218 = vmatprep.subr.bf16.mxu0 0
    %1219 = vmatpush1.bf16.xpose.msra.mxu0 0
    %1220 = vmatprep.subr.bf16.mxu0 0
    %1221 = vmatpush1.bf16.xpose.msra.mxu0 0
    %1222 = vmatprep.subr.bf16.mxu0 0
    %1223 = vmatpush1.bf16.xpose.msra.mxu0 0
    %1224 = vmatprep.subr.bf16.mxu0 0
    %1225 = vmatpush1.bf16.xpose.msra.mxu0 0
    %1226 = vmatprep.mubr.bf16.mxu0 0
    %1227 = vmatmul.mubr.bf16.gmra.mrb[0].mxu0 %v1189
    %v1228 = vpop.f32.mrb[0].mxu0
    %v1229 = vadd.f32 %v128, %v1228
    %v1230 = vpop.f32.mrb[0].mxu0
    %v1231 = vpop.f32.mrb[0].mxu0
    %v1232 = vadd.f32 %v129, %v1231
    %v1233 = vpop.f32.mrb[0].mxu0
    %1234 = vdwg.mxu0
    %v1235 = vsel %vm991, %v1229, -inf
    %1236 = vmax.xlane.f32.xlu0 %v1235
    %v1237 = vpop.xlane.xlu0 %1236
    %v1238 = vsel %vm991, %v1232, -inf
    %1239 = vmax.xlane.f32.xlu0 %v1238
    %v1240 = vpop.xlane.xlu0 %1239
    %v1241 = vsub.f32 %v1229, %v1237
    %v1242 = vsub.f32 %v1232, %v1240
    %v1243 = vmul.f32 %v1241, 1.442695
    %v1244 = vpow.pop %v1243
    %v1245 = vmul.f32 %v1242, 1.442695
    %v1246 = vpow.pop %v1245
    %v1247 = vsel %vm991, %v1244, 0.0
    %1248 = vadd.xlane.f32.xlu0 %v1247
    %v1249 = vpop.xlane.xlu0 %1248
    %v1250 = vsel %vm991, %v1246, 0.0
    %1251 = vadd.xlane.f32.xlu0 %v1250
    %v1252 = vpop.xlane.xlu0 %1251
    %v1253 = vrcp.pop %v1249
    %v1254 = vmul.f32 %v1244, %v1253
    %v1255 = vrcp.pop %v1252
    %v1256 = vmul.f32 %v1246, %v1255
    %v1257 = vpack.c.bf16 %v1256, %v1254
    %v1259 = vsel %vm991, %v1257, 0
    %1261 = vmatprep.subr.bf16.mxu0 0
    %1262 = vmatpush1.bf16.msra.mxu0 %v1187
    %1263 = vmatprep.subr.bf16.mxu0 0
    %1264 = vmatpush1.bf16.msra.mxu0 0
    %1265 = vmatprep.subr.bf16.mxu0 0
    %1266 = vmatpush1.bf16.msra.mxu0 0
    %1267 = vmatprep.subr.bf16.mxu0 0
    %1268 = vmatpush1.bf16.msra.mxu0 0
    %1269 = vmatprep.subr.bf16.mxu0 0
    %1270 = vmatpush1.bf16.msra.mxu0 0
    %1271 = vmatprep.subr.bf16.mxu0 0
    %1272 = vmatpush1.bf16.msra.mxu0 0
    %1273 = vmatprep.subr.bf16.mxu0 0
    %1274 = vmatpush1.bf16.msra.mxu0 0
    %1275 = vmatprep.subr.bf16.mxu0 0
    %1276 = vmatpush1.bf16.msra.mxu0 0
    %1277 = vmatprep.subr.bf16.mxu0 0
    %1278 = vmatpush1.bf16.msra.mxu0 0
    %1279 = vmatprep.subr.bf16.mxu0 0
    %1280 = vmatpush1.bf16.msra.mxu0 0
    %1281 = vmatprep.subr.bf16.mxu0 0
    %1282 = vmatpush1.bf16.msra.mxu0 0
    %1283 = vmatprep.subr.bf16.mxu0 0
    %1284 = vmatpush1.bf16.msra.mxu0 0
    %1285 = vmatprep.subr.bf16.mxu0 0
    %1286 = vmatpush1.bf16.msra.mxu0 0
    %1287 = vmatprep.subr.bf16.mxu0 0
    %1288 = vmatpush1.bf16.msra.mxu0 0
    %1289 = vmatprep.subr.bf16.mxu0 0
    %1290 = vmatpush1.bf16.msra.mxu0 0
    %1291 = vmatprep.subr.bf16.mxu0 0
    %1292 = vmatpush1.bf16.msra.mxu0 0
    %1293 = vmatprep.mubr.bf16.mxu0 0
    %1294 = vmatmul.mubr.bf16.gmra.mrb[0].mxu0 %v1259
    %v1295 = vpop.f32.mrb[0].mxu0
    %v1296 = vadd.f32 0.0, %v1295
    %v1297 = vpop.f32.mrb[0].mxu0
    %v1298 = vpop.f32.mrb[0].mxu0
    %v1299 = vadd.f32 0.0, %v1298
    %v1300 = vpop.f32.mrb[0].mxu0
    %1301 = vdwg.mxu0
    %1303 = vrot.lane.b32.xlu0 %v1185, 64
    %v1304 = vpop.permute.xlu0 %1303
    %1306 = vrot.lane.b32.xlu0 %v1186, 64
    %v1307 = vpop.permute.xlu0 %1306
    %v1309 = vsel %vm943, %v1304, 0
    %v1312 = vsel %vm943, %v1307, 0
    %1314 = vmatprep.subr.bf16.mxu0 0
    %1315 = vmatpush1.bf16.xpose.msra.mxu0 %v1312
    %1316 = vmatprep.subr.bf16.mxu0 0
    %1317 = vmatpush1.bf16.xpose.msra.mxu0 0
    %1318 = vmatprep.subr.bf16.mxu0 0
    %1319 = vmatpush1.bf16.xpose.msra.mxu0 0
    %1320 = vmatprep.subr.bf16.mxu0 0
    %1321 = vmatpush1.bf16.xpose.msra.mxu0 0
    %1322 = vmatprep.subr.bf16.mxu0 0
    %1323 = vmatpush1.bf16.xpose.msra.mxu0 0
    %1324 = vmatprep.subr.bf16.mxu0 0
    %1325 = vmatpush1.bf16.xpose.msra.mxu0 0
    %1326 = vmatprep.subr.bf16.mxu0 0
    %1327 = vmatpush1.bf16.xpose.msra.mxu0 0
    %1328 = vmatprep.subr.bf16.mxu0 0
    %1329 = vmatpush1.bf16.xpose.msra.mxu0 0
    %1330 = vmatprep.subr.bf16.mxu0 0
    %1331 = vmatpush1.bf16.xpose.msra.mxu0 0
    %1332 = vmatprep.subr.bf16.mxu0 0
    %1333 = vmatpush1.bf16.xpose.msra.mxu0 0
    %1334 = vmatprep.subr.bf16.mxu0 0
    %1335 = vmatpush1.bf16.xpose.msra.mxu0 0
    %1336 = vmatprep.subr.bf16.mxu0 0
    %1337 = vmatpush1.bf16.xpose.msra.mxu0 0
    %1338 = vmatprep.subr.bf16.mxu0 0
    %1339 = vmatpush1.bf16.xpose.msra.mxu0 0
    %1340 = vmatprep.subr.bf16.mxu0 0
    %1341 = vmatpush1.bf16.xpose.msra.mxu0 0
    %1342 = vmatprep.subr.bf16.mxu0 0
    %1343 = vmatpush1.bf16.xpose.msra.mxu0 0
    %1344 = vmatprep.subr.bf16.mxu0 0
    %1345 = vmatpush1.bf16.xpose.msra.mxu0 0
    %1346 = vmatprep.mubr.bf16.mxu0 0
    %1347 = vmatmul.mubr.bf16.gmra.mrb[0].mxu0 %v1309
    %v1348 = vpop.f32.mrb[0].mxu0
    %v1349 = vadd.f32 %v128, %v1348
    %v1350 = vpop.f32.mrb[0].mxu0
    %v1351 = vpop.f32.mrb[0].mxu0
    %v1352 = vadd.f32 %v129, %v1351
    %v1353 = vpop.f32.mrb[0].mxu0
    %1354 = vdwg.mxu0
    %v1355 = vsel %vm991, %v1349, -inf
    %1356 = vmax.xlane.f32.xlu0 %v1355
    %v1357 = vpop.xlane.xlu0 %1356
    %v1358 = vsel %vm991, %v1352, -inf
    %1359 = vmax.xlane.f32.xlu0 %v1358
    %v1360 = vpop.xlane.xlu0 %1359
    %v1361 = vsub.f32 %v1349, %v1357
    %v1362 = vsub.f32 %v1352, %v1360
    %v1363 = vmul.f32 %v1361, 1.442695
    %v1364 = vpow.pop %v1363
    %v1365 = vmul.f32 %v1362, 1.442695
    %v1366 = vpow.pop %v1365
    %v1367 = vsel %vm991, %v1364, 0.0
    %1368 = vadd.xlane.f32.xlu0 %v1367
    %v1369 = vpop.xlane.xlu0 %1368
    %v1370 = vsel %vm991, %v1366, 0.0
    %1371 = vadd.xlane.f32.xlu0 %v1370
    %v1372 = vpop.xlane.xlu0 %1371
    %v1373 = vrcp.pop %v1369
    %v1374 = vmul.f32 %v1364, %v1373
    %v1375 = vrcp.pop %v1372
    %v1376 = vmul.f32 %v1366, %v1375
    %v1377 = vpack.c.bf16 %v1376, %v1374
    %1379 = vrot.lane.b32.xlu0 %v1187, 64
    %v1380 = vpop.permute.xlu0 %1379
    %v1383 = vsel %vm991, %v1377, 0
    %1385 = vmatprep.subr.bf16.mxu0 0
    %1386 = vmatpush1.bf16.msra.mxu0 %v1380
    %1387 = vmatprep.subr.bf16.mxu0 0
    %1388 = vmatpush1.bf16.msra.mxu0 0
    %1389 = vmatprep.subr.bf16.mxu0 0
    %1390 = vmatpush1.bf16.msra.mxu0 0
    %1391 = vmatprep.subr.bf16.mxu0 0
    %1392 = vmatpush1.bf16.msra.mxu0 0
    %1393 = vmatprep.subr.bf16.mxu0 0
    %1394 = vmatpush1.bf16.msra.mxu0 0
    %1395 = vmatprep.subr.bf16.mxu0 0
    %1396 = vmatpush1.bf16.msra.mxu0 0
    %1397 = vmatprep.subr.bf16.mxu0 0
    %1398 = vmatpush1.bf16.msra.mxu0 0
    %1399 = vmatprep.subr.bf16.mxu0 0
    %1400 = vmatpush1.bf16.msra.mxu0 0
    %1401 = vmatprep.subr.bf16.mxu0 0
    %1402 = vmatpush1.bf16.msra.mxu0 0
    %1403 = vmatprep.subr.bf16.mxu0 0
    %1404 = vmatpush1.bf16.msra.mxu0 0
    %1405 = vmatprep.subr.bf16.mxu0 0
    %1406 = vmatpush1.bf16.msra.mxu0 0
    %1407 = vmatprep.subr.bf16.mxu0 0
    %1408 = vmatpush1.bf16.msra.mxu0 0
    %1409 = vmatprep.subr.bf16.mxu0 0
    %1410 = vmatpush1.bf16.msra.mxu0 0
    %1411 = vmatprep.subr.bf16.mxu0 0
    %1412 = vmatpush1.bf16.msra.mxu0 0
    %1413 = vmatprep.subr.bf16.mxu0 0
    %1414 = vmatpush1.bf16.msra.mxu0 0
    %1415 = vmatprep.subr.bf16.mxu0 0
    %1416 = vmatpush1.bf16.msra.mxu0 0
    %1417 = vmatprep.mubr.bf16.mxu0 0
    %1418 = vmatmul.mubr.bf16.gmra.mrb[0].mxu0 %v1383
    %v1419 = vpop.f32.mrb[0].mxu0
    %v1420 = vadd.f32 0.0, %v1419
    %v1421 = vpop.f32.mrb[0].mxu0
    %v1422 = vpop.f32.mrb[0].mxu0
    %v1423 = vadd.f32 0.0, %v1422
    %v1424 = vpop.f32.mrb[0].mxu0
    %1425 = vdwg.mxu0
    %1428 = vrot.lane.b32.xlu0 %v1177, 64
    %v1429 = vpop.permute.xlu0 %1428
    %1430 = vrot.lane.b32.xlu0 %v1180, 64
    %v1431 = vpop.permute.xlu0 %1430
    %1436 = vrot.lane.b32.xlu0 %v1420, 64
    %v1437 = vpop.permute.xlu0 %1436
    %1438 = vrot.lane.b32.xlu0 %v1423, 64
    %v1439 = vpop.permute.xlu0 %1438
    %v1442 = vsel %vm943, %v1053, %v1429
    %v1443 = vsel %vm943, %v1056, %v1431
    %v1444 = vsel %vm943, %v1296, %v1437
    %v1445 = vsel %vm943, %v1299, %v1439
    %v1446 = vld [vmem:[%s6] sm:$0xff]
    %v1447 = vld [vmem:[%s6 + $0x8] sm:$0xff]
    %v1448 = vld [vmem:[%s6 + $0x10] sm:$0xff]
    %v1449 = vld [vmem:[%s6 + $0x18] sm:$0xff]
    %v1450 = vld [vmem:[%s6 + $0x20] sm:$0xff]
    %v1451 = vld [vmem:[%s6 + $0x28] sm:$0xff]
    %v1452 = vld [vmem:[%s6 + $0x30] sm:$0xff]
    %v1453 = vld [vmem:[%s6 + $0x38] sm:$0xff]
    %v1454 = vld [vmem:[%s6 + $0x40] sm:$0xff]
    %v1455 = vld [vmem:[%s6 + $0x48] sm:$0xff]
    %v1456 = vld [vmem:[%s6 + $0x50] sm:$0xff]
    %v1457 = vld [vmem:[%s6 + $0x58] sm:$0xff]
    %v1458 = vld [vmem:[%s6 + $0x60] sm:$0xff]
    %v1459 = vld [vmem:[%s6 + $0x68] sm:$0xff]
    %v1460 = vld [vmem:[%s6 + $0x70] sm:$0xff]
    %v1461 = vld [vmem:[%s6 + $0x78] sm:$0xff]
    %v1462 = vld [vmem:[%s6 + $0x80] sm:$0xff]
    %v1463 = vld [vmem:[%s6 + $0x88] sm:$0xff]
    %v1464 = vld [vmem:[%s6 + $0x90] sm:$0xff]
    %v1465 = vld [vmem:[%s6 + $0x98] sm:$0xff]
    %v1466 = vld [vmem:[%s6 + $0xa0] sm:$0xff]
    %v1467 = vld [vmem:[%s6 + $0xa8] sm:$0xff]
    %v1468 = vld [vmem:[%s6 + $0xb0] sm:$0xff]
    %v1469 = vld [vmem:[%s6 + $0xb8] sm:$0xff]
    %v1470 = vld [vmem:[%s6 + $0xc0] sm:$0xff]
    %v1471 = vld [vmem:[%s6 + $0xc8] sm:$0xff]
    %v1472 = vld [vmem:[%s6 + $0xd0] sm:$0xff]
    %v1473 = vld [vmem:[%s6 + $0xd8] sm:$0xff]
    %v1474 = vld [vmem:[%s6 + $0xe0] sm:$0xff]
    %v1475 = vld [vmem:[%s6 + $0xe8] sm:$0xff]
    %v1476 = vld [vmem:[%s6 + $0xf0] sm:$0xff]
    %v1477 = vld [vmem:[%s6 + $0xf8] sm:$0xff]
    %v1478 = vpack.c.bf16 %v1443, %v1442
    %v1479 = vpack.c.bf16 %v1445, %v1444
    %v1480 = vld [vmem:[%s7] sm:$0x3]
    %v1482 = vlaneseq
    %v1483 = vshrl.u32 %v1482, 7
    %v1484 = vsub.s32 0, %v1483
    %v1485 = vrot.slane %v1480, %v1484
    %v1486 = vlaneseq
    %v1487 = vshrl.u32 %v1486, 7
    %v1488 = vsub.s32 1, %v1487
    %v1489 = vrot.slane %v1480, %v1488
    %v1524 = vunpack.c.l.b16 %v1446
    %v1525 = vunpack.c.h.b16 %v1446
    %v1526 = vunpack.c.l.b16 %v1447
    %v1527 = vunpack.c.h.b16 %v1447
    %v1528 = vunpack.c.l.b16 %v1448
    %v1529 = vunpack.c.h.b16 %v1448
    %v1530 = vunpack.c.l.b16 %v1449
    %v1531 = vunpack.c.h.b16 %v1449
    %v1532 = vunpack.c.l.b16 %v1450
    %v1533 = vunpack.c.h.b16 %v1450
    %v1534 = vunpack.c.l.b16 %v1451
    %v1535 = vunpack.c.h.b16 %v1451
    %v1536 = vunpack.c.l.b16 %v1452
    %v1537 = vunpack.c.h.b16 %v1452
    %v1538 = vunpack.c.l.b16 %v1453
    %v1539 = vunpack.c.h.b16 %v1453
    %v1540 = vunpack.c.l.b16 %v1454
    %v1541 = vunpack.c.h.b16 %v1454
    %v1542 = vunpack.c.l.b16 %v1455
    %v1543 = vunpack.c.h.b16 %v1455
    %v1544 = vunpack.c.l.b16 %v1456
    %v1545 = vunpack.c.h.b16 %v1456
    %v1546 = vunpack.c.l.b16 %v1457
    %v1547 = vunpack.c.h.b16 %v1457
    %v1548 = vunpack.c.l.b16 %v1458
    %v1549 = vunpack.c.h.b16 %v1458
    %v1550 = vunpack.c.l.b16 %v1459
    %v1551 = vunpack.c.h.b16 %v1459
    %v1552 = vunpack.c.l.b16 %v1460
    %v1553 = vunpack.c.h.b16 %v1460
    %v1554 = vunpack.c.l.b16 %v1461
    %v1555 = vunpack.c.h.b16 %v1461
    %v1556 = vunpack.c.l.b16 %v1462
    %v1557 = vunpack.c.h.b16 %v1462
    %v1558 = vunpack.c.l.b16 %v1463
    %v1559 = vunpack.c.h.b16 %v1463
    %v1560 = vunpack.c.l.b16 %v1464
    %v1561 = vunpack.c.h.b16 %v1464
    %v1562 = vunpack.c.l.b16 %v1465
    %v1563 = vunpack.c.h.b16 %v1465
    %v1564 = vunpack.c.l.b16 %v1466
    %v1565 = vunpack.c.h.b16 %v1466
    %v1566 = vunpack.c.l.b16 %v1467
    %v1567 = vunpack.c.h.b16 %v1467
    %v1568 = vunpack.c.l.b16 %v1468
    %v1569 = vunpack.c.h.b16 %v1468
    %v1570 = vunpack.c.l.b16 %v1469
    %v1571 = vunpack.c.h.b16 %v1469
    %v1572 = vunpack.c.l.b16 %v1470
    %v1573 = vunpack.c.h.b16 %v1470
    %v1574 = vunpack.c.l.b16 %v1471
    %v1575 = vunpack.c.h.b16 %v1471
    %v1576 = vunpack.c.l.b16 %v1472
    %v1577 = vunpack.c.h.b16 %v1472
    %v1578 = vunpack.c.l.b16 %v1473
    %v1579 = vunpack.c.h.b16 %v1473
    %v1580 = vunpack.c.l.b16 %v1474
    %v1581 = vunpack.c.h.b16 %v1474
    %v1582 = vunpack.c.l.b16 %v1475
    %v1583 = vunpack.c.h.b16 %v1475
    %v1584 = vunpack.c.l.b16 %v1476
    %v1585 = vunpack.c.h.b16 %v1476
    %v1586 = vunpack.c.l.b16 %v1477
    %v1587 = vunpack.c.h.b16 %v1477
    %v1588 = vpack.c.b16 %v1526, %v1524
    %v1589 = vpack.c.b16 %v1527, %v1525
    %v1590 = vpack.c.b16 %v1530, %v1528
    %v1591 = vpack.c.b16 %v1531, %v1529
    %v1592 = vpack.c.b16 %v1534, %v1532
    %v1593 = vpack.c.b16 %v1535, %v1533
    %v1594 = vpack.c.b16 %v1538, %v1536
    %v1595 = vpack.c.b16 %v1539, %v1537
    %v1596 = vpack.c.b16 %v1542, %v1540
    %v1597 = vpack.c.b16 %v1543, %v1541
    %v1598 = vpack.c.b16 %v1546, %v1544
    %v1599 = vpack.c.b16 %v1547, %v1545
    %v1600 = vpack.c.b16 %v1550, %v1548
    %v1601 = vpack.c.b16 %v1551, %v1549
    %v1602 = vpack.c.b16 %v1554, %v1552
    %v1603 = vpack.c.b16 %v1555, %v1553
    %v1604 = vpack.c.b16 %v1558, %v1556
    %v1605 = vpack.c.b16 %v1559, %v1557
    %v1606 = vpack.c.b16 %v1562, %v1560
    %v1607 = vpack.c.b16 %v1563, %v1561
    %v1608 = vpack.c.b16 %v1566, %v1564
    %v1609 = vpack.c.b16 %v1567, %v1565
    %v1610 = vpack.c.b16 %v1570, %v1568
    %v1611 = vpack.c.b16 %v1571, %v1569
    %v1612 = vpack.c.b16 %v1574, %v1572
    %v1613 = vpack.c.b16 %v1575, %v1573
    %v1614 = vpack.c.b16 %v1578, %v1576
    %v1615 = vpack.c.b16 %v1579, %v1577
    %v1616 = vpack.c.b16 %v1582, %v1580
    %v1617 = vpack.c.b16 %v1583, %v1581
    %v1618 = vpack.c.b16 %v1586, %v1584
    %v1619 = vpack.c.b16 %v1587, %v1585
    %1652 = vmatprep.subr.bf16.mxu0 %v1589
    %1653 = vmatpush1.bf16.msra.mxu0 %v1588
    %1654 = vmatprep.subr.bf16.mxu0 %v1591
    %1655 = vmatpush1.bf16.msra.mxu0 %v1590
    %1656 = vmatprep.subr.bf16.mxu0 %v1593
    %1657 = vmatpush1.bf16.msra.mxu0 %v1592
    %1658 = vmatprep.subr.bf16.mxu0 %v1595
    %1659 = vmatpush1.bf16.msra.mxu0 %v1594
    %1660 = vmatprep.subr.bf16.mxu0 %v1597
    %1661 = vmatpush1.bf16.msra.mxu0 %v1596
    %1662 = vmatprep.subr.bf16.mxu0 %v1599
    %1663 = vmatpush1.bf16.msra.mxu0 %v1598
    %1664 = vmatprep.subr.bf16.mxu0 %v1601
    %1665 = vmatpush1.bf16.msra.mxu0 %v1600
    %1666 = vmatprep.subr.bf16.mxu0 %v1603
    %1667 = vmatpush1.bf16.msra.mxu0 %v1602
    %1668 = vmatprep.subr.bf16.mxu0 %v1605
    %1669 = vmatpush1.bf16.msra.mxu0 %v1604
    %1670 = vmatprep.subr.bf16.mxu0 %v1607
    %1671 = vmatpush1.bf16.msra.mxu0 %v1606
    %1672 = vmatprep.subr.bf16.mxu0 %v1609
    %1673 = vmatpush1.bf16.msra.mxu0 %v1608
    %1674 = vmatprep.subr.bf16.mxu0 %v1611
    %1675 = vmatpush1.bf16.msra.mxu0 %v1610
    %1676 = vmatprep.subr.bf16.mxu0 %v1613
    %1677 = vmatpush1.bf16.msra.mxu0 %v1612
    %1678 = vmatprep.subr.bf16.mxu0 %v1615
    %1679 = vmatpush1.bf16.msra.mxu0 %v1614
    %1680 = vmatprep.subr.bf16.mxu0 %v1617
    %1681 = vmatpush1.bf16.msra.mxu0 %v1616
    %1682 = vmatprep.subr.bf16.mxu0 %v1619
    %1683 = vmatpush1.bf16.msra.mxu0 %v1618
    %1684 = vmatprep.mubr.bf16.mxu0 %v1479
    %1685 = vmatmul.mubr.bf16.gmra.mrb[0].mxu0 %v1478
    %v1686 = vpop.f32.mrb[0].mxu0
    %v1687 = vadd.f32 %v1485, %v1686
    %v1688 = vpop.f32.mrb[0].mxu0
    %v1689 = vadd.f32 %v1489, %v1688
    %v1690 = vpop.f32.mrb[0].mxu0
    %v1691 = vadd.f32 %v1485, %v1690
    %v1692 = vpop.f32.mrb[0].mxu0
    %v1693 = vadd.f32 %v1489, %v1692
    %1694 = vdwg.mxu0
    %v1695 = vadd.f32 %v1687, %v195
    %v1696 = vadd.f32 %v1689, %v196
    %v1697 = vadd.f32 %v1691, %v197
    %v1698 = vadd.f32 %v1693, %v198
    %v1699 = vld [vmem:[%s8] sm:$0x3]
    %v1700 = vld [vmem:[%s9] sm:$0x3]
    %v1701 = vadd.f32 %v1695, %v1696
    %1702 = vadd.xlane.f32.xlu0 %v1701
    %v1703 = vpop.xlane.xlu0 %1702
    %v1704 = vadd.f32 %v1697, %v1698
    %1705 = vadd.xlane.f32.xlu0 %v1704
    %v1706 = vpop.xlane.xlu0 %1705
    %v1707 = vmul.f32 %v1703, %v142
    %v1708 = vmul.f32 %v1706, %v142
    %v1709 = vsub.f32 %v1695, %v1707
    %v1710 = vsub.f32 %v1696, %v1707
    %v1711 = vsub.f32 %v1697, %v1708
    %v1712 = vsub.f32 %v1698, %v1708
    %v1713 = vmul.f32 %v1709, %v1709
    %v1714 = vmul.f32 %v1710, %v1710
    %v1715 = vmul.f32 %v1711, %v1711
    %v1716 = vmul.f32 %v1712, %v1712
    %v1717 = vadd.f32 %v1713, %v1714
    %1718 = vadd.xlane.f32.xlu0 %v1717
    %v1719 = vpop.xlane.xlu0 %1718
    %v1720 = vadd.f32 %v1715, %v1716
    %1721 = vadd.xlane.f32.xlu0 %v1720
    %v1722 = vpop.xlane.xlu0 %1721
    %v1723 = vmul.f32 %v1719, %v142
    %v1724 = vmul.f32 %v1722, %v142
    %v1725 = vadd.f32 %v1723, 1e-12
    %v1726 = vadd.f32 %v1724, 1e-12
    %v1727 = vrsqrt.pop %v1725
    %v1728 = vrsqrt.pop %v1726
    %v1729 = vmul.f32 %v1709, %v1727
    %v1730 = vmul.f32 %v1710, %v1727
    %v1731 = vmul.f32 %v1711, %v1728
    %v1732 = vmul.f32 %v1712, %v1728
    %v1734 = vlaneseq
    %v1735 = vshrl.u32 %v1734, 7
    %v1736 = vsub.s32 0, %v1735
    %v1737 = vrot.slane %v1699, %v1736
    %v1738 = vlaneseq
    %v1739 = vshrl.u32 %v1738, 7
    %v1740 = vsub.s32 1, %v1739
    %v1741 = vrot.slane %v1699, %v1740
    %v1744 = vmul.f32 %v1729, %v1737
    %v1745 = vmul.f32 %v1730, %v1741
    %v1746 = vmul.f32 %v1731, %v1737
    %v1747 = vmul.f32 %v1732, %v1741
    %v1749 = vlaneseq
    %v1750 = vshrl.u32 %v1749, 7
    %v1751 = vsub.s32 0, %v1750
    %v1752 = vrot.slane %v1700, %v1751
    %v1753 = vlaneseq
    %v1754 = vshrl.u32 %v1753, 7
    %v1755 = vsub.s32 1, %v1754
    %v1756 = vrot.slane %v1700, %v1755
    %v1759 = vadd.f32 %v1744, %v1752
    %v1760 = vadd.f32 %v1745, %v1756
    %v1761 = vadd.f32 %v1746, %v1752
    %v1762 = vadd.f32 %v1747, %v1756
    %v1763 = vld [vmem:[#allocation5] sm:$0xff]
    %v1764 = vld [vmem:[#allocation5 + $0x8] sm:$0xff]
    %v1765 = vld [vmem:[#allocation5 + $0x10] sm:$0xff]
    %v1766 = vld [vmem:[#allocation5 + $0x18] sm:$0xff]
    %v1767 = vld [vmem:[#allocation5 + $0x20] sm:$0xff]
    %v1768 = vld [vmem:[#allocation5 + $0x28] sm:$0xff]
    %v1769 = vld [vmem:[#allocation5 + $0x30] sm:$0xff]
    %v1770 = vld [vmem:[#allocation5 + $0x38] sm:$0xff]
    %v1771 = vld [vmem:[#allocation5 + $0x40] sm:$0xff]
    %v1772 = vld [vmem:[#allocation5 + $0x48] sm:$0xff]
    %v1773 = vld [vmem:[#allocation5 + $0x50] sm:$0xff]
    %v1774 = vld [vmem:[#allocation5 + $0x58] sm:$0xff]
    %v1775 = vld [vmem:[#allocation5 + $0x60] sm:$0xff]
    %v1776 = vld [vmem:[#allocation5 + $0x68] sm:$0xff]
    %v1777 = vld [vmem:[#allocation5 + $0x70] sm:$0xff]
    %v1778 = vld [vmem:[#allocation5 + $0x78] sm:$0xff]
    %v1779 = vld [vmem:[#allocation5 + $0x80] sm:$0xff]
    %v1780 = vld [vmem:[#allocation5 + $0x88] sm:$0xff]
    %v1781 = vld [vmem:[#allocation5 + $0x90] sm:$0xff]
    %v1782 = vld [vmem:[#allocation5 + $0x98] sm:$0xff]
    %v1783 = vld [vmem:[#allocation5 + $0xa0] sm:$0xff]
    %v1784 = vld [vmem:[#allocation5 + $0xa8] sm:$0xff]
    %v1785 = vld [vmem:[#allocation5 + $0xb0] sm:$0xff]
    %v1786 = vld [vmem:[#allocation5 + $0xb8] sm:$0xff]
    %v1787 = vld [vmem:[#allocation5 + $0xc0] sm:$0xff]
    %v1788 = vld [vmem:[#allocation5 + $0xc8] sm:$0xff]
    %v1789 = vld [vmem:[#allocation5 + $0xd0] sm:$0xff]
    %v1790 = vld [vmem:[#allocation5 + $0xd8] sm:$0xff]
    %v1791 = vld [vmem:[#allocation5 + $0xe0] sm:$0xff]
    %v1792 = vld [vmem:[#allocation5 + $0xe8] sm:$0xff]
    %v1793 = vld [vmem:[#allocation5 + $0xf0] sm:$0xff]
    %v1794 = vld [vmem:[#allocation5 + $0xf8] sm:$0xff]
    %v1795 = vld [vmem:[#allocation5 + $0x100] sm:$0xff]
    %v1796 = vld [vmem:[#allocation5 + $0x108] sm:$0xff]
    %v1797 = vld [vmem:[#allocation5 + $0x110] sm:$0xff]
    %v1798 = vld [vmem:[#allocation5 + $0x118] sm:$0xff]
    %v1799 = vld [vmem:[#allocation5 + $0x120] sm:$0xff]
    %v1800 = vld [vmem:[#allocation5 + $0x128] sm:$0xff]
    %v1801 = vld [vmem:[#allocation5 + $0x130] sm:$0xff]
    %v1802 = vld [vmem:[#allocation5 + $0x138] sm:$0xff]
    %v1803 = vld [vmem:[#allocation5 + $0x140] sm:$0xff]
    %v1804 = vld [vmem:[#allocation5 + $0x148] sm:$0xff]
    %v1805 = vld [vmem:[#allocation5 + $0x150] sm:$0xff]
    %v1806 = vld [vmem:[#allocation5 + $0x158] sm:$0xff]
    %v1807 = vld [vmem:[#allocation5 + $0x160] sm:$0xff]
    %v1808 = vld [vmem:[#allocation5 + $0x168] sm:$0xff]
    %v1809 = vld [vmem:[#allocation5 + $0x170] sm:$0xff]
    %v1810 = vld [vmem:[#allocation5 + $0x178] sm:$0xff]
    %v1811 = vld [vmem:[#allocation5 + $0x180] sm:$0xff]
    %v1812 = vld [vmem:[#allocation5 + $0x188] sm:$0xff]
    %v1813 = vld [vmem:[#allocation5 + $0x190] sm:$0xff]
    %v1814 = vld [vmem:[#allocation5 + $0x198] sm:$0xff]
    %v1815 = vld [vmem:[#allocation5 + $0x1a0] sm:$0xff]
    %v1816 = vld [vmem:[#allocation5 + $0x1a8] sm:$0xff]
    %v1817 = vld [vmem:[#allocation5 + $0x1b0] sm:$0xff]
    %v1818 = vld [vmem:[#allocation5 + $0x1b8] sm:$0xff]
    %v1819 = vld [vmem:[#allocation5 + $0x1c0] sm:$0xff]
    %v1820 = vld [vmem:[#allocation5 + $0x1c8] sm:$0xff]
    %v1821 = vld [vmem:[#allocation5 + $0x1d0] sm:$0xff]
    %v1822 = vld [vmem:[#allocation5 + $0x1d8] sm:$0xff]
    %v1823 = vld [vmem:[#allocation5 + $0x1e0] sm:$0xff]
    %v1824 = vld [vmem:[#allocation5 + $0x1e8] sm:$0xff]
    %v1825 = vld [vmem:[#allocation5 + $0x1f0] sm:$0xff]
    %v1826 = vld [vmem:[#allocation5 + $0x1f8] sm:$0xff]
    %v1827 = vpack.c.bf16 %v1761, %v1759
    %v1828 = vpack.c.bf16 %v1762, %v1760
    %v1829 = vld [vmem:[%s11] sm:$0xf]
    %v1831 = vlaneseq
    %v1832 = vshrl.u32 %v1831, 7
    %v1833 = vsub.s32 0, %v1832
    %v1834 = vrot.slane %v1829, %v1833
    %v1835 = vlaneseq
    %v1836 = vshrl.u32 %v1835, 7
    %v1837 = vsub.s32 1, %v1836
    %v1838 = vrot.slane %v1829, %v1837
    %v1839 = vlaneseq
    %v1840 = vshrl.u32 %v1839, 7
    %v1841 = vsub.s32 2, %v1840
    %v1842 = vrot.slane %v1829, %v1841
    %v1843 = vlaneseq
    %v1844 = vshrl.u32 %v1843, 7
    %v1845 = vsub.s32 3, %v1844
    %v1846 = vrot.slane %v1829, %v1845
    %v1915 = vunpack.c.l.b16 %v1763
    %v1916 = vunpack.c.h.b16 %v1763
    %v1917 = vunpack.c.l.b16 %v1764
    %v1918 = vunpack.c.h.b16 %v1764
    %v1919 = vunpack.c.l.b16 %v1765
    %v1920 = vunpack.c.h.b16 %v1765
    %v1921 = vunpack.c.l.b16 %v1766
    %v1922 = vunpack.c.h.b16 %v1766
    %v1923 = vunpack.c.l.b16 %v1767
    %v1924 = vunpack.c.h.b16 %v1767
    %v1925 = vunpack.c.l.b16 %v1768
    %v1926 = vunpack.c.h.b16 %v1768
    %v1927 = vunpack.c.l.b16 %v1769
    %v1928 = vunpack.c.h.b16 %v1769
    %v1929 = vunpack.c.l.b16 %v1770
    %v1930 = vunpack.c.h.b16 %v1770
    %v1931 = vunpack.c.l.b16 %v1771
    %v1932 = vunpack.c.h.b16 %v1771
    %v1933 = vunpack.c.l.b16 %v1772
    %v1934 = vunpack.c.h.b16 %v1772
    %v1935 = vunpack.c.l.b16 %v1773
    %v1936 = vunpack.c.h.b16 %v1773
    %v1937 = vunpack.c.l.b16 %v1774
    %v1938 = vunpack.c.h.b16 %v1774
    %v1939 = vunpack.c.l.b16 %v1775
    %v1940 = vunpack.c.h.b16 %v1775
    %v1941 = vunpack.c.l.b16 %v1776
    %v1942 = vunpack.c.h.b16 %v1776
    %v1943 = vunpack.c.l.b16 %v1777
    %v1944 = vunpack.c.h.b16 %v1777
    %v1945 = vunpack.c.l.b16 %v1778
    %v1946 = vunpack.c.h.b16 %v1778
    %v1947 = vunpack.c.l.b16 %v1779
    %v1948 = vunpack.c.h.b16 %v1779
    %v1949 = vunpack.c.l.b16 %v1780
    %v1950 = vunpack.c.h.b16 %v1780
    %v1951 = vunpack.c.l.b16 %v1781
    %v1952 = vunpack.c.h.b16 %v1781
    %v1953 = vunpack.c.l.b16 %v1782
    %v1954 = vunpack.c.h.b16 %v1782
    %v1955 = vunpack.c.l.b16 %v1783
    %v1956 = vunpack.c.h.b16 %v1783
    %v1957 = vunpack.c.l.b16 %v1784
    %v1958 = vunpack.c.h.b16 %v1784
    %v1959 = vunpack.c.l.b16 %v1785
    %v1960 = vunpack.c.h.b16 %v1785
    %v1961 = vunpack.c.l.b16 %v1786
    %v1962 = vunpack.c.h.b16 %v1786
    %v1963 = vunpack.c.l.b16 %v1787
    %v1964 = vunpack.c.h.b16 %v1787
    %v1965 = vunpack.c.l.b16 %v1788
    %v1966 = vunpack.c.h.b16 %v1788
    %v1967 = vunpack.c.l.b16 %v1789
    %v1968 = vunpack.c.h.b16 %v1789
    %v1969 = vunpack.c.l.b16 %v1790
    %v1970 = vunpack.c.h.b16 %v1790
    %v1971 = vunpack.c.l.b16 %v1791
    %v1972 = vunpack.c.h.b16 %v1791
    %v1973 = vunpack.c.l.b16 %v1792
    %v1974 = vunpack.c.h.b16 %v1792
    %v1975 = vunpack.c.l.b16 %v1793
    %v1976 = vunpack.c.h.b16 %v1793
    %v1977 = vunpack.c.l.b16 %v1794
    %v1978 = vunpack.c.h.b16 %v1794
    %v1979 = vunpack.c.l.b16 %v1795
    %v1980 = vunpack.c.h.b16 %v1795
    %v1981 = vunpack.c.l.b16 %v1796
    %v1982 = vunpack.c.h.b16 %v1796
    %v1983 = vunpack.c.l.b16 %v1797
    %v1984 = vunpack.c.h.b16 %v1797
    %v1985 = vunpack.c.l.b16 %v1798
    %v1986 = vunpack.c.h.b16 %v1798
    %v1987 = vunpack.c.l.b16 %v1799
    %v1988 = vunpack.c.h.b16 %v1799
    %v1989 = vunpack.c.l.b16 %v1800
    %v1990 = vunpack.c.h.b16 %v1800
    %v1991 = vunpack.c.l.b16 %v1801
    %v1992 = vunpack.c.h.b16 %v1801
    %v1993 = vunpack.c.l.b16 %v1802
    %v1994 = vunpack.c.h.b16 %v1802
    %v1995 = vunpack.c.l.b16 %v1803
    %v1996 = vunpack.c.h.b16 %v1803
    %v1997 = vunpack.c.l.b16 %v1804
    %v1998 = vunpack.c.h.b16 %v1804
    %v1999 = vunpack.c.l.b16 %v1805
    %v2000 = vunpack.c.h.b16 %v1805
    %v2001 = vunpack.c.l.b16 %v1806
    %v2002 = vunpack.c.h.b16 %v1806
    %v2003 = vunpack.c.l.b16 %v1807
    %v2004 = vunpack.c.h.b16 %v1807
    %v2005 = vunpack.c.l.b16 %v1808
    %v2006 = vunpack.c.h.b16 %v1808
    %v2007 = vunpack.c.l.b16 %v1809
    %v2008 = vunpack.c.h.b16 %v1809
    %v2009 = vunpack.c.l.b16 %v1810
    %v2010 = vunpack.c.h.b16 %v1810
    %v2011 = vunpack.c.l.b16 %v1811
    %v2012 = vunpack.c.h.b16 %v1811
    %v2013 = vunpack.c.l.b16 %v1812
    %v2014 = vunpack.c.h.b16 %v1812
    %v2015 = vunpack.c.l.b16 %v1813
    %v2016 = vunpack.c.h.b16 %v1813
    %v2017 = vunpack.c.l.b16 %v1814
    %v2018 = vunpack.c.h.b16 %v1814
    %v2019 = vunpack.c.l.b16 %v1815
    %v2020 = vunpack.c.h.b16 %v1815
    %v2021 = vunpack.c.l.b16 %v1816
    %v2022 = vunpack.c.h.b16 %v1816
    %v2023 = vunpack.c.l.b16 %v1817
    %v2024 = vunpack.c.h.b16 %v1817
    %v2025 = vunpack.c.l.b16 %v1818
    %v2026 = vunpack.c.h.b16 %v1818
    %v2027 = vunpack.c.l.b16 %v1819
    %v2028 = vunpack.c.h.b16 %v1819
    %v2029 = vunpack.c.l.b16 %v1820
    %v2030 = vunpack.c.h.b16 %v1820
    %v2031 = vunpack.c.l.b16 %v1821
    %v2032 = vunpack.c.h.b16 %v1821
    %v2033 = vunpack.c.l.b16 %v1822
    %v2034 = vunpack.c.h.b16 %v1822
    %v2035 = vunpack.c.l.b16 %v1823
    %v2036 = vunpack.c.h.b16 %v1823
    %v2037 = vunpack.c.l.b16 %v1824
    %v2038 = vunpack.c.h.b16 %v1824
    %v2039 = vunpack.c.l.b16 %v1825
    %v2040 = vunpack.c.h.b16 %v1825
    %v2041 = vunpack.c.l.b16 %v1826
    %v2042 = vunpack.c.h.b16 %v1826
    %v2043 = vpack.c.b16 %v1919, %v1915
    %v2044 = vpack.c.b16 %v1920, %v1916
    %v2045 = vpack.c.b16 %v1921, %v1917
    %v2046 = vpack.c.b16 %v1922, %v1918
    %v2047 = vpack.c.b16 %v1927, %v1923
    %v2048 = vpack.c.b16 %v1928, %v1924
    %v2049 = vpack.c.b16 %v1929, %v1925
    %v2050 = vpack.c.b16 %v1930, %v1926
    %v2051 = vpack.c.b16 %v1935, %v1931
    %v2052 = vpack.c.b16 %v1936, %v1932
    %v2053 = vpack.c.b16 %v1937, %v1933
    %v2054 = vpack.c.b16 %v1938, %v1934
    %v2055 = vpack.c.b16 %v1943, %v1939
    %v2056 = vpack.c.b16 %v1944, %v1940
    %v2057 = vpack.c.b16 %v1945, %v1941
    %v2058 = vpack.c.b16 %v1946, %v1942
    %v2059 = vpack.c.b16 %v1951, %v1947
    %v2060 = vpack.c.b16 %v1952, %v1948
    %v2061 = vpack.c.b16 %v1953, %v1949
    %v2062 = vpack.c.b16 %v1954, %v1950
    %v2063 = vpack.c.b16 %v1959, %v1955
    %v2064 = vpack.c.b16 %v1960, %v1956
    %v2065 = vpack.c.b16 %v1961, %v1957
    %v2066 = vpack.c.b16 %v1962, %v1958
    %v2067 = vpack.c.b16 %v1967, %v1963
    %v2068 = vpack.c.b16 %v1968, %v1964
    %v2069 = vpack.c.b16 %v1969, %v1965
    %v2070 = vpack.c.b16 %v1970, %v1966
    %v2071 = vpack.c.b16 %v1975, %v1971
    %v2072 = vpack.c.b16 %v1976, %v1972
    %v2073 = vpack.c.b16 %v1977, %v1973
    %v2074 = vpack.c.b16 %v1978, %v1974
    %v2075 = vpack.c.b16 %v1983, %v1979
    %v2076 = vpack.c.b16 %v1984, %v1980
    %v2077 = vpack.c.b16 %v1985, %v1981
    %v2078 = vpack.c.b16 %v1986, %v1982
    %v2079 = vpack.c.b16 %v1991, %v1987
    %v2080 = vpack.c.b16 %v1992, %v1988
    %v2081 = vpack.c.b16 %v1993, %v1989
    %v2082 = vpack.c.b16 %v1994, %v1990
    %v2083 = vpack.c.b16 %v1999, %v1995
    %v2084 = vpack.c.b16 %v2000, %v1996
    %v2085 = vpack.c.b16 %v2001, %v1997
    %v2086 = vpack.c.b16 %v2002, %v1998
    %v2087 = vpack.c.b16 %v2007, %v2003
    %v2088 = vpack.c.b16 %v2008, %v2004
    %v2089 = vpack.c.b16 %v2009, %v2005
    %v2090 = vpack.c.b16 %v2010, %v2006
    %v2091 = vpack.c.b16 %v2015, %v2011
    %v2092 = vpack.c.b16 %v2016, %v2012
    %v2093 = vpack.c.b16 %v2017, %v2013
    %v2094 = vpack.c.b16 %v2018, %v2014
    %v2095 = vpack.c.b16 %v2023, %v2019
    %v2096 = vpack.c.b16 %v2024, %v2020
    %v2097 = vpack.c.b16 %v2025, %v2021
    %v2098 = vpack.c.b16 %v2026, %v2022
    %v2099 = vpack.c.b16 %v2031, %v2027
    %v2100 = vpack.c.b16 %v2032, %v2028
    %v2101 = vpack.c.b16 %v2033, %v2029
    %v2102 = vpack.c.b16 %v2034, %v2030
    %v2103 = vpack.c.b16 %v2039, %v2035
    %v2104 = vpack.c.b16 %v2040, %v2036
    %v2105 = vpack.c.b16 %v2041, %v2037
    %v2106 = vpack.c.b16 %v2042, %v2038
    %2171 = vmatprep.subr.bf16.mxu0 %v2044
    %2172 = vmatpush1.bf16.msra.mxu0 %v2043
    %2173 = vmatprep.subr.bf16.mxu0 %v2048
    %2174 = vmatpush1.bf16.msra.mxu0 %v2047
    %2175 = vmatprep.subr.bf16.mxu0 %v2052
    %2176 = vmatpush1.bf16.msra.mxu0 %v2051
    %2177 = vmatprep.subr.bf16.mxu0 %v2056
    %2178 = vmatpush1.bf16.msra.mxu0 %v2055
    %2179 = vmatprep.subr.bf16.mxu0 %v2060
    %2180 = vmatpush1.bf16.msra.mxu0 %v2059
    %2181 = vmatprep.subr.bf16.mxu0 %v2064
    %2182 = vmatpush1.bf16.msra.mxu0 %v2063
    %2183 = vmatprep.subr.bf16.mxu0 %v2068
    %2184 = vmatpush1.bf16.msra.mxu0 %v2067
    %2185 = vmatprep.subr.bf16.mxu0 %v2072
    %2186 = vmatpush1.bf16.msra.mxu0 %v2071
    %2187 = vmatprep.subr.bf16.mxu0 %v2076
    %2188 = vmatpush1.bf16.msra.mxu0 %v2075
    %2189 = vmatprep.subr.bf16.mxu0 %v2080
    %2190 = vmatpush1.bf16.msra.mxu0 %v2079
    %2191 = vmatprep.subr.bf16.mxu0 %v2084
    %2192 = vmatpush1.bf16.msra.mxu0 %v2083
    %2193 = vmatprep.subr.bf16.mxu0 %v2088
    %2194 = vmatpush1.bf16.msra.mxu0 %v2087
    %2195 = vmatprep.subr.bf16.mxu0 %v2092
    %2196 = vmatpush1.bf16.msra.mxu0 %v2091
    %2197 = vmatprep.subr.bf16.mxu0 %v2096
    %2198 = vmatpush1.bf16.msra.mxu0 %v2095
    %2199 = vmatprep.subr.bf16.mxu0 %v2100
    %2200 = vmatpush1.bf16.msra.mxu0 %v2099
    %2201 = vmatprep.subr.bf16.mxu0 %v2104
    %2202 = vmatpush1.bf16.msra.mxu0 %v2103
    %2203 = vmatprep.mubr.bf16.mxu0 %v1828
    %2204 = vmatmul.mubr.bf16.gmra.mrb[0].mxu0 %v1827
    %v2205 = vpop.f32.mrb[0].mxu0
    %v2206 = vadd.f32 %v1834, %v2205
    %v2207 = vpop.f32.mrb[0].mxu0
    %v2208 = vadd.f32 %v1838, %v2207
    %v2209 = vpop.f32.mrb[0].mxu0
    %v2210 = vadd.f32 %v1834, %v2209
    %v2211 = vpop.f32.mrb[0].mxu0
    %v2212 = vadd.f32 %v1838, %v2211
    %2213 = vdwg.mxu0
    %2214 = vmatprep.subr.bf16.mxu0 %v2046
    %2215 = vmatpush1.bf16.msra.mxu0 %v2045
    %2216 = vmatprep.subr.bf16.mxu0 %v2050
    %2217 = vmatpush1.bf16.msra.mxu0 %v2049
    %2218 = vmatprep.subr.bf16.mxu0 %v2054
    %2219 = vmatpush1.bf16.msra.mxu0 %v2053
    %2220 = vmatprep.subr.bf16.mxu0 %v2058
    %2221 = vmatpush1.bf16.msra.mxu0 %v2057
    %2222 = vmatprep.subr.bf16.mxu0 %v2062
    %2223 = vmatpush1.bf16.msra.mxu0 %v2061
    %2224 = vmatprep.subr.bf16.mxu0 %v2066
    %2225 = vmatpush1.bf16.msra.mxu0 %v2065
    %2226 = vmatprep.subr.bf16.mxu0 %v2070
    %2227 = vmatpush1.bf16.msra.mxu0 %v2069
    %2228 = vmatprep.subr.bf16.mxu0 %v2074
    %2229 = vmatpush1.bf16.msra.mxu0 %v2073
    %2230 = vmatprep.subr.bf16.mxu0 %v2078
    %2231 = vmatpush1.bf16.msra.mxu0 %v2077
    %2232 = vmatprep.subr.bf16.mxu0 %v2082
    %2233 = vmatpush1.bf16.msra.mxu0 %v2081
    %2234 = vmatprep.subr.bf16.mxu0 %v2086
    %2235 = vmatpush1.bf16.msra.mxu0 %v2085
    %2236 = vmatprep.subr.bf16.mxu0 %v2090
    %2237 = vmatpush1.bf16.msra.mxu0 %v2089
    %2238 = vmatprep.subr.bf16.mxu0 %v2094
    %2239 = vmatpush1.bf16.msra.mxu0 %v2093
    %2240 = vmatprep.subr.bf16.mxu0 %v2098
    %2241 = vmatpush1.bf16.msra.mxu0 %v2097
    %2242 = vmatprep.subr.bf16.mxu0 %v2102
    %2243 = vmatpush1.bf16.msra.mxu0 %v2101
    %2244 = vmatprep.subr.bf16.mxu0 %v2106
    %2245 = vmatpush1.bf16.msra.mxu0 %v2105
    %2246 = vmatprep.mubr.bf16.mxu0 %v1828
    %2247 = vmatmul.mubr.bf16.gmra.mrb[0].mxu0 %v1827
    %v2248 = vpop.f32.mrb[0].mxu0
    %v2249 = vadd.f32 %v1842, %v2248
    %v2250 = vpop.f32.mrb[0].mxu0
    %v2251 = vadd.f32 %v1846, %v2250
    %v2252 = vpop.f32.mrb[0].mxu0
    %v2253 = vadd.f32 %v1842, %v2252
    %v2254 = vpop.f32.mrb[0].mxu0
    %v2255 = vadd.f32 %v1846, %v2254
    %2256 = vdwg.mxu0
    %v2257 = vmul.f32 %v2206, %v2206
    %v2258 = vmul.f32 %v2208, %v2208
    %v2259 = vmul.f32 %v2249, %v2249
    %v2260 = vmul.f32 %v2251, %v2251
    %v2261 = vmul.f32 %v2210, %v2210
    %v2262 = vmul.f32 %v2212, %v2212
    %v2263 = vmul.f32 %v2253, %v2253
    %v2264 = vmul.f32 %v2255, %v2255
    %v2265 = vmul.f32 %v2206, %v2257
    %v2266 = vmul.f32 %v2208, %v2258
    %v2267 = vmul.f32 %v2249, %v2259
    %v2268 = vmul.f32 %v2251, %v2260
    %v2269 = vmul.f32 %v2210, %v2261
    %v2270 = vmul.f32 %v2212, %v2262
    %v2271 = vmul.f32 %v2253, %v2263
    %v2272 = vmul.f32 %v2255, %v2264
    %v2273 = vmul.f32 %v2265, 0.044715
    %v2274 = vmul.f32 %v2266, 0.044715
    %v2275 = vmul.f32 %v2267, 0.044715
    %v2276 = vmul.f32 %v2268, 0.044715
    %v2277 = vmul.f32 %v2269, 0.044715
    %v2278 = vmul.f32 %v2270, 0.044715
    %v2279 = vmul.f32 %v2271, 0.044715
    %v2280 = vmul.f32 %v2272, 0.044715
    %v2281 = vadd.f32 %v2206, %v2273
    %v2282 = vadd.f32 %v2208, %v2274
    %v2283 = vadd.f32 %v2249, %v2275
    %v2284 = vadd.f32 %v2251, %v2276
    %v2285 = vadd.f32 %v2210, %v2277
    %v2286 = vadd.f32 %v2212, %v2278
    %v2287 = vadd.f32 %v2253, %v2279
    %v2288 = vadd.f32 %v2255, %v2280
    %v2289 = vmul.f32 %v2281, 0.7978846
    %v2290 = vmul.f32 %v2282, 0.7978846
    %v2291 = vmul.f32 %v2283, 0.7978846
    %v2292 = vmul.f32 %v2284, 0.7978846
    %v2293 = vmul.f32 %v2285, 0.7978846
    %v2294 = vmul.f32 %v2286, 0.7978846
    %v2295 = vmul.f32 %v2287, 0.7978846
    %v2296 = vmul.f32 %v2288, 0.7978846
    %v2297 = vtanh.pop %v2289
    %v2298 = vtanh.pop %v2290
    %v2299 = vtanh.pop %v2291
    %v2300 = vtanh.pop %v2292
    %v2301 = vtanh.pop %v2293
    %v2302 = vtanh.pop %v2294
    %v2303 = vtanh.pop %v2295
    %v2304 = vtanh.pop %v2296
    %v2305 = vadd.f32 %v2297, 1.0
    %v2306 = vadd.f32 %v2298, 1.0
    %v2307 = vadd.f32 %v2299, 1.0
    %v2308 = vadd.f32 %v2300, 1.0
    %v2309 = vadd.f32 %v2301, 1.0
    %v2310 = vadd.f32 %v2302, 1.0
    %v2311 = vadd.f32 %v2303, 1.0
    %v2312 = vadd.f32 %v2304, 1.0
    %v2313 = vmul.f32 %v2305, 0.5
    %v2314 = vmul.f32 %v2306, 0.5
    %v2315 = vmul.f32 %v2307, 0.5
    %v2316 = vmul.f32 %v2308, 0.5
    %v2317 = vmul.f32 %v2309, 0.5
    %v2318 = vmul.f32 %v2310, 0.5
    %v2319 = vmul.f32 %v2311, 0.5
    %v2320 = vmul.f32 %v2312, 0.5
    %v2321 = vmul.f32 %v2206, %v2313
    %v2322 = vmul.f32 %v2208, %v2314
    %v2323 = vmul.f32 %v2249, %v2315
    %v2324 = vmul.f32 %v2251, %v2316
    %v2325 = vmul.f32 %v2210, %v2317
    %v2326 = vmul.f32 %v2212, %v2318
    %v2327 = vmul.f32 %v2253, %v2319
    %v2328 = vmul.f32 %v2255, %v2320
    %v2329 = vld [vmem:[#allocation7] sm:$0xff]
    %v2330 = vld [vmem:[#allocation7 + $0x8] sm:$0xff]
    %v2331 = vld [vmem:[#allocation7 + $0x10] sm:$0xff]
    %v2332 = vld [vmem:[#allocation7 + $0x18] sm:$0xff]
    %v2333 = vld [vmem:[#allocation7 + $0x20] sm:$0xff]
    %v2334 = vld [vmem:[#allocation7 + $0x28] sm:$0xff]
    %v2335 = vld [vmem:[#allocation7 + $0x30] sm:$0xff]
    %v2336 = vld [vmem:[#allocation7 + $0x38] sm:$0xff]
    %v2337 = vld [vmem:[#allocation7 + $0x40] sm:$0xff]
    %v2338 = vld [vmem:[#allocation7 + $0x48] sm:$0xff]
    %v2339 = vld [vmem:[#allocation7 + $0x50] sm:$0xff]
    %v2340 = vld [vmem:[#allocation7 + $0x58] sm:$0xff]
    %v2341 = vld [vmem:[#allocation7 + $0x60] sm:$0xff]
    %v2342 = vld [vmem:[#allocation7 + $0x68] sm:$0xff]
    %v2343 = vld [vmem:[#allocation7 + $0x70] sm:$0xff]
    %v2344 = vld [vmem:[#allocation7 + $0x78] sm:$0xff]
    %v2345 = vld [vmem:[#allocation7 + $0x80] sm:$0xff]
    %v2346 = vld [vmem:[#allocation7 + $0x88] sm:$0xff]
    %v2347 = vld [vmem:[#allocation7 + $0x90] sm:$0xff]
    %v2348 = vld [vmem:[#allocation7 + $0x98] sm:$0xff]
    %v2349 = vld [vmem:[#allocation7 + $0xa0] sm:$0xff]
    %v2350 = vld [vmem:[#allocation7 + $0xa8] sm:$0xff]
    %v2351 = vld [vmem:[#allocation7 + $0xb0] sm:$0xff]
    %v2352 = vld [vmem:[#allocation7 + $0xb8] sm:$0xff]
    %v2353 = vld [vmem:[#allocation7 + $0xc0] sm:$0xff]
    %v2354 = vld [vmem:[#allocation7 + $0xc8] sm:$0xff]
    %v2355 = vld [vmem:[#allocation7 + $0xd0] sm:$0xff]
    %v2356 = vld [vmem:[#allocation7 + $0xd8] sm:$0xff]
    %v2357 = vld [vmem:[#allocation7 + $0xe0] sm:$0xff]
    %v2358 = vld [vmem:[#allocation7 + $0xe8] sm:$0xff]
    %v2359 = vld [vmem:[#allocation7 + $0xf0] sm:$0xff]
    %v2360 = vld [vmem:[#allocation7 + $0xf8] sm:$0xff]
    %v2361 = vld [vmem:[#allocation7 + $0x100] sm:$0xff]
    %v2362 = vld [vmem:[#allocation7 + $0x108] sm:$0xff]
    %v2363 = vld [vmem:[#allocation7 + $0x110] sm:$0xff]
    %v2364 = vld [vmem:[#allocation7 + $0x118] sm:$0xff]
    %v2365 = vld [vmem:[#allocation7 + $0x120] sm:$0xff]
    %v2366 = vld [vmem:[#allocation7 + $0x128] sm:$0xff]
    %v2367 = vld [vmem:[#allocation7 + $0x130] sm:$0xff]
    %v2368 = vld [vmem:[#allocation7 + $0x138] sm:$0xff]
    %v2369 = vld [vmem:[#allocation7 + $0x140] sm:$0xff]
    %v2370 = vld [vmem:[#allocation7 + $0x148] sm:$0xff]
    %v2371 = vld [vmem:[#allocation7 + $0x150] sm:$0xff]
    %v2372 = vld [vmem:[#allocation7 + $0x158] sm:$0xff]
    %v2373 = vld [vmem:[#allocation7 + $0x160] sm:$0xff]
    %v2374 = vld [vmem:[#allocation7 + $0x168] sm:$0xff]
    %v2375 = vld [vmem:[#allocation7 + $0x170] sm:$0xff]
    %v2376 = vld [vmem:[#allocation7 + $0x178] sm:$0xff]
    %v2377 = vld [vmem:[#allocation7 + $0x180] sm:$0xff]
    %v2378 = vld [vmem:[#allocation7 + $0x188] sm:$0xff]
    %v2379 = vld [vmem:[#allocation7 + $0x190] sm:$0xff]
    %v2380 = vld [vmem:[#allocation7 + $0x198] sm:$0xff]
    %v2381 = vld [vmem:[#allocation7 + $0x1a0] sm:$0xff]
    %v2382 = vld [vmem:[#allocation7 + $0x1a8] sm:$0xff]
    %v2383 = vld [vmem:[#allocation7 + $0x1b0] sm:$0xff]
    %v2384 = vld [vmem:[#allocation7 + $0x1b8] sm:$0xff]
    %v2385 = vld [vmem:[#allocation7 + $0x1c0] sm:$0xff]
    %v2386 = vld [vmem:[#allocation7 + $0x1c8] sm:$0xff]
    %v2387 = vld [vmem:[#allocation7 + $0x1d0] sm:$0xff]
    %v2388 = vld [vmem:[#allocation7 + $0x1d8] sm:$0xff]
    %v2389 = vld [vmem:[#allocation7 + $0x1e0] sm:$0xff]
    %v2390 = vld [vmem:[#allocation7 + $0x1e8] sm:$0xff]
    %v2391 = vld [vmem:[#allocation7 + $0x1f0] sm:$0xff]
    %v2392 = vld [vmem:[#allocation7 + $0x1f8] sm:$0xff]
    %v2393 = vpack.c.bf16 %v2325, %v2321
    %v2394 = vpack.c.bf16 %v2326, %v2322
    %v2395 = vpack.c.bf16 %v2327, %v2323
    %v2396 = vpack.c.bf16 %v2328, %v2324
    %v2397 = vld [vmem:[%s13] sm:$0x3]
    %v2399 = vlaneseq
    %v2400 = vshrl.u32 %v2399, 7
    %v2401 = vsub.s32 0, %v2400
    %v2402 = vrot.slane %v2397, %v2401
    %v2403 = vlaneseq
    %v2404 = vshrl.u32 %v2403, 7
    %v2405 = vsub.s32 1, %v2404
    %v2406 = vrot.slane %v2397, %v2405
    %v2473 = vunpack.c.l.b16 %v2329
    %v2474 = vunpack.c.h.b16 %v2329
    %v2475 = vunpack.c.l.b16 %v2330
    %v2476 = vunpack.c.h.b16 %v2330
    %v2477 = vunpack.c.l.b16 %v2331
    %v2478 = vunpack.c.h.b16 %v2331
    %v2479 = vunpack.c.l.b16 %v2332
    %v2480 = vunpack.c.h.b16 %v2332
    %v2481 = vunpack.c.l.b16 %v2333
    %v2482 = vunpack.c.h.b16 %v2333
    %v2483 = vunpack.c.l.b16 %v2334
    %v2484 = vunpack.c.h.b16 %v2334
    %v2485 = vunpack.c.l.b16 %v2335
    %v2486 = vunpack.c.h.b16 %v2335
    %v2487 = vunpack.c.l.b16 %v2336
    %v2488 = vunpack.c.h.b16 %v2336
    %v2489 = vunpack.c.l.b16 %v2337
    %v2490 = vunpack.c.h.b16 %v2337
    %v2491 = vunpack.c.l.b16 %v2338
    %v2492 = vunpack.c.h.b16 %v2338
    %v2493 = vunpack.c.l.b16 %v2339
    %v2494 = vunpack.c.h.b16 %v2339
    %v2495 = vunpack.c.l.b16 %v2340
    %v2496 = vunpack.c.h.b16 %v2340
    %v2497 = vunpack.c.l.b16 %v2341
    %v2498 = vunpack.c.h.b16 %v2341
    %v2499 = vunpack.c.l.b16 %v2342
    %v2500 = vunpack.c.h.b16 %v2342
    %v2501 = vunpack.c.l.b16 %v2343
    %v2502 = vunpack.c.h.b16 %v2343
    %v2503 = vunpack.c.l.b16 %v2344
    %v2504 = vunpack.c.h.b16 %v2344
    %v2505 = vunpack.c.l.b16 %v2345
    %v2506 = vunpack.c.h.b16 %v2345
    %v2507 = vunpack.c.l.b16 %v2346
    %v2508 = vunpack.c.h.b16 %v2346
    %v2509 = vunpack.c.l.b16 %v2347
    %v2510 = vunpack.c.h.b16 %v2347
    %v2511 = vunpack.c.l.b16 %v2348
    %v2512 = vunpack.c.h.b16 %v2348
    %v2513 = vunpack.c.l.b16 %v2349
    %v2514 = vunpack.c.h.b16 %v2349
    %v2515 = vunpack.c.l.b16 %v2350
    %v2516 = vunpack.c.h.b16 %v2350
    %v2517 = vunpack.c.l.b16 %v2351
    %v2518 = vunpack.c.h.b16 %v2351
    %v2519 = vunpack.c.l.b16 %v2352
    %v2520 = vunpack.c.h.b16 %v2352
    %v2521 = vunpack.c.l.b16 %v2353
    %v2522 = vunpack.c.h.b16 %v2353
    %v2523 = vunpack.c.l.b16 %v2354
    %v2524 = vunpack.c.h.b16 %v2354
    %v2525 = vunpack.c.l.b16 %v2355
    %v2526 = vunpack.c.h.b16 %v2355
    %v2527 = vunpack.c.l.b16 %v2356
    %v2528 = vunpack.c.h.b16 %v2356
    %v2529 = vunpack.c.l.b16 %v2357
    %v2530 = vunpack.c.h.b16 %v2357
    %v2531 = vunpack.c.l.b16 %v2358
    %v2532 = vunpack.c.h.b16 %v2358
    %v2533 = vunpack.c.l.b16 %v2359
    %v2534 = vunpack.c.h.b16 %v2359
    %v2535 = vunpack.c.l.b16 %v2360
    %v2536 = vunpack.c.h.b16 %v2360
    %v2537 = vunpack.c.l.b16 %v2361
    %v2538 = vunpack.c.h.b16 %v2361
    %v2539 = vunpack.c.l.b16 %v2362
    %v2540 = vunpack.c.h.b16 %v2362
    %v2541 = vunpack.c.l.b16 %v2363
    %v2542 = vunpack.c.h.b16 %v2363
    %v2543 = vunpack.c.l.b16 %v2364
    %v2544 = vunpack.c.h.b16 %v2364
    %v2545 = vunpack.c.l.b16 %v2365
    %v2546 = vunpack.c.h.b16 %v2365
    %v2547 = vunpack.c.l.b16 %v2366
    %v2548 = vunpack.c.h.b16 %v2366
    %v2549 = vunpack.c.l.b16 %v2367
    %v2550 = vunpack.c.h.b16 %v2367
    %v2551 = vunpack.c.l.b16 %v2368
    %v2552 = vunpack.c.h.b16 %v2368
    %v2553 = vunpack.c.l.b16 %v2369
    %v2554 = vunpack.c.h.b16 %v2369
    %v2555 = vunpack.c.l.b16 %v2370
    %v2556 = vunpack.c.h.b16 %v2370
    %v2557 = vunpack.c.l.b16 %v2371
    %v2558 = vunpack.c.h.b16 %v2371
    %v2559 = vunpack.c.l.b16 %v2372
    %v2560 = vunpack.c.h.b16 %v2372
    %v2561 = vunpack.c.l.b16 %v2373
    %v2562 = vunpack.c.h.b16 %v2373
    %v2563 = vunpack.c.l.b16 %v2374
    %v2564 = vunpack.c.h.b16 %v2374
    %v2565 = vunpack.c.l.b16 %v2375
    %v2566 = vunpack.c.h.b16 %v2375
    %v2567 = vunpack.c.l.b16 %v2376
    %v2568 = vunpack.c.h.b16 %v2376
    %v2569 = vunpack.c.l.b16 %v2377
    %v2570 = vunpack.c.h.b16 %v2377
    %v2571 = vunpack.c.l.b16 %v2378
    %v2572 = vunpack.c.h.b16 %v2378
    %v2573 = vunpack.c.l.b16 %v2379
    %v2574 = vunpack.c.h.b16 %v2379
    %v2575 = vunpack.c.l.b16 %v2380
    %v2576 = vunpack.c.h.b16 %v2380
    %v2577 = vunpack.c.l.b16 %v2381
    %v2578 = vunpack.c.h.b16 %v2381
    %v2579 = vunpack.c.l.b16 %v2382
    %v2580 = vunpack.c.h.b16 %v2382
    %v2581 = vunpack.c.l.b16 %v2383
    %v2582 = vunpack.c.h.b16 %v2383
    %v2583 = vunpack.c.l.b16 %v2384
    %v2584 = vunpack.c.h.b16 %v2384
    %v2585 = vunpack.c.l.b16 %v2385
    %v2586 = vunpack.c.h.b16 %v2385
    %v2587 = vunpack.c.l.b16 %v2386
    %v2588 = vunpack.c.h.b16 %v2386
    %v2589 = vunpack.c.l.b16 %v2387
    %v2590 = vunpack.c.h.b16 %v2387
    %v2591 = vunpack.c.l.b16 %v2388
    %v2592 = vunpack.c.h.b16 %v2388
    %v2593 = vunpack.c.l.b16 %v2389
    %v2594 = vunpack.c.h.b16 %v2389
    %v2595 = vunpack.c.l.b16 %v2390
    %v2596 = vunpack.c.h.b16 %v2390
    %v2597 = vunpack.c.l.b16 %v2391
    %v2598 = vunpack.c.h.b16 %v2391
    %v2599 = vunpack.c.l.b16 %v2392
    %v2600 = vunpack.c.h.b16 %v2392
    %v2601 = vpack.c.b16 %v2475, %v2473
    %v2602 = vpack.c.b16 %v2476, %v2474
    %v2603 = vpack.c.b16 %v2479, %v2477
    %v2604 = vpack.c.b16 %v2480, %v2478
    %v2605 = vpack.c.b16 %v2483, %v2481
    %v2606 = vpack.c.b16 %v2484, %v2482
    %v2607 = vpack.c.b16 %v2487, %v2485
    %v2608 = vpack.c.b16 %v2488, %v2486
    %v2609 = vpack.c.b16 %v2491, %v2489
    %v2610 = vpack.c.b16 %v2492, %v2490
    %v2611 = vpack.c.b16 %v2495, %v2493
    %v2612 = vpack.c.b16 %v2496, %v2494
    %v2613 = vpack.c.b16 %v2499, %v2497
    %v2614 = vpack.c.b16 %v2500, %v2498
    %v2615 = vpack.c.b16 %v2503, %v2501
    %v2616 = vpack.c.b16 %v2504, %v2502
    %v2617 = vpack.c.b16 %v2507, %v2505
    %v2618 = vpack.c.b16 %v2508, %v2506
    %v2619 = vpack.c.b16 %v2511, %v2509
    %v2620 = vpack.c.b16 %v2512, %v2510
    %v2621 = vpack.c.b16 %v2515, %v2513
    %v2622 = vpack.c.b16 %v2516, %v2514
    %v2623 = vpack.c.b16 %v2519, %v2517
    %v2624 = vpack.c.b16 %v2520, %v2518
    %v2625 = vpack.c.b16 %v2523, %v2521
    %v2626 = vpack.c.b16 %v2524, %v2522
    %v2627 = vpack.c.b16 %v2527, %v2525
    %v2628 = vpack.c.b16 %v2528, %v2526
    %v2629 = vpack.c.b16 %v2531, %v2529
    %v2630 = vpack.c.b16 %v2532, %v2530
    %v2631 = vpack.c.b16 %v2535, %v2533
    %v2632 = vpack.c.b16 %v2536, %v2534
    %v2633 = vpack.c.b16 %v2539, %v2537
    %v2634 = vpack.c.b16 %v2540, %v2538
    %v2635 = vpack.c.b16 %v2543, %v2541
    %v2636 = vpack.c.b16 %v2544, %v2542
    %v2637 = vpack.c.b16 %v2547, %v2545
    %v2638 = vpack.c.b16 %v2548, %v2546
    %v2639 = vpack.c.b16 %v2551, %v2549
    %v2640 = vpack.c.b16 %v2552, %v2550
    %v2641 = vpack.c.b16 %v2555, %v2553
    %v2642 = vpack.c.b16 %v2556, %v2554
    %v2643 = vpack.c.b16 %v2559, %v2557
    %v2644 = vpack.c.b16 %v2560, %v2558
    %v2645 = vpack.c.b16 %v2563, %v2561
    %v2646 = vpack.c.b16 %v2564, %v2562
    %v2647 = vpack.c.b16 %v2567, %v2565
    %v2648 = vpack.c.b16 %v2568, %v2566
    %v2649 = vpack.c.b16 %v2571, %v2569
    %v2650 = vpack.c.b16 %v2572, %v2570
    %v2651 = vpack.c.b16 %v2575, %v2573
    %v2652 = vpack.c.b16 %v2576, %v2574
    %v2653 = vpack.c.b16 %v2579, %v2577
    %v2654 = vpack.c.b16 %v2580, %v2578
    %v2655 = vpack.c.b16 %v2583, %v2581
    %v2656 = vpack.c.b16 %v2584, %v2582
    %v2657 = vpack.c.b16 %v2587, %v2585
    %v2658 = vpack.c.b16 %v2588, %v2586
    %v2659 = vpack.c.b16 %v2591, %v2589
    %v2660 = vpack.c.b16 %v2592, %v2590
    %v2661 = vpack.c.b16 %v2595, %v2593
    %v2662 = vpack.c.b16 %v2596, %v2594
    %v2663 = vpack.c.b16 %v2599, %v2597
    %v2664 = vpack.c.b16 %v2600, %v2598
    %2729 = vmatprep.subr.bf16.mxu0 %v2602
    %2730 = vmatpush1.bf16.msra.mxu0 %v2601
    %2731 = vmatprep.subr.bf16.mxu0 %v2604
    %2732 = vmatpush1.bf16.msra.mxu0 %v2603
    %2733 = vmatprep.subr.bf16.mxu0 %v2606
    %2734 = vmatpush1.bf16.msra.mxu0 %v2605
    %2735 = vmatprep.subr.bf16.mxu0 %v2608
    %2736 = vmatpush1.bf16.msra.mxu0 %v2607
    %2737 = vmatprep.subr.bf16.mxu0 %v2610
    %2738 = vmatpush1.bf16.msra.mxu0 %v2609
    %2739 = vmatprep.subr.bf16.mxu0 %v2612
    %2740 = vmatpush1.bf16.msra.mxu0 %v2611
    %2741 = vmatprep.subr.bf16.mxu0 %v2614
    %2742 = vmatpush1.bf16.msra.mxu0 %v2613
    %2743 = vmatprep.subr.bf16.mxu0 %v2616
    %2744 = vmatpush1.bf16.msra.mxu0 %v2615
    %2745 = vmatprep.subr.bf16.mxu0 %v2618
    %2746 = vmatpush1.bf16.msra.mxu0 %v2617
    %2747 = vmatprep.subr.bf16.mxu0 %v2620
    %2748 = vmatpush1.bf16.msra.mxu0 %v2619
    %2749 = vmatprep.subr.bf16.mxu0 %v2622
    %2750 = vmatpush1.bf16.msra.mxu0 %v2621
    %2751 = vmatprep.subr.bf16.mxu0 %v2624
    %2752 = vmatpush1.bf16.msra.mxu0 %v2623
    %2753 = vmatprep.subr.bf16.mxu0 %v2626
    %2754 = vmatpush1.bf16.msra.mxu0 %v2625
    %2755 = vmatprep.subr.bf16.mxu0 %v2628
    %2756 = vmatpush1.bf16.msra.mxu0 %v2627
    %2757 = vmatprep.subr.bf16.mxu0 %v2630
    %2758 = vmatpush1.bf16.msra.mxu0 %v2629
    %2759 = vmatprep.subr.bf16.mxu0 %v2632
    %2760 = vmatpush1.bf16.msra.mxu0 %v2631
    %2761 = vmatprep.mubr.bf16.mxu0 %v2394
    %2762 = vmatmul.mubr.bf16.gmra.mrb[0].mxu0 %v2393
    %v2763 = vpop.f32.mrb[0].mxu0
    %v2764 = vadd.f32 %v2402, %v2763
    %v2765 = vpop.f32.mrb[0].mxu0
    %v2766 = vadd.f32 %v2406, %v2765
    %v2767 = vpop.f32.mrb[0].mxu0
    %v2768 = vadd.f32 %v2402, %v2767
    %v2769 = vpop.f32.mrb[0].mxu0
    %v2770 = vadd.f32 %v2406, %v2769
    %2771 = vdwg.mxu0
    %2772 = vmatprep.subr.bf16.mxu0 %v2634
    %2773 = vmatpush1.bf16.msra.mxu0 %v2633
    %2774 = vmatprep.subr.bf16.mxu0 %v2636
    %2775 = vmatpush1.bf16.msra.mxu0 %v2635
    %2776 = vmatprep.subr.bf16.mxu0 %v2638
    %2777 = vmatpush1.bf16.msra.mxu0 %v2637
    %2778 = vmatprep.subr.bf16.mxu0 %v2640
    %2779 = vmatpush1.bf16.msra.mxu0 %v2639
    %2780 = vmatprep.subr.bf16.mxu0 %v2642
    %2781 = vmatpush1.bf16.msra.mxu0 %v2641
    %2782 = vmatprep.subr.bf16.mxu0 %v2644
    %2783 = vmatpush1.bf16.msra.mxu0 %v2643
    %2784 = vmatprep.subr.bf16.mxu0 %v2646
    %2785 = vmatpush1.bf16.msra.mxu0 %v2645
    %2786 = vmatprep.subr.bf16.mxu0 %v2648
    %2787 = vmatpush1.bf16.msra.mxu0 %v2647
    %2788 = vmatprep.subr.bf16.mxu0 %v2650
    %2789 = vmatpush1.bf16.msra.mxu0 %v2649
    %2790 = vmatprep.subr.bf16.mxu0 %v2652
    %2791 = vmatpush1.bf16.msra.mxu0 %v2651
    %2792 = vmatprep.subr.bf16.mxu0 %v2654
    %2793 = vmatpush1.bf16.msra.mxu0 %v2653
    %2794 = vmatprep.subr.bf16.mxu0 %v2656
    %2795 = vmatpush1.bf16.msra.mxu0 %v2655
    %2796 = vmatprep.subr.bf16.mxu0 %v2658
    %2797 = vmatpush1.bf16.msra.mxu0 %v2657
    %2798 = vmatprep.subr.bf16.mxu0 %v2660
    %2799 = vmatpush1.bf16.msra.mxu0 %v2659
    %2800 = vmatprep.subr.bf16.mxu0 %v2662
    %2801 = vmatpush1.bf16.msra.mxu0 %v2661
    %2802 = vmatprep.subr.bf16.mxu0 %v2664
    %2803 = vmatpush1.bf16.msra.mxu0 %v2663
    %2804 = vmatprep.mubr.bf16.mxu0 %v2396
    %2805 = vmatmul.mubr.bf16.gmra.mrb[0].mxu0 %v2395
    %v2806 = vpop.f32.mrb[0].mxu0
    %v2807 = vadd.f32 %v2764, %v2806
    %v2808 = vpop.f32.mrb[0].mxu0
    %v2809 = vadd.f32 %v2766, %v2808
    %v2810 = vpop.f32.mrb[0].mxu0
    %v2811 = vadd.f32 %v2768, %v2810
    %v2812 = vpop.f32.mrb[0].mxu0
    %v2813 = vadd.f32 %v2770, %v2812
    %2814 = vdwg.mxu0
    %v2815 = vadd.f32 %v2807, %v1759
    %v2816 = vadd.f32 %v2809, %v1760
    %v2817 = vadd.f32 %v2811, %v1761
    %v2818 = vadd.f32 %v2813, %v1762
    %v2819 = vld [vmem:[%s14] sm:$0x3]
    %v2820 = vld [vmem:[%s15] sm:$0x3]
    %v2821 = vadd.f32 %v2815, %v2816
    %2822 = vadd.xlane.f32.xlu0 %v2821
    %v2823 = vpop.xlane.xlu0 %2822
    %v2824 = vadd.f32 %v2817, %v2818
    %2825 = vadd.xlane.f32.xlu0 %v2824
    %v2826 = vpop.xlane.xlu0 %2825
    %v2827 = vmul.f32 %v2823, %v142
    %v2828 = vmul.f32 %v2826, %v142
    %v2829 = vsub.f32 %v2815, %v2827
    %v2830 = vsub.f32 %v2816, %v2827
    %v2831 = vsub.f32 %v2817, %v2828
    %v2832 = vsub.f32 %v2818, %v2828
    %v2833 = vmul.f32 %v2829, %v2829
    %v2834 = vmul.f32 %v2830, %v2830
    %v2835 = vmul.f32 %v2831, %v2831
    %v2836 = vmul.f32 %v2832, %v2832
    %v2837 = vadd.f32 %v2833, %v2834
    %2838 = vadd.xlane.f32.xlu0 %v2837
    %v2839 = vpop.xlane.xlu0 %2838
    %v2840 = vadd.f32 %v2835, %v2836
    %2841 = vadd.xlane.f32.xlu0 %v2840
    %v2842 = vpop.xlane.xlu0 %2841
    %v2843 = vmul.f32 %v2839, %v142
    %v2844 = vmul.f32 %v2842, %v142
    %v2845 = vadd.f32 %v2843, 1e-12
    %v2846 = vadd.f32 %v2844, 1e-12
    %v2847 = vrsqrt.pop %v2845
    %v2848 = vrsqrt.pop %v2846
    %v2849 = vmul.f32 %v2829, %v2847
    %v2850 = vmul.f32 %v2830, %v2847
    %v2851 = vmul.f32 %v2831, %v2848
    %v2852 = vmul.f32 %v2832, %v2848
    %v2854 = vlaneseq
    %v2855 = vshrl.u32 %v2854, 7
    %v2856 = vsub.s32 0, %v2855
    %v2857 = vrot.slane %v2819, %v2856
    %v2858 = vlaneseq
    %v2859 = vshrl.u32 %v2858, 7
    %v2860 = vsub.s32 1, %v2859
    %v2861 = vrot.slane %v2819, %v2860
    %v2864 = vmul.f32 %v2849, %v2857
    %v2865 = vmul.f32 %v2850, %v2861
    %v2866 = vmul.f32 %v2851, %v2857
    %v2867 = vmul.f32 %v2852, %v2861
    %v2869 = vlaneseq
    %v2870 = vshrl.u32 %v2869, 7
    %v2871 = vsub.s32 0, %v2870
    %v2872 = vrot.slane %v2820, %v2871
    %v2873 = vlaneseq
    %v2874 = vshrl.u32 %v2873, 7
    %v2875 = vsub.s32 1, %v2874
    %v2876 = vrot.slane %v2820, %v2875
    %v2879 = vadd.f32 %v2864, %v2872
    %v2880 = vadd.f32 %v2865, %v2876
    %v2881 = vadd.f32 %v2866, %v2872
    %v2882 = vadd.f32 %v2867, %v2876
    %v2885 = vrot.slane %v2881, 7
    %v2886 = vrot.slane %v2882, 7
    %vm2889 = vcmask 1040384
    %v2890 = vsel %vm2889, %v2879, %v2885
    %v2891 = vsel %vm2889, %v2880, %v2886
    %s2892 = scalar_lea.vmem [#allocation2], 768
    %v2893 = vld [vmem:[%s2892] sm:$0xff]
    %v2894 = vld [vmem:[%s2892 + $0x8] sm:$0xff]
    %v2895 = vld [vmem:[%s2892 + $0x10] sm:$0xff]
    %v2896 = vld [vmem:[%s2892 + $0x18] sm:$0xff]
    %v2897 = vld [vmem:[%s2892 + $0x20] sm:$0xff]
    %v2898 = vld [vmem:[%s2892 + $0x28] sm:$0xff]
    %v2899 = vld [vmem:[%s2892 + $0x30] sm:$0xff]
    %v2900 = vld [vmem:[%s2892 + $0x38] sm:$0xff]
    %v2901 = vld [vmem:[%s2892 + $0x40] sm:$0xff]
    %v2902 = vld [vmem:[%s2892 + $0x48] sm:$0xff]
    %v2903 = vld [vmem:[%s2892 + $0x50] sm:$0xff]
    %v2904 = vld [vmem:[%s2892 + $0x58] sm:$0xff]
    %v2905 = vld [vmem:[%s2892 + $0x60] sm:$0xff]
    %v2906 = vld [vmem:[%s2892 + $0x68] sm:$0xff]
    %v2907 = vld [vmem:[%s2892 + $0x70] sm:$0xff]
    %v2908 = vld [vmem:[%s2892 + $0x78] sm:$0xff]
    %v2909 = vld [vmem:[%s2892 + $0x80] sm:$0xff]
    %v2910 = vld [vmem:[%s2892 + $0x88] sm:$0xff]
    %v2911 = vld [vmem:[%s2892 + $0x90] sm:$0xff]
    %v2912 = vld [vmem:[%s2892 + $0x98] sm:$0xff]
    %v2913 = vld [vmem:[%s2892 + $0xa0] sm:$0xff]
    %v2914 = vld [vmem:[%s2892 + $0xa8] sm:$0xff]
    %v2915 = vld [vmem:[%s2892 + $0xb0] sm:$0xff]
    %v2916 = vld [vmem:[%s2892 + $0xb8] sm:$0xff]
    %v2917 = vld [vmem:[%s2892 + $0xc0] sm:$0xff]
    %v2918 = vld [vmem:[%s2892 + $0xc8] sm:$0xff]
    %v2919 = vld [vmem:[%s2892 + $0xd0] sm:$0xff]
    %v2920 = vld [vmem:[%s2892 + $0xd8] sm:$0xff]
    %v2921 = vld [vmem:[%s2892 + $0xe0] sm:$0xff]
    %v2922 = vld [vmem:[%s2892 + $0xe8] sm:$0xff]
    %v2923 = vld [vmem:[%s2892 + $0xf0] sm:$0xff]
    %v2924 = vld [vmem:[%s2892 + $0xf8] sm:$0xff]
    %v2925 = vld [vmem:[%s2892 + $0x100] sm:$0xff]
    %v2926 = vld [vmem:[%s2892 + $0x108] sm:$0xff]
    %v2927 = vld [vmem:[%s2892 + $0x110] sm:$0xff]
    %v2928 = vld [vmem:[%s2892 + $0x118] sm:$0xff]
    %v2929 = vld [vmem:[%s2892 + $0x120] sm:$0xff]
    %v2930 = vld [vmem:[%s2892 + $0x128] sm:$0xff]
    %v2931 = vld [vmem:[%s2892 + $0x130] sm:$0xff]
    %v2932 = vld [vmem:[%s2892 + $0x138] sm:$0xff]
    %v2933 = vld [vmem:[%s2892 + $0x140] sm:$0xff]
    %v2934 = vld [vmem:[%s2892 + $0x148] sm:$0xff]
    %v2935 = vld [vmem:[%s2892 + $0x150] sm:$0xff]
    %v2936 = vld [vmem:[%s2892 + $0x158] sm:$0xff]
    %v2937 = vld [vmem:[%s2892 + $0x160] sm:$0xff]
    %v2938 = vld [vmem:[%s2892 + $0x168] sm:$0xff]
    %v2939 = vld [vmem:[%s2892 + $0x170] sm:$0xff]
    %v2940 = vld [vmem:[%s2892 + $0x178] sm:$0xff]
    %v2941 = vld [vmem:[%s2892 + $0x180] sm:$0xff]
    %v2942 = vld [vmem:[%s2892 + $0x188] sm:$0xff]
    %v2943 = vld [vmem:[%s2892 + $0x190] sm:$0xff]
    %v2944 = vld [vmem:[%s2892 + $0x198] sm:$0xff]
    %v2945 = vld [vmem:[%s2892 + $0x1a0] sm:$0xff]
    %v2946 = vld [vmem:[%s2892 + $0x1a8] sm:$0xff]
    %v2947 = vld [vmem:[%s2892 + $0x1b0] sm:$0xff]
    %v2948 = vld [vmem:[%s2892 + $0x1b8] sm:$0xff]
    %v2949 = vld [vmem:[%s2892 + $0x1c0] sm:$0xff]
    %v2950 = vld [vmem:[%s2892 + $0x1c8] sm:$0xff]
    %v2951 = vld [vmem:[%s2892 + $0x1d0] sm:$0xff]
    %v2952 = vld [vmem:[%s2892 + $0x1d8] sm:$0xff]
    %v2953 = vld [vmem:[%s2892 + $0x1e0] sm:$0xff]
    %v2954 = vld [vmem:[%s2892 + $0x1e8] sm:$0xff]
    %v2955 = vld [vmem:[%s2892 + $0x1f0] sm:$0xff]
    %v2956 = vld [vmem:[%s2892 + $0x1f8] sm:$0xff]
    %v2957 = vld [vmem:[%s2892 + $0x200] sm:$0xff]
    %v2958 = vld [vmem:[%s2892 + $0x208] sm:$0xff]
    %v2959 = vld [vmem:[%s2892 + $0x210] sm:$0xff]
    %v2960 = vld [vmem:[%s2892 + $0x218] sm:$0xff]
    %v2961 = vld [vmem:[%s2892 + $0x220] sm:$0xff]
    %v2962 = vld [vmem:[%s2892 + $0x228] sm:$0xff]
    %v2963 = vld [vmem:[%s2892 + $0x230] sm:$0xff]
    %v2964 = vld [vmem:[%s2892 + $0x238] sm:$0xff]
    %v2965 = vld [vmem:[%s2892 + $0x240] sm:$0xff]
    %v2966 = vld [vmem:[%s2892 + $0x248] sm:$0xff]
    %v2967 = vld [vmem:[%s2892 + $0x250] sm:$0xff]
    %v2968 = vld [vmem:[%s2892 + $0x258] sm:$0xff]
    %v2969 = vld [vmem:[%s2892 + $0x260] sm:$0xff]
    %v2970 = vld [vmem:[%s2892 + $0x268] sm:$0xff]
    %v2971 = vld [vmem:[%s2892 + $0x270] sm:$0xff]
    %v2972 = vld [vmem:[%s2892 + $0x278] sm:$0xff]
    %v2973 = vld [vmem:[%s2892 + $0x280] sm:$0xff]
    %v2974 = vld [vmem:[%s2892 + $0x288] sm:$0xff]
    %v2975 = vld [vmem:[%s2892 + $0x290] sm:$0xff]
    %v2976 = vld [vmem:[%s2892 + $0x298] sm:$0xff]
    %v2977 = vld [vmem:[%s2892 + $0x2a0] sm:$0xff]
    %v2978 = vld [vmem:[%s2892 + $0x2a8] sm:$0xff]
    %v2979 = vld [vmem:[%s2892 + $0x2b0] sm:$0xff]
    %v2980 = vld [vmem:[%s2892 + $0x2b8] sm:$0xff]
    %v2981 = vld [vmem:[%s2892 + $0x2c0] sm:$0xff]
    %v2982 = vld [vmem:[%s2892 + $0x2c8] sm:$0xff]
    %v2983 = vld [vmem:[%s2892 + $0x2d0] sm:$0xff]
    %v2984 = vld [vmem:[%s2892 + $0x2d8] sm:$0xff]
    %v2985 = vld [vmem:[%s2892 + $0x2e0] sm:$0xff]
    %v2986 = vld [vmem:[%s2892 + $0x2e8] sm:$0xff]
    %v2987 = vld [vmem:[%s2892 + $0x2f0] sm:$0xff]
    %v2988 = vld [vmem:[%s2892 + $0x2f8] sm:$0xff]
    %v2989 = vpack.c.bf16 %v2881, %v2879
    %v2990 = vpack.c.bf16 %v2882, %v2880
    %s2991 = scalar_lea.vmem %s5, 6
    %v2992 = vld [vmem:[%s2991] sm:$0x3f]
    %v2994 = vlaneseq
    %v2995 = vshrl.u32 %v2994, 7
    %v2996 = vsub.s32 0, %v2995
    %v2997 = vrot.slane %v2992, %v2996
    %v2998 = vlaneseq
    %v2999 = vshrl.u32 %v2998, 7
    %v3000 = vsub.s32 1, %v2999
    %v3001 = vrot.slane %v2992, %v3000
    %v3002 = vlaneseq
    %v3003 = vshrl.u32 %v3002, 7
    %v3004 = vsub.s32 2, %v3003
    %v3005 = vrot.slane %v2992, %v3004
    %v3006 = vlaneseq
    %v3007 = vshrl.u32 %v3006, 7
    %v3008 = vsub.s32 3, %v3007
    %v3009 = vrot.slane %v2992, %v3008
    %v3010 = vlaneseq
    %v3011 = vshrl.u32 %v3010, 7
    %v3012 = vsub.s32 4, %v3011
    %v3013 = vrot.slane %v2992, %v3012
    %v3014 = vlaneseq
    %v3015 = vshrl.u32 %v3014, 7
    %v3016 = vsub.s32 5, %v3015
    %v3017 = vrot.slane %v2992, %v3016
    %v3120 = vunpack.c.l.b16 %v2893
    %v3121 = vunpack.c.h.b16 %v2893
    %v3122 = vunpack.c.l.b16 %v2894
    %v3123 = vunpack.c.h.b16 %v2894
    %v3124 = vunpack.c.l.b16 %v2895
    %v3125 = vunpack.c.h.b16 %v2895
    %v3126 = vunpack.c.l.b16 %v2896
    %v3127 = vunpack.c.h.b16 %v2896
    %v3128 = vunpack.c.l.b16 %v2897
    %v3129 = vunpack.c.h.b16 %v2897
    %v3130 = vunpack.c.l.b16 %v2898
    %v3131 = vunpack.c.h.b16 %v2898
    %v3132 = vunpack.c.l.b16 %v2899
    %v3133 = vunpack.c.h.b16 %v2899
    %v3134 = vunpack.c.l.b16 %v2900
    %v3135 = vunpack.c.h.b16 %v2900
    %v3136 = vunpack.c.l.b16 %v2901
    %v3137 = vunpack.c.h.b16 %v2901
    %v3138 = vunpack.c.l.b16 %v2902
    %v3139 = vunpack.c.h.b16 %v2902
    %v3140 = vunpack.c.l.b16 %v2903
    %v3141 = vunpack.c.h.b16 %v2903
    %v3142 = vunpack.c.l.b16 %v2904
    %v3143 = vunpack.c.h.b16 %v2904
    %v3144 = vunpack.c.l.b16 %v2905
    %v3145 = vunpack.c.h.b16 %v2905
    %v3146 = vunpack.c.l.b16 %v2906
    %v3147 = vunpack.c.h.b16 %v2906
    %v3148 = vunpack.c.l.b16 %v2907
    %v3149 = vunpack.c.h.b16 %v2907
    %v3150 = vunpack.c.l.b16 %v2908
    %v3151 = vunpack.c.h.b16 %v2908
    %v3152 = vunpack.c.l.b16 %v2909
    %v3153 = vunpack.c.h.b16 %v2909
    %v3154 = vunpack.c.l.b16 %v2910
    %v3155 = vunpack.c.h.b16 %v2910
    %v3156 = vunpack.c.l.b16 %v2911
    %v3157 = vunpack.c.h.b16 %v2911
    %v3158 = vunpack.c.l.b16 %v2912
    %v3159 = vunpack.c.h.b16 %v2912
    %v3160 = vunpack.c.l.b16 %v2913
    %v3161 = vunpack.c.h.b16 %v2913
    %v3162 = vunpack.c.l.b16 %v2914
    %v3163 = vunpack.c.h.b16 %v2914
    %v3164 = vunpack.c.l.b16 %v2915
    %v3165 = vunpack.c.h.b16 %v2915
    %v3166 = vunpack.c.l.b16 %v2916
    %v3167 = vunpack.c.h.b16 %v2916
    %v3168 = vunpack.c.l.b16 %v2917
    %v3169 = vunpack.c.h.b16 %v2917
    %v3170 = vunpack.c.l.b16 %v2918
    %v3171 = vunpack.c.h.b16 %v2918
    %v3172 = vunpack.c.l.b16 %v2919
    %v3173 = vunpack.c.h.b16 %v2919
    %v3174 = vunpack.c.l.b16 %v2920
    %v3175 = vunpack.c.h.b16 %v2920
    %v3176 = vunpack.c.l.b16 %v2921
    %v3177 = vunpack.c.h.b16 %v2921
    %v3178 = vunpack.c.l.b16 %v2922
    %v3179 = vunpack.c.h.b16 %v2922
    %v3180 = vunpack.c.l.b16 %v2923
    %v3181 = vunpack.c.h.b16 %v2923
    %v3182 = vunpack.c.l.b16 %v2924
    %v3183 = vunpack.c.h.b16 %v2924
    %v3184 = vunpack.c.l.b16 %v2925
    %v3185 = vunpack.c.h.b16 %v2925
    %v3186 = vunpack.c.l.b16 %v2926
    %v3187 = vunpack.c.h.b16 %v2926
    %v3188 = vunpack.c.l.b16 %v2927
    %v3189 = vunpack.c.h.b16 %v2927
    %v3190 = vunpack.c.l.b16 %v2928
    %v3191 = vunpack.c.h.b16 %v2928
    %v3192 = vunpack.c.l.b16 %v2929
    %v3193 = vunpack.c.h.b16 %v2929
    %v3194 = vunpack.c.l.b16 %v2930
    %v3195 = vunpack.c.h.b16 %v2930
    %v3196 = vunpack.c.l.b16 %v2931
    %v3197 = vunpack.c.h.b16 %v2931
    %v3198 = vunpack.c.l.b16 %v2932
    %v3199 = vunpack.c.h.b16 %v2932
    %v3200 = vunpack.c.l.b16 %v2933
    %v3201 = vunpack.c.h.b16 %v2933
    %v3202 = vunpack.c.l.b16 %v2934
    %v3203 = vunpack.c.h.b16 %v2934
    %v3204 = vunpack.c.l.b16 %v2935
    %v3205 = vunpack.c.h.b16 %v2935
    %v3206 = vunpack.c.l.b16 %v2936
    %v3207 = vunpack.c.h.b16 %v2936
    %v3208 = vunpack.c.l.b16 %v2937
    %v3209 = vunpack.c.h.b16 %v2937
    %v3210 = vunpack.c.l.b16 %v2938
    %v3211 = vunpack.c.h.b16 %v2938
    %v3212 = vunpack.c.l.b16 %v2939
    %v3213 = vunpack.c.h.b16 %v2939
    %v3214 = vunpack.c.l.b16 %v2940
    %v3215 = vunpack.c.h.b16 %v2940
    %v3216 = vunpack.c.l.b16 %v2941
    %v3217 = vunpack.c.h.b16 %v2941
    %v3218 = vunpack.c.l.b16 %v2942
    %v3219 = vunpack.c.h.b16 %v2942
    %v3220 = vunpack.c.l.b16 %v2943
    %v3221 = vunpack.c.h.b16 %v2943
    %v3222 = vunpack.c.l.b16 %v2944
    %v3223 = vunpack.c.h.b16 %v2944
    %v3224 = vunpack.c.l.b16 %v2945
    %v3225 = vunpack.c.h.b16 %v2945
    %v3226 = vunpack.c.l.b16 %v2946
    %v3227 = vunpack.c.h.b16 %v2946
    %v3228 = vunpack.c.l.b16 %v2947
    %v3229 = vunpack.c.h.b16 %v2947
    %v3230 = vunpack.c.l.b16 %v2948
    %v3231 = vunpack.c.h.b16 %v2948
    %v3232 = vunpack.c.l.b16 %v2949
    %v3233 = vunpack.c.h.b16 %v2949
    %v3234 = vunpack.c.l.b16 %v2950
    %v3235 = vunpack.c.h.b16 %v2950
    %v3236 = vunpack.c.l.b16 %v2951
    %v3237 = vunpack.c.h.b16 %v2951
    %v3238 = vunpack.c.l.b16 %v2952
    %v3239 = vunpack.c.h.b16 %v2952
    %v3240 = vunpack.c.l.b16 %v2953
    %v3241 = vunpack.c.h.b16 %v2953
    %v3242 = vunpack.c.l.b16 %v2954
    %v3243 = vunpack.c.h.b16 %v2954
    %v3244 = vunpack.c.l.b16 %v2955
    %v3245 = vunpack.c.h.b16 %v2955
    %v3246 = vunpack.c.l.b16 %v2956
    %v3247 = vunpack.c.h.b16 %v2956
    %v3248 = vunpack.c.l.b16 %v2957
    %v3249 = vunpack.c.h.b16 %v2957
    %v3250 = vunpack.c.l.b16 %v2958
    %v3251 = vunpack.c.h.b16 %v2958
    %v3252 = vunpack.c.l.b16 %v2959
    %v3253 = vunpack.c.h.b16 %v2959
    %v3254 = vunpack.c.l.b16 %v2960
    %v3255 = vunpack.c.h.b16 %v2960
    %v3256 = vunpack.c.l.b16 %v2961
    %v3257 = vunpack.c.h.b16 %v2961
    %v3258 = vunpack.c.l.b16 %v2962
    %v3259 = vunpack.c.h.b16 %v2962
    %v3260 = vunpack.c.l.b16 %v2963
    %v3261 = vunpack.c.h.b16 %v2963
    %v3262 = vunpack.c.l.b16 %v2964
    %v3263 = vunpack.c.h.b16 %v2964
    %v3264 = vunpack.c.l.b16 %v2965
    %v3265 = vunpack.c.h.b16 %v2965
    %v3266 = vunpack.c.l.b16 %v2966
    %v3267 = vunpack.c.h.b16 %v2966
    %v3268 = vunpack.c.l.b16 %v2967
    %v3269 = vunpack.c.h.b16 %v2967
    %v3270 = vunpack.c.l.b16 %v2968
    %v3271 = vunpack.c.h.b16 %v2968
    %v3272 = vunpack.c.l.b16 %v2969
    %v3273 = vunpack.c.h.b16 %v2969
    %v3274 = vunpack.c.l.b16 %v2970
    %v3275 = vunpack.c.h.b16 %v2970
    %v3276 = vunpack.c.l.b16 %v2971
    %v3277 = vunpack.c.h.b16 %v2971
    %v3278 = vunpack.c.l.b16 %v2972
    %v3279 = vunpack.c.h.b16 %v2972
    %v3280 = vunpack.c.l.b16 %v2973
    %v3281 = vunpack.c.h.b16 %v2973
    %v3282 = vunpack.c.l.b16 %v2974
    %v3283 = vunpack.c.h.b16 %v2974
    %v3284 = vunpack.c.l.b16 %v2975
    %v3285 = vunpack.c.h.b16 %v2975
    %v3286 = vunpack.c.l.b16 %v2976
    %v3287 = vunpack.c.h.b16 %v2976
    %v3288 = vunpack.c.l.b16 %v2977
    %v3289 = vunpack.c.h.b16 %v2977
    %v3290 = vunpack.c.l.b16 %v2978
    %v3291 = vunpack.c.h.b16 %v2978
    %v3292 = vunpack.c.l.b16 %v2979
    %v3293 = vunpack.c.h.b16 %v2979
    %v3294 = vunpack.c.l.b16 %v2980
    %v3295 = vunpack.c.h.b16 %v2980
    %v3296 = vunpack.c.l.b16 %v2981
    %v3297 = vunpack.c.h.b16 %v2981
    %v3298 = vunpack.c.l.b16 %v2982
    %v3299 = vunpack.c.h.b16 %v2982
    %v3300 = vunpack.c.l.b16 %v2983
    %v3301 = vunpack.c.h.b16 %v2983
    %v3302 = vunpack.c.l.b16 %v2984
    %v3303 = vunpack.c.h.b16 %v2984
    %v3304 = vunpack.c.l.b16 %v2985
    %v3305 = vunpack.c.h.b16 %v2985
    %v3306 = vunpack.c.l.b16 %v2986
    %v3307 = vunpack.c.h.b16 %v2986
    %v3308 = vunpack.c.l.b16 %v2987
    %v3309 = vunpack.c.h.b16 %v2987
    %v3310 = vunpack.c.l.b16 %v2988
    %v3311 = vunpack.c.h.b16 %v2988
    %v3312 = vpack.c.b16 %v3126, %v3120
    %v3313 = vpack.c.b16 %v3127, %v3121
    %v3314 = vpack.c.b16 %v3128, %v3122
    %v3315 = vpack.c.b16 %v3129, %v3123
    %v3316 = vpack.c.b16 %v3130, %v3124
    %v3317 = vpack.c.b16 %v3131, %v3125
    %v3318 = vpack.c.b16 %v3138, %v3132
    %v3319 = vpack.c.b16 %v3139, %v3133
    %v3320 = vpack.c.b16 %v3140, %v3134
    %v3321 = vpack.c.b16 %v3141, %v3135
    %v3322 = vpack.c.b16 %v3142, %v3136
    %v3323 = vpack.c.b16 %v3143, %v3137
    %v3324 = vpack.c.b16 %v3150, %v3144
    %v3325 = vpack.c.b16 %v3151, %v3145
    %v3326 = vpack.c.b16 %v3152, %v3146
    %v3327 = vpack.c.b16 %v3153, %v3147
    %v3328 = vpack.c.b16 %v3154, %v3148
    %v3329 = vpack.c.b16 %v3155, %v3149
    %v3330 = vpack.c.b16 %v3162, %v3156
    %v3331 = vpack.c.b16 %v3163, %v3157
    %v3332 = vpack.c.b16 %v3164, %v3158
    %v3333 = vpack.c.b16 %v3165, %v3159
    %v3334 = vpack.c.b16 %v3166, %v3160
    %v3335 = vpack.c.b16 %v3167, %v3161
    %v3336 = vpack.c.b16 %v3174, %v3168
    %v3337 = vpack.c.b16 %v3175, %v3169
    %v3338 = vpack.c.b16 %v3176, %v3170
    %v3339 = vpack.c.b16 %v3177, %v3171
    %v3340 = vpack.c.b16 %v3178, %v3172
    %v3341 = vpack.c.b16 %v3179, %v3173
    %v3342 = vpack.c.b16 %v3186, %v3180
    %v3343 = vpack.c.b16 %v3187, %v3181
    %v3344 = vpack.c.b16 %v3188, %v3182
    %v3345 = vpack.c.b16 %v3189, %v3183
    %v3346 = vpack.c.b16 %v3190, %v3184
    %v3347 = vpack.c.b16 %v3191, %v3185
    %v3348 = vpack.c.b16 %v3198, %v3192
    %v3349 = vpack.c.b16 %v3199, %v3193
    %v3350 = vpack.c.b16 %v3200, %v3194
    %v3351 = vpack.c.b16 %v3201, %v3195
    %v3352 = vpack.c.b16 %v3202, %v3196
    %v3353 = vpack.c.b16 %v3203, %v3197
    %v3354 = vpack.c.b16 %v3210, %v3204
    %v3355 = vpack.c.b16 %v3211, %v3205
    %v3356 = vpack.c.b16 %v3212, %v3206
    %v3357 = vpack.c.b16 %v3213, %v3207
    %v3358 = vpack.c.b16 %v3214, %v3208
    %v3359 = vpack.c.b16 %v3215, %v3209
    %v3360 = vpack.c.b16 %v3222, %v3216
    %v3361 = vpack.c.b16 %v3223, %v3217
    %v3362 = vpack.c.b16 %v3224, %v3218
    %v3363 = vpack.c.b16 %v3225, %v3219
    %v3364 = vpack.c.b16 %v3226, %v3220
    %v3365 = vpack.c.b16 %v3227, %v3221
    %v3366 = vpack.c.b16 %v3234, %v3228
    %v3367 = vpack.c.b16 %v3235, %v3229
    %v3368 = vpack.c.b16 %v3236, %v3230
    %v3369 = vpack.c.b16 %v3237, %v3231
    %v3370 = vpack.c.b16 %v3238, %v3232
    %v3371 = vpack.c.b16 %v3239, %v3233
    %v3372 = vpack.c.b16 %v3246, %v3240
    %v3373 = vpack.c.b16 %v3247, %v3241
    %v3374 = vpack.c.b16 %v3248, %v3242
    %v3375 = vpack.c.b16 %v3249, %v3243
    %v3376 = vpack.c.b16 %v3250, %v3244
    %v3377 = vpack.c.b16 %v3251, %v3245
    %v3378 = vpack.c.b16 %v3258, %v3252
    %v3379 = vpack.c.b16 %v3259, %v3253
    %v3380 = vpack.c.b16 %v3260, %v3254
    %v3381 = vpack.c.b16 %v3261, %v3255
    %v3382 = vpack.c.b16 %v3262, %v3256
    %v3383 = vpack.c.b16 %v3263, %v3257
    %v3384 = vpack.c.b16 %v3270, %v3264
    %v3385 = vpack.c.b16 %v3271, %v3265
    %v3386 = vpack.c.b16 %v3272, %v3266
    %v3387 = vpack.c.b16 %v3273, %v3267
    %v3388 = vpack.c.b16 %v3274, %v3268
    %v3389 = vpack.c.b16 %v3275, %v3269
    %v3390 = vpack.c.b16 %v3282, %v3276
    %v3391 = vpack.c.b16 %v3283, %v3277
    %v3392 = vpack.c.b16 %v3284, %v3278
    %v3393 = vpack.c.b16 %v3285, %v3279
    %v3394 = vpack.c.b16 %v3286, %v3280
    %v3395 = vpack.c.b16 %v3287, %v3281
    %v3396 = vpack.c.b16 %v3294, %v3288
    %v3397 = vpack.c.b16 %v3295, %v3289
    %v3398 = vpack.c.b16 %v3296, %v3290
    %v3399 = vpack.c.b16 %v3297, %v3291
    %v3400 = vpack.c.b16 %v3298, %v3292
    %v3401 = vpack.c.b16 %v3299, %v3293
    %v3402 = vpack.c.b16 %v3306, %v3300
    %v3403 = vpack.c.b16 %v3307, %v3301
    %v3404 = vpack.c.b16 %v3308, %v3302
    %v3405 = vpack.c.b16 %v3309, %v3303
    %v3406 = vpack.c.b16 %v3310, %v3304
    %v3407 = vpack.c.b16 %v3311, %v3305
    %3504 = vmatprep.subr.bf16.mxu0 %v3313
    %3505 = vmatpush1.bf16.msra.mxu0 %v3312
    %3506 = vmatprep.subr.bf16.mxu0 %v3319
    %3507 = vmatpush1.bf16.msra.mxu0 %v3318
    %3508 = vmatprep.subr.bf16.mxu0 %v3325
    %3509 = vmatpush1.bf16.msra.mxu0 %v3324
    %3510 = vmatprep.subr.bf16.mxu0 %v3331
    %3511 = vmatpush1.bf16.msra.mxu0 %v3330
    %3512 = vmatprep.subr.bf16.mxu0 %v3337
    %3513 = vmatpush1.bf16.msra.mxu0 %v3336
    %3514 = vmatprep.subr.bf16.mxu0 %v3343
    %3515 = vmatpush1.bf16.msra.mxu0 %v3342
    %3516 = vmatprep.subr.bf16.mxu0 %v3349
    %3517 = vmatpush1.bf16.msra.mxu0 %v3348
    %3518 = vmatprep.subr.bf16.mxu0 %v3355
    %3519 = vmatpush1.bf16.msra.mxu0 %v3354
    %3520 = vmatprep.subr.bf16.mxu0 %v3361
    %3521 = vmatpush1.bf16.msra.mxu0 %v3360
    %3522 = vmatprep.subr.bf16.mxu0 %v3367
    %3523 = vmatpush1.bf16.msra.mxu0 %v3366
    %3524 = vmatprep.subr.bf16.mxu0 %v3373
    %3525 = vmatpush1.bf16.msra.mxu0 %v3372
    %3526 = vmatprep.subr.bf16.mxu0 %v3379
    %3527 = vmatpush1.bf16.msra.mxu0 %v3378
    %3528 = vmatprep.subr.bf16.mxu0 %v3385
    %3529 = vmatpush1.bf16.msra.mxu0 %v3384
    %3530 = vmatprep.subr.bf16.mxu0 %v3391
    %3531 = vmatpush1.bf16.msra.mxu0 %v3390
    %3532 = vmatprep.subr.bf16.mxu0 %v3397
    %3533 = vmatpush1.bf16.msra.mxu0 %v3396
    %3534 = vmatprep.subr.bf16.mxu0 %v3403
    %3535 = vmatpush1.bf16.msra.mxu0 %v3402
    %3536 = vmatprep.mubr.bf16.mxu0 %v2990
    %3537 = vmatmul.mubr.bf16.gmra.mrb[0].mxu0 %v2989
    %v3538 = vpop.f32.mrb[0].mxu0
    %v3539 = vadd.f32 %v2997, %v3538
    %v3540 = vpop.f32.mrb[0].mxu0
    %v3541 = vadd.f32 %v3001, %v3540
    %v3542 = vpop.f32.mrb[0].mxu0
    %v3543 = vadd.f32 %v2997, %v3542
    %v3544 = vpop.f32.mrb[0].mxu0
    %v3545 = vadd.f32 %v3001, %v3544
    %3546 = vdwg.mxu0
    %3547 = vmatprep.subr.bf16.mxu0 %v3315
    %3548 = vmatpush1.bf16.msra.mxu0 %v3314
    %3549 = vmatprep.subr.bf16.mxu0 %v3321
    %3550 = vmatpush1.bf16.msra.mxu0 %v3320
    %3551 = vmatprep.subr.bf16.mxu0 %v3327
    %3552 = vmatpush1.bf16.msra.mxu0 %v3326
    %3553 = vmatprep.subr.bf16.mxu0 %v3333
    %3554 = vmatpush1.bf16.msra.mxu0 %v3332
    %3555 = vmatprep.subr.bf16.mxu0 %v3339
    %3556 = vmatpush1.bf16.msra.mxu0 %v3338
    %3557 = vmatprep.subr.bf16.mxu0 %v3345
    %3558 = vmatpush1.bf16.msra.mxu0 %v3344
    %3559 = vmatprep.subr.bf16.mxu0 %v3351
    %3560 = vmatpush1.bf16.msra.mxu0 %v3350
    %3561 = vmatprep.subr.bf16.mxu0 %v3357
    %3562 = vmatpush1.bf16.msra.mxu0 %v3356
    %3563 = vmatprep.subr.bf16.mxu0 %v3363
    %3564 = vmatpush1.bf16.msra.mxu0 %v3362
    %3565 = vmatprep.subr.bf16.mxu0 %v3369
    %3566 = vmatpush1.bf16.msra.mxu0 %v3368
    %3567 = vmatprep.subr.bf16.mxu0 %v3375
    %3568 = vmatpush1.bf16.msra.mxu0 %v3374
    %3569 = vmatprep.subr.bf16.mxu0 %v3381
    %3570 = vmatpush1.bf16.msra.mxu0 %v3380
    %3571 = vmatprep.subr.bf16.mxu0 %v3387
    %3572 = vmatpush1.bf16.msra.mxu0 %v3386
    %3573 = vmatprep.subr.bf16.mxu0 %v3393
    %3574 = vmatpush1.bf16.msra.mxu0 %v3392
    %3575 = vmatprep.subr.bf16.mxu0 %v3399
    %3576 = vmatpush1.bf16.msra.mxu0 %v3398
    %3577 = vmatprep.subr.bf16.mxu0 %v3405
    %3578 = vmatpush1.bf16.msra.mxu0 %v3404
    %3579 = vmatprep.mubr.bf16.mxu0 %v2990
    %3580 = vmatmul.mubr.bf16.gmra.mrb[0].mxu0 %v2989
    %v3581 = vpop.f32.mrb[0].mxu0
    %v3582 = vadd.f32 %v3005, %v3581
    %v3583 = vpop.f32.mrb[0].mxu0
    %v3584 = vadd.f32 %v3009, %v3583
    %v3585 = vpop.f32.mrb[0].mxu0
    %v3586 = vadd.f32 %v3005, %v3585
    %v3587 = vpop.f32.mrb[0].mxu0
    %v3588 = vadd.f32 %v3009, %v3587
    %3589 = vdwg.mxu0
    %3590 = vmatprep.subr.bf16.mxu0 %v3317
    %3591 = vmatpush1.bf16.msra.mxu0 %v3316
    %3592 = vmatprep.subr.bf16.mxu0 %v3323
    %3593 = vmatpush1.bf16.msra.mxu0 %v3322
    %3594 = vmatprep.subr.bf16.mxu0 %v3329
    %3595 = vmatpush1.bf16.msra.mxu0 %v3328
    %3596 = vmatprep.subr.bf16.mxu0 %v3335
    %3597 = vmatpush1.bf16.msra.mxu0 %v3334
    %3598 = vmatprep.subr.bf16.mxu0 %v3341
    %3599 = vmatpush1.bf16.msra.mxu0 %v3340
    %3600 = vmatprep.subr.bf16.mxu0 %v3347
    %3601 = vmatpush1.bf16.msra.mxu0 %v3346
    %3602 = vmatprep.subr.bf16.mxu0 %v3353
    %3603 = vmatpush1.bf16.msra.mxu0 %v3352
    %3604 = vmatprep.subr.bf16.mxu0 %v3359
    %3605 = vmatpush1.bf16.msra.mxu0 %v3358
    %3606 = vmatprep.subr.bf16.mxu0 %v3365
    %3607 = vmatpush1.bf16.msra.mxu0 %v3364
    %3608 = vmatprep.subr.bf16.mxu0 %v3371
    %3609 = vmatpush1.bf16.msra.mxu0 %v3370
    %3610 = vmatprep.subr.bf16.mxu0 %v3377
    %3611 = vmatpush1.bf16.msra.mxu0 %v3376
    %3612 = vmatprep.subr.bf16.mxu0 %v3383
    %3613 = vmatpush1.bf16.msra.mxu0 %v3382
    %3614 = vmatprep.subr.bf16.mxu0 %v3389
    %3615 = vmatpush1.bf16.msra.mxu0 %v3388
    %3616 = vmatprep.subr.bf16.mxu0 %v3395
    %3617 = vmatpush1.bf16.msra.mxu0 %v3394
    %3618 = vmatprep.subr.bf16.mxu0 %v3401
    %3619 = vmatpush1.bf16.msra.mxu0 %v3400
    %3620 = vmatprep.subr.bf16.mxu0 %v3407
    %3621 = vmatpush1.bf16.msra.mxu0 %v3406
    %3622 = vmatprep.mubr.bf16.mxu0 %v2990
    %3623 = vmatmul.mubr.bf16.gmra.mrb[0].mxu0 %v2989
    %v3624 = vpop.f32.mrb[0].mxu0
    %v3625 = vadd.f32 %v3013, %v3624
    %v3626 = vpop.f32.mrb[0].mxu0
    %v3627 = vadd.f32 %v3017, %v3626
    %v3628 = vpop.f32.mrb[0].mxu0
    %v3629 = vadd.f32 %v3013, %v3628
    %v3630 = vpop.f32.mrb[0].mxu0
    %v3631 = vadd.f32 %v3017, %v3630
    %3632 = vdwg.mxu0
    %v3633 = vmul.f32 %v3539, 0.125
    %v3634 = vmul.f32 %v3543, 0.125
    %v3635 = vpack.c.bf16 %v3634, %v3633
    %v3636 = vpack.c.bf16 %v3586, %v3582
    %v3637 = vpack.c.bf16 %v3629, %v3625
    %v3639 = vsel %vm943, %v3635, 0
    %v3642 = vsel %vm943, %v3636, 0
    %3644 = vmatprep.subr.bf16.mxu0 0
    %3645 = vmatpush1.bf16.xpose.msra.mxu0 %v3642
    %3646 = vmatprep.subr.bf16.mxu0 0
    %3647 = vmatpush1.bf16.xpose.msra.mxu0 0
    %3648 = vmatprep.subr.bf16.mxu0 0
    %3649 = vmatpush1.bf16.xpose.msra.mxu0 0
    %3650 = vmatprep.subr.bf16.mxu0 0
    %3651 = vmatpush1.bf16.xpose.msra.mxu0 0
    %3652 = vmatprep.subr.bf16.mxu0 0
    %3653 = vmatpush1.bf16.xpose.msra.mxu0 0
    %3654 = vmatprep.subr.bf16.mxu0 0
    %3655 = vmatpush1.bf16.xpose.msra.mxu0 0
    %3656 = vmatprep.subr.bf16.mxu0 0
    %3657 = vmatpush1.bf16.xpose.msra.mxu0 0
    %3658 = vmatprep.subr.bf16.mxu0 0
    %3659 = vmatpush1.bf16.xpose.msra.mxu0 0
    %3660 = vmatprep.subr.bf16.mxu0 0
    %3661 = vmatpush1.bf16.xpose.msra.mxu0 0
    %3662 = vmatprep.subr.bf16.mxu0 0
    %3663 = vmatpush1.bf16.xpose.msra.mxu0 0
    %3664 = vmatprep.subr.bf16.mxu0 0
    %3665 = vmatpush1.bf16.xpose.msra.mxu0 0
    %3666 = vmatprep.subr.bf16.mxu0 0
    %3667 = vmatpush1.bf16.xpose.msra.mxu0 0
    %3668 = vmatprep.subr.bf16.mxu0 0
    %3669 = vmatpush1.bf16.xpose.msra.mxu0 0
    %3670 = vmatprep.subr.bf16.mxu0 0
    %3671 = vmatpush1.bf16.xpose.msra.mxu0 0
    %3672 = vmatprep.subr.bf16.mxu0 0
    %3673 = vmatpush1.bf16.xpose.msra.mxu0 0
    %3674 = vmatprep.subr.bf16.mxu0 0
    %3675 = vmatpush1.bf16.xpose.msra.mxu0 0
    %3676 = vmatprep.mubr.bf16.mxu0 0
    %3677 = vmatmul.mubr.bf16.gmra.mrb[0].mxu0 %v3639
    %v3678 = vpop.f32.mrb[0].mxu0
    %v3679 = vadd.f32 %v128, %v3678
    %v3680 = vpop.f32.mrb[0].mxu0
    %v3681 = vpop.f32.mrb[0].mxu0
    %v3682 = vadd.f32 %v129, %v3681
    %v3683 = vpop.f32.mrb[0].mxu0
    %3684 = vdwg.mxu0
    %v3685 = vsel %vm991, %v3679, -inf
    %3686 = vmax.xlane.f32.xlu0 %v3685
    %v3687 = vpop.xlane.xlu0 %3686
    %v3688 = vsel %vm991, %v3682, -inf
    %3689 = vmax.xlane.f32.xlu0 %v3688
    %v3690 = vpop.xlane.xlu0 %3689
    %v3691 = vsub.f32 %v3679, %v3687
    %v3692 = vsub.f32 %v3682, %v3690
    %v3693 = vmul.f32 %v3691, 1.442695
    %v3694 = vpow.pop %v3693
    %v3695 = vmul.f32 %v3692, 1.442695
    %v3696 = vpow.pop %v3695
    %v3697 = vsel %vm991, %v3694, 0.0
    %3698 = vadd.xlane.f32.xlu0 %v3697
    %v3699 = vpop.xlane.xlu0 %3698
    %v3700 = vsel %vm991, %v3696, 0.0
    %3701 = vadd.xlane.f32.xlu0 %v3700
    %v3702 = vpop.xlane.xlu0 %3701
    %v3703 = vrcp.pop %v3699
    %v3704 = vmul.f32 %v3694, %v3703
    %v3705 = vrcp.pop %v3702
    %v3706 = vmul.f32 %v3696, %v3705
    %v3707 = vpack.c.bf16 %v3706, %v3704
    %v3709 = vsel %vm991, %v3707, 0
    %3711 = vmatprep.subr.bf16.mxu0 0
    %3712 = vmatpush1.bf16.msra.mxu0 %v3637
    %3713 = vmatprep.subr.bf16.mxu0 0
    %3714 = vmatpush1.bf16.msra.mxu0 0
    %3715 = vmatprep.subr.bf16.mxu0 0
    %3716 = vmatpush1.bf16.msra.mxu0 0
    %3717 = vmatprep.subr.bf16.mxu0 0
    %3718 = vmatpush1.bf16.msra.mxu0 0
    %3719 = vmatprep.subr.bf16.mxu0 0
    %3720 = vmatpush1.bf16.msra.mxu0 0
    %3721 = vmatprep.subr.bf16.mxu0 0
    %3722 = vmatpush1.bf16.msra.mxu0 0
    %3723 = vmatprep.subr.bf16.mxu0 0
    %3724 = vmatpush1.bf16.msra.mxu0 0
    %3725 = vmatprep.subr.bf16.mxu0 0
    %3726 = vmatpush1.bf16.msra.mxu0 0
    %3727 = vmatprep.subr.bf16.mxu0 0
    %3728 = vmatpush1.bf16.msra.mxu0 0
    %3729 = vmatprep.subr.bf16.mxu0 0
    %3730 = vmatpush1.bf16.msra.mxu0 0
    %3731 = vmatprep.subr.bf16.mxu0 0
    %3732 = vmatpush1.bf16.msra.mxu0 0
    %3733 = vmatprep.subr.bf16.mxu0 0
    %3734 = vmatpush1.bf16.msra.mxu0 0
    %3735 = vmatprep.subr.bf16.mxu0 0
    %3736 = vmatpush1.bf16.msra.mxu0 0
    %3737 = vmatprep.subr.bf16.mxu0 0
    %3738 = vmatpush1.bf16.msra.mxu0 0
    %3739 = vmatprep.subr.bf16.mxu0 0
    %3740 = vmatpush1.bf16.msra.mxu0 0
    %3741 = vmatprep.subr.bf16.mxu0 0
    %3742 = vmatpush1.bf16.msra.mxu0 0
    %3743 = vmatprep.mubr.bf16.mxu0 0
    %3744 = vmatmul.mubr.bf16.gmra.mrb[0].mxu0 %v3709
    %v3745 = vpop.f32.mrb[0].mxu0
    %v3746 = vadd.f32 0.0, %v3745
    %v3747 = vpop.f32.mrb[0].mxu0
    %v3748 = vpop.f32.mrb[0].mxu0
    %v3749 = vadd.f32 0.0, %v3748
    %v3750 = vpop.f32.mrb[0].mxu0
    %3751 = vdwg.mxu0
    %3753 = vrot.lane.b32.xlu0 %v3635, 64
    %v3754 = vpop.permute.xlu0 %3753
    %3756 = vrot.lane.b32.xlu0 %v3636, 64
    %v3757 = vpop.permute.xlu0 %3756
    %v3759 = vsel %vm943, %v3754, 0
    %v3762 = vsel %vm943, %v3757, 0
    %3764 = vmatprep.subr.bf16.mxu0 0
    %3765 = vmatpush1.bf16.xpose.msra.mxu0 %v3762
    %3766 = vmatprep.subr.bf16.mxu0 0
    %3767 = vmatpush1.bf16.xpose.msra.mxu0 0
    %3768 = vmatprep.subr.bf16.mxu0 0
    %3769 = vmatpush1.bf16.xpose.msra.mxu0 0
    %3770 = vmatprep.subr.bf16.mxu0 0
    %3771 = vmatpush1.bf16.xpose.msra.mxu0 0
    %3772 = vmatprep.subr.bf16.mxu0 0
    %3773 = vmatpush1.bf16.xpose.msra.mxu0 0
    %3774 = vmatprep.subr.bf16.mxu0 0
    %3775 = vmatpush1.bf16.xpose.msra.mxu0 0
    %3776 = vmatprep.subr.bf16.mxu0 0
    %3777 = vmatpush1.bf16.xpose.msra.mxu0 0
    %3778 = vmatprep.subr.bf16.mxu0 0
    %3779 = vmatpush1.bf16.xpose.msra.mxu0 0
    %3780 = vmatprep.subr.bf16.mxu0 0
    %3781 = vmatpush1.bf16.xpose.msra.mxu0 0
    %3782 = vmatprep.subr.bf16.mxu0 0
    %3783 = vmatpush1.bf16.xpose.msra.mxu0 0
    %3784 = vmatprep.subr.bf16.mxu0 0
    %3785 = vmatpush1.bf16.xpose.msra.mxu0 0
    %3786 = vmatprep.subr.bf16.mxu0 0
    %3787 = vmatpush1.bf16.xpose.msra.mxu0 0
    %3788 = vmatprep.subr.bf16.mxu0 0
    %3789 = vmatpush1.bf16.xpose.msra.mxu0 0
    %3790 = vmatprep.subr.bf16.mxu0 0
    %3791 = vmatpush1.bf16.xpose.msra.mxu0 0
    %3792 = vmatprep.subr.bf16.mxu0 0
    %3793 = vmatpush1.bf16.xpose.msra.mxu0 0
    %3794 = vmatprep.subr.bf16.mxu0 0
    %3795 = vmatpush1.bf16.xpose.msra.mxu0 0
    %3796 = vmatprep.mubr.bf16.mxu0 0
    %3797 = vmatmul.mubr.bf16.gmra.mrb[0].mxu0 %v3759
    %v3798 = vpop.f32.mrb[0].mxu0
    %v3799 = vadd.f32 %v128, %v3798
    %v3800 = vpop.f32.mrb[0].mxu0
    %v3801 = vpop.f32.mrb[0].mxu0
    %v3802 = vadd.f32 %v129, %v3801
    %v3803 = vpop.f32.mrb[0].mxu0
    %3804 = vdwg.mxu0
    %v3805 = vsel %vm991, %v3799, -inf
    %3806 = vmax.xlane.f32.xlu0 %v3805
    %v3807 = vpop.xlane.xlu0 %3806
    %v3808 = vsel %vm991, %v3802, -inf
    %3809 = vmax.xlane.f32.xlu0 %v3808
    %v3810 = vpop.xlane.xlu0 %3809
    %v3811 = vsub.f32 %v3799, %v3807
    %v3812 = vsub.f32 %v3802, %v3810
    %v3813 = vmul.f32 %v3811, 1.442695
    %v3814 = vpow.pop %v3813
    %v3815 = vmul.f32 %v3812, 1.442695
    %v3816 = vpow.pop %v3815
    %v3817 = vsel %vm991, %v3814, 0.0
    %3818 = vadd.xlane.f32.xlu0 %v3817
    %v3819 = vpop.xlane.xlu0 %3818
    %v3820 = vsel %vm991, %v3816, 0.0
    %3821 = vadd.xlane.f32.xlu0 %v3820
    %v3822 = vpop.xlane.xlu0 %3821
    %v3823 = vrcp.pop %v3819
    %v3824 = vmul.f32 %v3814, %v3823
    %v3825 = vrcp.pop %v3822
    %v3826 = vmul.f32 %v3816, %v3825
    %v3827 = vpack.c.bf16 %v3826, %v3824
    %3829 = vrot.lane.b32.xlu0 %v3637, 64
    %v3830 = vpop.permute.xlu0 %3829
    %v3833 = vsel %vm991, %v3827, 0
    %3835 = vmatprep.subr.bf16.mxu0 0
    %3836 = vmatpush1.bf16.msra.mxu0 %v3830
    %3837 = vmatprep.subr.bf16.mxu0 0
    %3838 = vmatpush1.bf16.msra.mxu0 0
    %3839 = vmatprep.subr.bf16.mxu0 0
    %3840 = vmatpush1.bf16.msra.mxu0 0
    %3841 = vmatprep.subr.bf16.mxu0 0
    %3842 = vmatpush1.bf16.msra.mxu0 0
    %3843 = vmatprep.subr.bf16.mxu0 0
    %3844 = vmatpush1.bf16.msra.mxu0 0
    %3845 = vmatprep.subr.bf16.mxu0 0
    %3846 = vmatpush1.bf16.msra.mxu0 0
    %3847 = vmatprep.subr.bf16.mxu0 0
    %3848 = vmatpush1.bf16.msra.mxu0 0
    %3849 = vmatprep.subr.bf16.mxu0 0
    %3850 = vmatpush1.bf16.msra.mxu0 0
    %3851 = vmatprep.subr.bf16.mxu0 0
    %3852 = vmatpush1.bf16.msra.mxu0 0
    %3853 = vmatprep.subr.bf16.mxu0 0
    %3854 = vmatpush1.bf16.msra.mxu0 0
    %3855 = vmatprep.subr.bf16.mxu0 0
    %3856 = vmatpush1.bf16.msra.mxu0 0
    %3857 = vmatprep.subr.bf16.mxu0 0
    %3858 = vmatpush1.bf16.msra.mxu0 0
    %3859 = vmatprep.subr.bf16.mxu0 0
    %3860 = vmatpush1.bf16.msra.mxu0 0
    %3861 = vmatprep.subr.bf16.mxu0 0
    %3862 = vmatpush1.bf16.msra.mxu0 0
    %3863 = vmatprep.subr.bf16.mxu0 0
    %3864 = vmatpush1.bf16.msra.mxu0 0
    %3865 = vmatprep.subr.bf16.mxu0 0
    %3866 = vmatpush1.bf16.msra.mxu0 0
    %3867 = vmatprep.mubr.bf16.mxu0 0
    %3868 = vmatmul.mubr.bf16.gmra.mrb[0].mxu0 %v3833
    %v3869 = vpop.f32.mrb[0].mxu0
    %v3870 = vadd.f32 0.0, %v3869
    %v3871 = vpop.f32.mrb[0].mxu0
    %v3872 = vpop.f32.mrb[0].mxu0
    %v3873 = vadd.f32 0.0, %v3872
    %v3874 = vpop.f32.mrb[0].mxu0
    %3875 = vdwg.mxu0
    %v3876 = vmul.f32 %v3541, 0.125
    %v3877 = vmul.f32 %v3545, 0.125
    %v3878 = vpack.c.bf16 %v3877, %v3876
    %v3879 = vpack.c.bf16 %v3588, %v3584
    %v3880 = vpack.c.bf16 %v3631, %v3627
    %v3882 = vsel %vm943, %v3878, 0
    %v3885 = vsel %vm943, %v3879, 0
    %3887 = vmatprep.subr.bf16.mxu0 0
    %3888 = vmatpush1.bf16.xpose.msra.mxu0 %v3885
    %3889 = vmatprep.subr.bf16.mxu0 0
    %3890 = vmatpush1.bf16.xpose.msra.mxu0 0
    %3891 = vmatprep.subr.bf16.mxu0 0
    %3892 = vmatpush1.bf16.xpose.msra.mxu0 0
    %3893 = vmatprep.subr.bf16.mxu0 0
    %3894 = vmatpush1.bf16.xpose.msra.mxu0 0
    %3895 = vmatprep.subr.bf16.mxu0 0
    %3896 = vmatpush1.bf16.xpose.msra.mxu0 0
    %3897 = vmatprep.subr.bf16.mxu0 0
    %3898 = vmatpush1.bf16.xpose.msra.mxu0 0
    %3899 = vmatprep.subr.bf16.mxu0 0
    %3900 = vmatpush1.bf16.xpose.msra.mxu0 0
    %3901 = vmatprep.subr.bf16.mxu0 0
    %3902 = vmatpush1.bf16.xpose.msra.mxu0 0
    %3903 = vmatprep.subr.bf16.mxu0 0
    %3904 = vmatpush1.bf16.xpose.msra.mxu0 0
    %3905 = vmatprep.subr.bf16.mxu0 0
    %3906 = vmatpush1.bf16.xpose.msra.mxu0 0
    %3907 = vmatprep.subr.bf16.mxu0 0
    %3908 = vmatpush1.bf16.xpose.msra.mxu0 0
    %3909 = vmatprep.subr.bf16.mxu0 0
    %3910 = vmatpush1.bf16.xpose.msra.mxu0 0
    %3911 = vmatprep.subr.bf16.mxu0 0
    %3912 = vmatpush1.bf16.xpose.msra.mxu0 0
    %3913 = vmatprep.subr.bf16.mxu0 0
    %3914 = vmatpush1.bf16.xpose.msra.mxu0 0
    %3915 = vmatprep.subr.bf16.mxu0 0
    %3916 = vmatpush1.bf16.xpose.msra.mxu0 0
    %3917 = vmatprep.subr.bf16.mxu0 0
    %3918 = vmatpush1.bf16.xpose.msra.mxu0 0
    %3919 = vmatprep.mubr.bf16.mxu0 0
    %3920 = vmatmul.mubr.bf16.gmra.mrb[0].mxu0 %v3882
    %v3921 = vpop.f32.mrb[0].mxu0
    %v3922 = vadd.f32 %v128, %v3921
    %v3923 = vpop.f32.mrb[0].mxu0
    %v3924 = vpop.f32.mrb[0].mxu0
    %v3925 = vadd.f32 %v129, %v3924
    %v3926 = vpop.f32.mrb[0].mxu0
    %3927 = vdwg.mxu0
    %v3928 = vsel %vm991, %v3922, -inf
    %3929 = vmax.xlane.f32.xlu0 %v3928
    %v3930 = vpop.xlane.xlu0 %3929
    %v3931 = vsel %vm991, %v3925, -inf
    %3932 = vmax.xlane.f32.xlu0 %v3931
    %v3933 = vpop.xlane.xlu0 %3932
    %v3934 = vsub.f32 %v3922, %v3930
    %v3935 = vsub.f32 %v3925, %v3933
    %v3936 = vmul.f32 %v3934, 1.442695
    %v3937 = vpow.pop %v3936
    %v3938 = vmul.f32 %v3935, 1.442695
    %v3939 = vpow.pop %v3938
    %v3940 = vsel %vm991, %v3937, 0.0
    %3941 = vadd.xlane.f32.xlu0 %v3940
    %v3942 = vpop.xlane.xlu0 %3941
    %v3943 = vsel %vm991, %v3939, 0.0
    %3944 = vadd.xlane.f32.xlu0 %v3943
    %v3945 = vpop.xlane.xlu0 %3944
    %v3946 = vrcp.pop %v3942
    %v3947 = vmul.f32 %v3937, %v3946
    %v3948 = vrcp.pop %v3945
    %v3949 = vmul.f32 %v3939, %v3948
    %v3950 = vpack.c.bf16 %v3949, %v3947
    %v3952 = vsel %vm991, %v3950, 0
    %3954 = vmatprep.subr.bf16.mxu0 0
    %3955 = vmatpush1.bf16.msra.mxu0 %v3880
    %3956 = vmatprep.subr.bf16.mxu0 0
    %3957 = vmatpush1.bf16.msra.mxu0 0
    %3958 = vmatprep.subr.bf16.mxu0 0
    %3959 = vmatpush1.bf16.msra.mxu0 0
    %3960 = vmatprep.subr.bf16.mxu0 0
    %3961 = vmatpush1.bf16.msra.mxu0 0
    %3962 = vmatprep.subr.bf16.mxu0 0
    %3963 = vmatpush1.bf16.msra.mxu0 0
    %3964 = vmatprep.subr.bf16.mxu0 0
    %3965 = vmatpush1.bf16.msra.mxu0 0
    %3966 = vmatprep.subr.bf16.mxu0 0
    %3967 = vmatpush1.bf16.msra.mxu0 0
    %3968 = vmatprep.subr.bf16.mxu0 0
    %3969 = vmatpush1.bf16.msra.mxu0 0
    %3970 = vmatprep.subr.bf16.mxu0 0
    %3971 = vmatpush1.bf16.msra.mxu0 0
    %3972 = vmatprep.subr.bf16.mxu0 0
    %3973 = vmatpush1.bf16.msra.mxu0 0
    %3974 = vmatprep.subr.bf16.mxu0 0
    %3975 = vmatpush1.bf16.msra.mxu0 0
    %3976 = vmatprep.subr.bf16.mxu0 0
    %3977 = vmatpush1.bf16.msra.mxu0 0
    %3978 = vmatprep.subr.bf16.mxu0 0
    %3979 = vmatpush1.bf16.msra.mxu0 0
    %3980 = vmatprep.subr.bf16.mxu0 0
    %3981 = vmatpush1.bf16.msra.mxu0 0
    %3982 = vmatprep.subr.bf16.mxu0 0
    %3983 = vmatpush1.bf16.msra.mxu0 0
    %3984 = vmatprep.subr.bf16.mxu0 0
    %3985 = vmatpush1.bf16.msra.mxu0 0
    %3986 = vmatprep.mubr.bf16.mxu0 0
    %3987 = vmatmul.mubr.bf16.gmra.mrb[0].mxu0 %v3952
    %v3988 = vpop.f32.mrb[0].mxu0
    %v3989 = vadd.f32 0.0, %v3988
    %v3990 = vpop.f32.mrb[0].mxu0
    %v3991 = vpop.f32.mrb[0].mxu0
    %v3992 = vadd.f32 0.0, %v3991
    %v3993 = vpop.f32.mrb[0].mxu0
    %3994 = vdwg.mxu0
    %3996 = vrot.lane.b32.xlu0 %v3878, 64
    %v3997 = vpop.permute.xlu0 %3996
    %3999 = vrot.lane.b32.xlu0 %v3879, 64
    %v4000 = vpop.permute.xlu0 %3999
    %v4002 = vsel %vm943, %v3997, 0
    %v4005 = vsel %vm943, %v4000, 0
    %4007 = vmatprep.subr.bf16.mxu0 0
    %4008 = vmatpush1.bf16.xpose.msra.mxu0 %v4005
    %4009 = vmatprep.subr.bf16.mxu0 0
    %4010 = vmatpush1.bf16.xpose.msra.mxu0 0
    %4011 = vmatprep.subr.bf16.mxu0 0
    %4012 = vmatpush1.bf16.xpose.msra.mxu0 0
    %4013 = vmatprep.subr.bf16.mxu0 0
    %4014 = vmatpush1.bf16.xpose.msra.mxu0 0
    %4015 = vmatprep.subr.bf16.mxu0 0
    %4016 = vmatpush1.bf16.xpose.msra.mxu0 0
    %4017 = vmatprep.subr.bf16.mxu0 0
    %4018 = vmatpush1.bf16.xpose.msra.mxu0 0
    %4019 = vmatprep.subr.bf16.mxu0 0
    %4020 = vmatpush1.bf16.xpose.msra.mxu0 0
    %4021 = vmatprep.subr.bf16.mxu0 0
    %4022 = vmatpush1.bf16.xpose.msra.mxu0 0
    %4023 = vmatprep.subr.bf16.mxu0 0
    %4024 = vmatpush1.bf16.xpose.msra.mxu0 0
    %4025 = vmatprep.subr.bf16.mxu0 0
    %4026 = vmatpush1.bf16.xpose.msra.mxu0 0
    %4027 = vmatprep.subr.bf16.mxu0 0
    %4028 = vmatpush1.bf16.xpose.msra.mxu0 0
    %4029 = vmatprep.subr.bf16.mxu0 0
    %4030 = vmatpush1.bf16.xpose.msra.mxu0 0
    %4031 = vmatprep.subr.bf16.mxu0 0
    %4032 = vmatpush1.bf16.xpose.msra.mxu0 0
    %4033 = vmatprep.subr.bf16.mxu0 0
    %4034 = vmatpush1.bf16.xpose.msra.mxu0 0
    %4035 = vmatprep.subr.bf16.mxu0 0
    %4036 = vmatpush1.bf16.xpose.msra.mxu0 0
    %4037 = vmatprep.subr.bf16.mxu0 0
    %4038 = vmatpush1.bf16.xpose.msra.mxu0 0
    %4039 = vmatprep.mubr.bf16.mxu0 0
    %4040 = vmatmul.mubr.bf16.gmra.mrb[0].mxu0 %v4002
    %v4041 = vpop.f32.mrb[0].mxu0
    %v4042 = vadd.f32 %v128, %v4041
    %v4043 = vpop.f32.mrb[0].mxu0
    %v4044 = vpop.f32.mrb[0].mxu0
    %v4045 = vadd.f32 %v129, %v4044
    %v4046 = vpop.f32.mrb[0].mxu0
    %4047 = vdwg.mxu0
    %v4048 = vsel %vm991, %v4042, -inf
    %4049 = vmax.xlane.f32.xlu0 %v4048
    %v4050 = vpop.xlane.xlu0 %4049
    %v4051 = vsel %vm991, %v4045, -inf
    %4052 = vmax.xlane.f32.xlu0 %v4051
    %v4053 = vpop.xlane.xlu0 %4052
    %v4054 = vsub.f32 %v4042, %v4050
    %v4055 = vsub.f32 %v4045, %v4053
    %v4056 = vmul.f32 %v4054, 1.442695
    %v4057 = vpow.pop %v4056
    %v4058 = vmul.f32 %v4055, 1.442695
    %v4059 = vpow.pop %v4058
    %v4060 = vsel %vm991, %v4057, 0.0
    %4061 = vadd.xlane.f32.xlu0 %v4060
    %v4062 = vpop.xlane.xlu0 %4061
    %v4063 = vsel %vm991, %v4059, 0.0
    %4064 = vadd.xlane.f32.xlu0 %v4063
    %v4065 = vpop.xlane.xlu0 %4064
    %v4066 = vrcp.pop %v4062
    %v4067 = vmul.f32 %v4057, %v4066
    %v4068 = vrcp.pop %v4065
    %v4069 = vmul.f32 %v4059, %v4068
    %v4070 = vpack.c.bf16 %v4069, %v4067
    %4072 = vrot.lane.b32.xlu0 %v3880, 64
    %v4073 = vpop.permute.xlu0 %4072
    %v4076 = vsel %vm991, %v4070, 0
    %4078 = vmatprep.subr.bf16.mxu0 0
    %4079 = vmatpush1.bf16.msra.mxu0 %v4073
    %4080 = vmatprep.subr.bf16.mxu0 0
    %4081 = vmatpush1.bf16.msra.mxu0 0
    %4082 = vmatprep.subr.bf16.mxu0 0
    %4083 = vmatpush1.bf16.msra.mxu0 0
    %4084 = vmatprep.subr.bf16.mxu0 0
    %4085 = vmatpush1.bf16.msra.mxu0 0
    %4086 = vmatprep.subr.bf16.mxu0 0
    %4087 = vmatpush1.bf16.msra.mxu0 0
    %4088 = vmatprep.subr.bf16.mxu0 0
    %4089 = vmatpush1.bf16.msra.mxu0 0
    %4090 = vmatprep.subr.bf16.mxu0 0
    %4091 = vmatpush1.bf16.msra.mxu0 0
    %4092 = vmatprep.subr.bf16.mxu0 0
    %4093 = vmatpush1.bf16.msra.mxu0 0
    %4094 = vmatprep.subr.bf16.mxu0 0
    %4095 = vmatpush1.bf16.msra.mxu0 0
    %4096 = vmatprep.subr.bf16.mxu0 0
    %4097 = vmatpush1.bf16.msra.mxu0 0
    %4098 = vmatprep.subr.bf16.mxu0 0
    %4099 = vmatpush1.bf16.msra.mxu0 0
    %4100 = vmatprep.subr.bf16.mxu0 0
    %4101 = vmatpush1.bf16.msra.mxu0 0
    %4102 = vmatprep.subr.bf16.mxu0 0
    %4103 = vmatpush1.bf16.msra.mxu0 0
    %4104 = vmatprep.subr.bf16.mxu0 0
    %4105 = vmatpush1.bf16.msra.mxu0 0
    %4106 = vmatprep.subr.bf16.mxu0 0
    %4107 = vmatpush1.bf16.msra.mxu0 0
    %4108 = vmatprep.subr.bf16.mxu0 0
    %4109 = vmatpush1.bf16.msra.mxu0 0
    %4110 = vmatprep.mubr.bf16.mxu0 0
    %4111 = vmatmul.mubr.bf16.gmra.mrb[0].mxu0 %v4076
    %v4112 = vpop.f32.mrb[0].mxu0
    %v4113 = vadd.f32 0.0, %v4112
    %v4114 = vpop.f32.mrb[0].mxu0
    %v4115 = vpop.f32.mrb[0].mxu0
    %v4116 = vadd.f32 0.0, %v4115
    %v4117 = vpop.f32.mrb[0].mxu0
    %4118 = vdwg.mxu0
    %4121 = vrot.lane.b32.xlu0 %v3870, 64
    %v4122 = vpop.permute.xlu0 %4121
    %4123 = vrot.lane.b32.xlu0 %v3873, 64
    %v4124 = vpop.permute.xlu0 %4123
    %4129 = vrot.lane.b32.xlu0 %v4113, 64
    %v4130 = vpop.permute.xlu0 %4129
    %4131 = vrot.lane.b32.xlu0 %v4116, 64
    %v4132 = vpop.permute.xlu0 %4131
    %v4135 = vsel %vm943, %v3746, %v4122
    %v4136 = vsel %vm943, %v3749, %v4124
    %v4137 = vsel %vm943, %v3989, %v4130
    %v4138 = vsel %vm943, %v3992, %v4132
    %s4139 = scalar_lea.vmem %s6, 256
    %v4140 = vld [vmem:[%s4139] sm:$0xff]
    %v4141 = vld [vmem:[%s4139 + $0x8] sm:$0xff]
    %v4142 = vld [vmem:[%s4139 + $0x10] sm:$0xff]
    %v4143 = vld [vmem:[%s4139 + $0x18] sm:$0xff]
    %v4144 = vld [vmem:[%s4139 + $0x20] sm:$0xff]
    %v4145 = vld [vmem:[%s4139 + $0x28] sm:$0xff]
    %v4146 = vld [vmem:[%s4139 + $0x30] sm:$0xff]
    %v4147 = vld [vmem:[%s4139 + $0x38] sm:$0xff]
    %v4148 = vld [vmem:[%s4139 + $0x40] sm:$0xff]
    %v4149 = vld [vmem:[%s4139 + $0x48] sm:$0xff]
    %v4150 = vld [vmem:[%s4139 + $0x50] sm:$0xff]
    %v4151 = vld [vmem:[%s4139 + $0x58] sm:$0xff]
    %v4152 = vld [vmem:[%s4139 + $0x60] sm:$0xff]
    %v4153 = vld [vmem:[%s4139 + $0x68] sm:$0xff]
    %v4154 = vld [vmem:[%s4139 + $0x70] sm:$0xff]
    %v4155 = vld [vmem:[%s4139 + $0x78] sm:$0xff]
    %v4156 = vld [vmem:[%s4139 + $0x80] sm:$0xff]
    %v4157 = vld [vmem:[%s4139 + $0x88] sm:$0xff]
    %v4158 = vld [vmem:[%s4139 + $0x90] sm:$0xff]
    %v4159 = vld [vmem:[%s4139 + $0x98] sm:$0xff]
    %v4160 = vld [vmem:[%s4139 + $0xa0] sm:$0xff]
    %v4161 = vld [vmem:[%s4139 + $0xa8] sm:$0xff]
    %v4162 = vld [vmem:[%s4139 + $0xb0] sm:$0xff]
    %v4163 = vld [vmem:[%s4139 + $0xb8] sm:$0xff]
    %v4164 = vld [vmem:[%s4139 + $0xc0] sm:$0xff]
    %v4165 = vld [vmem:[%s4139 + $0xc8] sm:$0xff]
    %v4166 = vld [vmem:[%s4139 + $0xd0] sm:$0xff]
    %v4167 = vld [vmem:[%s4139 + $0xd8] sm:$0xff]
    %v4168 = vld [vmem:[%s4139 + $0xe0] sm:$0xff]
    %v4169 = vld [vmem:[%s4139 + $0xe8] sm:$0xff]
    %v4170 = vld [vmem:[%s4139 + $0xf0] sm:$0xff]
    %v4171 = vld [vmem:[%s4139 + $0xf8] sm:$0xff]
    %v4172 = vpack.c.bf16 %v4136, %v4135
    %v4173 = vpack.c.bf16 %v4138, %v4137
    %s4174 = scalar_lea.vmem %s7, 2
    %v4175 = vld [vmem:[%s4174] sm:$0x3]
    %v4177 = vlaneseq
    %v4178 = vshrl.u32 %v4177, 7
    %v4179 = vsub.s32 0, %v4178
    %v4180 = vrot.slane %v4175, %v4179
    %v4181 = vlaneseq
    %v4182 = vshrl.u32 %v4181, 7
    %v4183 = vsub.s32 1, %v4182
    %v4184 = vrot.slane %v4175, %v4183
    %v4219 = vunpack.c.l.b16 %v4140
    %v4220 = vunpack.c.h.b16 %v4140
    %v4221 = vunpack.c.l.b16 %v4141
    %v4222 = vunpack.c.h.b16 %v4141
    %v4223 = vunpack.c.l.b16 %v4142
    %v4224 = vunpack.c.h.b16 %v4142
    %v4225 = vunpack.c.l.b16 %v4143
    %v4226 = vunpack.c.h.b16 %v4143
    %v4227 = vunpack.c.l.b16 %v4144
    %v4228 = vunpack.c.h.b16 %v4144
    %v4229 = vunpack.c.l.b16 %v4145
    %v4230 = vunpack.c.h.b16 %v4145
    %v4231 = vunpack.c.l.b16 %v4146
    %v4232 = vunpack.c.h.b16 %v4146
    %v4233 = vunpack.c.l.b16 %v4147
    %v4234 = vunpack.c.h.b16 %v4147
    %v4235 = vunpack.c.l.b16 %v4148
    %v4236 = vunpack.c.h.b16 %v4148
    %v4237 = vunpack.c.l.b16 %v4149
    %v4238 = vunpack.c.h.b16 %v4149
    %v4239 = vunpack.c.l.b16 %v4150
    %v4240 = vunpack.c.h.b16 %v4150
    %v4241 = vunpack.c.l.b16 %v4151
    %v4242 = vunpack.c.h.b16 %v4151
    %v4243 = vunpack.c.l.b16 %v4152
    %v4244 = vunpack.c.h.b16 %v4152
    %v4245 = vunpack.c.l.b16 %v4153
    %v4246 = vunpack.c.h.b16 %v4153
    %v4247 = vunpack.c.l.b16 %v4154
    %v4248 = vunpack.c.h.b16 %v4154
    %v4249 = vunpack.c.l.b16 %v4155
    %v4250 = vunpack.c.h.b16 %v4155
    %v4251 = vunpack.c.l.b16 %v4156
    %v4252 = vunpack.c.h.b16 %v4156
    %v4253 = vunpack.c.l.b16 %v4157
    %v4254 = vunpack.c.h.b16 %v4157
    %v4255 = vunpack.c.l.b16 %v4158
    %v4256 = vunpack.c.h.b16 %v4158
    %v4257 = vunpack.c.l.b16 %v4159
    %v4258 = vunpack.c.h.b16 %v4159
    %v4259 = vunpack.c.l.b16 %v4160
    %v4260 = vunpack.c.h.b16 %v4160
    %v4261 = vunpack.c.l.b16 %v4161
    %v4262 = vunpack.c.h.b16 %v4161
    %v4263 = vunpack.c.l.b16 %v4162
    %v4264 = vunpack.c.h.b16 %v4162
    %v4265 = vunpack.c.l.b16 %v4163
    %v4266 = vunpack.c.h.b16 %v4163
    %v4267 = vunpack.c.l.b16 %v4164
    %v4268 = vunpack.c.h.b16 %v4164
    %v4269 = vunpack.c.l.b16 %v4165
    %v4270 = vunpack.c.h.b16 %v4165
    %v4271 = vunpack.c.l.b16 %v4166
    %v4272 = vunpack.c.h.b16 %v4166
    %v4273 = vunpack.c.l.b16 %v4167
    %v4274 = vunpack.c.h.b16 %v4167
    %v4275 = vunpack.c.l.b16 %v4168
    %v4276 = vunpack.c.h.b16 %v4168
    %v4277 = vunpack.c.l.b16 %v4169
    %v4278 = vunpack.c.h.b16 %v4169
    %v4279 = vunpack.c.l.b16 %v4170
    %v4280 = vunpack.c.h.b16 %v4170
    %v4281 = vunpack.c.l.b16 %v4171
    %v4282 = vunpack.c.h.b16 %v4171
    %v4283 = vpack.c.b16 %v4221, %v4219
    %v4284 = vpack.c.b16 %v4222, %v4220
    %v4285 = vpack.c.b16 %v4225, %v4223
    %v4286 = vpack.c.b16 %v4226, %v4224
    %v4287 = vpack.c.b16 %v4229, %v4227
    %v4288 = vpack.c.b16 %v4230, %v4228
    %v4289 = vpack.c.b16 %v4233, %v4231
    %v4290 = vpack.c.b16 %v4234, %v4232
    %v4291 = vpack.c.b16 %v4237, %v4235
    %v4292 = vpack.c.b16 %v4238, %v4236
    %v4293 = vpack.c.b16 %v4241, %v4239
    %v4294 = vpack.c.b16 %v4242, %v4240
    %v4295 = vpack.c.b16 %v4245, %v4243
    %v4296 = vpack.c.b16 %v4246, %v4244
    %v4297 = vpack.c.b16 %v4249, %v4247
    %v4298 = vpack.c.b16 %v4250, %v4248
    %v4299 = vpack.c.b16 %v4253, %v4251
    %v4300 = vpack.c.b16 %v4254, %v4252
    %v4301 = vpack.c.b16 %v4257, %v4255
    %v4302 = vpack.c.b16 %v4258, %v4256
    %v4303 = vpack.c.b16 %v4261, %v4259
    %v4304 = vpack.c.b16 %v4262, %v4260
    %v4305 = vpack.c.b16 %v4265, %v4263
    %v4306 = vpack.c.b16 %v4266, %v4264
    %v4307 = vpack.c.b16 %v4269, %v4267
    %v4308 = vpack.c.b16 %v4270, %v4268
    %v4309 = vpack.c.b16 %v4273, %v4271
    %v4310 = vpack.c.b16 %v4274, %v4272
    %v4311 = vpack.c.b16 %v4277, %v4275
    %v4312 = vpack.c.b16 %v4278, %v4276
    %v4313 = vpack.c.b16 %v4281, %v4279
    %v4314 = vpack.c.b16 %v4282, %v4280
    %4347 = vmatprep.subr.bf16.mxu0 %v4284
    %4348 = vmatpush1.bf16.msra.mxu0 %v4283
    %4349 = vmatprep.subr.bf16.mxu0 %v4286
    %4350 = vmatpush1.bf16.msra.mxu0 %v4285
    %4351 = vmatprep.subr.bf16.mxu0 %v4288
    %4352 = vmatpush1.bf16.msra.mxu0 %v4287
    %4353 = vmatprep.subr.bf16.mxu0 %v4290
    %4354 = vmatpush1.bf16.msra.mxu0 %v4289
    %4355 = vmatprep.subr.bf16.mxu0 %v4292
    %4356 = vmatpush1.bf16.msra.mxu0 %v4291
    %4357 = vmatprep.subr.bf16.mxu0 %v4294
    %4358 = vmatpush1.bf16.msra.mxu0 %v4293
    %4359 = vmatprep.subr.bf16.mxu0 %v4296
    %4360 = vmatpush1.bf16.msra.mxu0 %v4295
    %4361 = vmatprep.subr.bf16.mxu0 %v4298
    %4362 = vmatpush1.bf16.msra.mxu0 %v4297
    %4363 = vmatprep.subr.bf16.mxu0 %v4300
    %4364 = vmatpush1.bf16.msra.mxu0 %v4299
    %4365 = vmatprep.subr.bf16.mxu0 %v4302
    %4366 = vmatpush1.bf16.msra.mxu0 %v4301
    %4367 = vmatprep.subr.bf16.mxu0 %v4304
    %4368 = vmatpush1.bf16.msra.mxu0 %v4303
    %4369 = vmatprep.subr.bf16.mxu0 %v4306
    %4370 = vmatpush1.bf16.msra.mxu0 %v4305
    %4371 = vmatprep.subr.bf16.mxu0 %v4308
    %4372 = vmatpush1.bf16.msra.mxu0 %v4307
    %4373 = vmatprep.subr.bf16.mxu0 %v4310
    %4374 = vmatpush1.bf16.msra.mxu0 %v4309
    %4375 = vmatprep.subr.bf16.mxu0 %v4312
    %4376 = vmatpush1.bf16.msra.mxu0 %v4311
    %4377 = vmatprep.subr.bf16.mxu0 %v4314
    %4378 = vmatpush1.bf16.msra.mxu0 %v4313
    %4379 = vmatprep.mubr.bf16.mxu0 %v4173
    %4380 = vmatmul.mubr.bf16.gmra.mrb[0].mxu0 %v4172
    %v4381 = vpop.f32.mrb[0].mxu0
    %v4382 = vadd.f32 %v4180, %v4381
    %v4383 = vpop.f32.mrb[0].mxu0
    %v4384 = vadd.f32 %v4184, %v4383
    %v4385 = vpop.f32.mrb[0].mxu0
    %v4386 = vadd.f32 %v4180, %v4385
    %v4387 = vpop.f32.mrb[0].mxu0
    %v4388 = vadd.f32 %v4184, %v4387
    %4389 = vdwg.mxu0
    %v4390 = vadd.f32 %v4382, %v2879
    %v4391 = vadd.f32 %v4384, %v2880
    %v4392 = vadd.f32 %v4386, %v2881
    %v4393 = vadd.f32 %v4388, %v2882
    %s4394 = scalar_lea.vmem %s8, 2
    %v4395 = vld [vmem:[%s4394] sm:$0x3]
    %s4396 = scalar_lea.vmem %s9, 2
    %v4397 = vld [vmem:[%s4396] sm:$0x3]
    %v4398 = vadd.f32 %v4390, %v4391
    %4399 = vadd.xlane.f32.xlu0 %v4398
    %v4400 = vpop.xlane.xlu0 %4399
    %v4401 = vadd.f32 %v4392, %v4393
    %4402 = vadd.xlane.f32.xlu0 %v4401
    %v4403 = vpop.xlane.xlu0 %4402
    %v4404 = vmul.f32 %v4400, %v142
    %v4405 = vmul.f32 %v4403, %v142
    %v4406 = vsub.f32 %v4390, %v4404
    %v4407 = vsub.f32 %v4391, %v4404
    %v4408 = vsub.f32 %v4392, %v4405
    %v4409 = vsub.f32 %v4393, %v4405
    %v4410 = vmul.f32 %v4406, %v4406
    %v4411 = vmul.f32 %v4407, %v4407
    %v4412 = vmul.f32 %v4408, %v4408
    %v4413 = vmul.f32 %v4409, %v4409
    %v4414 = vadd.f32 %v4410, %v4411
    %4415 = vadd.xlane.f32.xlu0 %v4414
    %v4416 = vpop.xlane.xlu0 %4415
    %v4417 = vadd.f32 %v4412, %v4413
    %4418 = vadd.xlane.f32.xlu0 %v4417
    %v4419 = vpop.xlane.xlu0 %4418
    %v4420 = vmul.f32 %v4416, %v142
    %v4421 = vmul.f32 %v4419, %v142
    %v4422 = vadd.f32 %v4420, 1e-12
    %v4423 = vadd.f32 %v4421, 1e-12
    %v4424 = vrsqrt.pop %v4422
    %v4425 = vrsqrt.pop %v4423
    %v4426 = vmul.f32 %v4406, %v4424
    %v4427 = vmul.f32 %v4407, %v4424
    %v4428 = vmul.f32 %v4408, %v4425
    %v4429 = vmul.f32 %v4409, %v4425
    %v4431 = vlaneseq
    %v4432 = vshrl.u32 %v4431, 7
    %v4433 = vsub.s32 0, %v4432
    %v4434 = vrot.slane %v4395, %v4433
    %v4435 = vlaneseq
    %v4436 = vshrl.u32 %v4435, 7
    %v4437 = vsub.s32 1, %v4436
    %v4438 = vrot.slane %v4395, %v4437
    %v4441 = vmul.f32 %v4426, %v4434
    %v4442 = vmul.f32 %v4427, %v4438
    %v4443 = vmul.f32 %v4428, %v4434
    %v4444 = vmul.f32 %v4429, %v4438
    %v4446 = vlaneseq
    %v4447 = vshrl.u32 %v4446, 7
    %v4448 = vsub.s32 0, %v4447
    %v4449 = vrot.slane %v4397, %v4448
    %v4450 = vlaneseq
    %v4451 = vshrl.u32 %v4450, 7
    %v4452 = vsub.s32 1, %v4451
    %v4453 = vrot.slane %v4397, %v4452
    %v4456 = vadd.f32 %v4441, %v4449
    %v4457 = vadd.f32 %v4442, %v4453
    %v4458 = vadd.f32 %v4443, %v4449
    %v4459 = vadd.f32 %v4444, %v4453
    %s4460 = scalar_lea.vmem [#allocation5], 512
    %v4461 = vld [vmem:[%s4460] sm:$0xff]
    %v4462 = vld [vmem:[%s4460 + $0x8] sm:$0xff]
    %v4463 = vld [vmem:[%s4460 + $0x10] sm:$0xff]
    %v4464 = vld [vmem:[%s4460 + $0x18] sm:$0xff]
    %v4465 = vld [vmem:[%s4460 + $0x20] sm:$0xff]
    %v4466 = vld [vmem:[%s4460 + $0x28] sm:$0xff]
    %v4467 = vld [vmem:[%s4460 + $0x30] sm:$0xff]
    %v4468 = vld [vmem:[%s4460 + $0x38] sm:$0xff]
    %v4469 = vld [vmem:[%s4460 + $0x40] sm:$0xff]
    %v4470 = vld [vmem:[%s4460 + $0x48] sm:$0xff]
    %v4471 = vld [vmem:[%s4460 + $0x50] sm:$0xff]
    %v4472 = vld [vmem:[%s4460 + $0x58] sm:$0xff]
    %v4473 = vld [vmem:[%s4460 + $0x60] sm:$0xff]
    %v4474 = vld [vmem:[%s4460 + $0x68] sm:$0xff]
    %v4475 = vld [vmem:[%s4460 + $0x70] sm:$0xff]
    %v4476 = vld [vmem:[%s4460 + $0x78] sm:$0xff]
    %v4477 = vld [vmem:[%s4460 + $0x80] sm:$0xff]
    %v4478 = vld [vmem:[%s4460 + $0x88] sm:$0xff]
    %v4479 = vld [vmem:[%s4460 + $0x90] sm:$0xff]
    %v4480 = vld [vmem:[%s4460 + $0x98] sm:$0xff]
    %v4481 = vld [vmem:[%s4460 + $0xa0] sm:$0xff]
    %v4482 = vld [vmem:[%s4460 + $0xa8] sm:$0xff]
    %v4483 = vld [vmem:[%s4460 + $0xb0] sm:$0xff]
    %v4484 = vld [vmem:[%s4460 + $0xb8] sm:$0xff]
    %v4485 = vld [vmem:[%s4460 + $0xc0] sm:$0xff]
    %v4486 = vld [vmem:[%s4460 + $0xc8] sm:$0xff]
    %v4487 = vld [vmem:[%s4460 + $0xd0] sm:$0xff]
    %v4488 = vld [vmem:[%s4460 + $0xd8] sm:$0xff]
    %v4489 = vld [vmem:[%s4460 + $0xe0] sm:$0xff]
    %v4490 = vld [vmem:[%s4460 + $0xe8] sm:$0xff]
    %v4491 = vld [vmem:[%s4460 + $0xf0] sm:$0xff]
    %v4492 = vld [vmem:[%s4460 + $0xf8] sm:$0xff]
    %v4493 = vld [vmem:[%s4460 + $0x100] sm:$0xff]
    %v4494 = vld [vmem:[%s4460 + $0x108] sm:$0xff]
    %v4495 = vld [vmem:[%s4460 + $0x110] sm:$0xff]
    %v4496 = vld [vmem:[%s4460 + $0x118] sm:$0xff]
    %v4497 = vld [vmem:[%s4460 + $0x120] sm:$0xff]
    %v4498 = vld [vmem:[%s4460 + $0x128] sm:$0xff]
    %v4499 = vld [vmem:[%s4460 + $0x130] sm:$0xff]
    %v4500 = vld [vmem:[%s4460 + $0x138] sm:$0xff]
    %v4501 = vld [vmem:[%s4460 + $0x140] sm:$0xff]
    %v4502 = vld [vmem:[%s4460 + $0x148] sm:$0xff]
    %v4503 = vld [vmem:[%s4460 + $0x150] sm:$0xff]
    %v4504 = vld [vmem:[%s4460 + $0x158] sm:$0xff]
    %v4505 = vld [vmem:[%s4460 + $0x160] sm:$0xff]
    %v4506 = vld [vmem:[%s4460 + $0x168] sm:$0xff]
    %v4507 = vld [vmem:[%s4460 + $0x170] sm:$0xff]
    %v4508 = vld [vmem:[%s4460 + $0x178] sm:$0xff]
    %v4509 = vld [vmem:[%s4460 + $0x180] sm:$0xff]
    %v4510 = vld [vmem:[%s4460 + $0x188] sm:$0xff]
    %v4511 = vld [vmem:[%s4460 + $0x190] sm:$0xff]
    %v4512 = vld [vmem:[%s4460 + $0x198] sm:$0xff]
    %v4513 = vld [vmem:[%s4460 + $0x1a0] sm:$0xff]
    %v4514 = vld [vmem:[%s4460 + $0x1a8] sm:$0xff]
    %v4515 = vld [vmem:[%s4460 + $0x1b0] sm:$0xff]
    %v4516 = vld [vmem:[%s4460 + $0x1b8] sm:$0xff]
    %v4517 = vld [vmem:[%s4460 + $0x1c0] sm:$0xff]
    %v4518 = vld [vmem:[%s4460 + $0x1c8] sm:$0xff]
    %v4519 = vld [vmem:[%s4460 + $0x1d0] sm:$0xff]
    %v4520 = vld [vmem:[%s4460 + $0x1d8] sm:$0xff]
    %v4521 = vld [vmem:[%s4460 + $0x1e0] sm:$0xff]
    %v4522 = vld [vmem:[%s4460 + $0x1e8] sm:$0xff]
    %v4523 = vld [vmem:[%s4460 + $0x1f0] sm:$0xff]
    %v4524 = vld [vmem:[%s4460 + $0x1f8] sm:$0xff]
    %v4525 = vpack.c.bf16 %v4458, %v4456
    %v4526 = vpack.c.bf16 %v4459, %v4457
    %s4527 = scalar_lea.vmem %s11, 4
    %v4528 = vld [vmem:[%s4527] sm:$0xf]
    %v4530 = vlaneseq
    %v4531 = vshrl.u32 %v4530, 7
    %v4532 = vsub.s32 0, %v4531
    %v4533 = vrot.slane %v4528, %v4532
    %v4534 = vlaneseq
    %v4535 = vshrl.u32 %v4534, 7
    %v4536 = vsub.s32 1, %v4535
    %v4537 = vrot.slane %v4528, %v4536
    %v4538 = vlaneseq
    %v4539 = vshrl.u32 %v4538, 7
    %v4540 = vsub.s32 2, %v4539
    %v4541 = vrot.slane %v4528, %v4540
    %v4542 = vlaneseq
    %v4543 = vshrl.u32 %v4542, 7
    %v4544 = vsub.s32 3, %v4543
    %v4545 = vrot.slane %v4528, %v4544
    %v4614 = vunpack.c.l.b16 %v4461
    %v4615 = vunpack.c.h.b16 %v4461
    %v4616 = vunpack.c.l.b16 %v4462
    %v4617 = vunpack.c.h.b16 %v4462
    %v4618 = vunpack.c.l.b16 %v4463
    %v4619 = vunpack.c.h.b16 %v4463
    %v4620 = vunpack.c.l.b16 %v4464
    %v4621 = vunpack.c.h.b16 %v4464
    %v4622 = vunpack.c.l.b16 %v4465
    %v4623 = vunpack.c.h.b16 %v4465
    %v4624 = vunpack.c.l.b16 %v4466
    %v4625 = vunpack.c.h.b16 %v4466
    %v4626 = vunpack.c.l.b16 %v4467
    %v4627 = vunpack.c.h.b16 %v4467
    %v4628 = vunpack.c.l.b16 %v4468
    %v4629 = vunpack.c.h.b16 %v4468
    %v4630 = vunpack.c.l.b16 %v4469
    %v4631 = vunpack.c.h.b16 %v4469
    %v4632 = vunpack.c.l.b16 %v4470
    %v4633 = vunpack.c.h.b16 %v4470
    %v4634 = vunpack.c.l.b16 %v4471
    %v4635 = vunpack.c.h.b16 %v4471
    %v4636 = vunpack.c.l.b16 %v4472
    %v4637 = vunpack.c.h.b16 %v4472
    %v4638 = vunpack.c.l.b16 %v4473
    %v4639 = vunpack.c.h.b16 %v4473
    %v4640 = vunpack.c.l.b16 %v4474
    %v4641 = vunpack.c.h.b16 %v4474
    %v4642 = vunpack.c.l.b16 %v4475
    %v4643 = vunpack.c.h.b16 %v4475
    %v4644 = vunpack.c.l.b16 %v4476
    %v4645 = vunpack.c.h.b16 %v4476
    %v4646 = vunpack.c.l.b16 %v4477
    %v4647 = vunpack.c.h.b16 %v4477
    %v4648 = vunpack.c.l.b16 %v4478
    %v4649 = vunpack.c.h.b16 %v4478
    %v4650 = vunpack.c.l.b16 %v4479
    %v4651 = vunpack.c.h.b16 %v4479
    %v4652 = vunpack.c.l.b16 %v4480
    %v4653 = vunpack.c.h.b16 %v4480
    %v4654 = vunpack.c.l.b16 %v4481
    %v4655 = vunpack.c.h.b16 %v4481
    %v4656 = vunpack.c.l.b16 %v4482
    %v4657 = vunpack.c.h.b16 %v4482
    %v4658 = vunpack.c.l.b16 %v4483
    %v4659 = vunpack.c.h.b16 %v4483
    %v4660 = vunpack.c.l.b16 %v4484
    %v4661 = vunpack.c.h.b16 %v4484
    %v4662 = vunpack.c.l.b16 %v4485
    %v4663 = vunpack.c.h.b16 %v4485
    %v4664 = vunpack.c.l.b16 %v4486
    %v4665 = vunpack.c.h.b16 %v4486
    %v4666 = vunpack.c.l.b16 %v4487
    %v4667 = vunpack.c.h.b16 %v4487
    %v4668 = vunpack.c.l.b16 %v4488
    %v4669 = vunpack.c.h.b16 %v4488
    %v4670 = vunpack.c.l.b16 %v4489
    %v4671 = vunpack.c.h.b16 %v4489
    %v4672 = vunpack.c.l.b16 %v4490
    %v4673 = vunpack.c.h.b16 %v4490
    %v4674 = vunpack.c.l.b16 %v4491
    %v4675 = vunpack.c.h.b16 %v4491
    %v4676 = vunpack.c.l.b16 %v4492
    %v4677 = vunpack.c.h.b16 %v4492
    %v4678 = vunpack.c.l.b16 %v4493
    %v4679 = vunpack.c.h.b16 %v4493
    %v4680 = vunpack.c.l.b16 %v4494
    %v4681 = vunpack.c.h.b16 %v4494
    %v4682 = vunpack.c.l.b16 %v4495
    %v4683 = vunpack.c.h.b16 %v4495
    %v4684 = vunpack.c.l.b16 %v4496
    %v4685 = vunpack.c.h.b16 %v4496
    %v4686 = vunpack.c.l.b16 %v4497
    %v4687 = vunpack.c.h.b16 %v4497
    %v4688 = vunpack.c.l.b16 %v4498
    %v4689 = vunpack.c.h.b16 %v4498
    %v4690 = vunpack.c.l.b16 %v4499
    %v4691 = vunpack.c.h.b16 %v4499
    %v4692 = vunpack.c.l.b16 %v4500
    %v4693 = vunpack.c.h.b16 %v4500
    %v4694 = vunpack.c.l.b16 %v4501
    %v4695 = vunpack.c.h.b16 %v4501
    %v4696 = vunpack.c.l.b16 %v4502
    %v4697 = vunpack.c.h.b16 %v4502
    %v4698 = vunpack.c.l.b16 %v4503
    %v4699 = vunpack.c.h.b16 %v4503
    %v4700 = vunpack.c.l.b16 %v4504
    %v4701 = vunpack.c.h.b16 %v4504
    %v4702 = vunpack.c.l.b16 %v4505
    %v4703 = vunpack.c.h.b16 %v4505
    %v4704 = vunpack.c.l.b16 %v4506
    %v4705 = vunpack.c.h.b16 %v4506
    %v4706 = vunpack.c.l.b16 %v4507
    %v4707 = vunpack.c.h.b16 %v4507
    %v4708 = vunpack.c.l.b16 %v4508
    %v4709 = vunpack.c.h.b16 %v4508
    %v4710 = vunpack.c.l.b16 %v4509
    %v4711 = vunpack.c.h.b16 %v4509
    %v4712 = vunpack.c.l.b16 %v4510
    %v4713 = vunpack.c.h.b16 %v4510
    %v4714 = vunpack.c.l.b16 %v4511
    %v4715 = vunpack.c.h.b16 %v4511
    %v4716 = vunpack.c.l.b16 %v4512
    %v4717 = vunpack.c.h.b16 %v4512
    %v4718 = vunpack.c.l.b16 %v4513
    %v4719 = vunpack.c.h.b16 %v4513
    %v4720 = vunpack.c.l.b16 %v4514
    %v4721 = vunpack.c.h.b16 %v4514
    %v4722 = vunpack.c.l.b16 %v4515
    %v4723 = vunpack.c.h.b16 %v4515
    %v4724 = vunpack.c.l.b16 %v4516
    %v4725 = vunpack.c.h.b16 %v4516
    %v4726 = vunpack.c.l.b16 %v4517
    %v4727 = vunpack.c.h.b16 %v4517
    %v4728 = vunpack.c.l.b16 %v4518
    %v4729 = vunpack.c.h.b16 %v4518
    %v4730 = vunpack.c.l.b16 %v4519
    %v4731 = vunpack.c.h.b16 %v4519
    %v4732 = vunpack.c.l.b16 %v4520
    %v4733 = vunpack.c.h.b16 %v4520
    %v4734 = vunpack.c.l.b16 %v4521
    %v4735 = vunpack.c.h.b16 %v4521
    %v4736 = vunpack.c.l.b16 %v4522
    %v4737 = vunpack.c.h.b16 %v4522
    %v4738 = vunpack.c.l.b16 %v4523
    %v4739 = vunpack.c.h.b16 %v4523
    %v4740 = vunpack.c.l.b16 %v4524
    %v4741 = vunpack.c.h.b16 %v4524
    %v4742 = vpack.c.b16 %v4618, %v4614
    %v4743 = vpack.c.b16 %v4619, %v4615
    %v4744 = vpack.c.b16 %v4620, %v4616
    %v4745 = vpack.c.b16 %v4621, %v4617
    %v4746 = vpack.c.b16 %v4626, %v4622
    %v4747 = vpack.c.b16 %v4627, %v4623
    %v4748 = vpack.c.b16 %v4628, %v4624
    %v4749 = vpack.c.b16 %v4629, %v4625
    %v4750 = vpack.c.b16 %v4634, %v4630
    %v4751 = vpack.c.b16 %v4635, %v4631
    %v4752 = vpack.c.b16 %v4636, %v4632
    %v4753 = vpack.c.b16 %v4637, %v4633
    %v4754 = vpack.c.b16 %v4642, %v4638
    %v4755 = vpack.c.b16 %v4643, %v4639
    %v4756 = vpack.c.b16 %v4644, %v4640
    %v4757 = vpack.c.b16 %v4645, %v4641
    %v4758 = vpack.c.b16 %v4650, %v4646
    %v4759 = vpack.c.b16 %v4651, %v4647
    %v4760 = vpack.c.b16 %v4652, %v4648
    %v4761 = vpack.c.b16 %v4653, %v4649
    %v4762 = vpack.c.b16 %v4658, %v4654
    %v4763 = vpack.c.b16 %v4659, %v4655
    %v4764 = vpack.c.b16 %v4660, %v4656
    %v4765 = vpack.c.b16 %v4661, %v4657
    %v4766 = vpack.c.b16 %v4666, %v4662
    %v4767 = vpack.c.b16 %v4667, %v4663
    %v4768 = vpack.c.b16 %v4668, %v4664
    %v4769 = vpack.c.b16 %v4669, %v4665
    %v4770 = vpack.c.b16 %v4674, %v4670
    %v4771 = vpack.c.b16 %v4675, %v4671
    %v4772 = vpack.c.b16 %v4676, %v4672
    %v4773 = vpack.c.b16 %v4677, %v4673
    %v4774 = vpack.c.b16 %v4682, %v4678
    %v4775 = vpack.c.b16 %v4683, %v4679
    %v4776 = vpack.c.b16 %v4684, %v4680
    %v4777 = vpack.c.b16 %v4685, %v4681
    %v4778 = vpack.c.b16 %v4690, %v4686
    %v4779 = vpack.c.b16 %v4691, %v4687
    %v4780 = vpack.c.b16 %v4692, %v4688
    %v4781 = vpack.c.b16 %v4693, %v4689
    %v4782 = vpack.c.b16 %v4698, %v4694
    %v4783 = vpack.c.b16 %v4699, %v4695
    %v4784 = vpack.c.b16 %v4700, %v4696
    %v4785 = vpack.c.b16 %v4701, %v4697
    %v4786 = vpack.c.b16 %v4706, %v4702
    %v4787 = vpack.c.b16 %v4707, %v4703
    %v4788 = vpack.c.b16 %v4708, %v4704
    %v4789 = vpack.c.b16 %v4709, %v4705
    %v4790 = vpack.c.b16 %v4714, %v4710
    %v4791 = vpack.c.b16 %v4715, %v4711
    %v4792 = vpack.c.b16 %v4716, %v4712
    %v4793 = vpack.c.b16 %v4717, %v4713
    %v4794 = vpack.c.b16 %v4722, %v4718
    %v4795 = vpack.c.b16 %v4723, %v4719
    %v4796 = vpack.c.b16 %v4724, %v4720
    %v4797 = vpack.c.b16 %v4725, %v4721
    %v4798 = vpack.c.b16 %v4730, %v4726
    %v4799 = vpack.c.b16 %v4731, %v4727
    %v4800 = vpack.c.b16 %v4732, %v4728
    %v4801 = vpack.c.b16 %v4733, %v4729
    %v4802 = vpack.c.b16 %v4738, %v4734
    %v4803 = vpack.c.b16 %v4739, %v4735
    %v4804 = vpack.c.b16 %v4740, %v4736
    %v4805 = vpack.c.b16 %v4741, %v4737
    %4870 = vmatprep.subr.bf16.mxu0 %v4743
    %4871 = vmatpush1.bf16.msra.mxu0 %v4742
    %4872 = vmatprep.subr.bf16.mxu0 %v4747
    %4873 = vmatpush1.bf16.msra.mxu0 %v4746
    %4874 = vmatprep.subr.bf16.mxu0 %v4751
    %4875 = vmatpush1.bf16.msra.mxu0 %v4750
    %4876 = vmatprep.subr.bf16.mxu0 %v4755
    %4877 = vmatpush1.bf16.msra.mxu0 %v4754
    %4878 = vmatprep.subr.bf16.mxu0 %v4759
    %4879 = vmatpush1.bf16.msra.mxu0 %v4758
    %4880 = vmatprep.subr.bf16.mxu0 %v4763
    %4881 = vmatpush1.bf16.msra.mxu0 %v4762
    %4882 = vmatprep.subr.bf16.mxu0 %v4767
    %4883 = vmatpush1.bf16.msra.mxu0 %v4766
    %4884 = vmatprep.subr.bf16.mxu0 %v4771
    %4885 = vmatpush1.bf16.msra.mxu0 %v4770
    %4886 = vmatprep.subr.bf16.mxu0 %v4775
    %4887 = vmatpush1.bf16.msra.mxu0 %v4774
    %4888 = vmatprep.subr.bf16.mxu0 %v4779
    %4889 = vmatpush1.bf16.msra.mxu0 %v4778
    %4890 = vmatprep.subr.bf16.mxu0 %v4783
    %4891 = vmatpush1.bf16.msra.mxu0 %v4782
    %4892 = vmatprep.subr.bf16.mxu0 %v4787
    %4893 = vmatpush1.bf16.msra.mxu0 %v4786
    %4894 = vmatprep.subr.bf16.mxu0 %v4791
    %4895 = vmatpush1.bf16.msra.mxu0 %v4790
    %4896 = vmatprep.subr.bf16.mxu0 %v4795
    %4897 = vmatpush1.bf16.msra.mxu0 %v4794
    %4898 = vmatprep.subr.bf16.mxu0 %v4799
    %4899 = vmatpush1.bf16.msra.mxu0 %v4798
    %4900 = vmatprep.subr.bf16.mxu0 %v4803
    %4901 = vmatpush1.bf16.msra.mxu0 %v4802
    %4902 = vmatprep.mubr.bf16.mxu0 %v4526
    %4903 = vmatmul.mubr.bf16.gmra.mrb[0].mxu0 %v4525
    %v4904 = vpop.f32.mrb[0].mxu0
    %v4905 = vadd.f32 %v4533, %v4904
    %v4906 = vpop.f32.mrb[0].mxu0
    %v4907 = vadd.f32 %v4537, %v4906
    %v4908 = vpop.f32.mrb[0].mxu0
    %v4909 = vadd.f32 %v4533, %v4908
    %v4910 = vpop.f32.mrb[0].mxu0
    %v4911 = vadd.f32 %v4537, %v4910
    %4912 = vdwg.mxu0
    %4913 = vmatprep.subr.bf16.mxu0 %v4745
    %4914 = vmatpush1.bf16.msra.mxu0 %v4744
    %4915 = vmatprep.subr.bf16.mxu0 %v4749
    %4916 = vmatpush1.bf16.msra.mxu0 %v4748
    %4917 = vmatprep.subr.bf16.mxu0 %v4753
    %4918 = vmatpush1.bf16.msra.mxu0 %v4752
    %4919 = vmatprep.subr.bf16.mxu0 %v4757
    %4920 = vmatpush1.bf16.msra.mxu0 %v4756
    %4921 = vmatprep.subr.bf16.mxu0 %v4761
    %4922 = vmatpush1.bf16.msra.mxu0 %v4760
    %4923 = vmatprep.subr.bf16.mxu0 %v4765
    %4924 = vmatpush1.bf16.msra.mxu0 %v4764
    %4925 = vmatprep.subr.bf16.mxu0 %v4769
    %4926 = vmatpush1.bf16.msra.mxu0 %v4768
    %4927 = vmatprep.subr.bf16.mxu0 %v4773
    %4928 = vmatpush1.bf16.msra.mxu0 %v4772
    %4929 = vmatprep.subr.bf16.mxu0 %v4777
    %4930 = vmatpush1.bf16.msra.mxu0 %v4776
    %4931 = vmatprep.subr.bf16.mxu0 %v4781
    %4932 = vmatpush1.bf16.msra.mxu0 %v4780
    %4933 = vmatprep.subr.bf16.mxu0 %v4785
    %4934 = vmatpush1.bf16.msra.mxu0 %v4784
    %4935 = vmatprep.subr.bf16.mxu0 %v4789
    %4936 = vmatpush1.bf16.msra.mxu0 %v4788
    %4937 = vmatprep.subr.bf16.mxu0 %v4793
    %4938 = vmatpush1.bf16.msra.mxu0 %v4792
    %4939 = vmatprep.subr.bf16.mxu0 %v4797
    %4940 = vmatpush1.bf16.msra.mxu0 %v4796
    %4941 = vmatprep.subr.bf16.mxu0 %v4801
    %4942 = vmatpush1.bf16.msra.mxu0 %v4800
    %4943 = vmatprep.subr.bf16.mxu0 %v4805
    %4944 = vmatpush1.bf16.msra.mxu0 %v4804
    %4945 = vmatprep.mubr.bf16.mxu0 %v4526
    %4946 = vmatmul.mubr.bf16.gmra.mrb[0].mxu0 %v4525
    %v4947 = vpop.f32.mrb[0].mxu0
    %v4948 = vadd.f32 %v4541, %v4947
    %v4949 = vpop.f32.mrb[0].mxu0
    %v4950 = vadd.f32 %v4545, %v4949
    %v4951 = vpop.f32.mrb[0].mxu0
    %v4952 = vadd.f32 %v4541, %v4951
    %v4953 = vpop.f32.mrb[0].mxu0
    %v4954 = vadd.f32 %v4545, %v4953
    %4955 = vdwg.mxu0
    %v4956 = vmul.f32 %v4905, %v4905
    %v4957 = vmul.f32 %v4907, %v4907
    %v4958 = vmul.f32 %v4948, %v4948
    %v4959 = vmul.f32 %v4950, %v4950
    %v4960 = vmul.f32 %v4909, %v4909
    %v4961 = vmul.f32 %v4911, %v4911
    %v4962 = vmul.f32 %v4952, %v4952
    %v4963 = vmul.f32 %v4954, %v4954
    %v4964 = vmul.f32 %v4905, %v4956
    %v4965 = vmul.f32 %v4907, %v4957
    %v4966 = vmul.f32 %v4948, %v4958
    %v4967 = vmul.f32 %v4950, %v4959
    %v4968 = vmul.f32 %v4909, %v4960
    %v4969 = vmul.f32 %v4911, %v4961
    %v4970 = vmul.f32 %v4952, %v4962
    %v4971 = vmul.f32 %v4954, %v4963
    %v4972 = vmul.f32 %v4964, 0.044715
    %v4973 = vmul.f32 %v4965, 0.044715
    %v4974 = vmul.f32 %v4966, 0.044715
    %v4975 = vmul.f32 %v4967, 0.044715
    %v4976 = vmul.f32 %v4968, 0.044715
    %v4977 = vmul.f32 %v4969, 0.044715
    %v4978 = vmul.f32 %v4970, 0.044715
    %v4979 = vmul.f32 %v4971, 0.044715
    %v4980 = vadd.f32 %v4905, %v4972
    %v4981 = vadd.f32 %v4907, %v4973
    %v4982 = vadd.f32 %v4948, %v4974
    %v4983 = vadd.f32 %v4950, %v4975
    %v4984 = vadd.f32 %v4909, %v4976
    %v4985 = vadd.f32 %v4911, %v4977
    %v4986 = vadd.f32 %v4952, %v4978
    %v4987 = vadd.f32 %v4954, %v4979
    %v4988 = vmul.f32 %v4980, 0.7978846
    %v4989 = vmul.f32 %v4981, 0.7978846
    %v4990 = vmul.f32 %v4982, 0.7978846
    %v4991 = vmul.f32 %v4983, 0.7978846
    %v4992 = vmul.f32 %v4984, 0.7978846
    %v4993 = vmul.f32 %v4985, 0.7978846
    %v4994 = vmul.f32 %v4986, 0.7978846
    %v4995 = vmul.f32 %v4987, 0.7978846
    %v4996 = vtanh.pop %v4988
    %v4997 = vtanh.pop %v4989
    %v4998 = vtanh.pop %v4990
    %v4999 = vtanh.pop %v4991
    %v5000 = vtanh.pop %v4992
    %v5001 = vtanh.pop %v4993
    %v5002 = vtanh.pop %v4994
    %v5003 = vtanh.pop %v4995
    %v5004 = vadd.f32 %v4996, 1.0
    %v5005 = vadd.f32 %v4997, 1.0
    %v5006 = vadd.f32 %v4998, 1.0
    %v5007 = vadd.f32 %v4999, 1.0
    %v5008 = vadd.f32 %v5000, 1.0
    %v5009 = vadd.f32 %v5001, 1.0
    %v5010 = vadd.f32 %v5002, 1.0
    %v5011 = vadd.f32 %v5003, 1.0
    %v5012 = vmul.f32 %v5004, 0.5
    %v5013 = vmul.f32 %v5005, 0.5
    %v5014 = vmul.f32 %v5006, 0.5
    %v5015 = vmul.f32 %v5007, 0.5
    %v5016 = vmul.f32 %v5008, 0.5
    %v5017 = vmul.f32 %v5009, 0.5
    %v5018 = vmul.f32 %v5010, 0.5
    %v5019 = vmul.f32 %v5011, 0.5
    %v5020 = vmul.f32 %v4905, %v5012
    %v5021 = vmul.f32 %v4907, %v5013
    %v5022 = vmul.f32 %v4948, %v5014
    %v5023 = vmul.f32 %v4950, %v5015
    %v5024 = vmul.f32 %v4909, %v5016
    %v5025 = vmul.f32 %v4911, %v5017
    %v5026 = vmul.f32 %v4952, %v5018
    %v5027 = vmul.f32 %v4954, %v5019
    %s5028 = scalar_lea.vmem [#allocation7], 512
    %v5029 = vld [vmem:[%s5028] sm:$0xff]
    %v5030 = vld [vmem:[%s5028 + $0x8] sm:$0xff]
    %v5031 = vld [vmem:[%s5028 + $0x10] sm:$0xff]
    %v5032 = vld [vmem:[%s5028 + $0x18] sm:$0xff]
    %v5033 = vld [vmem:[%s5028 + $0x20] sm:$0xff]
    %v5034 = vld [vmem:[%s5028 + $0x28] sm:$0xff]
    %v5035 = vld [vmem:[%s5028 + $0x30] sm:$0xff]
    %v5036 = vld [vmem:[%s5028 + $0x38] sm:$0xff]
    %v5037 = vld [vmem:[%s5028 + $0x40] sm:$0xff]
    %v5038 = vld [vmem:[%s5028 + $0x48] sm:$0xff]
    %v5039 = vld [vmem:[%s5028 + $0x50] sm:$0xff]
    %v5040 = vld [vmem:[%s5028 + $0x58] sm:$0xff]
    %v5041 = vld [vmem:[%s5028 + $0x60] sm:$0xff]
    %v5042 = vld [vmem:[%s5028 + $0x68] sm:$0xff]
    %v5043 = vld [vmem:[%s5028 + $0x70] sm:$0xff]
    %v5044 = vld [vmem:[%s5028 + $0x78] sm:$0xff]
    %v5045 = vld [vmem:[%s5028 + $0x80] sm:$0xff]
    %v5046 = vld [vmem:[%s5028 + $0x88] sm:$0xff]
    %v5047 = vld [vmem:[%s5028 + $0x90] sm:$0xff]
    %v5048 = vld [vmem:[%s5028 + $0x98] sm:$0xff]
    %v5049 = vld [vmem:[%s5028 + $0xa0] sm:$0xff]
    %v5050 = vld [vmem:[%s5028 + $0xa8] sm:$0xff]
    %v5051 = vld [vmem:[%s5028 + $0xb0] sm:$0xff]
    %v5052 = vld [vmem:[%s5028 + $0xb8] sm:$0xff]
    %v5053 = vld [vmem:[%s5028 + $0xc0] sm:$0xff]
    %v5054 = vld [vmem:[%s5028 + $0xc8] sm:$0xff]
    %v5055 = vld [vmem:[%s5028 + $0xd0] sm:$0xff]
    %v5056 = vld [vmem:[%s5028 + $0xd8] sm:$0xff]
    %v5057 = vld [vmem:[%s5028 + $0xe0] sm:$0xff]
    %v5058 = vld [vmem:[%s5028 + $0xe8] sm:$0xff]
    %v5059 = vld [vmem:[%s5028 + $0xf0] sm:$0xff]
    %v5060 = vld [vmem:[%s5028 + $0xf8] sm:$0xff]
    %v5061 = vld [vmem:[%s5028 + $0x100] sm:$0xff]
    %v5062 = vld [vmem:[%s5028 + $0x108] sm:$0xff]
    %v5063 = vld [vmem:[%s5028 + $0x110] sm:$0xff]
    %v5064 = vld [vmem:[%s5028 + $0x118] sm:$0xff]
    %v5065 = vld [vmem:[%s5028 + $0x120] sm:$0xff]
    %v5066 = vld [vmem:[%s5028 + $0x128] sm:$0xff]
    %v5067 = vld [vmem:[%s5028 + $0x130] sm:$0xff]
    %v5068 = vld [vmem:[%s5028 + $0x138] sm:$0xff]
    %v5069 = vld [vmem:[%s5028 + $0x140] sm:$0xff]
    %v5070 = vld [vmem:[%s5028 + $0x148] sm:$0xff]
    %v5071 = vld [vmem:[%s5028 + $0x150] sm:$0xff]
    %v5072 = vld [vmem:[%s5028 + $0x158] sm:$0xff]
    %v5073 = vld [vmem:[%s5028 + $0x160] sm:$0xff]
    %v5074 = vld [vmem:[%s5028 + $0x168] sm:$0xff]
    %v5075 = vld [vmem:[%s5028 + $0x170] sm:$0xff]
    %v5076 = vld [vmem:[%s5028 + $0x178] sm:$0xff]
    %v5077 = vld [vmem:[%s5028 + $0x180] sm:$0xff]
    %v5078 = vld [vmem:[%s5028 + $0x188] sm:$0xff]
    %v5079 = vld [vmem:[%s5028 + $0x190] sm:$0xff]
    %v5080 = vld [vmem:[%s5028 + $0x198] sm:$0xff]
    %v5081 = vld [vmem:[%s5028 + $0x1a0] sm:$0xff]
    %v5082 = vld [vmem:[%s5028 + $0x1a8] sm:$0xff]
    %v5083 = vld [vmem:[%s5028 + $0x1b0] sm:$0xff]
    %v5084 = vld [vmem:[%s5028 + $0x1b8] sm:$0xff]
    %v5085 = vld [vmem:[%s5028 + $0x1c0] sm:$0xff]
    %v5086 = vld [vmem:[%s5028 + $0x1c8] sm:$0xff]
    %v5087 = vld [vmem:[%s5028 + $0x1d0] sm:$0xff]
    %v5088 = vld [vmem:[%s5028 + $0x1d8] sm:$0xff]
    %v5089 = vld [vmem:[%s5028 + $0x1e0] sm:$0xff]
    %v5090 = vld [vmem:[%s5028 + $0x1e8] sm:$0xff]
    %v5091 = vld [vmem:[%s5028 + $0x1f0] sm:$0xff]
    %v5092 = vld [vmem:[%s5028 + $0x1f8] sm:$0xff]
    %v5093 = vpack.c.bf16 %v5024, %v5020
    %v5094 = vpack.c.bf16 %v5025, %v5021
    %v5095 = vpack.c.bf16 %v5026, %v5022
    %v5096 = vpack.c.bf16 %v5027, %v5023
    %s5097 = scalar_lea.vmem %s13, 2
    %v5098 = vld [vmem:[%s5097] sm:$0x3]
    %v5100 = vlaneseq
    %v5101 = vshrl.u32 %v5100, 7
    %v5102 = vsub.s32 0, %v5101
    %v5103 = vrot.slane %v5098, %v5102
    %v5104 = vlaneseq
    %v5105 = vshrl.u32 %v5104, 7
    %v5106 = vsub.s32 1, %v5105
    %v5107 = vrot.slane %v5098, %v5106
    %v5174 = vunpack.c.l.b16 %v5029
    %v5175 = vunpack.c.h.b16 %v5029
    %v5176 = vunpack.c.l.b16 %v5030
    %v5177 = vunpack.c.h.b16 %v5030
    %v5178 = vunpack.c.l.b16 %v5031
    %v5179 = vunpack.c.h.b16 %v5031
    %v5180 = vunpack.c.l.b16 %v5032
    %v5181 = vunpack.c.h.b16 %v5032
    %v5182 = vunpack.c.l.b16 %v5033
    %v5183 = vunpack.c.h.b16 %v5033
    %v5184 = vunpack.c.l.b16 %v5034
    %v5185 = vunpack.c.h.b16 %v5034
    %v5186 = vunpack.c.l.b16 %v5035
    %v5187 = vunpack.c.h.b16 %v5035
    %v5188 = vunpack.c.l.b16 %v5036
    %v5189 = vunpack.c.h.b16 %v5036
    %v5190 = vunpack.c.l.b16 %v5037
    %v5191 = vunpack.c.h.b16 %v5037
    %v5192 = vunpack.c.l.b16 %v5038
    %v5193 = vunpack.c.h.b16 %v5038
    %v5194 = vunpack.c.l.b16 %v5039
    %v5195 = vunpack.c.h.b16 %v5039
    %v5196 = vunpack.c.l.b16 %v5040
    %v5197 = vunpack.c.h.b16 %v5040
    %v5198 = vunpack.c.l.b16 %v5041
    %v5199 = vunpack.c.h.b16 %v5041
    %v5200 = vunpack.c.l.b16 %v5042
    %v5201 = vunpack.c.h.b16 %v5042
    %v5202 = vunpack.c.l.b16 %v5043
    %v5203 = vunpack.c.h.b16 %v5043
    %v5204 = vunpack.c.l.b16 %v5044
    %v5205 = vunpack.c.h.b16 %v5044
    %v5206 = vunpack.c.l.b16 %v5045
    %v5207 = vunpack.c.h.b16 %v5045
    %v5208 = vunpack.c.l.b16 %v5046
    %v5209 = vunpack.c.h.b16 %v5046
    %v5210 = vunpack.c.l.b16 %v5047
    %v5211 = vunpack.c.h.b16 %v5047
    %v5212 = vunpack.c.l.b16 %v5048
    %v5213 = vunpack.c.h.b16 %v5048
    %v5214 = vunpack.c.l.b16 %v5049
    %v5215 = vunpack.c.h.b16 %v5049
    %v5216 = vunpack.c.l.b16 %v5050
    %v5217 = vunpack.c.h.b16 %v5050
    %v5218 = vunpack.c.l.b16 %v5051
    %v5219 = vunpack.c.h.b16 %v5051
    %v5220 = vunpack.c.l.b16 %v5052
    %v5221 = vunpack.c.h.b16 %v5052
    %v5222 = vunpack.c.l.b16 %v5053
    %v5223 = vunpack.c.h.b16 %v5053
    %v5224 = vunpack.c.l.b16 %v5054
    %v5225 = vunpack.c.h.b16 %v5054
    %v5226 = vunpack.c.l.b16 %v5055
    %v5227 = vunpack.c.h.b16 %v5055
    %v5228 = vunpack.c.l.b16 %v5056
    %v5229 = vunpack.c.h.b16 %v5056
    %v5230 = vunpack.c.l.b16 %v5057
    %v5231 = vunpack.c.h.b16 %v5057
    %v5232 = vunpack.c.l.b16 %v5058
    %v5233 = vunpack.c.h.b16 %v5058
    %v5234 = vunpack.c.l.b16 %v5059
    %v5235 = vunpack.c.h.b16 %v5059
    %v5236 = vunpack.c.l.b16 %v5060
    %v5237 = vunpack.c.h.b16 %v5060
    %v5238 = vunpack.c.l.b16 %v5061
    %v5239 = vunpack.c.h.b16 %v5061
    %v5240 = vunpack.c.l.b16 %v5062
    %v5241 = vunpack.c.h.b16 %v5062
    %v5242 = vunpack.c.l.b16 %v5063
    %v5243 = vunpack.c.h.b16 %v5063
    %v5244 = vunpack.c.l.b16 %v5064
    %v5245 = vunpack.c.h.b16 %v5064
    %v5246 = vunpack.c.l.b16 %v5065
    %v5247 = vunpack.c.h.b16 %v5065
    %v5248 = vunpack.c.l.b16 %v5066
    %v5249 = vunpack.c.h.b16 %v5066
    %v5250 = vunpack.c.l.b16 %v5067
    %v5251 = vunpack.c.h.b16 %v5067
    %v5252 = vunpack.c.l.b16 %v5068
    %v5253 = vunpack.c.h.b16 %v5068
    %v5254 = vunpack.c.l.b16 %v5069
    %v5255 = vunpack.c.h.b16 %v5069
    %v5256 = vunpack.c.l.b16 %v5070
    %v5257 = vunpack.c.h.b16 %v5070
    %v5258 = vunpack.c.l.b16 %v5071
    %v5259 = vunpack.c.h.b16 %v5071
    %v5260 = vunpack.c.l.b16 %v5072
    %v5261 = vunpack.c.h.b16 %v5072
    %v5262 = vunpack.c.l.b16 %v5073
    %v5263 = vunpack.c.h.b16 %v5073
    %v5264 = vunpack.c.l.b16 %v5074
    %v5265 = vunpack.c.h.b16 %v5074
    %v5266 = vunpack.c.l.b16 %v5075
    %v5267 = vunpack.c.h.b16 %v5075
    %v5268 = vunpack.c.l.b16 %v5076
    %v5269 = vunpack.c.h.b16 %v5076
    %v5270 = vunpack.c.l.b16 %v5077
    %v5271 = vunpack.c.h.b16 %v5077
    %v5272 = vunpack.c.l.b16 %v5078
    %v5273 = vunpack.c.h.b16 %v5078
    %v5274 = vunpack.c.l.b16 %v5079
    %v5275 = vunpack.c.h.b16 %v5079
    %v5276 = vunpack.c.l.b16 %v5080
    %v5277 = vunpack.c.h.b16 %v5080
    %v5278 = vunpack.c.l.b16 %v5081
    %v5279 = vunpack.c.h.b16 %v5081
    %v5280 = vunpack.c.l.b16 %v5082
    %v5281 = vunpack.c.h.b16 %v5082
    %v5282 = vunpack.c.l.b16 %v5083
    %v5283 = vunpack.c.h.b16 %v5083
    %v5284 = vunpack.c.l.b16 %v5084
    %v5285 = vunpack.c.h.b16 %v5084
    %v5286 = vunpack.c.l.b16 %v5085
    %v5287 = vunpack.c.h.b16 %v5085
    %v5288 = vunpack.c.l.b16 %v5086
    %v5289 = vunpack.c.h.b16 %v5086
    %v5290 = vunpack.c.l.b16 %v5087
    %v5291 = vunpack.c.h.b16 %v5087
    %v5292 = vunpack.c.l.b16 %v5088
    %v5293 = vunpack.c.h.b16 %v5088
    %v5294 = vunpack.c.l.b16 %v5089
    %v5295 = vunpack.c.h.b16 %v5089
    %v5296 = vunpack.c.l.b16 %v5090
    %v5297 = vunpack.c.h.b16 %v5090
    %v5298 = vunpack.c.l.b16 %v5091
    %v5299 = vunpack.c.h.b16 %v5091
    %v5300 = vunpack.c.l.b16 %v5092
    %v5301 = vunpack.c.h.b16 %v5092
    %v5302 = vpack.c.b16 %v5176, %v5174
    %v5303 = vpack.c.b16 %v5177, %v5175
    %v5304 = vpack.c.b16 %v5180, %v5178
    %v5305 = vpack.c.b16 %v5181, %v5179
    %v5306 = vpack.c.b16 %v5184, %v5182
    %v5307 = vpack.c.b16 %v5185, %v5183
    %v5308 = vpack.c.b16 %v5188, %v5186
    %v5309 = vpack.c.b16 %v5189, %v5187
    %v5310 = vpack.c.b16 %v5192, %v5190
    %v5311 = vpack.c.b16 %v5193, %v5191
    %v5312 = vpack.c.b16 %v5196, %v5194
    %v5313 = vpack.c.b16 %v5197, %v5195
    %v5314 = vpack.c.b16 %v5200, %v5198
    %v5315 = vpack.c.b16 %v5201, %v5199
    %v5316 = vpack.c.b16 %v5204, %v5202
    %v5317 = vpack.c.b16 %v5205, %v5203
    %v5318 = vpack.c.b16 %v5208, %v5206
    %v5319 = vpack.c.b16 %v5209, %v5207
    %v5320 = vpack.c.b16 %v5212, %v5210
    %v5321 = vpack.c.b16 %v5213, %v5211
    %v5322 = vpack.c.b16 %v5216, %v5214
    %v5323 = vpack.c.b16 %v5217, %v5215
    %v5324 = vpack.c.b16 %v5220, %v5218
    %v5325 = vpack.c.b16 %v5221, %v5219
    %v5326 = vpack.c.b16 %v5224, %v5222
    %v5327 = vpack.c.b16 %v5225, %v5223
    %v5328 = vpack.c.b16 %v5228, %v5226
    %v5329 = vpack.c.b16 %v5229, %v5227
    %v5330 = vpack.c.b16 %v5232, %v5230
    %v5331 = vpack.c.b16 %v5233, %v5231
    %v5332 = vpack.c.b16 %v5236, %v5234
    %v5333 = vpack.c.b16 %v5237, %v5235
    %v5334 = vpack.c.b16 %v5240, %v5238
    %v5335 = vpack.c.b16 %v5241, %v5239
    %v5336 = vpack.c.b16 %v5244, %v5242
    %v5337 = vpack.c.b16 %v5245, %v5243
    %v5338 = vpack.c.b16 %v5248, %v5246
    %v5339 = vpack.c.b16 %v5249, %v5247
    %v5340 = vpack.c.b16 %v5252, %v5250
    %v5341 = vpack.c.b16 %v5253, %v5251
    %v5342 = vpack.c.b16 %v5256, %v5254
    %v5343 = vpack.c.b16 %v5257, %v5255
    %v5344 = vpack.c.b16 %v5260, %v5258
    %v5345 = vpack.c.b16 %v5261, %v5259
    %v5346 = vpack.c.b16 %v5264, %v5262
    %v5347 = vpack.c.b16 %v5265, %v5263
    %v5348 = vpack.c.b16 %v5268, %v5266
    %v5349 = vpack.c.b16 %v5269, %v5267
    %v5350 = vpack.c.b16 %v5272, %v5270
    %v5351 = vpack.c.b16 %v5273, %v5271
    %v5352 = vpack.c.b16 %v5276, %v5274
    %v5353 = vpack.c.b16 %v5277, %v5275
    %v5354 = vpack.c.b16 %v5280, %v5278
    %v5355 = vpack.c.b16 %v5281, %v5279
    %v5356 = vpack.c.b16 %v5284, %v5282
    %v5357 = vpack.c.b16 %v5285, %v5283
    %v5358 = vpack.c.b16 %v5288, %v5286
    %v5359 = vpack.c.b16 %v5289, %v5287
    %v5360 = vpack.c.b16 %v5292, %v5290
    %v5361 = vpack.c.b16 %v5293, %v5291
    %v5362 = vpack.c.b16 %v5296, %v5294
    %v5363 = vpack.c.b16 %v5297, %v5295
    %v5364 = vpack.c.b16 %v5300, %v5298
    %v5365 = vpack.c.b16 %v5301, %v5299
    %5430 = vmatprep.subr.bf16.mxu0 %v5303
    %5431 = vmatpush1.bf16.msra.mxu0 %v5302
    %5432 = vmatprep.subr.bf16.mxu0 %v5305
    %5433 = vmatpush1.bf16.msra.mxu0 %v5304
    %5434 = vmatprep.subr.bf16.mxu0 %v5307
    %5435 = vmatpush1.bf16.msra.mxu0 %v5306
    %5436 = vmatprep.subr.bf16.mxu0 %v5309
    %5437 = vmatpush1.bf16.msra.mxu0 %v5308
    %5438 = vmatprep.subr.bf16.mxu0 %v5311
    %5439 = vmatpush1.bf16.msra.mxu0 %v5310
    %5440 = vmatprep.subr.bf16.mxu0 %v5313
    %5441 = vmatpush1.bf16.msra.mxu0 %v5312
    %5442 = vmatprep.subr.bf16.mxu0 %v5315
    %5443 = vmatpush1.bf16.msra.mxu0 %v5314
    %5444 = vmatprep.subr.bf16.mxu0 %v5317
    %5445 = vmatpush1.bf16.msra.mxu0 %v5316
    %5446 = vmatprep.subr.bf16.mxu0 %v5319
    %5447 = vmatpush1.bf16.msra.mxu0 %v5318
    %5448 = vmatprep.subr.bf16.mxu0 %v5321
    %5449 = vmatpush1.bf16.msra.mxu0 %v5320
    %5450 = vmatprep.subr.bf16.mxu0 %v5323
    %5451 = vmatpush1.bf16.msra.mxu0 %v5322
    %5452 = vmatprep.subr.bf16.mxu0 %v5325
    %5453 = vmatpush1.bf16.msra.mxu0 %v5324
    %5454 = vmatprep.subr.bf16.mxu0 %v5327
    %5455 = vmatpush1.bf16.msra.mxu0 %v5326
    %5456 = vmatprep.subr.bf16.mxu0 %v5329
    %5457 = vmatpush1.bf16.msra.mxu0 %v5328
    %5458 = vmatprep.subr.bf16.mxu0 %v5331
    %5459 = vmatpush1.bf16.msra.mxu0 %v5330
    %5460 = vmatprep.subr.bf16.mxu0 %v5333
    %5461 = vmatpush1.bf16.msra.mxu0 %v5332
    %5462 = vmatprep.mubr.bf16.mxu0 %v5094
    %5463 = vmatmul.mubr.bf16.gmra.mrb[0].mxu0 %v5093
    %v5464 = vpop.f32.mrb[0].mxu0
    %v5465 = vadd.f32 %v5103, %v5464
    %v5466 = vpop.f32.mrb[0].mxu0
    %v5467 = vadd.f32 %v5107, %v5466
    %v5468 = vpop.f32.mrb[0].mxu0
    %v5469 = vadd.f32 %v5103, %v5468
    %v5470 = vpop.f32.mrb[0].mxu0
    %v5471 = vadd.f32 %v5107, %v5470
    %5472 = vdwg.mxu0
    %5473 = vmatprep.subr.bf16.mxu0 %v5335
    %5474 = vmatpush1.bf16.msra.mxu0 %v5334
    %5475 = vmatprep.subr.bf16.mxu0 %v5337
    %5476 = vmatpush1.bf16.msra.mxu0 %v5336
    %5477 = vmatprep.subr.bf16.mxu0 %v5339
    %5478 = vmatpush1.bf16.msra.mxu0 %v5338
    %5479 = vmatprep.subr.bf16.mxu0 %v5341
    %5480 = vmatpush1.bf16.msra.mxu0 %v5340
    %5481 = vmatprep.subr.bf16.mxu0 %v5343
    %5482 = vmatpush1.bf16.msra.mxu0 %v5342
    %5483 = vmatprep.subr.bf16.mxu0 %v5345
    %5484 = vmatpush1.bf16.msra.mxu0 %v5344
    %5485 = vmatprep.subr.bf16.mxu0 %v5347
    %5486 = vmatpush1.bf16.msra.mxu0 %v5346
    %5487 = vmatprep.subr.bf16.mxu0 %v5349
    %5488 = vmatpush1.bf16.msra.mxu0 %v5348
    %5489 = vmatprep.subr.bf16.mxu0 %v5351
    %5490 = vmatpush1.bf16.msra.mxu0 %v5350
    %5491 = vmatprep.subr.bf16.mxu0 %v5353
    %5492 = vmatpush1.bf16.msra.mxu0 %v5352
    %5493 = vmatprep.subr.bf16.mxu0 %v5355
    %5494 = vmatpush1.bf16.msra.mxu0 %v5354
    %5495 = vmatprep.subr.bf16.mxu0 %v5357
    %5496 = vmatpush1.bf16.msra.mxu0 %v5356
    %5497 = vmatprep.subr.bf16.mxu0 %v5359
    %5498 = vmatpush1.bf16.msra.mxu0 %v5358
    %5499 = vmatprep.subr.bf16.mxu0 %v5361
    %5500 = vmatpush1.bf16.msra.mxu0 %v5360
    %5501 = vmatprep.subr.bf16.mxu0 %v5363
    %5502 = vmatpush1.bf16.msra.mxu0 %v5362
    %5503 = vmatprep.subr.bf16.mxu0 %v5365
    %5504 = vmatpush1.bf16.msra.mxu0 %v5364
    %5505 = vmatprep.mubr.bf16.mxu0 %v5096
    %5506 = vmatmul.mubr.bf16.gmra.mrb[0].mxu0 %v5095
    %v5507 = vpop.f32.mrb[0].mxu0
    %v5508 = vadd.f32 %v5465, %v5507
    %v5509 = vpop.f32.mrb[0].mxu0
    %v5510 = vadd.f32 %v5467, %v5509
    %v5511 = vpop.f32.mrb[0].mxu0
    %v5512 = vadd.f32 %v5469, %v5511
    %v5513 = vpop.f32.mrb[0].mxu0
    %v5514 = vadd.f32 %v5471, %v5513
    %5515 = vdwg.mxu0
    %v5516 = vadd.f32 %v5508, %v4456
    %v5517 = vadd.f32 %v5510, %v4457
    %v5518 = vadd.f32 %v5512, %v4458
    %v5519 = vadd.f32 %v5514, %v4459
    %s5520 = scalar_lea.vmem %s14, 2
    %v5521 = vld [vmem:[%s5520] sm:$0x3]
    %s5522 = scalar_lea.vmem %s15, 2
    %v5523 = vld [vmem:[%s5522] sm:$0x3]
    %v5524 = vadd.f32 %v5516, %v5517
    %5525 = vadd.xlane.f32.xlu0 %v5524
    %v5526 = vpop.xlane.xlu0 %5525
    %v5527 = vadd.f32 %v5518, %v5519
    %5528 = vadd.xlane.f32.xlu0 %v5527
    %v5529 = vpop.xlane.xlu0 %5528
    %v5530 = vmul.f32 %v5526, %v142
    %v5531 = vmul.f32 %v5529, %v142
    %v5532 = vsub.f32 %v5516, %v5530
    %v5533 = vsub.f32 %v5517, %v5530
    %v5534 = vsub.f32 %v5518, %v5531
    %v5535 = vsub.f32 %v5519, %v5531
    %v5536 = vmul.f32 %v5532, %v5532
    %v5537 = vmul.f32 %v5533, %v5533
    %v5538 = vmul.f32 %v5534, %v5534
    %v5539 = vmul.f32 %v5535, %v5535
    %v5540 = vadd.f32 %v5536, %v5537
    %5541 = vadd.xlane.f32.xlu0 %v5540
    %v5542 = vpop.xlane.xlu0 %5541
    %v5543 = vadd.f32 %v5538, %v5539
    %5544 = vadd.xlane.f32.xlu0 %v5543
    %v5545 = vpop.xlane.xlu0 %5544
    %v5546 = vmul.f32 %v5542, %v142
    %v5547 = vmul.f32 %v5545, %v142
    %v5548 = vadd.f32 %v5546, 1e-12
    %v5549 = vadd.f32 %v5547, 1e-12
    %v5550 = vrsqrt.pop %v5548
    %v5551 = vrsqrt.pop %v5549
    %v5552 = vmul.f32 %v5532, %v5550
    %v5553 = vmul.f32 %v5533, %v5550
    %v5554 = vmul.f32 %v5534, %v5551
    %v5555 = vmul.f32 %v5535, %v5551
    %v5557 = vlaneseq
    %v5558 = vshrl.u32 %v5557, 7
    %v5559 = vsub.s32 0, %v5558
    %v5560 = vrot.slane %v5521, %v5559
    %v5561 = vlaneseq
    %v5562 = vshrl.u32 %v5561, 7
    %v5563 = vsub.s32 1, %v5562
    %v5564 = vrot.slane %v5521, %v5563
    %v5567 = vmul.f32 %v5552, %v5560
    %v5568 = vmul.f32 %v5553, %v5564
    %v5569 = vmul.f32 %v5554, %v5560
    %v5570 = vmul.f32 %v5555, %v5564
    %v5572 = vlaneseq
    %v5573 = vshrl.u32 %v5572, 7
    %v5574 = vsub.s32 0, %v5573
    %v5575 = vrot.slane %v5523, %v5574
    %v5576 = vlaneseq
    %v5577 = vshrl.u32 %v5576, 7
    %v5578 = vsub.s32 1, %v5577
    %v5579 = vrot.slane %v5523, %v5578
    %v5582 = vadd.f32 %v5567, %v5575
    %v5583 = vadd.f32 %v5568, %v5579
    %v5584 = vadd.f32 %v5569, %v5575
    %v5585 = vadd.f32 %v5570, %v5579
    %v5588 = vrot.slane %v5584, 7
    %v5589 = vrot.slane %v5585, 7
    %v5592 = vsel %vm2889, %v5582, %v5588
    %v5593 = vsel %vm2889, %v5583, %v5589
    %v5594 = vld [vmem:[#allocation8] sm:$0xff]
    %v5595 = vld [vmem:[#allocation8 + $0x8] sm:$0xff]
    %v5596 = vld [vmem:[#allocation8 + $0x10] sm:$0xff]
    %v5597 = vld [vmem:[#allocation8 + $0x18] sm:$0xff]
    %v5598 = vld [vmem:[#allocation8 + $0x20] sm:$0xff]
    %v5599 = vld [vmem:[#allocation8 + $0x28] sm:$0xff]
    %v5600 = vld [vmem:[#allocation8 + $0x30] sm:$0xff]
    %v5601 = vld [vmem:[#allocation8 + $0x38] sm:$0xff]
    %v5602 = vld [vmem:[#allocation8 + $0x40] sm:$0xff]
    %v5603 = vld [vmem:[#allocation8 + $0x48] sm:$0xff]
    %v5604 = vld [vmem:[#allocation8 + $0x50] sm:$0xff]
    %v5605 = vld [vmem:[#allocation8 + $0x58] sm:$0xff]
    %v5606 = vld [vmem:[#allocation8 + $0x60] sm:$0xff]
    %v5607 = vld [vmem:[#allocation8 + $0x68] sm:$0xff]
    %v5608 = vld [vmem:[#allocation8 + $0x70] sm:$0xff]
    %v5609 = vld [vmem:[#allocation8 + $0x78] sm:$0xff]
    %v5610 = vld [vmem:[#allocation8 + $0x80] sm:$0xff]
    %v5611 = vld [vmem:[#allocation8 + $0x88] sm:$0xff]
    %v5612 = vld [vmem:[#allocation8 + $0x90] sm:$0xff]
    %v5613 = vld [vmem:[#allocation8 + $0x98] sm:$0xff]
    %v5614 = vld [vmem:[#allocation8 + $0xa0] sm:$0xff]
    %v5615 = vld [vmem:[#allocation8 + $0xa8] sm:$0xff]
    %v5616 = vld [vmem:[#allocation8 + $0xb0] sm:$0xff]
    %v5617 = vld [vmem:[#allocation8 + $0xb8] sm:$0xff]
    %v5618 = vld [vmem:[#allocation8 + $0xc0] sm:$0xff]
    %v5619 = vld [vmem:[#allocation8 + $0xc8] sm:$0xff]
    %v5620 = vld [vmem:[#allocation8 + $0xd0] sm:$0xff]
    %v5621 = vld [vmem:[#allocation8 + $0xd8] sm:$0xff]
    %v5622 = vld [vmem:[#allocation8 + $0xe0] sm:$0xff]
    %v5623 = vld [vmem:[#allocation8 + $0xe8] sm:$0xff]
    %v5624 = vld [vmem:[#allocation8 + $0xf0] sm:$0xff]
    %v5625 = vld [vmem:[#allocation8 + $0xf8] sm:$0xff]
    %v5626 = vld [vmem:[#allocation8 + $0x100] sm:$0xff]
    %v5627 = vld [vmem:[#allocation8 + $0x108] sm:$0xff]
    %v5628 = vld [vmem:[#allocation8 + $0x110] sm:$0xff]
    %v5629 = vld [vmem:[#allocation8 + $0x118] sm:$0xff]
    %v5630 = vld [vmem:[#allocation8 + $0x120] sm:$0xff]
    %v5631 = vld [vmem:[#allocation8 + $0x128] sm:$0xff]
    %v5632 = vld [vmem:[#allocation8 + $0x130] sm:$0xff]
    %v5633 = vld [vmem:[#allocation8 + $0x138] sm:$0xff]
    %v5634 = vld [vmem:[#allocation8 + $0x140] sm:$0xff]
    %v5635 = vld [vmem:[#allocation8 + $0x148] sm:$0xff]
    %v5636 = vld [vmem:[#allocation8 + $0x150] sm:$0xff]
    %v5637 = vld [vmem:[#allocation8 + $0x158] sm:$0xff]
    %v5638 = vld [vmem:[#allocation8 + $0x160] sm:$0xff]
    %v5639 = vld [vmem:[#allocation8 + $0x168] sm:$0xff]
    %v5640 = vld [vmem:[#allocation8 + $0x170] sm:$0xff]
    %v5641 = vld [vmem:[#allocation8 + $0x178] sm:$0xff]
    %v5642 = vld [vmem:[#allocation8 + $0x180] sm:$0xff]
    %v5643 = vld [vmem:[#allocation8 + $0x188] sm:$0xff]
    %v5644 = vld [vmem:[#allocation8 + $0x190] sm:$0xff]
    %v5645 = vld [vmem:[#allocation8 + $0x198] sm:$0xff]
    %v5646 = vld [vmem:[#allocation8 + $0x1a0] sm:$0xff]
    %v5647 = vld [vmem:[#allocation8 + $0x1a8] sm:$0xff]
    %v5648 = vld [vmem:[#allocation8 + $0x1b0] sm:$0xff]
    %v5649 = vld [vmem:[#allocation8 + $0x1b8] sm:$0xff]
    %v5650 = vld [vmem:[#allocation8 + $0x1c0] sm:$0xff]
    %v5651 = vld [vmem:[#allocation8 + $0x1c8] sm:$0xff]
    %v5652 = vld [vmem:[#allocation8 + $0x1d0] sm:$0xff]
    %v5653 = vld [vmem:[#allocation8 + $0x1d8] sm:$0xff]
    %v5654 = vld [vmem:[#allocation8 + $0x1e0] sm:$0xff]
    %v5655 = vld [vmem:[#allocation8 + $0x1e8] sm:$0xff]
    %v5656 = vld [vmem:[#allocation8 + $0x1f0] sm:$0xff]
    %v5657 = vld [vmem:[#allocation8 + $0x1f8] sm:$0xff]
    %v5658 = vld [vmem:[%s17] sm:$0x3]
    %v5659 = vpack.c.bf16 %v5592, %v5592
    %v5660 = vpack.c.bf16 %v5593, %v5593
    %v5661 = vpack.c.bf16 %v2890, %v2890
    %v5662 = vpack.c.bf16 %v2891, %v2891
    %v5664 = vlaneseq
    %v5665 = vshrl.u32 %v5664, 7
    %v5666 = vsub.s32 0, %v5665
    %v5667 = vrot.slane %v5658, %v5666
    %v5668 = vlaneseq
    %v5669 = vshrl.u32 %v5668, 7
    %v5670 = vsub.s32 1, %v5669
    %v5671 = vrot.slane %v5658, %v5670
    %v5738 = vunpack.c.l.b16 %v5594
    %v5739 = vunpack.c.h.b16 %v5594
    %v5740 = vunpack.c.l.b16 %v5595
    %v5741 = vunpack.c.h.b16 %v5595
    %v5742 = vunpack.c.l.b16 %v5596
    %v5743 = vunpack.c.h.b16 %v5596
    %v5744 = vunpack.c.l.b16 %v5597
    %v5745 = vunpack.c.h.b16 %v5597
    %v5746 = vunpack.c.l.b16 %v5598
    %v5747 = vunpack.c.h.b16 %v5598
    %v5748 = vunpack.c.l.b16 %v5599
    %v5749 = vunpack.c.h.b16 %v5599
    %v5750 = vunpack.c.l.b16 %v5600
    %v5751 = vunpack.c.h.b16 %v5600
    %v5752 = vunpack.c.l.b16 %v5601
    %v5753 = vunpack.c.h.b16 %v5601
    %v5754 = vunpack.c.l.b16 %v5602
    %v5755 = vunpack.c.h.b16 %v5602
    %v5756 = vunpack.c.l.b16 %v5603
    %v5757 = vunpack.c.h.b16 %v5603
    %v5758 = vunpack.c.l.b16 %v5604
    %v5759 = vunpack.c.h.b16 %v5604
    %v5760 = vunpack.c.l.b16 %v5605
    %v5761 = vunpack.c.h.b16 %v5605
    %v5762 = vunpack.c.l.b16 %v5606
    %v5763 = vunpack.c.h.b16 %v5606
    %v5764 = vunpack.c.l.b16 %v5607
    %v5765 = vunpack.c.h.b16 %v5607
    %v5766 = vunpack.c.l.b16 %v5608
    %v5767 = vunpack.c.h.b16 %v5608
    %v5768 = vunpack.c.l.b16 %v5609
    %v5769 = vunpack.c.h.b16 %v5609
    %v5770 = vunpack.c.l.b16 %v5610
    %v5771 = vunpack.c.h.b16 %v5610
    %v5772 = vunpack.c.l.b16 %v5611
    %v5773 = vunpack.c.h.b16 %v5611
    %v5774 = vunpack.c.l.b16 %v5612
    %v5775 = vunpack.c.h.b16 %v5612
    %v5776 = vunpack.c.l.b16 %v5613
    %v5777 = vunpack.c.h.b16 %v5613
    %v5778 = vunpack.c.l.b16 %v5614
    %v5779 = vunpack.c.h.b16 %v5614
    %v5780 = vunpack.c.l.b16 %v5615
    %v5781 = vunpack.c.h.b16 %v5615
    %v5782 = vunpack.c.l.b16 %v5616
    %v5783 = vunpack.c.h.b16 %v5616
    %v5784 = vunpack.c.l.b16 %v5617
    %v5785 = vunpack.c.h.b16 %v5617
    %v5786 = vunpack.c.l.b16 %v5618
    %v5787 = vunpack.c.h.b16 %v5618
    %v5788 = vunpack.c.l.b16 %v5619
    %v5789 = vunpack.c.h.b16 %v5619
    %v5790 = vunpack.c.l.b16 %v5620
    %v5791 = vunpack.c.h.b16 %v5620
    %v5792 = vunpack.c.l.b16 %v5621
    %v5793 = vunpack.c.h.b16 %v5621
    %v5794 = vunpack.c.l.b16 %v5622
    %v5795 = vunpack.c.h.b16 %v5622
    %v5796 = vunpack.c.l.b16 %v5623
    %v5797 = vunpack.c.h.b16 %v5623
    %v5798 = vunpack.c.l.b16 %v5624
    %v5799 = vunpack.c.h.b16 %v5624
    %v5800 = vunpack.c.l.b16 %v5625
    %v5801 = vunpack.c.h.b16 %v5625
    %v5802 = vunpack.c.l.b16 %v5626
    %v5803 = vunpack.c.h.b16 %v5626
    %v5804 = vunpack.c.l.b16 %v5627
    %v5805 = vunpack.c.h.b16 %v5627
    %v5806 = vunpack.c.l.b16 %v5628
    %v5807 = vunpack.c.h.b16 %v5628
    %v5808 = vunpack.c.l.b16 %v5629
    %v5809 = vunpack.c.h.b16 %v5629
    %v5810 = vunpack.c.l.b16 %v5630
    %v5811 = vunpack.c.h.b16 %v5630
    %v5812 = vunpack.c.l.b16 %v5631
    %v5813 = vunpack.c.h.b16 %v5631
    %v5814 = vunpack.c.l.b16 %v5632
    %v5815 = vunpack.c.h.b16 %v5632
    %v5816 = vunpack.c.l.b16 %v5633
    %v5817 = vunpack.c.h.b16 %v5633
    %v5818 = vunpack.c.l.b16 %v5634
    %v5819 = vunpack.c.h.b16 %v5634
    %v5820 = vunpack.c.l.b16 %v5635
    %v5821 = vunpack.c.h.b16 %v5635
    %v5822 = vunpack.c.l.b16 %v5636
    %v5823 = vunpack.c.h.b16 %v5636
    %v5824 = vunpack.c.l.b16 %v5637
    %v5825 = vunpack.c.h.b16 %v5637
    %v5826 = vunpack.c.l.b16 %v5638
    %v5827 = vunpack.c.h.b16 %v5638
    %v5828 = vunpack.c.l.b16 %v5639
    %v5829 = vunpack.c.h.b16 %v5639
    %v5830 = vunpack.c.l.b16 %v5640
    %v5831 = vunpack.c.h.b16 %v5640
    %v5832 = vunpack.c.l.b16 %v5641
    %v5833 = vunpack.c.h.b16 %v5641
    %v5834 = vunpack.c.l.b16 %v5642
    %v5835 = vunpack.c.h.b16 %v5642
    %v5836 = vunpack.c.l.b16 %v5643
    %v5837 = vunpack.c.h.b16 %v5643
    %v5838 = vunpack.c.l.b16 %v5644
    %v5839 = vunpack.c.h.b16 %v5644
    %v5840 = vunpack.c.l.b16 %v5645
    %v5841 = vunpack.c.h.b16 %v5645
    %v5842 = vunpack.c.l.b16 %v5646
    %v5843 = vunpack.c.h.b16 %v5646
    %v5844 = vunpack.c.l.b16 %v5647
    %v5845 = vunpack.c.h.b16 %v5647
    %v5846 = vunpack.c.l.b16 %v5648
    %v5847 = vunpack.c.h.b16 %v5648
    %v5848 = vunpack.c.l.b16 %v5649
    %v5849 = vunpack.c.h.b16 %v5649
    %v5850 = vunpack.c.l.b16 %v5650
    %v5851 = vunpack.c.h.b16 %v5650
    %v5852 = vunpack.c.l.b16 %v5651
    %v5853 = vunpack.c.h.b16 %v5651
    %v5854 = vunpack.c.l.b16 %v5652
    %v5855 = vunpack.c.h.b16 %v5652
    %v5856 = vunpack.c.l.b16 %v5653
    %v5857 = vunpack.c.h.b16 %v5653
    %v5858 = vunpack.c.l.b16 %v5654
    %v5859 = vunpack.c.h.b16 %v5654
    %v5860 = vunpack.c.l.b16 %v5655
    %v5861 = vunpack.c.h.b16 %v5655
    %v5862 = vunpack.c.l.b16 %v5656
    %v5863 = vunpack.c.h.b16 %v5656
    %v5864 = vunpack.c.l.b16 %v5657
    %v5865 = vunpack.c.h.b16 %v5657
    %v5866 = vpack.c.b16 %v5740, %v5738
    %v5867 = vpack.c.b16 %v5741, %v5739
    %v5868 = vpack.c.b16 %v5744, %v5742
    %v5869 = vpack.c.b16 %v5745, %v5743
    %v5870 = vpack.c.b16 %v5748, %v5746
    %v5871 = vpack.c.b16 %v5749, %v5747
    %v5872 = vpack.c.b16 %v5752, %v5750
    %v5873 = vpack.c.b16 %v5753, %v5751
    %v5874 = vpack.c.b16 %v5756, %v5754
    %v5875 = vpack.c.b16 %v5757, %v5755
    %v5876 = vpack.c.b16 %v5760, %v5758
    %v5877 = vpack.c.b16 %v5761, %v5759
    %v5878 = vpack.c.b16 %v5764, %v5762
    %v5879 = vpack.c.b16 %v5765, %v5763
    %v5880 = vpack.c.b16 %v5768, %v5766
    %v5881 = vpack.c.b16 %v5769, %v5767
    %v5882 = vpack.c.b16 %v5772, %v5770
    %v5883 = vpack.c.b16 %v5773, %v5771
    %v5884 = vpack.c.b16 %v5776, %v5774
    %v5885 = vpack.c.b16 %v5777, %v5775
    %v5886 = vpack.c.b16 %v5780, %v5778
    %v5887 = vpack.c.b16 %v5781, %v5779
    %v5888 = vpack.c.b16 %v5784, %v5782
    %v5889 = vpack.c.b16 %v5785, %v5783
    %v5890 = vpack.c.b16 %v5788, %v5786
    %v5891 = vpack.c.b16 %v5789, %v5787
    %v5892 = vpack.c.b16 %v5792, %v5790
    %v5893 = vpack.c.b16 %v5793, %v5791
    %v5894 = vpack.c.b16 %v5796, %v5794
    %v5895 = vpack.c.b16 %v5797, %v5795
    %v5896 = vpack.c.b16 %v5800, %v5798
    %v5897 = vpack.c.b16 %v5801, %v5799
    %v5898 = vpack.c.b16 %v5804, %v5802
    %v5899 = vpack.c.b16 %v5805, %v5803
    %v5900 = vpack.c.b16 %v5808, %v5806
    %v5901 = vpack.c.b16 %v5809, %v5807
    %v5902 = vpack.c.b16 %v5812, %v5810
    %v5903 = vpack.c.b16 %v5813, %v5811
    %v5904 = vpack.c.b16 %v5816, %v5814
    %v5905 = vpack.c.b16 %v5817, %v5815
    %v5906 = vpack.c.b16 %v5820, %v5818
    %v5907 = vpack.c.b16 %v5821, %v5819
    %v5908 = vpack.c.b16 %v5824, %v5822
    %v5909 = vpack.c.b16 %v5825, %v5823
    %v5910 = vpack.c.b16 %v5828, %v5826
    %v5911 = vpack.c.b16 %v5829, %v5827
    %v5912 = vpack.c.b16 %v5832, %v5830
    %v5913 = vpack.c.b16 %v5833, %v5831
    %v5914 = vpack.c.b16 %v5836, %v5834
    %v5915 = vpack.c.b16 %v5837, %v5835
    %v5916 = vpack.c.b16 %v5840, %v5838
    %v5917 = vpack.c.b16 %v5841, %v5839
    %v5918 = vpack.c.b16 %v5844, %v5842
    %v5919 = vpack.c.b16 %v5845, %v5843
    %v5920 = vpack.c.b16 %v5848, %v5846
    %v5921 = vpack.c.b16 %v5849, %v5847
    %v5922 = vpack.c.b16 %v5852, %v5850
    %v5923 = vpack.c.b16 %v5853, %v5851
    %v5924 = vpack.c.b16 %v5856, %v5854
    %v5925 = vpack.c.b16 %v5857, %v5855
    %v5926 = vpack.c.b16 %v5860, %v5858
    %v5927 = vpack.c.b16 %v5861, %v5859
    %v5928 = vpack.c.b16 %v5864, %v5862
    %v5929 = vpack.c.b16 %v5865, %v5863
    %5994 = vmatprep.subr.bf16.mxu0 %v5867
    %5995 = vmatpush1.bf16.msra.mxu0 %v5866
    %5996 = vmatprep.subr.bf16.mxu0 %v5869
    %5997 = vmatpush1.bf16.msra.mxu0 %v5868
    %5998 = vmatprep.subr.bf16.mxu0 %v5871
    %5999 = vmatpush1.bf16.msra.mxu0 %v5870
    %6000 = vmatprep.subr.bf16.mxu0 %v5873
    %6001 = vmatpush1.bf16.msra.mxu0 %v5872
    %6002 = vmatprep.subr.bf16.mxu0 %v5875
    %6003 = vmatpush1.bf16.msra.mxu0 %v5874
    %6004 = vmatprep.subr.bf16.mxu0 %v5877
    %6005 = vmatpush1.bf16.msra.mxu0 %v5876
    %6006 = vmatprep.subr.bf16.mxu0 %v5879
    %6007 = vmatpush1.bf16.msra.mxu0 %v5878
    %6008 = vmatprep.subr.bf16.mxu0 %v5881
    %6009 = vmatpush1.bf16.msra.mxu0 %v5880
    %6010 = vmatprep.subr.bf16.mxu0 %v5883
    %6011 = vmatpush1.bf16.msra.mxu0 %v5882
    %6012 = vmatprep.subr.bf16.mxu0 %v5885
    %6013 = vmatpush1.bf16.msra.mxu0 %v5884
    %6014 = vmatprep.subr.bf16.mxu0 %v5887
    %6015 = vmatpush1.bf16.msra.mxu0 %v5886
    %6016 = vmatprep.subr.bf16.mxu0 %v5889
    %6017 = vmatpush1.bf16.msra.mxu0 %v5888
    %6018 = vmatprep.subr.bf16.mxu0 %v5891
    %6019 = vmatpush1.bf16.msra.mxu0 %v5890
    %6020 = vmatprep.subr.bf16.mxu0 %v5893
    %6021 = vmatpush1.bf16.msra.mxu0 %v5892
    %6022 = vmatprep.subr.bf16.mxu0 %v5895
    %6023 = vmatpush1.bf16.msra.mxu0 %v5894
    %6024 = vmatprep.subr.bf16.mxu0 %v5897
    %6025 = vmatpush1.bf16.msra.mxu0 %v5896
    %6026 = vmatprep.mubr.bf16.mxu0 %v5660
    %6027 = vmatmul.mubr.bf16.gmra.mrb[0].mxu0 %v5659
    %v6028 = vpop.f32.mrb[0].mxu0
    %v6029 = vadd.f32 %v5667, %v6028
    %v6030 = vpop.f32.mrb[0].mxu0
    %v6031 = vadd.f32 %v5671, %v6030
    %v6032 = vpop.f32.mrb[0].mxu0
    %v6033 = vpop.f32.mrb[0].mxu0
    %6034 = vdwg.mxu0
    %6035 = vmatprep.subr.bf16.mxu0 %v5899
    %6036 = vmatpush1.bf16.msra.mxu0 %v5898
    %6037 = vmatprep.subr.bf16.mxu0 %v5901
    %6038 = vmatpush1.bf16.msra.mxu0 %v5900
    %6039 = vmatprep.subr.bf16.mxu0 %v5903
    %6040 = vmatpush1.bf16.msra.mxu0 %v5902
    %6041 = vmatprep.subr.bf16.mxu0 %v5905
    %6042 = vmatpush1.bf16.msra.mxu0 %v5904
    %6043 = vmatprep.subr.bf16.mxu0 %v5907
    %6044 = vmatpush1.bf16.msra.mxu0 %v5906
    %6045 = vmatprep.subr.bf16.mxu0 %v5909
    %6046 = vmatpush1.bf16.msra.mxu0 %v5908
    %6047 = vmatprep.subr.bf16.mxu0 %v5911
    %6048 = vmatpush1.bf16.msra.mxu0 %v5910
    %6049 = vmatprep.subr.bf16.mxu0 %v5913
    %6050 = vmatpush1.bf16.msra.mxu0 %v5912
    %6051 = vmatprep.subr.bf16.mxu0 %v5915
    %6052 = vmatpush1.bf16.msra.mxu0 %v5914
    %6053 = vmatprep.subr.bf16.mxu0 %v5917
    %6054 = vmatpush1.bf16.msra.mxu0 %v5916
    %6055 = vmatprep.subr.bf16.mxu0 %v5919
    %6056 = vmatpush1.bf16.msra.mxu0 %v5918
    %6057 = vmatprep.subr.bf16.mxu0 %v5921
    %6058 = vmatpush1.bf16.msra.mxu0 %v5920
    %6059 = vmatprep.subr.bf16.mxu0 %v5923
    %6060 = vmatpush1.bf16.msra.mxu0 %v5922
    %6061 = vmatprep.subr.bf16.mxu0 %v5925
    %6062 = vmatpush1.bf16.msra.mxu0 %v5924
    %6063 = vmatprep.subr.bf16.mxu0 %v5927
    %6064 = vmatpush1.bf16.msra.mxu0 %v5926
    %6065 = vmatprep.subr.bf16.mxu0 %v5929
    %6066 = vmatpush1.bf16.msra.mxu0 %v5928
    %6067 = vmatprep.mubr.bf16.mxu0 %v5662
    %6068 = vmatmul.mubr.bf16.gmra.mrb[0].mxu0 %v5661
    %v6069 = vpop.f32.mrb[0].mxu0
    %v6070 = vadd.f32 %v6029, %v6069
    %v6071 = vpop.f32.mrb[0].mxu0
    %v6072 = vadd.f32 %v6031, %v6071
    %v6073 = vpop.f32.mrb[0].mxu0
    %v6074 = vpop.f32.mrb[0].mxu0
    %6075 = vdwg.mxu0
    %v6076 = vxor.u32 %v6070, 2147483648
    %v6077 = vmul.f32 %v6076, 1.442695
    %v6078 = vpow.pop %v6077
    %v6079 = vadd.f32 %v6078, 1.0
    %v6080 = vrcp.pop %v6079
    %v6081 = vmul.f32 1.0, %v6080
    %v6082 = vtanh.pop %v6072
    %v6083 = vxor.u32 %v6072, 2147483648
    %v6084 = vmul.f32 %v6083, 1.442695
    %v6085 = vpow.pop %v6084
    %v6086 = vadd.f32 %v6085, 1.0
    %v6087 = vrcp.pop %v6086
    %v6088 = vmul.f32 1.0, %v6087
    %v6089 = vmul.f32 %v6081, %v6082
    %v6090 = vtanh.pop %v6089
    %6092 = vrot.lane.b32.xlu0 %v6090, 64
    %v6093 = vpop.permute.xlu0 %6092
    %v6095 = vmul.f32 %v6088, %v6093
    %s6096 = scalar_lea.vmem [#allocation8], 512
    %v6097 = vld [vmem:[%s6096] sm:$0xff]
    %v6098 = vld [vmem:[%s6096 + $0x8] sm:$0xff]
    %v6099 = vld [vmem:[%s6096 + $0x10] sm:$0xff]
    %v6100 = vld [vmem:[%s6096 + $0x18] sm:$0xff]
    %v6101 = vld [vmem:[%s6096 + $0x20] sm:$0xff]
    %v6102 = vld [vmem:[%s6096 + $0x28] sm:$0xff]
    %v6103 = vld [vmem:[%s6096 + $0x30] sm:$0xff]
    %v6104 = vld [vmem:[%s6096 + $0x38] sm:$0xff]
    %v6105 = vld [vmem:[%s6096 + $0x40] sm:$0xff]
    %v6106 = vld [vmem:[%s6096 + $0x48] sm:$0xff]
    %v6107 = vld [vmem:[%s6096 + $0x50] sm:$0xff]
    %v6108 = vld [vmem:[%s6096 + $0x58] sm:$0xff]
    %v6109 = vld [vmem:[%s6096 + $0x60] sm:$0xff]
    %v6110 = vld [vmem:[%s6096 + $0x68] sm:$0xff]
    %v6111 = vld [vmem:[%s6096 + $0x70] sm:$0xff]
    %v6112 = vld [vmem:[%s6096 + $0x78] sm:$0xff]
    %v6113 = vld [vmem:[%s6096 + $0x80] sm:$0xff]
    %v6114 = vld [vmem:[%s6096 + $0x88] sm:$0xff]
    %v6115 = vld [vmem:[%s6096 + $0x90] sm:$0xff]
    %v6116 = vld [vmem:[%s6096 + $0x98] sm:$0xff]
    %v6117 = vld [vmem:[%s6096 + $0xa0] sm:$0xff]
    %v6118 = vld [vmem:[%s6096 + $0xa8] sm:$0xff]
    %v6119 = vld [vmem:[%s6096 + $0xb0] sm:$0xff]
    %v6120 = vld [vmem:[%s6096 + $0xb8] sm:$0xff]
    %v6121 = vld [vmem:[%s6096 + $0xc0] sm:$0xff]
    %v6122 = vld [vmem:[%s6096 + $0xc8] sm:$0xff]
    %v6123 = vld [vmem:[%s6096 + $0xd0] sm:$0xff]
    %v6124 = vld [vmem:[%s6096 + $0xd8] sm:$0xff]
    %v6125 = vld [vmem:[%s6096 + $0xe0] sm:$0xff]
    %v6126 = vld [vmem:[%s6096 + $0xe8] sm:$0xff]
    %v6127 = vld [vmem:[%s6096 + $0xf0] sm:$0xff]
    %v6128 = vld [vmem:[%s6096 + $0xf8] sm:$0xff]
    %v6129 = vld [vmem:[%s6096 + $0x100] sm:$0xff]
    %v6130 = vld [vmem:[%s6096 + $0x108] sm:$0xff]
    %v6131 = vld [vmem:[%s6096 + $0x110] sm:$0xff]
    %v6132 = vld [vmem:[%s6096 + $0x118] sm:$0xff]
    %v6133 = vld [vmem:[%s6096 + $0x120] sm:$0xff]
    %v6134 = vld [vmem:[%s6096 + $0x128] sm:$0xff]
    %v6135 = vld [vmem:[%s6096 + $0x130] sm:$0xff]
    %v6136 = vld [vmem:[%s6096 + $0x138] sm:$0xff]
    %v6137 = vld [vmem:[%s6096 + $0x140] sm:$0xff]
    %v6138 = vld [vmem:[%s6096 + $0x148] sm:$0xff]
    %v6139 = vld [vmem:[%s6096 + $0x150] sm:$0xff]
    %v6140 = vld [vmem:[%s6096 + $0x158] sm:$0xff]
    %v6141 = vld [vmem:[%s6096 + $0x160] sm:$0xff]
    %v6142 = vld [vmem:[%s6096 + $0x168] sm:$0xff]
    %v6143 = vld [vmem:[%s6096 + $0x170] sm:$0xff]
    %v6144 = vld [vmem:[%s6096 + $0x178] sm:$0xff]
    %v6145 = vld [vmem:[%s6096 + $0x180] sm:$0xff]
    %v6146 = vld [vmem:[%s6096 + $0x188] sm:$0xff]
    %v6147 = vld [vmem:[%s6096 + $0x190] sm:$0xff]
    %v6148 = vld [vmem:[%s6096 + $0x198] sm:$0xff]
    %v6149 = vld [vmem:[%s6096 + $0x1a0] sm:$0xff]
    %v6150 = vld [vmem:[%s6096 + $0x1a8] sm:$0xff]
    %v6151 = vld [vmem:[%s6096 + $0x1b0] sm:$0xff]
    %v6152 = vld [vmem:[%s6096 + $0x1b8] sm:$0xff]
    %v6153 = vld [vmem:[%s6096 + $0x1c0] sm:$0xff]
    %v6154 = vld [vmem:[%s6096 + $0x1c8] sm:$0xff]
    %v6155 = vld [vmem:[%s6096 + $0x1d0] sm:$0xff]
    %v6156 = vld [vmem:[%s6096 + $0x1d8] sm:$0xff]
    %v6157 = vld [vmem:[%s6096 + $0x1e0] sm:$0xff]
    %v6158 = vld [vmem:[%s6096 + $0x1e8] sm:$0xff]
    %v6159 = vld [vmem:[%s6096 + $0x1f0] sm:$0xff]
    %v6160 = vld [vmem:[%s6096 + $0x1f8] sm:$0xff]
    %s6161 = scalar_lea.vmem %s17, 2
    %v6162 = vld [vmem:[%s6161] sm:$0x3]
    %v6164 = vlaneseq
    %v6165 = vshrl.u32 %v6164, 7
    %v6166 = vsub.s32 0, %v6165
    %v6167 = vrot.slane %v6162, %v6166
    %v6168 = vlaneseq
    %v6169 = vshrl.u32 %v6168, 7
    %v6170 = vsub.s32 1, %v6169
    %v6171 = vrot.slane %v6162, %v6170
    %v6238 = vunpack.c.l.b16 %v6097
    %v6239 = vunpack.c.h.b16 %v6097
    %v6240 = vunpack.c.l.b16 %v6098
    %v6241 = vunpack.c.h.b16 %v6098
    %v6242 = vunpack.c.l.b16 %v6099
    %v6243 = vunpack.c.h.b16 %v6099
    %v6244 = vunpack.c.l.b16 %v6100
    %v6245 = vunpack.c.h.b16 %v6100
    %v6246 = vunpack.c.l.b16 %v6101
    %v6247 = vunpack.c.h.b16 %v6101
    %v6248 = vunpack.c.l.b16 %v6102
    %v6249 = vunpack.c.h.b16 %v6102
    %v6250 = vunpack.c.l.b16 %v6103
    %v6251 = vunpack.c.h.b16 %v6103
    %v6252 = vunpack.c.l.b16 %v6104
    %v6253 = vunpack.c.h.b16 %v6104
    %v6254 = vunpack.c.l.b16 %v6105
    %v6255 = vunpack.c.h.b16 %v6105
    %v6256 = vunpack.c.l.b16 %v6106
    %v6257 = vunpack.c.h.b16 %v6106
    %v6258 = vunpack.c.l.b16 %v6107
    %v6259 = vunpack.c.h.b16 %v6107
    %v6260 = vunpack.c.l.b16 %v6108
    %v6261 = vunpack.c.h.b16 %v6108
    %v6262 = vunpack.c.l.b16 %v6109
    %v6263 = vunpack.c.h.b16 %v6109
    %v6264 = vunpack.c.l.b16 %v6110
    %v6265 = vunpack.c.h.b16 %v6110
    %v6266 = vunpack.c.l.b16 %v6111
    %v6267 = vunpack.c.h.b16 %v6111
    %v6268 = vunpack.c.l.b16 %v6112
    %v6269 = vunpack.c.h.b16 %v6112
    %v6270 = vunpack.c.l.b16 %v6113
    %v6271 = vunpack.c.h.b16 %v6113
    %v6272 = vunpack.c.l.b16 %v6114
    %v6273 = vunpack.c.h.b16 %v6114
    %v6274 = vunpack.c.l.b16 %v6115
    %v6275 = vunpack.c.h.b16 %v6115
    %v6276 = vunpack.c.l.b16 %v6116
    %v6277 = vunpack.c.h.b16 %v6116
    %v6278 = vunpack.c.l.b16 %v6117
    %v6279 = vunpack.c.h.b16 %v6117
    %v6280 = vunpack.c.l.b16 %v6118
    %v6281 = vunpack.c.h.b16 %v6118
    %v6282 = vunpack.c.l.b16 %v6119
    %v6283 = vunpack.c.h.b16 %v6119
    %v6284 = vunpack.c.l.b16 %v6120
    %v6285 = vunpack.c.h.b16 %v6120
    %v6286 = vunpack.c.l.b16 %v6121
    %v6287 = vunpack.c.h.b16 %v6121
    %v6288 = vunpack.c.l.b16 %v6122
    %v6289 = vunpack.c.h.b16 %v6122
    %v6290 = vunpack.c.l.b16 %v6123
    %v6291 = vunpack.c.h.b16 %v6123
    %v6292 = vunpack.c.l.b16 %v6124
    %v6293 = vunpack.c.h.b16 %v6124
    %v6294 = vunpack.c.l.b16 %v6125
    %v6295 = vunpack.c.h.b16 %v6125
    %v6296 = vunpack.c.l.b16 %v6126
    %v6297 = vunpack.c.h.b16 %v6126
    %v6298 = vunpack.c.l.b16 %v6127
    %v6299 = vunpack.c.h.b16 %v6127
    %v6300 = vunpack.c.l.b16 %v6128
    %v6301 = vunpack.c.h.b16 %v6128
    %v6302 = vunpack.c.l.b16 %v6129
    %v6303 = vunpack.c.h.b16 %v6129
    %v6304 = vunpack.c.l.b16 %v6130
    %v6305 = vunpack.c.h.b16 %v6130
    %v6306 = vunpack.c.l.b16 %v6131
    %v6307 = vunpack.c.h.b16 %v6131
    %v6308 = vunpack.c.l.b16 %v6132
    %v6309 = vunpack.c.h.b16 %v6132
    %v6310 = vunpack.c.l.b16 %v6133
    %v6311 = vunpack.c.h.b16 %v6133
    %v6312 = vunpack.c.l.b16 %v6134
    %v6313 = vunpack.c.h.b16 %v6134
    %v6314 = vunpack.c.l.b16 %v6135
    %v6315 = vunpack.c.h.b16 %v6135
    %v6316 = vunpack.c.l.b16 %v6136
    %v6317 = vunpack.c.h.b16 %v6136
    %v6318 = vunpack.c.l.b16 %v6137
    %v6319 = vunpack.c.h.b16 %v6137
    %v6320 = vunpack.c.l.b16 %v6138
    %v6321 = vunpack.c.h.b16 %v6138
    %v6322 = vunpack.c.l.b16 %v6139
    %v6323 = vunpack.c.h.b16 %v6139
    %v6324 = vunpack.c.l.b16 %v6140
    %v6325 = vunpack.c.h.b16 %v6140
    %v6326 = vunpack.c.l.b16 %v6141
    %v6327 = vunpack.c.h.b16 %v6141
    %v6328 = vunpack.c.l.b16 %v6142
    %v6329 = vunpack.c.h.b16 %v6142
    %v6330 = vunpack.c.l.b16 %v6143
    %v6331 = vunpack.c.h.b16 %v6143
    %v6332 = vunpack.c.l.b16 %v6144
    %v6333 = vunpack.c.h.b16 %v6144
    %v6334 = vunpack.c.l.b16 %v6145
    %v6335 = vunpack.c.h.b16 %v6145
    %v6336 = vunpack.c.l.b16 %v6146
    %v6337 = vunpack.c.h.b16 %v6146
    %v6338 = vunpack.c.l.b16 %v6147
    %v6339 = vunpack.c.h.b16 %v6147
    %v6340 = vunpack.c.l.b16 %v6148
    %v6341 = vunpack.c.h.b16 %v6148
    %v6342 = vunpack.c.l.b16 %v6149
    %v6343 = vunpack.c.h.b16 %v6149
    %v6344 = vunpack.c.l.b16 %v6150
    %v6345 = vunpack.c.h.b16 %v6150
    %v6346 = vunpack.c.l.b16 %v6151
    %v6347 = vunpack.c.h.b16 %v6151
    %v6348 = vunpack.c.l.b16 %v6152
    %v6349 = vunpack.c.h.b16 %v6152
    %v6350 = vunpack.c.l.b16 %v6153
    %v6351 = vunpack.c.h.b16 %v6153
    %v6352 = vunpack.c.l.b16 %v6154
    %v6353 = vunpack.c.h.b16 %v6154
    %v6354 = vunpack.c.l.b16 %v6155
    %v6355 = vunpack.c.h.b16 %v6155
    %v6356 = vunpack.c.l.b16 %v6156
    %v6357 = vunpack.c.h.b16 %v6156
    %v6358 = vunpack.c.l.b16 %v6157
    %v6359 = vunpack.c.h.b16 %v6157
    %v6360 = vunpack.c.l.b16 %v6158
    %v6361 = vunpack.c.h.b16 %v6158
    %v6362 = vunpack.c.l.b16 %v6159
    %v6363 = vunpack.c.h.b16 %v6159
    %v6364 = vunpack.c.l.b16 %v6160
    %v6365 = vunpack.c.h.b16 %v6160
    %v6366 = vpack.c.b16 %v6240, %v6238
    %v6367 = vpack.c.b16 %v6241, %v6239
    %v6368 = vpack.c.b16 %v6244, %v6242
    %v6369 = vpack.c.b16 %v6245, %v6243
    %v6370 = vpack.c.b16 %v6248, %v6246
    %v6371 = vpack.c.b16 %v6249, %v6247
    %v6372 = vpack.c.b16 %v6252, %v6250
    %v6373 = vpack.c.b16 %v6253, %v6251
    %v6374 = vpack.c.b16 %v6256, %v6254
    %v6375 = vpack.c.b16 %v6257, %v6255
    %v6376 = vpack.c.b16 %v6260, %v6258
    %v6377 = vpack.c.b16 %v6261, %v6259
    %v6378 = vpack.c.b16 %v6264, %v6262
    %v6379 = vpack.c.b16 %v6265, %v6263
    %v6380 = vpack.c.b16 %v6268, %v6266
    %v6381 = vpack.c.b16 %v6269, %v6267
    %v6382 = vpack.c.b16 %v6272, %v6270
    %v6383 = vpack.c.b16 %v6273, %v6271
    %v6384 = vpack.c.b16 %v6276, %v6274
    %v6385 = vpack.c.b16 %v6277, %v6275
    %v6386 = vpack.c.b16 %v6280, %v6278
    %v6387 = vpack.c.b16 %v6281, %v6279
    %v6388 = vpack.c.b16 %v6284, %v6282
    %v6389 = vpack.c.b16 %v6285, %v6283
    %v6390 = vpack.c.b16 %v6288, %v6286
    %v6391 = vpack.c.b16 %v6289, %v6287
    %v6392 = vpack.c.b16 %v6292, %v6290
    %v6393 = vpack.c.b16 %v6293, %v6291
    %v6394 = vpack.c.b16 %v6296, %v6294
    %v6395 = vpack.c.b16 %v6297, %v6295
    %v6396 = vpack.c.b16 %v6300, %v6298
    %v6397 = vpack.c.b16 %v6301, %v6299
    %v6398 = vpack.c.b16 %v6304, %v6302
    %v6399 = vpack.c.b16 %v6305, %v6303
    %v6400 = vpack.c.b16 %v6308, %v6306
    %v6401 = vpack.c.b16 %v6309, %v6307
    %v6402 = vpack.c.b16 %v6312, %v6310
    %v6403 = vpack.c.b16 %v6313, %v6311
    %v6404 = vpack.c.b16 %v6316, %v6314
    %v6405 = vpack.c.b16 %v6317, %v6315
    %v6406 = vpack.c.b16 %v6320, %v6318
    %v6407 = vpack.c.b16 %v6321, %v6319
    %v6408 = vpack.c.b16 %v6324, %v6322
    %v6409 = vpack.c.b16 %v6325, %v6323
    %v6410 = vpack.c.b16 %v6328, %v6326
    %v6411 = vpack.c.b16 %v6329, %v6327
    %v6412 = vpack.c.b16 %v6332, %v6330
    %v6413 = vpack.c.b16 %v6333, %v6331
    %v6414 = vpack.c.b16 %v6336, %v6334
    %v6415 = vpack.c.b16 %v6337, %v6335
    %v6416 = vpack.c.b16 %v6340, %v6338
    %v6417 = vpack.c.b16 %v6341, %v6339
    %v6418 = vpack.c.b16 %v6344, %v6342
    %v6419 = vpack.c.b16 %v6345, %v6343
    %v6420 = vpack.c.b16 %v6348, %v6346
    %v6421 = vpack.c.b16 %v6349, %v6347
    %v6422 = vpack.c.b16 %v6352, %v6350
    %v6423 = vpack.c.b16 %v6353, %v6351
    %v6424 = vpack.c.b16 %v6356, %v6354
    %v6425 = vpack.c.b16 %v6357, %v6355
    %v6426 = vpack.c.b16 %v6360, %v6358
    %v6427 = vpack.c.b16 %v6361, %v6359
    %v6428 = vpack.c.b16 %v6364, %v6362
    %v6429 = vpack.c.b16 %v6365, %v6363
    %6494 = vmatprep.subr.bf16.mxu0 %v6367
    %6495 = vmatpush1.bf16.msra.mxu0 %v6366
    %6496 = vmatprep.subr.bf16.mxu0 %v6369
    %6497 = vmatpush1.bf16.msra.mxu0 %v6368
    %6498 = vmatprep.subr.bf16.mxu0 %v6371
    %6499 = vmatpush1.bf16.msra.mxu0 %v6370
    %6500 = vmatprep.subr.bf16.mxu0 %v6373
    %6501 = vmatpush1.bf16.msra.mxu0 %v6372
    %6502 = vmatprep.subr.bf16.mxu0 %v6375
    %6503 = vmatpush1.bf16.msra.mxu0 %v6374
    %6504 = vmatprep.subr.bf16.mxu0 %v6377
    %6505 = vmatpush1.bf16.msra.mxu0 %v6376
    %6506 = vmatprep.subr.bf16.mxu0 %v6379
    %6507 = vmatpush1.bf16.msra.mxu0 %v6378
    %6508 = vmatprep.subr.bf16.mxu0 %v6381
    %6509 = vmatpush1.bf16.msra.mxu0 %v6380
    %6510 = vmatprep.subr.bf16.mxu0 %v6383
    %6511 = vmatpush1.bf16.msra.mxu0 %v6382
    %6512 = vmatprep.subr.bf16.mxu0 %v6385
    %6513 = vmatpush1.bf16.msra.mxu0 %v6384
    %6514 = vmatprep.subr.bf16.mxu0 %v6387
    %6515 = vmatpush1.bf16.msra.mxu0 %v6386
    %6516 = vmatprep.subr.bf16.mxu0 %v6389
    %6517 = vmatpush1.bf16.msra.mxu0 %v6388
    %6518 = vmatprep.subr.bf16.mxu0 %v6391
    %6519 = vmatpush1.bf16.msra.mxu0 %v6390
    %6520 = vmatprep.subr.bf16.mxu0 %v6393
    %6521 = vmatpush1.bf16.msra.mxu0 %v6392
    %6522 = vmatprep.subr.bf16.mxu0 %v6395
    %6523 = vmatpush1.bf16.msra.mxu0 %v6394
    %6524 = vmatprep.subr.bf16.mxu0 %v6397
    %6525 = vmatpush1.bf16.msra.mxu0 %v6396
    %6526 = vmatprep.mubr.bf16.mxu0 %v5660
    %6527 = vmatmul.mubr.bf16.gmra.mrb[0].mxu0 %v5659
    %v6528 = vpop.f32.mrb[0].mxu0
    %v6529 = vadd.f32 %v6167, %v6528
    %v6530 = vpop.f32.mrb[0].mxu0
    %v6531 = vadd.f32 %v6171, %v6530
    %v6532 = vpop.f32.mrb[0].mxu0
    %v6533 = vpop.f32.mrb[0].mxu0
    %6534 = vdwg.mxu0
    %6535 = vmatprep.subr.bf16.mxu0 %v6399
    %6536 = vmatpush1.bf16.msra.mxu0 %v6398
    %6537 = vmatprep.subr.bf16.mxu0 %v6401
    %6538 = vmatpush1.bf16.msra.mxu0 %v6400
    %6539 = vmatprep.subr.bf16.mxu0 %v6403
    %6540 = vmatpush1.bf16.msra.mxu0 %v6402
    %6541 = vmatprep.subr.bf16.mxu0 %v6405
    %6542 = vmatpush1.bf16.msra.mxu0 %v6404
    %6543 = vmatprep.subr.bf16.mxu0 %v6407
    %6544 = vmatpush1.bf16.msra.mxu0 %v6406
    %6545 = vmatprep.subr.bf16.mxu0 %v6409
    %6546 = vmatpush1.bf16.msra.mxu0 %v6408
    %6547 = vmatprep.subr.bf16.mxu0 %v6411
    %6548 = vmatpush1.bf16.msra.mxu0 %v6410
    %6549 = vmatprep.subr.bf16.mxu0 %v6413
    %6550 = vmatpush1.bf16.msra.mxu0 %v6412
    %6551 = vmatprep.subr.bf16.mxu0 %v6415
    %6552 = vmatpush1.bf16.msra.mxu0 %v6414
    %6553 = vmatprep.subr.bf16.mxu0 %v6417
    %6554 = vmatpush1.bf16.msra.mxu0 %v6416
    %6555 = vmatprep.subr.bf16.mxu0 %v6419
    %6556 = vmatpush1.bf16.msra.mxu0 %v6418
    %6557 = vmatprep.subr.bf16.mxu0 %v6421
    %6558 = vmatpush1.bf16.msra.mxu0 %v6420
    %6559 = vmatprep.subr.bf16.mxu0 %v6423
    %6560 = vmatpush1.bf16.msra.mxu0 %v6422
    %6561 = vmatprep.subr.bf16.mxu0 %v6425
    %6562 = vmatpush1.bf16.msra.mxu0 %v6424
    %6563 = vmatprep.subr.bf16.mxu0 %v6427
    %6564 = vmatpush1.bf16.msra.mxu0 %v6426
    %6565 = vmatprep.subr.bf16.mxu0 %v6429
    %6566 = vmatpush1.bf16.msra.mxu0 %v6428
    %6567 = vmatprep.mubr.bf16.mxu0 %v5662
    %6568 = vmatmul.mubr.bf16.gmra.mrb[0].mxu0 %v5661
    %v6569 = vpop.f32.mrb[0].mxu0
    %v6570 = vadd.f32 %v6529, %v6569
    %v6571 = vpop.f32.mrb[0].mxu0
    %v6572 = vadd.f32 %v6531, %v6571
    %v6573 = vpop.f32.mrb[0].mxu0
    %v6574 = vpop.f32.mrb[0].mxu0
    %6575 = vdwg.mxu0
    %v6576 = vxor.u32 %v6570, 2147483648
    %v6577 = vmul.f32 %v6576, 1.442695
    %v6578 = vpow.pop %v6577
    %v6579 = vadd.f32 %v6578, 1.0
    %v6580 = vrcp.pop %v6579
    %v6581 = vmul.f32 1.0, %v6580
    %v6582 = vtanh.pop %v6572
    %v6583 = vxor.u32 %v6572, 2147483648
    %v6584 = vmul.f32 %v6583, 1.442695
    %v6585 = vpow.pop %v6584
    %v6586 = vadd.f32 %v6585, 1.0
    %v6587 = vrcp.pop %v6586
    %v6588 = vmul.f32 1.0, %v6587
    %v6589 = vmul.f32 %v6581, %v6582
    %v6590 = vtanh.pop %v6589
    %6592 = vrot.lane.b32.xlu0 %v6590, 64
    %v6593 = vpop.permute.xlu0 %6592
    %v6595 = vmul.f32 %v6588, %v6593
    %6597 = vrot.lane.b32.xlu0 %v6095, 64
    %v6598 = vpop.permute.xlu0 %6597
    %v6600 = vsel %vm943, %v6598, %v6595
    %v6601 = vld [vmem:[%s18] sm:$0xf]
    %v6602 = vld [vmem:[%s18 + $0x4] sm:$0xf]
    %v6603 = vld [vmem:[%s18 + $0x8] sm:$0xf]
    %v6604 = vld [vmem:[%s18 + $0xc] sm:$0xf]
    %v6605 = vld [vmem:[%s18 + $0x10] sm:$0xf]
    %v6606 = vld [vmem:[%s18 + $0x14] sm:$0xf]
    %v6607 = vld [vmem:[%s18 + $0x18] sm:$0xf]
    %v6608 = vld [vmem:[%s18 + $0x1c] sm:$0xf]
    %v6609 = vld [vmem:[%s18 + $0x20] sm:$0xf]
    %v6610 = vld [vmem:[%s18 + $0x24] sm:$0xf]
    %v6611 = vld [vmem:[%s18 + $0x28] sm:$0xf]
    %v6612 = vld [vmem:[%s18 + $0x2c] sm:$0xf]
    %v6613 = vld [vmem:[%s18 + $0x30] sm:$0xf]
    %v6614 = vld [vmem:[%s18 + $0x34] sm:$0xf]
    %v6615 = vld [vmem:[%s18 + $0x38] sm:$0xf]
    %v6616 = vld [vmem:[%s18 + $0x3c] sm:$0xf]
    %v6617 = vpack.c.bf16 %v6600, %v6600
    %v6618 = vld [vmem:[%s19] sm:$0x1]
    %v6620 = vlaneseq
    %v6621 = vshrl.u32 %v6620, 7
    %v6622 = vsub.s32 0, %v6621
    %v6623 = vrot.slane %v6618, %v6622
    %v6641 = vunpack.c.l.b16 %v6601
    %v6642 = vunpack.c.l.b16 %v6602
    %v6643 = vunpack.c.l.b16 %v6603
    %v6644 = vunpack.c.l.b16 %v6604
    %v6645 = vunpack.c.l.b16 %v6605
    %v6646 = vunpack.c.l.b16 %v6606
    %v6647 = vunpack.c.l.b16 %v6607
    %v6648 = vunpack.c.l.b16 %v6608
    %v6649 = vunpack.c.l.b16 %v6609
    %v6650 = vunpack.c.l.b16 %v6610
    %v6651 = vunpack.c.l.b16 %v6611
    %v6652 = vunpack.c.l.b16 %v6612
    %v6653 = vunpack.c.l.b16 %v6613
    %v6654 = vunpack.c.l.b16 %v6614
    %v6655 = vunpack.c.l.b16 %v6615
    %v6656 = vunpack.c.l.b16 %v6616
    %v6657 = vpack.c.b16 %v6642, %v6641
    %v6658 = vpack.c.b16 %v6644, %v6643
    %v6659 = vpack.c.b16 %v6646, %v6645
    %v6660 = vpack.c.b16 %v6648, %v6647
    %v6661 = vpack.c.b16 %v6650, %v6649
    %v6662 = vpack.c.b16 %v6652, %v6651
    %v6663 = vpack.c.b16 %v6654, %v6653
    %v6664 = vpack.c.b16 %v6656, %v6655
    %6673 = vmatprep.subr.bf16.mxu0 0
    %6674 = vmatpush1.bf16.msra.mxu0 %v6657
    %6675 = vmatprep.subr.bf16.mxu0 0
    %6676 = vmatpush1.bf16.msra.mxu0 %v6658
    %6677 = vmatprep.subr.bf16.mxu0 0
    %6678 = vmatpush1.bf16.msra.mxu0 %v6659
    %6679 = vmatprep.subr.bf16.mxu0 0
    %6680 = vmatpush1.bf16.msra.mxu0 %v6660
    %6681 = vmatprep.subr.bf16.mxu0 0
    %6682 = vmatpush1.bf16.msra.mxu0 %v6661
    %6683 = vmatprep.subr.bf16.mxu0 0
    %6684 = vmatpush1.bf16.msra.mxu0 %v6662
    %6685 = vmatprep.subr.bf16.mxu0 0
    %6686 = vmatpush1.bf16.msra.mxu0 %v6663
    %6687 = vmatprep.subr.bf16.mxu0 0
    %6688 = vmatpush1.bf16.msra.mxu0 %v6664
    %6689 = vmatprep.subr.bf16.mxu0 0
    %6690 = vmatpush1.bf16.msra.mxu0 0
    %6691 = vmatprep.subr.bf16.mxu0 0
    %6692 = vmatpush1.bf16.msra.mxu0 0
    %6693 = vmatprep.subr.bf16.mxu0 0
    %6694 = vmatpush1.bf16.msra.mxu0 0
    %6695 = vmatprep.subr.bf16.mxu0 0
    %6696 = vmatpush1.bf16.msra.mxu0 0
    %6697 = vmatprep.subr.bf16.mxu0 0
    %6698 = vmatpush1.bf16.msra.mxu0 0
    %6699 = vmatprep.subr.bf16.mxu0 0
    %6700 = vmatpush1.bf16.msra.mxu0 0
    %6701 = vmatprep.subr.bf16.mxu0 0
    %6702 = vmatpush1.bf16.msra.mxu0 0
    %6703 = vmatprep.subr.bf16.mxu0 0
    %6704 = vmatpush1.bf16.msra.mxu0 0
    %6705 = vmatprep.mubr.bf16.mxu0 0
    %6706 = vmatmul.mubr.bf16.gmra.mrb[0].mxu0 %v6617
    %v6707 = vpop.f32.mrb[0].mxu0
    %v6708 = vadd.f32 %v6623, %v6707
    %v6709 = vpop.f32.mrb[0].mxu0
    %v6710 = vpop.f32.mrb[0].mxu0
    %v6711 = vpop.f32.mrb[0].mxu0
    %6712 = vdwg.mxu0
    %v6713 = vmax.f32 %v6708, 0.0
    %v6714 = vld [vmem:[%s20] sm:$0xf]
    %v6715 = vld [vmem:[%s20 + $0x4] sm:$0xf]
    %v6716 = vld [vmem:[%s20 + $0x8] sm:$0xf]
    %v6717 = vld [vmem:[%s20 + $0xc] sm:$0xf]
    %v6718 = vld [vmem:[%s20 + $0x10] sm:$0xf]
    %v6719 = vld [vmem:[%s20 + $0x14] sm:$0xf]
    %v6720 = vld [vmem:[%s20 + $0x18] sm:$0xf]
    %v6721 = vld [vmem:[%s20 + $0x1c] sm:$0xf]
    %v6722 = vpack.c.bf16 %v6713, %v6713
    %v6723 = vld [vmem:[%s21] sm:$0x1]
    %v6725 = vlaneseq
    %v6726 = vshrl.u32 %v6725, 7
    %v6727 = vsub.s32 0, %v6726
    %v6728 = vrot.slane %v6723, %v6727
    %v6738 = vunpack.c.l.b16 %v6714
    %v6739 = vunpack.c.l.b16 %v6715
    %v6740 = vunpack.c.l.b16 %v6716
    %v6741 = vunpack.c.l.b16 %v6717
    %v6742 = vunpack.c.l.b16 %v6718
    %v6743 = vunpack.c.l.b16 %v6719
    %v6744 = vunpack.c.l.b16 %v6720
    %v6745 = vunpack.c.l.b16 %v6721
    %v6746 = vpack.c.b16 %v6739, %v6738
    %v6747 = vpack.c.b16 %v6741, %v6740
    %v6748 = vpack.c.b16 %v6743, %v6742
    %v6749 = vpack.c.b16 %v6745, %v6744
    %v6755 = vsel %vm943, %v6722, 0
    %6757 = vmatprep.subr.bf16.mxu0 0
    %6758 = vmatpush1.bf16.msra.mxu0 %v6746
    %6759 = vmatprep.subr.bf16.mxu0 0
    %6760 = vmatpush1.bf16.msra.mxu0 %v6747
    %6761 = vmatprep.subr.bf16.mxu0 0
    %6762 = vmatpush1.bf16.msra.mxu0 %v6748
    %6763 = vmatprep.subr.bf16.mxu0 0
    %6764 = vmatpush1.bf16.msra.mxu0 %v6749
    %6765 = vmatprep.subr.bf16.mxu0 0
    %6766 = vmatpush1.bf16.msra.mxu0 0
    %6767 = vmatprep.subr.bf16.mxu0 0
    %6768 = vmatpush1.bf16.msra.mxu0 0
    %6769 = vmatprep.subr.bf16.mxu0 0
    %6770 = vmatpush1.bf16.msra.mxu0 0
    %6771 = vmatprep.subr.bf16.mxu0 0
    %6772 = vmatpush1.bf16.msra.mxu0 0
    %6773 = vmatprep.subr.bf16.mxu0 0
    %6774 = vmatpush1.bf16.msra.mxu0 0
    %6775 = vmatprep.subr.bf16.mxu0 0
    %6776 = vmatpush1.bf16.msra.mxu0 0
    %6777 = vmatprep.subr.bf16.mxu0 0
    %6778 = vmatpush1.bf16.msra.mxu0 0
    %6779 = vmatprep.subr.bf16.mxu0 0
    %6780 = vmatpush1.bf16.msra.mxu0 0
    %6781 = vmatprep.subr.bf16.mxu0 0
    %6782 = vmatpush1.bf16.msra.mxu0 0
    %6783 = vmatprep.subr.bf16.mxu0 0
    %6784 = vmatpush1.bf16.msra.mxu0 0
    %6785 = vmatprep.subr.bf16.mxu0 0
    %6786 = vmatpush1.bf16.msra.mxu0 0
    %6787 = vmatprep.subr.bf16.mxu0 0
    %6788 = vmatpush1.bf16.msra.mxu0 0
    %6789 = vmatprep.mubr.bf16.mxu0 0
    %6790 = vmatmul.mubr.bf16.gmra.mrb[0].mxu0 %v6755
    %v6791 = vpop.f32.mrb[0].mxu0
    %v6792 = vadd.f32 %v6728, %v6791
    %v6793 = vpop.f32.mrb[0].mxu0
    %v6794 = vpop.f32.mrb[0].mxu0
    %v6795 = vpop.f32.mrb[0].mxu0
    %6796 = vdwg.mxu0
    %vm6797 = vcmask 107520
    %6798 = vst.msk [vmem:[#allocation10] sm:$0x3] %vm6797, %v6792
    // Predicated region
    $region106: #{bert_class_forward.1} parent=1 // pred_check
      _
    $region107: #{bert_class_forward.1} parent=1 // pred_check_branch
      %6800 = sbr.rel (0) target = $region109
    $region108: #{bert_class_forward.1} parent=1 // pred_region
      %s6802 = ssub.s32 32, 32
      %6803 = vsyncadd [#allocation4], %s6802
      %s6805 = sshll.u32 [#allocation10], 4
      %s6806 = int_to_ptr.vmem [resolvable:$true] %s6805
      %6808 = dma.vmem_to_hbm [thread:$0]  %s6806, 32, %s22, [#allocation4]
    $region109: #{bert_class_forward.1} parent=1 // pred_fallthru
      _
    // Predicated region
    $region110: #{bert_class_forward.1} parent=1 // pred_check
      _
    $region111: #{bert_class_forward.1} parent=1 // pred_check_branch
      %6810 = sbr.rel (0) target = $region113
    $region112: #{bert_class_forward.1} parent=1 // pred_region
      %6811 = dma.done [#allocation4], 32
    $region113: #{bert_class_forward.1} parent=1 // pred_fallthru
      _
    %6812 = vsyncpa [#allocation3], 1
    %6813 = vsyncpa [#allocation6], 1
    %6814 = vsyncpa [#allocation9], 1
    %6815 = vsyncpa [#allocation4], 1

</llo_original>
